<compile_context>
chip_gen: v5e
topology: v5e:2x2
jax: 0.10.0
libtpu: 0.0.40
codegen_flags: <defaults>
</compile_context>

<pallas_src>
import functools

import jax
import jax.numpy as jnp
from jax import lax
from jax.experimental import pallas as pl
from jax.experimental.pallas import tpu as pltpu

# Scoped-VMEM budget: safe on every generation (v7x physical VMEM is 64 MiB); tune per chip.
VMEM_LIMIT = 32 * 1024 * 1024
_BF16 = jnp.bfloat16


def _pick_tile(n, pref, mult):
    """Largest multiple of `mult` (<= pref) that evenly divides n, else the whole axis."""
    if n <= pref:
        return n
    t = (pref // mult) * mult
    while t >= mult:
        if n % t == 0:
            return t
        t -= mult
    return n


# ----------------------------- Pallas kernels -----------------------------

def _ln_matmul_kernel(x_ref, g_ref, b_ref, w_ref, o_ref, *, eps=1e-5):
    """LayerNorm(row tile) @ W   (W is bf16; no bias — to_q/to_k/to_v are bias-free)."""
    x = x_ref[...]
    mean = jnp.mean(x, axis=-1, keepdims=True)
    xc = x - mean
    var = jnp.mean(xc * xc, axis=-1, keepdims=True)
    xn = (xc * lax.rsqrt(var + eps)) * g_ref[...] + b_ref[...]
    o_ref[...] = jnp.dot(xn.astype(_BF16), w_ref[...],
                         preferred_element_type=jnp.float32).astype(o_ref.dtype)


def _matmul_kernel(x_ref, w_ref, o_ref):
    """Plain bias-free projection (context -> fused [K|V])."""
    o_ref[...] = jnp.dot(x_ref[...].astype(_BF16), w_ref[...],
                         preferred_element_type=jnp.float32).astype(o_ref.dtype)


def _flash_attn_out_kernel(q_ref, k_ref, v_ref, wo_ref, bo_ref, res_ref, o_ref,
                           m_sc, l_sc, acc_sc, *, scale, res_scale):
    """Online-softmax attention fused with the output projection + bias + res_scale * residual.

    Grid is (batch, q-tile, kv-tile); kv-tile is the reduction axis.  On the last kv step the
    per-head accumulators are normalized, head-merged into the projection
    (out = sum_h attn[h] @ Wo[h*d:(h+1)*d, :]) so no (b h) n d -> b n (h d) transpose is ever
    materialized, and the bias + res_scale*x epilogue is written to a lane-dense (tq, D) tile.
    """
    kv = pl.program_id(2)

    @pl.when(kv == 0)
    def _():
        m_sc[...] = jnp.full(m_sc.shape, -jnp.inf, m_sc.dtype)
        l_sc[...] = jnp.zeros_like(l_sc)
        acc_sc[...] = jnp.zeros_like(acc_sc)

    q = q_ref[0].astype(_BF16)          # (H, tq, d)
    k = k_ref[0].astype(_BF16)          # (H, tk, d)
    v = v_ref[0].astype(_BF16)          # (H, tk, d)

    s = jnp.einsum('hqd,hkd->hqk', q, k,
                   preferred_element_type=jnp.float32) * scale      # (H, tq, tk) f32
    m_prev = m_sc[...]
    m_new = jnp.maximum(m_prev, s.max(-1, keepdims=True))
    alpha = jnp.exp(m_prev - m_new)
    p = jnp.exp(s - m_new)
    l_sc[...] = alpha * l_sc[...] + p.sum(-1, keepdims=True)
    acc_sc[...] = alpha * acc_sc[...] + jnp.einsum('hqk,hkd->hqd', p.astype(_BF16), v,
                                                   preferred_element_type=jnp.float32)
    m_sc[...] = m_new

    @pl.when(kv == pl.num_programs(2) - 1)
    def _():
        inv_l = pl.reciprocal(l_sc[...], approx=True)                # EUP slot, ~free
        attn = (acc_sc[...] * inv_l).astype(_BF16)                   # (H, tq, d)
        w = wo_ref[...]                                              # (H, d, D) bf16
        out = jnp.dot(attn[0], w[0], preferred_element_type=jnp.float32)
        for h in range(1, attn.shape[0]):                            # static unroll over heads
            out = out + jnp.dot(attn[h], w[h], preferred_element_type=jnp.float32)
        o_ref[0] = out + bo_ref[...] + res_scale * res_ref[0]


def _ff_fused_kernel(x_ref, g_ref, beta_ref, wv_ref, bv_ref, wg_ref, bg_ref,
                     w2_ref, b2_ref, o_ref, xn_sc, acc_sc, *, eps=1e-5):
    """Fully fused FeedForward: LN3 -> GEGLU (split val/gate weights) -> proj -> bias -> +x.

    Grid is (row-tile, ff-inner-tile); the FF inner dim is the reduction axis and is accumulated
    in an f32 VMEM scratch, so VMEM stays bounded at real LVDM dims (v7x: 64 MiB).
    """
    kf = pl.program_id(1)

    @pl.when(kf == 0)
    def _():
        x = x_ref[...]
        mean = jnp.mean(x, axis=-1, keepdims=True)
        xc = x - mean
        var = jnp.mean(xc * xc, axis=-1, keepdims=True)
        xn = (xc * lax.rsqrt(var + eps)) * g_ref[...] + beta_ref[...]
        xn_sc[...] = xn.astype(_BF16)
        acc_sc[...] = jnp.zeros_like(acc_sc)

    xn = xn_sc[...]                                                   # (tm, D) bf16
    hv = jnp.dot(xn, wv_ref[...], preferred_element_type=jnp.float32) + bv_ref[...]
    hg = jnp.dot(xn, wg_ref[...], preferred_element_type=jnp.float32) + bg_ref[...]
    # TODO(synk): torch's F.gelu is exact-erf; tanh-approx GELU (EUP tanh) deviates by ~1e-3.
    c = 0.7978845608028654
    gelu_g = 0.5 * hg * (1.0 + jnp.tanh(c * (hg + 0.044715 * hg * hg * hg)))
    hidden = (hv * gelu_g).astype(_BF16)
    acc_sc[...] += jnp.dot(hidden, w2_ref[...], preferred_element_type=jnp.float32)

    @pl.when(kf == pl.num_programs(1) - 1)
    def _():
        o_ref[...] = acc_sc[...] + b2_ref[...] + x_ref[...]           # + bias + residual


def _rbf_k_kernel(a_ref, asq_ref, bsq_ref, o_ref):
    """K[i,j] = exp(-0.5 * ||a_i - a_j||^2); squared norms hoisted to the wrapper."""
    a = a_ref[...]
    cross = lax.dot_general(a, a, (((1,), (1,)), ((), ())),
                            preferred_element_type=jnp.float32)
    d2 = jnp.maximum(asq_ref[...] + bsq_ref[...] - 2.0 * cross, 0.0)
    o_ref[...] = jnp.exp(-0.5 * d2)


def _gp_predict_kernel(xt_ref, tt_ref, xn_ref, nn_ref, alpha_ref, o_ref):
    """mu[b] = rbf(X_train, X_new[b]) @ (K^-1 y_train)  — matches the torch GP exactly."""
    xt = xt_ref[...]                    # (n, D)
    xn = xn_ref[0]                      # (nf, D)
    cross = lax.dot_general(xt, xn, (((1,), (1,)), ((), ())),
                            preferred_element_type=jnp.float32)       # (n, nf)
    d2 = jnp.maximum(tt_ref[...] + nn_ref[0] - 2.0 * cross, 0.0)
    C = jnp.exp(-0.5 * d2)
    o_ref[0] = jnp.dot(C, alpha_ref[...], preferred_element_type=jnp.float32)


# ----------------------------- Pallas wrappers -----------------------------

def ln_matmul(x2d, gamma, beta, w_bf16, *, out_dtype=_BF16, tm_pref=256, tn_pref=512):
    R, K = x2d.shape
    Nout = w_bf16.shape[1]
    tm = _pick_tile(R, tm_pref, 8)
    tn = _pick_tile(Nout, tn_pref, 128)
    return pl.pallas_call(
        _ln_matmul_kernel,
        out_shape=jax.ShapeDtypeStruct((R, Nout), out_dtype),
        grid=(R // tm, Nout // tn),
        in_specs=[pl.BlockSpec((tm, K), lambda i, j: (i, 0)),
                  pl.BlockSpec((1, K), lambda i, j: (0, 0)),
                  pl.BlockSpec((1, K), lambda i, j: (0, 0)),
                  pl.BlockSpec((K, tn), lambda i, j: (0, j))],
        out_specs=pl.BlockSpec((tm, tn), lambda i, j: (i, j)),
        compiler_params=pltpu.CompilerParams(
            dimension_semantics=("parallel", "parallel"),
            vmem_limit_bytes=VMEM_LIMIT),
    )(x2d, gamma.reshape(1, K), beta.reshape(1, K), w_bf16)


def matmul(x2d, w_bf16, *, out_dtype=_BF16, tm_pref=256, tn_pref=512):
    R, K = x2d.shape
    Nout = w_bf16.shape[1]
    tm = _pick_tile(R, tm_pref, 8)
    tn = _pick_tile(Nout, tn_pref, 128)
    return pl.pallas_call(
        _matmul_kernel,
        out_shape=jax.ShapeDtypeStruct((R, Nout), out_dtype),
        grid=(R // tm, Nout // tn),
        in_specs=[pl.BlockSpec((tm, K), lambda i, j: (i, 0)),
                  pl.BlockSpec((K, tn), lambda i, j: (0, j))],
        out_specs=pl.BlockSpec((tm, tn), lambda i, j: (i, j)),
        compiler_params=pltpu.CompilerParams(
            dimension_semantics=("parallel", "parallel"),
            vmem_limit_bytes=VMEM_LIMIT),
    )(x2d, w_bf16)


def attention_core(q, k, v, wo_r, bias, residual, scale, res_scale,
                   *, tq_pref=256, tk_pref=512):
    """q,k,v: (B,H,Nq/Nk,d); wo_r: (H,d,D) bf16; residual: (B,Nq,D) f32.
    Returns  softmax(qk^T*scale) v @ Wo + bias + res_scale*residual  as f32 (B, Nq, D)."""
    B, H, Nq, d = q.shape
    Nk = k.shape[2]
    D = wo_r.shape[-1]
    tq = _pick_tile(Nq, tq_pref, 8)
    tk = _pick_tile(Nk, tk_pref, 8)
    kern = functools.partial(_flash_attn_out_kernel, scale=scale, res_scale=res_scale)
    return pl.pallas_call(
        kern,
        out_shape=jax.ShapeDtypeStruct((B, Nq, D), jnp.float32),
        grid=(B, Nq // tq, Nk // tk),
        in_specs=[pl.BlockSpec((1, H, tq, d), lambda b, qi, ki: (b, 0, qi, 0)),
                  pl.BlockSpec((1, H, tk, d), lambda b, qi, ki: (b, 0, ki, 0)),
                  pl.BlockSpec((1, H, tk, d), lambda b, qi, ki: (b, 0, ki, 0)),
                  pl.BlockSpec((H, d, D), lambda b, qi, ki: (0, 0, 0)),
                  pl.BlockSpec((1, D), lambda b, qi, ki: (0, 0)),
                  pl.BlockSpec((1, tq, D), lambda b, qi, ki: (b, qi, 0))],
        out_specs=pl.BlockSpec((1, tq, D), lambda b, qi, ki: (b, qi, 0)),
        scratch_shapes=[pltpu.VMEM((H, tq, 1), jnp.float32),
                        pltpu.VMEM((H, tq, 1), jnp.float32),
                        pltpu.VMEM((H, tq, d), jnp.float32)],
        compiler_params=pltpu.CompilerParams(
            dimension_semantics=("parallel", "parallel", "arbitrary"),
            vmem_limit_bytes=VMEM_LIMIT),
    )(q, k, v, wo_r, bias.reshape(1, D), residual)


def feedforward_block(x, gamma, beta, ffp, *, tm_pref=256, tf_pref=512):
    """Fused  ff(norm3(x)) + x  (GEGLU FeedForward with residual)."""
    B, N, D = x.shape
    R = B * N
    F = ffp["w_val"].shape[1]
    x2 = x.reshape(R, D)
    tm = _pick_tile(R, tm_pref, 8)
    tf = _pick_tile(F, tf_pref, 128)
    out = pl.pallas_call(
        _ff_fused_kernel,
        out_shape=jax.ShapeDtypeStruct((R, D), jnp.float32),
        grid=(R // tm, F // tf),
        in_specs=[pl.BlockSpec((tm, D), lambda i, kf: (i, 0)),
                  pl.BlockSpec((1, D), lambda i, kf: (0, 0)),
                  pl.BlockSpec((1, D), lambda i, kf: (0, 0)),
                  pl.BlockSpec((D, tf), lambda i, kf: (0, kf)),
                  pl.BlockSpec((1, tf), lambda i, kf: (0, kf)),
                  pl.BlockSpec((D, tf), lambda i, kf: (0, kf)),
                  pl.BlockSpec((1, tf), lambda i, kf: (0, kf)),
                  pl.BlockSpec((tf, D), lambda i, kf: (kf, 0)),
                  pl.BlockSpec((1, D), lambda i, kf: (0, 0))],
        out_specs=pl.BlockSpec((tm, D), lambda i, kf: (i, 0)),
        scratch_shapes=[pltpu.VMEM((tm, D), _BF16),
                        pltpu.VMEM((tm, D), jnp.float32)],
        compiler_params=pltpu.CompilerParams(
            dimension_semantics=("parallel", "arbitrary"),
            vmem_limit_bytes=VMEM_LIMIT),
    )(x2, gamma.reshape(1, D), beta.reshape(1, D),
      ffp["w_val"].astype(_BF16), ffp["b_val"].reshape(1, F),
      ffp["w_gate"].astype(_BF16), ffp["b_gate"].reshape(1, F),
      ffp["w2"].astype(_BF16), ffp["b2"].reshape(1, D))
    return out.reshape(B, N, D)


def gp_predict(X_train, y_train, X_new, noise_var=1e-4):
    n, D = X_train.shape
    Bp, nf, _ = X_new.shape
    sq = jnp.sum(X_train * X_train, axis=-1)
    K = pl.pallas_call(
        _rbf_k_kernel,
        out_shape=jax.ShapeDtypeStruct((n, n), jnp.float32),
        grid=(1,),
        in_specs=[pl.BlockSpec((n, D), lambda i: (0, 0)),
                  pl.BlockSpec((n, 1), lambda i: (0, 0)),
                  pl.BlockSpec((1, n), lambda i: (0, 0))],
        out_specs=pl.BlockSpec((n, n), lambda i: (0, 0)),
    )(X_train, sq[:, None], sq[None, :])
    K = K + noise_var * jnp.eye(n, dtype=jnp.float32)
    # TODO(synk): torch.inverse (dense matrix inverse) has no clean Pallas TPU equivalent;
    #             computed with jnp.linalg.inv in plain JAX glue, as is alpha = K^-1 @ y.
    alpha = jnp.linalg.inv(K) @ y_train                               # (n, D)

    nn = jnp.sum(X_new * X_new, axis=-1)[:, None, :]                  # (Bp, 1, nf)
    return pl.pallas_call(
        _gp_predict_kernel,
        out_shape=jax.ShapeDtypeStruct((Bp, n, D), jnp.float32),
        grid=(Bp,),
        in_specs=[pl.BlockSpec((n, D), lambda b: (0, 0)),
                  pl.BlockSpec((n, 1), lambda b: (0, 0)),
                  pl.BlockSpec((1, nf, D), lambda b: (b, 0, 0)),
                  pl.BlockSpec((1, 1, nf), lambda b: (b, 0, 0)),
                  pl.BlockSpec((n, D), lambda b: (0, 0))],
        out_specs=pl.BlockSpec((1, n, D), lambda b: (b, 0, 0)),
        compiler_params=pltpu.CompilerParams(
            dimension_semantics=("parallel",),
            vmem_limit_bytes=VMEM_LIMIT),
    )(X_train, sq[:, None], X_new, nn, alpha)


# ----------------------------- module forward (glue) -----------------------------

def attention_block(x, p, norm_g, norm_b, heads, dim_head, context=None,
                    text_context_len=77, res_scale=0.9):
    """Returns attn(norm(x), context) @ Wo + bo + res_scale * x   (fully fused epilogue)."""
    B, N, D = x.shape
    x2 = x.reshape(B * N, D)

    if context is None:
        # fused LayerNorm + single QKV matmul (wq|wk|wv concatenated)
        w_qkv = jnp.concatenate([p["wq"], p["wk"], p["wv"]], axis=1).astype(_BF16)
        qkv = ln_matmul(x2, norm_g, norm_b, w_qkv).reshape(B, N, 3, heads, dim_head)
        qkv = jnp.transpose(qkv, (2, 0, 3, 1, 4))                     # (3, B, H, N, d)
        q, k, v = qkv[0], qkv[1], qkv[2]
    else:
        ctx = context[:, :text_context_len, :]
        Bc, M, Dc = ctx.shape
        q = ln_matmul(x2, norm_g, norm_b, p["wq"].astype(_BF16))
        q = jnp.transpose(q.reshape(B, N, heads, dim_head), (0, 2, 1, 3))
        w_kv = jnp.concatenate([p["wk"], p["wv"]], axis=1).astype(_BF16)
        kv = matmul(ctx.reshape(Bc * M, Dc), w_kv).reshape(B, M, 2, heads, dim_head)
        kv = jnp.transpose(kv, (2, 0, 3, 1, 4))                       # (2, B, H, M, d)
        k, v = kv[0], kv[1]

    wo_r = p["wo"].reshape(heads, dim_head, D).astype(_BF16)
    return attention_core(q, k, v, wo_r, p["bo"], x, dim_head ** (-0.5), res_scale)


def gp_update(x, noise_var=1e-4):
    """Functional version of the in-place GP smoothing step in _forward."""
    B, N, D = x.shape
    if B < N:
        nf = B
        if nf - 2 <= 1:
            return x
        mu = gp_predict(x[0], x[-1], x[1:nf - 2], noise_var)          # (nf-3, N, D)
        return x.at[1:nf - 2].set(mu)
    else:
        nf = N
        if nf - 2 <= 1:
            return x
        X_new = jnp.transpose(x[:, 1:nf - 2, :], (1, 0, 2))           # (nf-3, B, D)
        mu = gp_predict(x[:, 0, :], x[:, -1, :], X_new, noise_var)
        return x.at[:, 1:nf - 2, :].set(jnp.transpose(mu, (1, 0, 2)))


def basic_transformer_block(x, params, heads, dim_head, context=None, text_context_len=77):
    # attn1 is self-attention (disable_self_attn=False -> context=None), fused with +0.9*x
    _x = attention_block(x, params["attn1"], params["n1_g"], params["n1_b"],
                         heads, dim_head, context=None,
                         text_context_len=text_context_len, res_scale=0.9)
    x = gp_update(x)
    x = _x + 0.1 * x

    _x = attention_block(x, params["attn2"], params["n2_g"], params["n2_b"],
                         heads, dim_head, context=context,
                         text_context_len=text_context_len, res_scale=0.9)
    x = gp_update(x)
    x = _x + 0.1 * x

    # fused LN3 + GEGLU + projection + bias + residual
    return feedforward_block(x, params["n3_g"], params["n3_b"], params["ff"])


# ----------------------------- deterministic params -----------------------------

def init_params(key, dim, heads, dim_head, ff_mult=4, context_dim=None):
    inner = heads * dim_head
    inner_ff = dim * ff_mult
    cdim = dim if context_dim is None else context_dim
    ks = jax.random.split(key, 12)

    def w(k, shape, scale=0.05):
        return jax.random.normal(k, shape, jnp.float32) * scale

    return {
        "n1_g": jnp.ones((dim,), jnp.float32), "n1_b": jnp.zeros((dim,), jnp.float32),
        "n2_g": jnp.ones((dim,), jnp.float32), "n2_b": jnp.zeros((dim,), jnp.float32),
        "n3_g": jnp.ones((dim,), jnp.float32), "n3_b": jnp.zeros((dim,), jnp.float32),
        "attn1": {"wq": w(ks[0], (dim, inner)), "wk": w(ks[1], (dim, inner)),
                  "wv": w(ks[2], (dim, inner)), "wo": w(ks[3], (inner, dim)),
                  "bo": jnp.zeros((dim,), jnp.float32)},
        "attn2": {"wq": w(ks[4], (dim, inner)), "wk": w(ks[5], (cdim, inner)),
                  "wv": w(ks[6], (cdim, inner)), "wo": w(ks[7], (inner, dim)),
                  "bo": jnp.zeros((dim,), jnp.float32)},
        # GEGLU proj split into value / gate halves (value first, gate second, like torch .chunk)
        "ff": {"w_val": w(ks[8], (dim, inner_ff)), "b_val": jnp.zeros((inner_ff,), jnp.float32),
               "w_gate": w(ks[9], (dim, inner_ff)), "b_gate": jnp.zeros((inner_ff,), jnp.float32),
               "w2": w(ks[10], (inner_ff, dim)), "b2": jnp.zeros((dim,), jnp.float32)},
    }


if __name__ == "__main__":
    key = jax.random.PRNGKey(0)
    B, N, dim = 8, 16, 128         # B < N -> exercises the temporal GP branch (slice 1:B-2 non-empty)
    heads, d_head = 2, 64          # inner_dim == dim; d_head=64 keeps attention blocks lane-friendly
    ctx_len = 24                   # cross-attention context for attn2 (sliced to text_context_len)

    kx, kc, kp = jax.random.split(key, 3)
    x = jax.random.normal(kx, (B, N, dim), jnp.float32)
    context = jax.random.normal(kc, (B, ctx_len, dim), jnp.float32)
    params = init_params(kp, dim, heads, d_head)

    fwd = jax.jit(functools.partial(basic_transformer_block, heads=heads, dim_head=d_head))
    out = fwd(x, params, context=context)
    jax.block_until_ready(out)
    assert out.shape == (B, N, dim) and out.dtype == jnp.float32
    assert bool(jnp.all(jnp.isfinite(out)))
    print("KERNEL_OK")
</pallas_src>

<mosaic_0001>
module attributes {stable_mosaic.version = 11 : i64} {
  func.func @_ln_matmul_kernel(%arg0: i32, %arg1: i32, %arg2: memref<128x128xf32, #tpu.memory_space<vmem>>, %arg3: memref<1x128xf32, #tpu.memory_space<vmem>>, %arg4: memref<1x128xf32, #tpu.memory_space<vmem>>, %arg5: memref<128x384xbf16, #tpu.memory_space<vmem>>, %arg6: memref<128x384xbf16, #tpu.memory_space<vmem>>) attributes {dimension_semantics = [#tpu.dimension_semantics<parallel>, #tpu.dimension_semantics<parallel>], iteration_bounds = array<i64: 1, 1>, scalar_prefetch = 0 : i64, scratch_operands = 0 : i64, tpu.core_type = #tpu.core_type<tc>, window_params = [{transform_indices = @transform_0, window_bounds = array<i64: 128, 128>}, {pipeline_mode = #tpu.pipeline_mode<synchronous>, transform_indices = @transform_1, window_bounds = array<i64: 1, 128>}, {pipeline_mode = #tpu.pipeline_mode<synchronous>, transform_indices = @transform_2, window_bounds = array<i64: 1, 128>}, {transform_indices = @transform_3, window_bounds = array<i64: 128, 384>}, {transform_indices = @transform_4, window_bounds = array<i64: 128, 384>}]} {
    %c0 = arith.constant 0 : index
    %c0_0 = arith.constant 0 : index
    %0 = vector.load %arg2[%c0, %c0_0] : memref<128x128xf32, #tpu.memory_space<vmem>>, vector<128x128xf32>
    %cst = arith.constant dense<0.000000e+00> : vector<128xf32>
    %1 = vector.multi_reduction <add>, %0, %cst [1] : vector<128x128xf32> to vector<128xf32>
    %2 = vector.shape_cast %1 : vector<128xf32> to vector<128x1xf32>
    %cst_1 = arith.constant 1.280000e+02 : f32
    %3 = vector.broadcast %cst_1 : f32 to vector<128x1xf32>
    %4 = arith.divf %2, %3 : vector<128x1xf32>
    %5 = vector.broadcast %4 : vector<128x1xf32> to vector<128x128xf32>
    %6 = arith.subf %0, %5 : vector<128x128xf32>
    %7 = arith.mulf %6, %6 : vector<128x128xf32>
    %cst_2 = arith.constant dense<0.000000e+00> : vector<128xf32>
    %8 = vector.multi_reduction <add>, %7, %cst_2 [1] : vector<128x128xf32> to vector<128xf32>
    %9 = vector.shape_cast %8 : vector<128xf32> to vector<128x1xf32>
    %cst_3 = arith.constant 1.280000e+02 : f32
    %10 = vector.broadcast %cst_3 : f32 to vector<128x1xf32>
    %11 = arith.divf %9, %10 : vector<128x1xf32>
    %cst_4 = arith.constant 9.99999974E-6 : f32
    %12 = vector.broadcast %cst_4 : f32 to vector<128x1xf32>
    %13 = arith.addf %11, %12 : vector<128x1xf32>
    %14 = math.rsqrt %13 : vector<128x1xf32>
    %15 = vector.broadcast %14 : vector<128x1xf32> to vector<128x128xf32>
    %16 = arith.mulf %6, %15 : vector<128x128xf32>
    %c0_5 = arith.constant 0 : index
    %c0_6 = arith.constant 0 : index
    %17 = vector.load %arg3[%c0_5, %c0_6] : memref<1x128xf32, #tpu.memory_space<vmem>>, vector<1x128xf32>
    %18 = vector.broadcast %17 : vector<1x128xf32> to vector<128x128xf32>
    %19 = arith.mulf %16, %18 : vector<128x128xf32>
    %c0_7 = arith.constant 0 : index
    %c0_8 = arith.constant 0 : index
    %20 = vector.load %arg4[%c0_7, %c0_8] : memref<1x128xf32, #tpu.memory_space<vmem>>, vector<1x128xf32>
    %21 = vector.broadcast %20 : vector<1x128xf32> to vector<128x128xf32>
    %22 = arith.addf %19, %21 : vector<128x128xf32>
    %23 = arith.truncf %22 : vector<128x128xf32> to vector<128x128xbf16>
    %c0_9 = arith.constant 0 : index
    %c0_10 = arith.constant 0 : index
    %24 = vector.load %arg5[%c0_9, %c0_10] : memref<128x384xbf16, #tpu.memory_space<vmem>>, vector<128x384xbf16>
    %cst_11 = arith.constant dense<0.000000e+00> : vector<128x384xf32>
    %25 = tpu.matmul %23, %24, %cst_11 {dimension_numbers = #tpu.dot_dimension_numbers<[1], [0], [0], [1], [0, 0, 1, 1], [], []>} : vector<128x128xbf16>, vector<128x384xbf16>, vector<128x384xf32> -> vector<128x384xf32>
    %26 = arith.truncf %25 : vector<128x384xf32> to vector<128x384xbf16>
    %c0_12 = arith.constant 0 : index
    %c0_13 = arith.constant 0 : index
    %27 = vector.load %arg6[%c0_12, %c0_13] : memref<128x384xbf16, #tpu.memory_space<vmem>>, vector<128x384xbf16>
    tpu.vector_store %arg6[%c0_12, %c0_13], %26 {strides = array<i32>} : memref<128x384xbf16, #tpu.memory_space<vmem>>, vector<128x384xbf16>,
    return
  }
  func.func @transform_0(%arg0: i32, %arg1: i32) -> (i32, i32) {
    %c0_i32 = arith.constant 0 : i32
    %c0_i32_0 = arith.constant 0 : i32
    return %arg0, %c0_i32 : i32, i32
  }
  func.func @transform_1(%arg0: i32, %arg1: i32) -> (i32, i32) {
    %c0_i32 = arith.constant 0 : i32
    %c0_i32_0 = arith.constant 0 : i32
    %c0_i32_1 = arith.constant 0 : i32
    return %c0_i32, %c0_i32_0 : i32, i32
  }
  func.func @transform_2(%arg0: i32, %arg1: i32) -> (i32, i32) {
    %c0_i32 = arith.constant 0 : i32
    %c0_i32_0 = arith.constant 0 : i32
    %c0_i32_1 = arith.constant 0 : i32
    return %c0_i32, %c0_i32_0 : i32, i32
  }
  func.func @transform_3(%arg0: i32, %arg1: i32) -> (i32, i32) {
    %c0_i32 = arith.constant 0 : i32
    %c0_i32_0 = arith.constant 0 : i32
    return %c0_i32, %arg1 : i32, i32
  }
  func.func @transform_4(%arg0: i32, %arg1: i32) -> (i32, i32) {
    %c0_i32 = arith.constant 0 : i32
    return %arg0, %arg1 : i32, i32
  }
}

module attributes {stable_mosaic.version = 11 : i64} {
  func.func @_flash_attn_out_kernel(%arg0: i32, %arg1: i32, %arg2: i32, %arg3: memref<1x2x16x64xbf16, #tpu.memory_space<vmem>>, %arg4: memref<1x2x16x64xbf16, #tpu.memory_space<vmem>>, %arg5: memref<1x2x16x64xbf16, #tpu.memory_space<vmem>>, %arg6: memref<2x64x128xbf16, #tpu.memory_space<vmem>>, %arg7: memref<1x128xf32, #tpu.memory_space<vmem>>, %arg8: memref<1x16x128xf32, #tpu.memory_space<vmem>>, %arg9: memref<1x16x128xf32, #tpu.memory_space<vmem>>, %arg10: memref<2x16x1xf32, #tpu.memory_space<vmem>>, %arg11: memref<2x16x1xf32, #tpu.memory_space<vmem>>, %arg12: memref<2x16x64xf32, #tpu.memory_space<vmem>>) attributes {dimension_semantics = [#tpu.dimension_semantics<parallel>, #tpu.dimension_semantics<parallel>, #tpu.dimension_semantics<arbitrary>], iteration_bounds = array<i64: 8, 1, 1>, scalar_prefetch = 0 : i64, scratch_operands = 3 : i64, tpu.core_type = #tpu.core_type<tc>, window_params = [{transform_indices = @transform_0, window_bounds = array<i64: 1, 2, 16, 64>}, {transform_indices = @transform_1, window_bounds = array<i64: 1, 2, 16, 64>}, {transform_indices = @transform_2, window_bounds = array<i64: 1, 2, 16, 64>}, {pipeline_mode = #tpu.pipeline_mode<synchronous>, transform_indices = @transform_3, window_bounds = array<i64: 2, 64, 128>}, {pipeline_mode = #tpu.pipeline_mode<synchronous>, transform_indices = @transform_4, window_bounds = array<i64: 1, 128>}, {transform_indices = @transform_5, window_bounds = array<i64: 1, 16, 128>}, {transform_indices = @transform_6, window_bounds = array<i64: 1, 16, 128>}]} {
    %c0_i32 = arith.constant 0 : i32
    %0 = arith.cmpi eq, %arg2, %c0_i32 : i32
    %1 = arith.extui %0 : i1 to i32
    %c0_i32_0 = arith.constant 0 : i32
    %2 = arith.cmpi ne, %1, %c0_i32_0 : i32
    scf.if %2 {
      %cst_36 = arith.constant 0xFF800000 : f32
      %38 = vector.broadcast %cst_36 : f32 to vector<2x16x1xf32>
      %c0_37 = arith.constant 0 : index
      %c0_38 = arith.constant 0 : index
      %c0_39 = arith.constant 0 : index
      %39 = vector.load %arg10[%c0_37, %c0_38, %c0_39] : memref<2x16x1xf32, #tpu.memory_space<vmem>>, vector<2x16x1xf32>
      tpu.vector_store %arg10[%c0_37, %c0_38, %c0_39], %38 {strides = array<i32>} : memref<2x16x1xf32, #tpu.memory_space<vmem>>, vector<2x16x1xf32>,
      %cst_40 = arith.constant 0.000000e+00 : f32
      %40 = vector.broadcast %cst_40 : f32 to vector<2x16x1xf32>
      %c0_41 = arith.constant 0 : index
      %c0_42 = arith.constant 0 : index
      %c0_43 = arith.constant 0 : index
      %41 = vector.load %arg11[%c0_41, %c0_42, %c0_43] : memref<2x16x1xf32, #tpu.memory_space<vmem>>, vector<2x16x1xf32>
      tpu.vector_store %arg11[%c0_41, %c0_42, %c0_43], %40 {strides = array<i32>} : memref<2x16x1xf32, #tpu.memory_space<vmem>>, vector<2x16x1xf32>,
      %cst_44 = arith.constant 0.000000e+00 : f32
      %42 = vector.broadcast %cst_44 : f32 to vector<2x16x64xf32>
      %c0_45 = arith.constant 0 : index
      %c0_46 = arith.constant 0 : index
      %c0_47 = arith.constant 0 : index
      %43 = vector.load %arg12[%c0_45, %c0_46, %c0_47] : memref<2x16x64xf32, #tpu.memory_space<vmem>>, vector<2x16x64xf32>
      tpu.vector_store %arg12[%c0_45, %c0_46, %c0_47], %42 {strides = array<i32>} : memref<2x16x64xf32, #tpu.memory_space<vmem>>, vector<2x16x64xf32>,
    } else {
    }
    %c0 = arith.constant 0 : index
    %c0_1 = arith.constant 0 : index
    %c0_2 = arith.constant 0 : index
    %c0_3 = arith.constant 0 : index
    %3 = vector.load %arg3[%c0, %c0_1, %c0_2, %c0_3] : memref<1x2x16x64xbf16, #tpu.memory_space<vmem>>, vector<1x2x16x64xbf16>
    %4 = vector.shape_cast %3 : vector<1x2x16x64xbf16> to vector<2x16x64xbf16>
    %c0_4 = arith.constant 0 : index
    %c0_5 = arith.constant 0 : index
    %c0_6 = arith.constant 0 : index
    %c0_7 = arith.constant 0 : index
    %5 = vector.load %arg4[%c0_4, %c0_5, %c0_6, %c0_7] : memref<1x2x16x64xbf16, #tpu.memory_space<vmem>>, vector<1x2x16x64xbf16>
    %6 = vector.shape_cast %5 : vector<1x2x16x64xbf16> to vector<2x16x64xbf16>
    %c0_8 = arith.constant 0 : index
    %c0_9 = arith.constant 0 : index
    %c0_10 = arith.constant 0 : index
    %c0_11 = arith.constant 0 : index
    %7 = vector.load %arg5[%c0_8, %c0_9, %c0_10, %c0_11] : memref<1x2x16x64xbf16, #tpu.memory_space<vmem>>, vector<1x2x16x64xbf16>
    %8 = vector.shape_cast %7 : vector<1x2x16x64xbf16> to vector<2x16x64xbf16>
    "tpu.trace_start"() <{level = 10 : i32, message = "hqd,hkd->hqk"}> : () -> ()
    %cst = arith.constant dense<0.000000e+00> : vector<2x16x16xf32>
    %9 = tpu.matmul %4, %6, %cst {dimension_numbers = #tpu.dot_dimension_numbers<[2], [2], [1], [1], [0, 0, 0, 1, 1, 1], [0], [0]>} : vector<2x16x64xbf16>, vector<2x16x64xbf16>, vector<2x16x16xf32> -> vector<2x16x16xf32>
    "tpu.trace_stop"() : () -> ()
    %cst_12 = arith.constant 1.250000e-01 : f32
    %10 = vector.broadcast %cst_12 : f32 to vector<2x16x16xf32>
    %11 = arith.mulf %9, %10 : vector<2x16x16xf32>
    %c0_13 = arith.constant 0 : index
    %c0_14 = arith.constant 0 : index
    %c0_15 = arith.constant 0 : index
    %12 = vector.load %arg10[%c0_13, %c0_14, %c0_15] : memref<2x16x1xf32, #tpu.memory_space<vmem>>, vector<2x16x1xf32>
    %cst_16 = arith.constant dense<0xFF800000> : vector<2x16xf32>
    %13 = vector.multi_reduction <maximumf>, %11, %cst_16 [2] : vector<2x16x16xf32> to vector<2x16xf32>
    %14 = vector.shape_cast %13 : vector<2x16xf32> to vector<2x16x1xf32>
    %15 = arith.maximumf %12, %14 : vector<2x16x1xf32>
    %16 = arith.subf %12, %15 : vector<2x16x1xf32>
    %17 = math.exp %16 : vector<2x16x1xf32>
    %18 = vector.broadcast %15 : vector<2x16x1xf32> to vector<2x16x16xf32>
    %19 = arith.subf %11, %18 : vector<2x16x16xf32>
    %20 = math.exp %19 : vector<2x16x16xf32>
    %c0_17 = arith.constant 0 : index
    %c0_18 = arith.constant 0 : index
    %c0_19 = arith.constant 0 : index
    %21 = vector.load %arg11[%c0_17, %c0_18, %c0_19] : memref<2x16x1xf32, #tpu.memory_space<vmem>>, vector<2x16x1xf32>
    %22 = arith.mulf %17, %21 : vector<2x16x1xf32>
    %cst_20 = arith.constant dense<0.000000e+00> : vector<2x16xf32>
    %23 = vector.multi_reduction <add>, %20, %cst_20 [2] : vector<2x16x16xf32> to vector<2x16xf32>
    %24 = vector.shape_cast %23 : vector<2x16xf32> to vector<2x16x1xf32>
    %25 = arith.addf %22, %24 : vector<2x16x1xf32>
    %c0_21 = arith.constant 0 : index
    %c0_22 = arith.constant 0 : index
    %c0_23 = arith.constant 0 : index
    %26 = vector.load %arg11[%c0_21, %c0_22, %c0_23] : memref<2x16x1xf32, #tpu.memory_space<vmem>>, vector<2x16x1xf32>
    tpu.vector_store %arg11[%c0_21, %c0_22, %c0_23], %25 {strides = array<i32>} : memref<2x16x1xf32, #tpu.memory_space<vmem>>, vector<2x16x1xf32>,
    %c0_24 = arith.constant 0 : index
    %c0_25 = arith.constant 0 : index
    %c0_26 = arith.constant 0 : index
    %27 = vector.load %arg12[%c0_24, %c0_25, %c0_26] : memref<2x16x64xf32, #tpu.memory_space<vmem>>, vector<2x16x64xf32>
    %28 = vector.broadcast %17 : vector<2x16x1xf32> to vector<2x16x64xf32>
    %29 = arith.mulf %28, %27 : vector<2x16x64xf32>
    %30 = arith.truncf %20 : vector<2x16x16xf32> to vector<2x16x16xbf16>
    "tpu.trace_start"() <{level = 10 : i32, message = "hqk,hkd->hqd"}> : () -> ()
    %cst_27 = arith.constant dense<0.000000e+00> : vector<2x16x64xf32>
    %31 = tpu.matmul %30, %8, %cst_27 {dimension_numbers = #tpu.dot_dimension_numbers<[2], [1], [1], [2], [0, 0, 0, 1, 1, 2], [0], [0]>} : vector<2x16x16xbf16>, vector<2x16x64xbf16>, vector<2x16x64xf32> -> vector<2x16x64xf32>
    "tpu.trace_stop"() : () -> ()
    %32 = arith.addf %29, %31 : vector<2x16x64xf32>
    %c0_28 = arith.constant 0 : index
    %c0_29 = arith.constant 0 : index
    %c0_30 = arith.constant 0 : index
    %33 = vector.load %arg12[%c0_28, %c0_29, %c0_30] : memref<2x16x64xf32, #tpu.memory_space<vmem>>, vector<2x16x64xf32>
    tpu.vector_store %arg12[%c0_28, %c0_29, %c0_30], %32 {strides = array<i32>} : memref<2x16x64xf32, #tpu.memory_space<vmem>>, vector<2x16x64xf32>,
    %c0_31 = arith.constant 0 : index
    %c0_32 = arith.constant 0 : index
    %c0_33 = arith.constant 0 : index
    %34 = vector.load %arg10[%c0_31, %c0_32, %c0_33] : memref<2x16x1xf32, #tpu.memory_space<vmem>>, vector<2x16x1xf32>
    tpu.vector_store %arg10[%c0_31, %c0_32, %c0_33], %15 {strides = array<i32>} : memref<2x16x1xf32, #tpu.memory_space<vmem>>, vector<2x16x1xf32>,
    %c0_i32_34 = arith.constant 0 : i32
    %35 = arith.cmpi eq, %arg2, %c0_i32_34 : i32
    %36 = arith.extui %35 : i1 to i32
    %c0_i32_35 = arith.constant 0 : i32
    %37 = arith.cmpi ne, %36, %c0_i32_35 : i32
    scf.if %37 {
      %c0_36 = arith.constant 0 : index
      %c0_37 = arith.constant 0 : index
      %c0_38 = arith.constant 0 : index
      %38 = vector.load %arg11[%c0_36, %c0_37, %c0_38] : memref<2x16x1xf32, #tpu.memory_space<vmem>>, vector<2x16x1xf32>
      %39 = tpu.reciprocal %38 {approx = true} : vector<2x16x1xf32> -> vector<2x16x1xf32>
      %c0_39 = arith.constant 0 : index
      %c0_40 = arith.constant 0 : index
      %c0_41 = arith.constant 0 : index
      %40 = vector.load %arg12[%c0_39, %c0_40, %c0_41] : memref<2x16x64xf32, #tpu.memory_space<vmem>>, vector<2x16x64xf32>
      %41 = vector.broadcast %39 : vector<2x16x1xf32> to vector<2x16x64xf32>
      %42 = arith.mulf %40, %41 : vector<2x16x64xf32>
      %43 = arith.truncf %42 : vector<2x16x64xf32> to vector<2x16x64xbf16>
      %c0_42 = arith.constant 0 : index
      %c0_43 = arith.constant 0 : index
      %c0_44 = arith.constant 0 : index
      %44 = vector.load %arg6[%c0_42, %c0_43, %c0_44] : memref<2x64x128xbf16, #tpu.memory_space<vmem>>, vector<2x64x128xbf16>
      %45 = vector.extract_strided_slice %43 {offsets = [0, 0, 0], sizes = [1, 16, 64], strides = [1, 1, 1]} : vector<2x16x64xbf16> to vector<1x16x64xbf16>
      %46 = vector.shape_cast %45 : vector<1x16x64xbf16> to vector<16x64xbf16>
      %47 = vector.extract_strided_slice %44 {offsets = [0, 0, 0], sizes = [1, 64, 128], strides = [1, 1, 1]} : vector<2x64x128xbf16> to vector<1x64x128xbf16>
      %48 = vector.shape_cast %47 : vector<1x64x128xbf16> to vector<64x128xbf16>
      %cst_45 = arith.constant dense<0.000000e+00> : vector<16x128xf32>
      %49 = tpu.matmul %46, %48, %cst_45 {dimension_numbers = #tpu.dot_dimension_numbers<[1], [0], [0], [1], [0, 0, 1, 1], [], []>} : vector<16x64xbf16>, vector<64x128xbf16>, vector<16x128xf32> -> vector<16x128xf32>
      %50 = vector.extract_strided_slice %43 {offsets = [1, 0, 0], sizes = [1, 16, 64], strides = [1, 1, 1]} : vector<2x16x64xbf16> to vector<1x16x64xbf16>
      %51 = vector.shape_cast %50 : vector<1x16x64xbf16> to vector<16x64xbf16>
      %52 = vector.extract_strided_slice %44 {offsets = [1, 0, 0], sizes = [1, 64, 128], strides = [1, 1, 1]} : vector<2x64x128xbf16> to vector<1x64x128xbf16>
      %53 = vector.shape_cast %52 : vector<1x64x128xbf16> to vector<64x128xbf16>
      %cst_46 = arith.constant dense<0.000000e+00> : vector<16x128xf32>
      %54 = tpu.matmul %51, %53, %cst_46 {dimension_numbers = #tpu.dot_dimension_numbers<[1], [0], [0], [1], [0, 0, 1, 1], [], []>} : vector<16x64xbf16>, vector<64x128xbf16>, vector<16x128xf32> -> vector<16x128xf32>
      %55 = arith.addf %49, %54 : vector<16x128xf32>
      %c0_47 = arith.constant 0 : index
      %c0_48 = arith.constant 0 : index
      %56 = vector.load %arg7[%c0_47, %c0_48] : memref<1x128xf32, #tpu.memory_space<vmem>>, vector<1x128xf32>
      %57 = vector.broadcast %56 : vector<1x128xf32> to vector<16x128xf32>
      %58 = arith.addf %55, %57 : vector<16x128xf32>
      %c0_49 = arith.constant 0 : index
      %c0_50 = arith.constant 0 : index
      %c0_51 = arith.constant 0 : index
      %59 = vector.load %arg8[%c0_49, %c0_50, %c0_51] : memref<1x16x128xf32, #tpu.memory_space<vmem>>, vector<1x16x128xf32>
      %60 = vector.shape_cast %59 : vector<1x16x128xf32> to vector<16x128xf32>
      %cst_52 = arith.constant 0.899999976 : f32
      %61 = vector.broadcast %cst_52 : f32 to vector<16x128xf32>
      %62 = arith.mulf %61, %60 : vector<16x128xf32>
      %63 = arith.addf %58, %62 : vector<16x128xf32>
      %c0_53 = arith.constant 0 : index
      %c0_54 = arith.constant 0 : index
      %c0_55 = arith.constant 0 : index
      %64 = vector.load %arg9[%c0_53, %c0_54, %c0_55] : memref<1x16x128xf32, #tpu.memory_space<vmem>>, vector<1x16x128xf32>
      %65 = vector.shape_cast %64 : vector<1x16x128xf32> to vector<16x128xf32>
      %66 = vector.shape_cast %63 : vector<16x128xf32> to vector<1x16x128xf32>
      tpu.vector_store %arg9[%c0_53, %c0_54, %c0_55], %66 {strides = array<i32>} : memref<1x16x128xf32, #tpu.memory_space<vmem>>, vector<1x16x128xf32>,
    } else {
    }
    return
  }
  func.func @transform_0(%arg0: i32, %arg1: i32, %arg2: i32) -> (i32, i32, i32, i32) {
    %c0_i32 = arith.constant 0 : i32
    %c0_i32_0 = arith.constant 0 : i32
    %c0_i32_1 = arith.constant 0 : i32
    return %arg0, %c0_i32, %arg1, %c0_i32_0 : i32, i32, i32, i32
  }
  func.func @transform_1(%arg0: i32, %arg1: i32, %arg2: i32) -> (i32, i32, i32, i32) {
    %c0_i32 = arith.constant 0 : i32
    %c0_i32_0 = arith.constant 0 : i32
    %c0_i32_1 = arith.constant 0 : i32
    return %arg0, %c0_i32, %arg2, %c0_i32_0 : i32, i32, i32, i32
  }
  func.func @transform_2(%arg0: i32, %arg1: i32, %arg2: i32) -> (i32, i32, i32, i32) {
    %c0_i32 = arith.constant 0 : i32
    %c0_i32_0 = arith.constant 0 : i32
    %c0_i32_1 = arith.constant 0 : i32
    return %arg0, %c0_i32, %arg2, %c0_i32_0 : i32, i32, i32, i32
  }
  func.func @transform_3(%arg0: i32, %arg1: i32, %arg2: i32) -> (i32, i32, i32) {
    %c0_i32 = arith.constant 0 : i32
    %c0_i32_0 = arith.constant 0 : i32
    %c0_i32_1 = arith.constant 0 : i32
    %c0_i32_2 = arith.constant 0 : i32
    return %c0_i32, %c0_i32_0, %c0_i32_1 : i32, i32, i32
  }
  func.func @transform_4(%arg0: i32, %arg1: i32, %arg2: i32) -> (i32, i32) {
    %c0_i32 = arith.constant 0 : i32
    %c0_i32_0 = arith.constant 0 : i32
    %c0_i32_1 = arith.constant 0 : i32
    return %c0_i32, %c0_i32_0 : i32, i32
  }
  func.func @transform_5(%arg0: i32, %arg1: i32, %arg2: i32) -> (i32, i32, i32) {
    %c0_i32 = arith.constant 0 : i32
    %c0_i32_0 = arith.constant 0 : i32
    return %arg0, %arg1, %c0_i32 : i32, i32, i32
  }
  func.func @transform_6(%arg0: i32, %arg1: i32, %arg2: i32) -> (i32, i32, i32) {
    %c0_i32 = arith.constant 0 : i32
    %c0_i32_0 = arith.constant 0 : i32
    return %arg0, %arg1, %c0_i32 : i32, i32, i32
  }
}

module attributes {stable_mosaic.version = 11 : i64} {
  func.func @_rbf_k_kernel(%arg0: i32, %arg1: memref<16x128xf32, #tpu.memory_space<vmem>>, %arg2: memref<16x1xf32, #tpu.memory_space<vmem>>, %arg3: memref<1x16xf32, #tpu.memory_space<vmem>>, %arg4: memref<16x16xf32, #tpu.memory_space<vmem>>) attributes {dimension_semantics = [#tpu.dimension_semantics<arbitrary>], iteration_bounds = array<i64: 1>, scalar_prefetch = 0 : i64, scratch_operands = 0 : i64, tpu.core_type = #tpu.core_type<tc>, window_params = [{pipeline_mode = #tpu.pipeline_mode<synchronous>, transform_indices = @transform_0, window_bounds = array<i64: 16, 128>}, {pipeline_mode = #tpu.pipeline_mode<synchronous>, transform_indices = @transform_1, window_bounds = array<i64: 16, 1>}, {pipeline_mode = #tpu.pipeline_mode<synchronous>, transform_indices = @transform_2, window_bounds = array<i64: 1, 16>}, {pipeline_mode = #tpu.pipeline_mode<synchronous>, transform_indices = @transform_3, window_bounds = array<i64: 16, 16>}]} {
    %c0 = arith.constant 0 : index
    %c0_0 = arith.constant 0 : index
    %0 = vector.load %arg1[%c0, %c0_0] : memref<16x128xf32, #tpu.memory_space<vmem>>, vector<16x128xf32>
    %cst = arith.constant dense<0.000000e+00> : vector<16x16xf32>
    %1 = tpu.matmul %0, %0, %cst {dimension_numbers = #tpu.dot_dimension_numbers<[1], [1], [0], [0], [0, 0, 1, 0], [], []>} : vector<16x128xf32>, vector<16x128xf32>, vector<16x16xf32> -> vector<16x16xf32>
    %c0_1 = arith.constant 0 : index
    %c0_2 = arith.constant 0 : index
    %2 = vector.load %arg2[%c0_1, %c0_2] : memref<16x1xf32, #tpu.memory_space<vmem>>, vector<16x1xf32>
    %c0_3 = arith.constant 0 : index
    %c0_4 = arith.constant 0 : index
    %3 = vector.load %arg3[%c0_3, %c0_4] : memref<1x16xf32, #tpu.memory_space<vmem>>, vector<1x16xf32>
    %4 = vector.broadcast %2 : vector<16x1xf32> to vector<16x16xf32>
    %5 = vector.broadcast %3 : vector<1x16xf32> to vector<16x16xf32>
    %6 = arith.addf %4, %5 : vector<16x16xf32>
    %cst_5 = arith.constant 2.000000e+00 : f32
    %7 = vector.broadcast %cst_5 : f32 to vector<16x16xf32>
    %8 = arith.mulf %7, %1 : vector<16x16xf32>
    %9 = arith.subf %6, %8 : vector<16x16xf32>
    %cst_6 = arith.constant 0.000000e+00 : f32
    %10 = vector.broadcast %cst_6 : f32 to vector<16x16xf32>
    %11 = arith.maximumf %9, %10 : vector<16x16xf32>
    %cst_7 = arith.constant -5.000000e-01 : f32
    %12 = vector.broadcast %cst_7 : f32 to vector<16x16xf32>
    %13 = arith.mulf %12, %11 : vector<16x16xf32>
    %14 = math.exp %13 : vector<16x16xf32>
    %c0_8 = arith.constant 0 : index
    %c0_9 = arith.constant 0 : index
    %15 = vector.load %arg4[%c0_8, %c0_9] : memref<16x16xf32, #tpu.memory_space<vmem>>, vector<16x16xf32>
    tpu.vector_store %arg4[%c0_8, %c0_9], %14 {strides = array<i32>} : memref<16x16xf32, #tpu.memory_space<vmem>>, vector<16x16xf32>,
    return
  }
  func.func @transform_0(%arg0: i32) -> (i32, i32) {
    %c0_i32 = arith.constant 0 : i32
    %c0_i32_0 = arith.constant 0 : i32
    %c0_i32_1 = arith.constant 0 : i32
    return %c0_i32, %c0_i32_0 : i32, i32
  }
  func.func @transform_1(%arg0: i32) -> (i32, i32) {
    %c0_i32 = arith.constant 0 : i32
    %c0_i32_0 = arith.constant 0 : i32
    %c0_i32_1 = arith.constant 0 : i32
    return %c0_i32, %c0_i32_0 : i32, i32
  }
  func.func @transform_2(%arg0: i32) -> (i32, i32) {
    %c0_i32 = arith.constant 0 : i32
    %c0_i32_0 = arith.constant 0 : i32
    %c0_i32_1 = arith.constant 0 : i32
    return %c0_i32, %c0_i32_0 : i32, i32
  }
  func.func @transform_3(%arg0: i32) -> (i32, i32) {
    %c0_i32 = arith.constant 0 : i32
    %c0_i32_0 = arith.constant 0 : i32
    %c0_i32_1 = arith.constant 0 : i32
    return %c0_i32, %c0_i32_0 : i32, i32
  }
}

module attributes {stable_mosaic.version = 11 : i64} {
  func.func @_gp_predict_kernel(%arg0: i32, %arg1: memref<16x128xf32, #tpu.memory_space<vmem>>, %arg2: memref<16x1xf32, #tpu.memory_space<vmem>>, %arg3: memref<1x16x128xf32, #tpu.memory_space<vmem>>, %arg4: memref<1x1x16xf32, #tpu.memory_space<vmem>>, %arg5: memref<16x128xf32, #tpu.memory_space<vmem>>, %arg6: memref<1x16x128xf32, #tpu.memory_space<vmem>>) attributes {dimension_semantics = [#tpu.dimension_semantics<parallel>], iteration_bounds = array<i64: 5>, scalar_prefetch = 0 : i64, scratch_operands = 0 : i64, tpu.core_type = #tpu.core_type<tc>, window_params = [{pipeline_mode = #tpu.pipeline_mode<synchronous>, transform_indices = @transform_0, window_bounds = array<i64: 16, 128>}, {pipeline_mode = #tpu.pipeline_mode<synchronous>, transform_indices = @transform_1, window_bounds = array<i64: 16, 1>}, {transform_indices = @transform_2, window_bounds = array<i64: 1, 16, 128>}, {transform_indices = @transform_3, window_bounds = array<i64: 1, 1, 16>}, {pipeline_mode = #tpu.pipeline_mode<synchronous>, transform_indices = @transform_4, window_bounds = array<i64: 16, 128>}, {transform_indices = @transform_5, window_bounds = array<i64: 1, 16, 128>}]} {
    %c0 = arith.constant 0 : index
    %c0_0 = arith.constant 0 : index
    %0 = vector.load %arg1[%c0, %c0_0] : memref<16x128xf32, #tpu.memory_space<vmem>>, vector<16x128xf32>
    %c0_1 = arith.constant 0 : index
    %c0_2 = arith.constant 0 : index
    %c0_3 = arith.constant 0 : index
    %1 = vector.load %arg3[%c0_1, %c0_2, %c0_3] : memref<1x16x128xf32, #tpu.memory_space<vmem>>, vector<1x16x128xf32>
    %2 = vector.shape_cast %1 : vector<1x16x128xf32> to vector<16x128xf32>
    %cst = arith.constant dense<0.000000e+00> : vector<16x16xf32>
    %3 = tpu.matmul %0, %2, %cst {dimension_numbers = #tpu.dot_dimension_numbers<[1], [1], [0], [0], [0, 0, 1, 0], [], []>} : vector<16x128xf32>, vector<16x128xf32>, vector<16x16xf32> -> vector<16x16xf32>
    %c0_4 = arith.constant 0 : index
    %c0_5 = arith.constant 0 : index
    %4 = vector.load %arg2[%c0_4, %c0_5] : memref<16x1xf32, #tpu.memory_space<vmem>>, vector<16x1xf32>
    %c0_6 = arith.constant 0 : index
    %c0_7 = arith.constant 0 : index
    %c0_8 = arith.constant 0 : index
    %5 = vector.load %arg4[%c0_6, %c0_7, %c0_8] : memref<1x1x16xf32, #tpu.memory_space<vmem>>, vector<1x1x16xf32>
    %6 = vector.shape_cast %5 : vector<1x1x16xf32> to vector<1x16xf32>
    %7 = vector.broadcast %4 : vector<16x1xf32> to vector<16x16xf32>
    %8 = vector.broadcast %6 : vector<1x16xf32> to vector<16x16xf32>
    %9 = arith.addf %7, %8 : vector<16x16xf32>
    %cst_9 = arith.constant 2.000000e+00 : f32
    %10 = vector.broadcast %cst_9 : f32 to vector<16x16xf32>
    %11 = arith.mulf %10, %3 : vector<16x16xf32>
    %12 = arith.subf %9, %11 : vector<16x16xf32>
    %cst_10 = arith.constant 0.000000e+00 : f32
    %13 = vector.broadcast %cst_10 : f32 to vector<16x16xf32>
    %14 = arith.maximumf %12, %13 : vector<16x16xf32>
    %cst_11 = arith.constant -5.000000e-01 : f32
    %15 = vector.broadcast %cst_11 : f32 to vector<16x16xf32>
    %16 = arith.mulf %15, %14 : vector<16x16xf32>
    %17 = math.exp %16 : vector<16x16xf32>
    %c0_12 = arith.constant 0 : index
    %c0_13 = arith.constant 0 : index
    %18 = vector.load %arg5[%c0_12, %c0_13] : memref<16x128xf32, #tpu.memory_space<vmem>>, vector<16x128xf32>
    %cst_14 = arith.constant dense<0.000000e+00> : vector<16x128xf32>
    %19 = tpu.matmul %17, %18, %cst_14 {dimension_numbers = #tpu.dot_dimension_numbers<[1], [0], [0], [1], [0, 0, 1, 1], [], []>} : vector<16x16xf32>, vector<16x128xf32>, vector<16x128xf32> -> vector<16x128xf32>
    %c0_15 = arith.constant 0 : index
    %c0_16 = arith.constant 0 : index
    %c0_17 = arith.constant 0 : index
    %20 = vector.load %arg6[%c0_15, %c0_16, %c0_17] : memref<1x16x128xf32, #tpu.memory_space<vmem>>, vector<1x16x128xf32>
    %21 = vector.shape_cast %20 : vector<1x16x128xf32> to vector<16x128xf32>
    %22 = vector.shape_cast %19 : vector<16x128xf32> to vector<1x16x128xf32>
    tpu.vector_store %arg6[%c0_15, %c0_16, %c0_17], %22 {strides = array<i32>} : memref<1x16x128xf32, #tpu.memory_space<vmem>>, vector<1x16x128xf32>,
    return
  }
  func.func @transform_0(%arg0: i32) -> (i32, i32) {
    %c0_i32 = arith.constant 0 : i32
    %c0_i32_0 = arith.constant 0 : i32
    %c0_i32_1 = arith.constant 0 : i32
    return %c0_i32, %c0_i32_0 : i32, i32
  }
  func.func @transform_1(%arg0: i32) -> (i32, i32) {
    %c0_i32 = arith.constant 0 : i32
    %c0_i32_0 = arith.constant 0 : i32
    %c0_i32_1 = arith.constant 0 : i32
    return %c0_i32, %c0_i32_0 : i32, i32
  }
  func.func @transform_2(%arg0: i32) -> (i32, i32, i32) {
    %c0_i32 = arith.constant 0 : i32
    %c0_i32_0 = arith.constant 0 : i32
    %c0_i32_1 = arith.constant 0 : i32
    return %arg0, %c0_i32, %c0_i32_0 : i32, i32, i32
  }
  func.func @transform_3(%arg0: i32) -> (i32, i32, i32) {
    %c0_i32 = arith.constant 0 : i32
    %c0_i32_0 = arith.constant 0 : i32
    %c0_i32_1 = arith.constant 0 : i32
    return %arg0, %c0_i32, %c0_i32_0 : i32, i32, i32
  }
  func.func @transform_4(%arg0: i32) -> (i32, i32) {
    %c0_i32 = arith.constant 0 : i32
    %c0_i32_0 = arith.constant 0 : i32
    %c0_i32_1 = arith.constant 0 : i32
    return %c0_i32, %c0_i32_0 : i32, i32
  }
  func.func @transform_5(%arg0: i32) -> (i32, i32, i32) {
    %c0_i32 = arith.constant 0 : i32
    %c0_i32_0 = arith.constant 0 : i32
    %c0_i32_1 = arith.constant 0 : i32
    return %arg0, %c0_i32, %c0_i32_0 : i32, i32, i32
  }
}

module attributes {stable_mosaic.version = 11 : i64} {
  func.func @_ln_matmul_kernel(%arg0: i32, %arg1: i32, %arg2: memref<128x128xf32, #tpu.memory_space<vmem>>, %arg3: memref<1x128xf32, #tpu.memory_space<vmem>>, %arg4: memref<1x128xf32, #tpu.memory_space<vmem>>, %arg5: memref<128x128xbf16, #tpu.memory_space<vmem>>, %arg6: memref<128x128xbf16, #tpu.memory_space<vmem>>) attributes {dimension_semantics = [#tpu.dimension_semantics<parallel>, #tpu.dimension_semantics<parallel>], iteration_bounds = array<i64: 1, 1>, scalar_prefetch = 0 : i64, scratch_operands = 0 : i64, tpu.core_type = #tpu.core_type<tc>, window_params = [{transform_indices = @transform_0, window_bounds = array<i64: 128, 128>}, {pipeline_mode = #tpu.pipeline_mode<synchronous>, transform_indices = @transform_1, window_bounds = array<i64: 1, 128>}, {pipeline_mode = #tpu.pipeline_mode<synchronous>, transform_indices = @transform_2, window_bounds = array<i64: 1, 128>}, {transform_indices = @transform_3, window_bounds = array<i64: 128, 128>}, {transform_indices = @transform_4, window_bounds = array<i64: 128, 128>}]} {
    %c0 = arith.constant 0 : index
    %c0_0 = arith.constant 0 : index
    %0 = vector.load %arg2[%c0, %c0_0] : memref<128x128xf32, #tpu.memory_space<vmem>>, vector<128x128xf32>
    %cst = arith.constant dense<0.000000e+00> : vector<128xf32>
    %1 = vector.multi_reduction <add>, %0, %cst [1] : vector<128x128xf32> to vector<128xf32>
    %2 = vector.shape_cast %1 : vector<128xf32> to vector<128x1xf32>
    %cst_1 = arith.constant 1.280000e+02 : f32
    %3 = vector.broadcast %cst_1 : f32 to vector<128x1xf32>
    %4 = arith.divf %2, %3 : vector<128x1xf32>
    %5 = vector.broadcast %4 : vector<128x1xf32> to vector<128x128xf32>
    %6 = arith.subf %0, %5 : vector<128x128xf32>
    %7 = arith.mulf %6, %6 : vector<128x128xf32>
    %cst_2 = arith.constant dense<0.000000e+00> : vector<128xf32>
    %8 = vector.multi_reduction <add>, %7, %cst_2 [1] : vector<128x128xf32> to vector<128xf32>
    %9 = vector.shape_cast %8 : vector<128xf32> to vector<128x1xf32>
    %cst_3 = arith.constant 1.280000e+02 : f32
    %10 = vector.broadcast %cst_3 : f32 to vector<128x1xf32>
    %11 = arith.divf %9, %10 : vector<128x1xf32>
    %cst_4 = arith.constant 9.99999974E-6 : f32
    %12 = vector.broadcast %cst_4 : f32 to vector<128x1xf32>
    %13 = arith.addf %11, %12 : vector<128x1xf32>
    %14 = math.rsqrt %13 : vector<128x1xf32>
    %15 = vector.broadcast %14 : vector<128x1xf32> to vector<128x128xf32>
    %16 = arith.mulf %6, %15 : vector<128x128xf32>
    %c0_5 = arith.constant 0 : index
    %c0_6 = arith.constant 0 : index
    %17 = vector.load %arg3[%c0_5, %c0_6] : memref<1x128xf32, #tpu.memory_space<vmem>>, vector<1x128xf32>
    %18 = vector.broadcast %17 : vector<1x128xf32> to vector<128x128xf32>
    %19 = arith.mulf %16, %18 : vector<128x128xf32>
    %c0_7 = arith.constant 0 : index
    %c0_8 = arith.constant 0 : index
    %20 = vector.load %arg4[%c0_7, %c0_8] : memref<1x128xf32, #tpu.memory_space<vmem>>, vector<1x128xf32>
    %21 = vector.broadcast %20 : vector<1x128xf32> to vector<128x128xf32>
    %22 = arith.addf %19, %21 : vector<128x128xf32>
    %23 = arith.truncf %22 : vector<128x128xf32> to vector<128x128xbf16>
    %c0_9 = arith.constant 0 : index
    %c0_10 = arith.constant 0 : index
    %24 = vector.load %arg5[%c0_9, %c0_10] : memref<128x128xbf16, #tpu.memory_space<vmem>>, vector<128x128xbf16>
    %cst_11 = arith.constant dense<0.000000e+00> : vector<128x128xf32>
    %25 = tpu.matmul %23, %24, %cst_11 {dimension_numbers = #tpu.dot_dimension_numbers<[1], [0], [0], [1], [0, 0, 1, 1], [], []>} : vector<128x128xbf16>, vector<128x128xbf16>, vector<128x128xf32> -> vector<128x128xf32>
    %26 = arith.truncf %25 : vector<128x128xf32> to vector<128x128xbf16>
    %c0_12 = arith.constant 0 : index
    %c0_13 = arith.constant 0 : index
    %27 = vector.load %arg6[%c0_12, %c0_13] : memref<128x128xbf16, #tpu.memory_space<vmem>>, vector<128x128xbf16>
    tpu.vector_store %arg6[%c0_12, %c0_13], %26 {strides = array<i32>} : memref<128x128xbf16, #tpu.memory_space<vmem>>, vector<128x128xbf16>,
    return
  }
  func.func @transform_0(%arg0: i32, %arg1: i32) -> (i32, i32) {
    %c0_i32 = arith.constant 0 : i32
    %c0_i32_0 = arith.constant 0 : i32
    return %arg0, %c0_i32 : i32, i32
  }
  func.func @transform_1(%arg0: i32, %arg1: i32) -> (i32, i32) {
    %c0_i32 = arith.constant 0 : i32
    %c0_i32_0 = arith.constant 0 : i32
    %c0_i32_1 = arith.constant 0 : i32
    return %c0_i32, %c0_i32_0 : i32, i32
  }
  func.func @transform_2(%arg0: i32, %arg1: i32) -> (i32, i32) {
    %c0_i32 = arith.constant 0 : i32
    %c0_i32_0 = arith.constant 0 : i32
    %c0_i32_1 = arith.constant 0 : i32
    return %c0_i32, %c0_i32_0 : i32, i32
  }
  func.func @transform_3(%arg0: i32, %arg1: i32) -> (i32, i32) {
    %c0_i32 = arith.constant 0 : i32
    %c0_i32_0 = arith.constant 0 : i32
    return %c0_i32, %arg1 : i32, i32
  }
  func.func @transform_4(%arg0: i32, %arg1: i32) -> (i32, i32) {
    %c0_i32 = arith.constant 0 : i32
    return %arg0, %arg1 : i32, i32
  }
}

module attributes {stable_mosaic.version = 11 : i64} {
  func.func @_matmul_kernel(%arg0: i32, %arg1: i32, %arg2: memref<192x128xf32, #tpu.memory_space<vmem>>, %arg3: memref<128x256xbf16, #tpu.memory_space<vmem>>, %arg4: memref<192x256xbf16, #tpu.memory_space<vmem>>) attributes {dimension_semantics = [#tpu.dimension_semantics<parallel>, #tpu.dimension_semantics<parallel>], iteration_bounds = array<i64: 1, 1>, scalar_prefetch = 0 : i64, scratch_operands = 0 : i64, tpu.core_type = #tpu.core_type<tc>, window_params = [{transform_indices = @transform_0, window_bounds = array<i64: 192, 128>}, {transform_indices = @transform_1, window_bounds = array<i64: 128, 256>}, {transform_indices = @transform_2, window_bounds = array<i64: 192, 256>}]} {
    %c0 = arith.constant 0 : index
    %c0_0 = arith.constant 0 : index
    %0 = vector.load %arg2[%c0, %c0_0] : memref<192x128xf32, #tpu.memory_space<vmem>>, vector<192x128xf32>
    %1 = arith.truncf %0 : vector<192x128xf32> to vector<192x128xbf16>
    %c0_1 = arith.constant 0 : index
    %c0_2 = arith.constant 0 : index
    %2 = vector.load %arg3[%c0_1, %c0_2] : memref<128x256xbf16, #tpu.memory_space<vmem>>, vector<128x256xbf16>
    %cst = arith.constant dense<0.000000e+00> : vector<192x256xf32>
    %3 = tpu.matmul %1, %2, %cst {dimension_numbers = #tpu.dot_dimension_numbers<[1], [0], [0], [1], [0, 0, 1, 1], [], []>} : vector<192x128xbf16>, vector<128x256xbf16>, vector<192x256xf32> -> vector<192x256xf32>
    %4 = arith.truncf %3 : vector<192x256xf32> to vector<192x256xbf16>
    %c0_3 = arith.constant 0 : index
    %c0_4 = arith.constant 0 : index
    %5 = vector.load %arg4[%c0_3, %c0_4] : memref<192x256xbf16, #tpu.memory_space<vmem>>, vector<192x256xbf16>
    tpu.vector_store %arg4[%c0_3, %c0_4], %4 {strides = array<i32>} : memref<192x256xbf16, #tpu.memory_space<vmem>>, vector<192x256xbf16>,
    return
  }
  func.func @transform_0(%arg0: i32, %arg1: i32) -> (i32, i32) {
    %c0_i32 = arith.constant 0 : i32
    %c0_i32_0 = arith.constant 0 : i32
    return %arg0, %c0_i32 : i32, i32
  }
  func.func @transform_1(%arg0: i32, %arg1: i32) -> (i32, i32) {
    %c0_i32 = arith.constant 0 : i32
    %c0_i32_0 = arith.constant 0 : i32
    return %c0_i32, %arg1 : i32, i32
  }
  func.func @transform_2(%arg0: i32, %arg1: i32) -> (i32, i32) {
    %c0_i32 = arith.constant 0 : i32
    return %arg0, %arg1 : i32, i32
  }
}

module attributes {stable_mosaic.version = 11 : i64} {
  func.func @_flash_attn_out_kernel(%arg0: i32, %arg1: i32, %arg2: i32, %arg3: memref<1x2x16x64xbf16, #tpu.memory_space<vmem>>, %arg4: memref<1x2x24x64xbf16, #tpu.memory_space<vmem>>, %arg5: memref<1x2x24x64xbf16, #tpu.memory_space<vmem>>, %arg6: memref<2x64x128xbf16, #tpu.memory_space<vmem>>, %arg7: memref<1x128xf32, #tpu.memory_space<vmem>>, %arg8: memref<1x16x128xf32, #tpu.memory_space<vmem>>, %arg9: memref<1x16x128xf32, #tpu.memory_space<vmem>>, %arg10: memref<2x16x1xf32, #tpu.memory_space<vmem>>, %arg11: memref<2x16x1xf32, #tpu.memory_space<vmem>>, %arg12: memref<2x16x64xf32, #tpu.memory_space<vmem>>) attributes {dimension_semantics = [#tpu.dimension_semantics<parallel>, #tpu.dimension_semantics<parallel>, #tpu.dimension_semantics<arbitrary>], iteration_bounds = array<i64: 8, 1, 1>, scalar_prefetch = 0 : i64, scratch_operands = 3 : i64, tpu.core_type = #tpu.core_type<tc>, window_params = [{transform_indices = @transform_0, window_bounds = array<i64: 1, 2, 16, 64>}, {transform_indices = @transform_1, window_bounds = array<i64: 1, 2, 24, 64>}, {transform_indices = @transform_2, window_bounds = array<i64: 1, 2, 24, 64>}, {pipeline_mode = #tpu.pipeline_mode<synchronous>, transform_indices = @transform_3, window_bounds = array<i64: 2, 64, 128>}, {pipeline_mode = #tpu.pipeline_mode<synchronous>, transform_indices = @transform_4, window_bounds = array<i64: 1, 128>}, {transform_indices = @transform_5, window_bounds = array<i64: 1, 16, 128>}, {transform_indices = @transform_6, window_bounds = array<i64: 1, 16, 128>}]} {
    %c0_i32 = arith.constant 0 : i32
    %0 = arith.cmpi eq, %arg2, %c0_i32 : i32
    %1 = arith.extui %0 : i1 to i32
    %c0_i32_0 = arith.constant 0 : i32
    %2 = arith.cmpi ne, %1, %c0_i32_0 : i32
    scf.if %2 {
      %cst_36 = arith.constant 0xFF800000 : f32
      %38 = vector.broadcast %cst_36 : f32 to vector<2x16x1xf32>
      %c0_37 = arith.constant 0 : index
      %c0_38 = arith.constant 0 : index
      %c0_39 = arith.constant 0 : index
      %39 = vector.load %arg10[%c0_37, %c0_38, %c0_39] : memref<2x16x1xf32, #tpu.memory_space<vmem>>, vector<2x16x1xf32>
      tpu.vector_store %arg10[%c0_37, %c0_38, %c0_39], %38 {strides = array<i32>} : memref<2x16x1xf32, #tpu.memory_space<vmem>>, vector<2x16x1xf32>,
      %cst_40 = arith.constant 0.000000e+00 : f32
      %40 = vector.broadcast %cst_40 : f32 to vector<2x16x1xf32>
      %c0_41 = arith.constant 0 : index
      %c0_42 = arith.constant 0 : index
      %c0_43 = arith.constant 0 : index
      %41 = vector.load %arg11[%c0_41, %c0_42, %c0_43] : memref<2x16x1xf32, #tpu.memory_space<vmem>>, vector<2x16x1xf32>
      tpu.vector_store %arg11[%c0_41, %c0_42, %c0_43], %40 {strides = array<i32>} : memref<2x16x1xf32, #tpu.memory_space<vmem>>, vector<2x16x1xf32>,
      %cst_44 = arith.constant 0.000000e+00 : f32
      %42 = vector.broadcast %cst_44 : f32 to vector<2x16x64xf32>
      %c0_45 = arith.constant 0 : index
      %c0_46 = arith.constant 0 : index
      %c0_47 = arith.constant 0 : index
      %43 = vector.load %arg12[%c0_45, %c0_46, %c0_47] : memref<2x16x64xf32, #tpu.memory_space<vmem>>, vector<2x16x64xf32>
      tpu.vector_store %arg12[%c0_45, %c0_46, %c0_47], %42 {strides = array<i32>} : memref<2x16x64xf32, #tpu.memory_space<vmem>>, vector<2x16x64xf32>,
    } else {
    }
    %c0 = arith.constant 0 : index
    %c0_1 = arith.constant 0 : index
    %c0_2 = arith.constant 0 : index
    %c0_3 = arith.constant 0 : index
    %3 = vector.load %arg3[%c0, %c0_1, %c0_2, %c0_3] : memref<1x2x16x64xbf16, #tpu.memory_space<vmem>>, vector<1x2x16x64xbf16>
    %4 = vector.shape_cast %3 : vector<1x2x16x64xbf16> to vector<2x16x64xbf16>
    %c0_4 = arith.constant 0 : index
    %c0_5 = arith.constant 0 : index
    %c0_6 = arith.constant 0 : index
    %c0_7 = arith.constant 0 : index
    %5 = vector.load %arg4[%c0_4, %c0_5, %c0_6, %c0_7] : memref<1x2x24x64xbf16, #tpu.memory_space<vmem>>, vector<1x2x24x64xbf16>
    %6 = vector.shape_cast %5 : vector<1x2x24x64xbf16> to vector<2x24x64xbf16>
    %c0_8 = arith.constant 0 : index
    %c0_9 = arith.constant 0 : index
    %c0_10 = arith.constant 0 : index
    %c0_11 = arith.constant 0 : index
    %7 = vector.load %arg5[%c0_8, %c0_9, %c0_10, %c0_11] : memref<1x2x24x64xbf16, #tpu.memory_space<vmem>>, vector<1x2x24x64xbf16>
    %8 = vector.shape_cast %7 : vector<1x2x24x64xbf16> to vector<2x24x64xbf16>
    "tpu.trace_start"() <{level = 10 : i32, message = "hqd,hkd->hqk"}> : () -> ()
    %cst = arith.constant dense<0.000000e+00> : vector<2x16x24xf32>
    %9 = tpu.matmul %4, %6, %cst {dimension_numbers = #tpu.dot_dimension_numbers<[2], [2], [1], [1], [0, 0, 0, 1, 1, 1], [0], [0]>} : vector<2x16x64xbf16>, vector<2x24x64xbf16>, vector<2x16x24xf32> -> vector<2x16x24xf32>
    "tpu.trace_stop"() : () -> ()
    %cst_12 = arith.constant 1.250000e-01 : f32
    %10 = vector.broadcast %cst_12 : f32 to vector<2x16x24xf32>
    %11 = arith.mulf %9, %10 : vector<2x16x24xf32>
    %c0_13 = arith.constant 0 : index
    %c0_14 = arith.constant 0 : index
    %c0_15 = arith.constant 0 : index
    %12 = vector.load %arg10[%c0_13, %c0_14, %c0_15] : memref<2x16x1xf32, #tpu.memory_space<vmem>>, vector<2x16x1xf32>
    %cst_16 = arith.constant dense<0xFF800000> : vector<2x16xf32>
    %13 = vector.multi_reduction <maximumf>, %11, %cst_16 [2] : vector<2x16x24xf32> to vector<2x16xf32>
    %14 = vector.shape_cast %13 : vector<2x16xf32> to vector<2x16x1xf32>
    %15 = arith.maximumf %12, %14 : vector<2x16x1xf32>
    %16 = arith.subf %12, %15 : vector<2x16x1xf32>
    %17 = math.exp %16 : vector<2x16x1xf32>
    %18 = vector.broadcast %15 : vector<2x16x1xf32> to vector<2x16x24xf32>
    %19 = arith.subf %11, %18 : vector<2x16x24xf32>
    %20 = math.exp %19 : vector<2x16x24xf32>
    %c0_17 = arith.constant 0 : index
    %c0_18 = arith.constant 0 : index
    %c0_19 = arith.constant 0 : index
    %21 = vector.load %arg11[%c0_17, %c0_18, %c0_19] : memref<2x16x1xf32, #tpu.memory_space<vmem>>, vector<2x16x1xf32>
    %22 = arith.mulf %17, %21 : vector<2x16x1xf32>
    %cst_20 = arith.constant dense<0.000000e+00> : vector<2x16xf32>
    %23 = vector.multi_reduction <add>, %20, %cst_20 [2] : vector<2x16x24xf32> to vector<2x16xf32>
    %24 = vector.shape_cast %23 : vector<2x16xf32> to vector<2x16x1xf32>
    %25 = arith.addf %22, %24 : vector<2x16x1xf32>
    %c0_21 = arith.constant 0 : index
    %c0_22 = arith.constant 0 : index
    %c0_23 = arith.constant 0 : index
    %26 = vector.load %arg11[%c0_21, %c0_22, %c0_23] : memref<2x16x1xf32, #tpu.memory_space<vmem>>, vector<2x16x1xf32>
    tpu.vector_store %arg11[%c0_21, %c0_22, %c0_23], %25 {strides = array<i32>} : memref<2x16x1xf32, #tpu.memory_space<vmem>>, vector<2x16x1xf32>,
    %c0_24 = arith.constant 0 : index
    %c0_25 = arith.constant 0 : index
    %c0_26 = arith.constant 0 : index
    %27 = vector.load %arg12[%c0_24, %c0_25, %c0_26] : memref<2x16x64xf32, #tpu.memory_space<vmem>>, vector<2x16x64xf32>
    %28 = vector.broadcast %17 : vector<2x16x1xf32> to vector<2x16x64xf32>
    %29 = arith.mulf %28, %27 : vector<2x16x64xf32>
    %30 = arith.truncf %20 : vector<2x16x24xf32> to vector<2x16x24xbf16>
    "tpu.trace_start"() <{level = 10 : i32, message = "hqk,hkd->hqd"}> : () -> ()
    %cst_27 = arith.constant dense<0.000000e+00> : vector<2x16x64xf32>
    %31 = tpu.matmul %30, %8, %cst_27 {dimension_numbers = #tpu.dot_dimension_numbers<[2], [1], [1], [2], [0, 0, 0, 1, 1, 2], [0], [0]>} : vector<2x16x24xbf16>, vector<2x24x64xbf16>, vector<2x16x64xf32> -> vector<2x16x64xf32>
    "tpu.trace_stop"() : () -> ()
    %32 = arith.addf %29, %31 : vector<2x16x64xf32>
    %c0_28 = arith.constant 0 : index
    %c0_29 = arith.constant 0 : index
    %c0_30 = arith.constant 0 : index
    %33 = vector.load %arg12[%c0_28, %c0_29, %c0_30] : memref<2x16x64xf32, #tpu.memory_space<vmem>>, vector<2x16x64xf32>
    tpu.vector_store %arg12[%c0_28, %c0_29, %c0_30], %32 {strides = array<i32>} : memref<2x16x64xf32, #tpu.memory_space<vmem>>, vector<2x16x64xf32>,
    %c0_31 = arith.constant 0 : index
    %c0_32 = arith.constant 0 : index
    %c0_33 = arith.constant 0 : index
    %34 = vector.load %arg10[%c0_31, %c0_32, %c0_33] : memref<2x16x1xf32, #tpu.memory_space<vmem>>, vector<2x16x1xf32>
    tpu.vector_store %arg10[%c0_31, %c0_32, %c0_33], %15 {strides = array<i32>} : memref<2x16x1xf32, #tpu.memory_space<vmem>>, vector<2x16x1xf32>,
    %c0_i32_34 = arith.constant 0 : i32
    %35 = arith.cmpi eq, %arg2, %c0_i32_34 : i32
    %36 = arith.extui %35 : i1 to i32
    %c0_i32_35 = arith.constant 0 : i32
    %37 = arith.cmpi ne, %36, %c0_i32_35 : i32
    scf.if %37 {
      %c0_36 = arith.constant 0 : index
      %c0_37 = arith.constant 0 : index
      %c0_38 = arith.constant 0 : index
      %38 = vector.load %arg11[%c0_36, %c0_37, %c0_38] : memref<2x16x1xf32, #tpu.memory_space<vmem>>, vector<2x16x1xf32>
      %39 = tpu.reciprocal %38 {approx = true} : vector<2x16x1xf32> -> vector<2x16x1xf32>
      %c0_39 = arith.constant 0 : index
      %c0_40 = arith.constant 0 : index
      %c0_41 = arith.constant 0 : index
      %40 = vector.load %arg12[%c0_39, %c0_40, %c0_41] : memref<2x16x64xf32, #tpu.memory_space<vmem>>, vector<2x16x64xf32>
      %41 = vector.broadcast %39 : vector<2x16x1xf32> to vector<2x16x64xf32>
      %42 = arith.mulf %40, %41 : vector<2x16x64xf32>
      %43 = arith.truncf %42 : vector<2x16x64xf32> to vector<2x16x64xbf16>
      %c0_42 = arith.constant 0 : index
      %c0_43 = arith.constant 0 : index
      %c0_44 = arith.constant 0 : index
      %44 = vector.load %arg6[%c0_42, %c0_43, %c0_44] : memref<2x64x128xbf16, #tpu.memory_space<vmem>>, vector<2x64x128xbf16>
      %45 = vector.extract_strided_slice %43 {offsets = [0, 0, 0], sizes = [1, 16, 64], strides = [1, 1, 1]} : vector<2x16x64xbf16> to vector<1x16x64xbf16>
      %46 = vector.shape_cast %45 : vector<1x16x64xbf16> to vector<16x64xbf16>
      %47 = vector.extract_strided_slice %44 {offsets = [0, 0, 0], sizes = [1, 64, 128], strides = [1, 1, 1]} : vector<2x64x128xbf16> to vector<1x64x128xbf16>
      %48 = vector.shape_cast %47 : vector<1x64x128xbf16> to vector<64x128xbf16>
      %cst_45 = arith.constant dense<0.000000e+00> : vector<16x128xf32>
      %49 = tpu.matmul %46, %48, %cst_45 {dimension_numbers = #tpu.dot_dimension_numbers<[1], [0], [0], [1], [0, 0, 1, 1], [], []>} : vector<16x64xbf16>, vector<64x128xbf16>, vector<16x128xf32> -> vector<16x128xf32>
      %50 = vector.extract_strided_slice %43 {offsets = [1, 0, 0], sizes = [1, 16, 64], strides = [1, 1, 1]} : vector<2x16x64xbf16> to vector<1x16x64xbf16>
      %51 = vector.shape_cast %50 : vector<1x16x64xbf16> to vector<16x64xbf16>
      %52 = vector.extract_strided_slice %44 {offsets = [1, 0, 0], sizes = [1, 64, 128], strides = [1, 1, 1]} : vector<2x64x128xbf16> to vector<1x64x128xbf16>
      %53 = vector.shape_cast %52 : vector<1x64x128xbf16> to vector<64x128xbf16>
      %cst_46 = arith.constant dense<0.000000e+00> : vector<16x128xf32>
      %54 = tpu.matmul %51, %53, %cst_46 {dimension_numbers = #tpu.dot_dimension_numbers<[1], [0], [0], [1], [0, 0, 1, 1], [], []>} : vector<16x64xbf16>, vector<64x128xbf16>, vector<16x128xf32> -> vector<16x128xf32>
      %55 = arith.addf %49, %54 : vector<16x128xf32>
      %c0_47 = arith.constant 0 : index
      %c0_48 = arith.constant 0 : index
      %56 = vector.load %arg7[%c0_47, %c0_48] : memref<1x128xf32, #tpu.memory_space<vmem>>, vector<1x128xf32>
      %57 = vector.broadcast %56 : vector<1x128xf32> to vector<16x128xf32>
      %58 = arith.addf %55, %57 : vector<16x128xf32>
      %c0_49 = arith.constant 0 : index
      %c0_50 = arith.constant 0 : index
      %c0_51 = arith.constant 0 : index
      %59 = vector.load %arg8[%c0_49, %c0_50, %c0_51] : memref<1x16x128xf32, #tpu.memory_space<vmem>>, vector<1x16x128xf32>
      %60 = vector.shape_cast %59 : vector<1x16x128xf32> to vector<16x128xf32>
      %cst_52 = arith.constant 0.899999976 : f32
      %61 = vector.broadcast %cst_52 : f32 to vector<16x128xf32>
      %62 = arith.mulf %61, %60 : vector<16x128xf32>
      %63 = arith.addf %58, %62 : vector<16x128xf32>
      %c0_53 = arith.constant 0 : index
      %c0_54 = arith.constant 0 : index
      %c0_55 = arith.constant 0 : index
      %64 = vector.load %arg9[%c0_53, %c0_54, %c0_55] : memref<1x16x128xf32, #tpu.memory_space<vmem>>, vector<1x16x128xf32>
      %65 = vector.shape_cast %64 : vector<1x16x128xf32> to vector<16x128xf32>
      %66 = vector.shape_cast %63 : vector<16x128xf32> to vector<1x16x128xf32>
      tpu.vector_store %arg9[%c0_53, %c0_54, %c0_55], %66 {strides = array<i32>} : memref<1x16x128xf32, #tpu.memory_space<vmem>>, vector<1x16x128xf32>,
    } else {
    }
    return
  }
  func.func @transform_0(%arg0: i32, %arg1: i32, %arg2: i32) -> (i32, i32, i32, i32) {
    %c0_i32 = arith.constant 0 : i32
    %c0_i32_0 = arith.constant 0 : i32
    %c0_i32_1 = arith.constant 0 : i32
    return %arg0, %c0_i32, %arg1, %c0_i32_0 : i32, i32, i32, i32
  }
  func.func @transform_1(%arg0: i32, %arg1: i32, %arg2: i32) -> (i32, i32, i32, i32) {
    %c0_i32 = arith.constant 0 : i32
    %c0_i32_0 = arith.constant 0 : i32
    %c0_i32_1 = arith.constant 0 : i32
    return %arg0, %c0_i32, %arg2, %c0_i32_0 : i32, i32, i32, i32
  }
  func.func @transform_2(%arg0: i32, %arg1: i32, %arg2: i32) -> (i32, i32, i32, i32) {
    %c0_i32 = arith.constant 0 : i32
    %c0_i32_0 = arith.constant 0 : i32
    %c0_i32_1 = arith.constant 0 : i32
    return %arg0, %c0_i32, %arg2, %c0_i32_0 : i32, i32, i32, i32
  }
  func.func @transform_3(%arg0: i32, %arg1: i32, %arg2: i32) -> (i32, i32, i32) {
    %c0_i32 = arith.constant 0 : i32
    %c0_i32_0 = arith.constant 0 : i32
    %c0_i32_1 = arith.constant 0 : i32
    %c0_i32_2 = arith.constant 0 : i32
    return %c0_i32, %c0_i32_0, %c0_i32_1 : i32, i32, i32
  }
  func.func @transform_4(%arg0: i32, %arg1: i32, %arg2: i32) -> (i32, i32) {
    %c0_i32 = arith.constant 0 : i32
    %c0_i32_0 = arith.constant 0 : i32
    %c0_i32_1 = arith.constant 0 : i32
    return %c0_i32, %c0_i32_0 : i32, i32
  }
  func.func @transform_5(%arg0: i32, %arg1: i32, %arg2: i32) -> (i32, i32, i32) {
    %c0_i32 = arith.constant 0 : i32
    %c0_i32_0 = arith.constant 0 : i32
    return %arg0, %arg1, %c0_i32 : i32, i32, i32
  }
  func.func @transform_6(%arg0: i32, %arg1: i32, %arg2: i32) -> (i32, i32, i32) {
    %c0_i32 = arith.constant 0 : i32
    %c0_i32_0 = arith.constant 0 : i32
    return %arg0, %arg1, %c0_i32 : i32, i32, i32
  }
}

module attributes {stable_mosaic.version = 11 : i64} {
  func.func @_ff_fused_kernel(%arg0: i32, %arg1: i32, %arg2: memref<128x128xf32, #tpu.memory_space<vmem>>, %arg3: memref<1x128xf32, #tpu.memory_space<vmem>>, %arg4: memref<1x128xf32, #tpu.memory_space<vmem>>, %arg5: memref<128x512xbf16, #tpu.memory_space<vmem>>, %arg6: memref<1x512xf32, #tpu.memory_space<vmem>>, %arg7: memref<128x512xbf16, #tpu.memory_space<vmem>>, %arg8: memref<1x512xf32, #tpu.memory_space<vmem>>, %arg9: memref<512x128xbf16, #tpu.memory_space<vmem>>, %arg10: memref<1x128xf32, #tpu.memory_space<vmem>>, %arg11: memref<128x128xf32, #tpu.memory_space<vmem>>, %arg12: memref<128x128xbf16, #tpu.memory_space<vmem>>, %arg13: memref<128x128xf32, #tpu.memory_space<vmem>>) attributes {dimension_semantics = [#tpu.dimension_semantics<parallel>, #tpu.dimension_semantics<arbitrary>], iteration_bounds = array<i64: 1, 1>, scalar_prefetch = 0 : i64, scratch_operands = 2 : i64, tpu.core_type = #tpu.core_type<tc>, window_params = [{transform_indices = @transform_0, window_bounds = array<i64: 128, 128>}, {pipeline_mode = #tpu.pipeline_mode<synchronous>, transform_indices = @transform_1, window_bounds = array<i64: 1, 128>}, {pipeline_mode = #tpu.pipeline_mode<synchronous>, transform_indices = @transform_2, window_bounds = array<i64: 1, 128>}, {transform_indices = @transform_3, window_bounds = array<i64: 128, 512>}, {transform_indices = @transform_4, window_bounds = array<i64: 1, 512>}, {transform_indices = @transform_5, window_bounds = array<i64: 128, 512>}, {transform_indices = @transform_6, window_bounds = array<i64: 1, 512>}, {transform_indices = @transform_7, window_bounds = array<i64: 512, 128>}, {pipeline_mode = #tpu.pipeline_mode<synchronous>, transform_indices = @transform_8, window_bounds = array<i64: 1, 128>}, {transform_indices = @transform_9, window_bounds = array<i64: 128, 128>}]} {
    %c0_i32 = arith.constant 0 : i32
    %0 = arith.cmpi eq, %arg1, %c0_i32 : i32
    %1 = arith.extui %0 : i1 to i32
    %c0_i32_0 = arith.constant 0 : i32
    %2 = arith.cmpi ne, %1, %c0_i32_0 : i32
    scf.if %2 {
      %c0_24 = arith.constant 0 : index
      %c0_25 = arith.constant 0 : index
      %37 = vector.load %arg2[%c0_24, %c0_25] : memref<128x128xf32, #tpu.memory_space<vmem>>, vector<128x128xf32>
      %cst_26 = arith.constant dense<0.000000e+00> : vector<128xf32>
      %38 = vector.multi_reduction <add>, %37, %cst_26 [1] : vector<128x128xf32> to vector<128xf32>
      %39 = vector.shape_cast %38 : vector<128xf32> to vector<128x1xf32>
      %cst_27 = arith.constant 1.280000e+02 : f32
      %40 = vector.broadcast %cst_27 : f32 to vector<128x1xf32>
      %41 = arith.divf %39, %40 : vector<128x1xf32>
      %42 = vector.broadcast %41 : vector<128x1xf32> to vector<128x128xf32>
      %43 = arith.subf %37, %42 : vector<128x128xf32>
      %44 = arith.mulf %43, %43 : vector<128x128xf32>
      %cst_28 = arith.constant dense<0.000000e+00> : vector<128xf32>
      %45 = vector.multi_reduction <add>, %44, %cst_28 [1] : vector<128x128xf32> to vector<128xf32>
      %46 = vector.shape_cast %45 : vector<128xf32> to vector<128x1xf32>
      %cst_29 = arith.constant 1.280000e+02 : f32
      %47 = vector.broadcast %cst_29 : f32 to vector<128x1xf32>
      %48 = arith.divf %46, %47 : vector<128x1xf32>
      %cst_30 = arith.constant 9.99999974E-6 : f32
      %49 = vector.broadcast %cst_30 : f32 to vector<128x1xf32>
      %50 = arith.addf %48, %49 : vector<128x1xf32>
      %51 = math.rsqrt %50 : vector<128x1xf32>
      %52 = vector.broadcast %51 : vector<128x1xf32> to vector<128x128xf32>
      %53 = arith.mulf %43, %52 : vector<128x128xf32>
      %c0_31 = arith.constant 0 : index
      %c0_32 = arith.constant 0 : index
      %54 = vector.load %arg3[%c0_31, %c0_32] : memref<1x128xf32, #tpu.memory_space<vmem>>, vector<1x128xf32>
      %55 = vector.broadcast %54 : vector<1x128xf32> to vector<128x128xf32>
      %56 = arith.mulf %53, %55 : vector<128x128xf32>
      %c0_33 = arith.constant 0 : index
      %c0_34 = arith.constant 0 : index
      %57 = vector.load %arg4[%c0_33, %c0_34] : memref<1x128xf32, #tpu.memory_space<vmem>>, vector<1x128xf32>
      %58 = vector.broadcast %57 : vector<1x128xf32> to vector<128x128xf32>
      %59 = arith.addf %56, %58 : vector<128x128xf32>
      %60 = arith.truncf %59 : vector<128x128xf32> to vector<128x128xbf16>
      %c0_35 = arith.constant 0 : index
      %c0_36 = arith.constant 0 : index
      %61 = vector.load %arg12[%c0_35, %c0_36] : memref<128x128xbf16, #tpu.memory_space<vmem>>, vector<128x128xbf16>
      tpu.vector_store %arg12[%c0_35, %c0_36], %60 {strides = array<i32>} : memref<128x128xbf16, #tpu.memory_space<vmem>>, vector<128x128xbf16>,
      %cst_37 = arith.constant 0.000000e+00 : f32
      %62 = vector.broadcast %cst_37 : f32 to vector<128x128xf32>
      %c0_38 = arith.constant 0 : index
      %c0_39 = arith.constant 0 : index
      %63 = vector.load %arg13[%c0_38, %c0_39] : memref<128x128xf32, #tpu.memory_space<vmem>>, vector<128x128xf32>
      tpu.vector_store %arg13[%c0_38, %c0_39], %62 {strides = array<i32>} : memref<128x128xf32, #tpu.memory_space<vmem>>, vector<128x128xf32>,
    } else {
    }
    %c0 = arith.constant 0 : index
    %c0_1 = arith.constant 0 : index
    %3 = vector.load %arg12[%c0, %c0_1] : memref<128x128xbf16, #tpu.memory_space<vmem>>, vector<128x128xbf16>
    %c0_2 = arith.constant 0 : index
    %c0_3 = arith.constant 0 : index
    %4 = vector.load %arg5[%c0_2, %c0_3] : memref<128x512xbf16, #tpu.memory_space<vmem>>, vector<128x512xbf16>
    %cst = arith.constant dense<0.000000e+00> : vector<128x512xf32>
    %5 = tpu.matmul %3, %4, %cst {dimension_numbers = #tpu.dot_dimension_numbers<[1], [0], [0], [1], [0, 0, 1, 1], [], []>} : vector<128x128xbf16>, vector<128x512xbf16>, vector<128x512xf32> -> vector<128x512xf32>
    %c0_4 = arith.constant 0 : index
    %c0_5 = arith.constant 0 : index
    %6 = vector.load %arg6[%c0_4, %c0_5] : memref<1x512xf32, #tpu.memory_space<vmem>>, vector<1x512xf32>
    %7 = vector.broadcast %6 : vector<1x512xf32> to vector<128x512xf32>
    %8 = arith.addf %5, %7 : vector<128x512xf32>
    %c0_6 = arith.constant 0 : index
    %c0_7 = arith.constant 0 : index
    %9 = vector.load %arg7[%c0_6, %c0_7] : memref<128x512xbf16, #tpu.memory_space<vmem>>, vector<128x512xbf16>
    %cst_8 = arith.constant dense<0.000000e+00> : vector<128x512xf32>
    %10 = tpu.matmul %3, %9, %cst_8 {dimension_numbers = #tpu.dot_dimension_numbers<[1], [0], [0], [1], [0, 0, 1, 1], [], []>} : vector<128x128xbf16>, vector<128x512xbf16>, vector<128x512xf32> -> vector<128x512xf32>
    %c0_9 = arith.constant 0 : index
    %c0_10 = arith.constant 0 : index
    %11 = vector.load %arg8[%c0_9, %c0_10] : memref<1x512xf32, #tpu.memory_space<vmem>>, vector<1x512xf32>
    %12 = vector.broadcast %11 : vector<1x512xf32> to vector<128x512xf32>
    %13 = arith.addf %10, %12 : vector<128x512xf32>
    %cst_11 = arith.constant 5.000000e-01 : f32
    %14 = vector.broadcast %cst_11 : f32 to vector<128x512xf32>
    %15 = arith.mulf %14, %13 : vector<128x512xf32>
    %cst_12 = arith.constant 4.471500e-02 : f32
    %16 = vector.broadcast %cst_12 : f32 to vector<128x512xf32>
    %17 = arith.mulf %16, %13 : vector<128x512xf32>
    %18 = arith.mulf %17, %13 : vector<128x512xf32>
    %19 = arith.mulf %18, %13 : vector<128x512xf32>
    %20 = arith.addf %13, %19 : vector<128x512xf32>
    %cst_13 = arith.constant 0.797884583 : f32
    %21 = vector.broadcast %cst_13 : f32 to vector<128x512xf32>
    %22 = arith.mulf %21, %20 : vector<128x512xf32>
    %23 = math.tanh %22 : vector<128x512xf32>
    %cst_14 = arith.constant 1.000000e+00 : f32
    %24 = vector.broadcast %cst_14 : f32 to vector<128x512xf32>
    %25 = arith.addf %24, %23 : vector<128x512xf32>
    %26 = arith.mulf %15, %25 : vector<128x512xf32>
    %27 = arith.mulf %8, %26 : vector<128x512xf32>
    %28 = arith.truncf %27 : vector<128x512xf32> to vector<128x512xbf16>
    %c0_15 = arith.constant 0 : index
    %c0_16 = arith.constant 0 : index
    %29 = vector.load %arg13[%c0_15, %c0_16] : memref<128x128xf32, #tpu.memory_space<vmem>>, vector<128x128xf32>
    %c0_17 = arith.constant 0 : index
    %c0_18 = arith.constant 0 : index
    %30 = vector.load %arg9[%c0_17, %c0_18] : memref<512x128xbf16, #tpu.memory_space<vmem>>, vector<512x128xbf16>
    %cst_19 = arith.constant dense<0.000000e+00> : vector<128x128xf32>
    %31 = tpu.matmul %28, %30, %cst_19 {dimension_numbers = #tpu.dot_dimension_numbers<[1], [0], [0], [1], [0, 0, 1, 1], [], []>} : vector<128x512xbf16>, vector<512x128xbf16>, vector<128x128xf32> -> vector<128x128xf32>
    %32 = arith.addf %29, %31 : vector<128x128xf32>
    %c0_20 = arith.constant 0 : index
    %c0_21 = arith.constant 0 : index
    %33 = vector.load %arg13[%c0_20, %c0_21] : memref<128x128xf32, #tpu.memory_space<vmem>>, vector<128x128xf32>
    tpu.vector_store %arg13[%c0_20, %c0_21], %32 {strides = array<i32>} : memref<128x128xf32, #tpu.memory_space<vmem>>, vector<128x128xf32>,
    %c0_i32_22 = arith.constant 0 : i32
    %34 = arith.cmpi eq, %arg1, %c0_i32_22 : i32
    %35 = arith.extui %34 : i1 to i32
    %c0_i32_23 = arith.constant 0 : i32
    %36 = arith.cmpi ne, %35, %c0_i32_23 : i32
    scf.if %36 {
      %c0_24 = arith.constant 0 : index
      %c0_25 = arith.constant 0 : index
      %37 = vector.load %arg13[%c0_24, %c0_25] : memref<128x128xf32, #tpu.memory_space<vmem>>, vector<128x128xf32>
      %c0_26 = arith.constant 0 : index
      %c0_27 = arith.constant 0 : index
      %38 = vector.load %arg10[%c0_26, %c0_27] : memref<1x128xf32, #tpu.memory_space<vmem>>, vector<1x128xf32>
      %39 = vector.broadcast %38 : vector<1x128xf32> to vector<128x128xf32>
      %40 = arith.addf %37, %39 : vector<128x128xf32>
      %c0_28 = arith.constant 0 : index
      %c0_29 = arith.constant 0 : index
      %41 = vector.load %arg2[%c0_28, %c0_29] : memref<128x128xf32, #tpu.memory_space<vmem>>, vector<128x128xf32>
      %42 = arith.addf %40, %41 : vector<128x128xf32>
      %c0_30 = arith.constant 0 : index
      %c0_31 = arith.constant 0 : index
      %43 = vector.load %arg11[%c0_30, %c0_31] : memref<128x128xf32, #tpu.memory_space<vmem>>, vector<128x128xf32>
      tpu.vector_store %arg11[%c0_30, %c0_31], %42 {strides = array<i32>} : memref<128x128xf32, #tpu.memory_space<vmem>>, vector<128x128xf32>,
    } else {
    }
    return
  }
  func.func @transform_0(%arg0: i32, %arg1: i32) -> (i32, i32) {
    %c0_i32 = arith.constant 0 : i32
    %c0_i32_0 = arith.constant 0 : i32
    return %arg0, %c0_i32 : i32, i32
  }
  func.func @transform_1(%arg0: i32, %arg1: i32) -> (i32, i32) {
    %c0_i32 = arith.constant 0 : i32
    %c0_i32_0 = arith.constant 0 : i32
    %c0_i32_1 = arith.constant 0 : i32
    return %c0_i32, %c0_i32_0 : i32, i32
  }
  func.func @transform_2(%arg0: i32, %arg1: i32) -> (i32, i32) {
    %c0_i32 = arith.constant 0 : i32
    %c0_i32_0 = arith.constant 0 : i32
    %c0_i32_1 = arith.constant 0 : i32
    return %c0_i32, %c0_i32_0 : i32, i32
  }
  func.func @transform_3(%arg0: i32, %arg1: i32) -> (i32, i32) {
    %c0_i32 = arith.constant 0 : i32
    %c0_i32_0 = arith.constant 0 : i32
    return %c0_i32, %arg1 : i32, i32
  }
  func.func @transform_4(%arg0: i32, %arg1: i32) -> (i32, i32) {
    %c0_i32 = arith.constant 0 : i32
    %c0_i32_0 = arith.constant 0 : i32
    return %c0_i32, %arg1 : i32, i32
  }
  func.func @transform_5(%arg0: i32, %arg1: i32) -> (i32, i32) {
    %c0_i32 = arith.constant 0 : i32
    %c0_i32_0 = arith.constant 0 : i32
    return %c0_i32, %arg1 : i32, i32
  }
  func.func @transform_6(%arg0: i32, %arg1: i32) -> (i32, i32) {
    %c0_i32 = arith.constant 0 : i32
    %c0_i32_0 = arith.constant 0 : i32
    return %c0_i32, %arg1 : i32, i32
  }
  func.func @transform_7(%arg0: i32, %arg1: i32) -> (i32, i32) {
    %c0_i32 = arith.constant 0 : i32
    %c0_i32_0 = arith.constant 0 : i32
    return %arg1, %c0_i32 : i32, i32
  }
  func.func @transform_8(%arg0: i32, %arg1: i32) -> (i32, i32) {
    %c0_i32 = arith.constant 0 : i32
    %c0_i32_0 = arith.constant 0 : i32
    %c0_i32_1 = arith.constant 0 : i32
    return %c0_i32, %c0_i32_0 : i32, i32
  }
  func.func @transform_9(%arg0: i32, %arg1: i32) -> (i32, i32) {
    %c0_i32 = arith.constant 0 : i32
    %c0_i32_0 = arith.constant 0 : i32
    return %arg0, %c0_i32 : i32, i32
  }
}

</mosaic_0001>

<llo_original>
// kernel: basic_transformer_block.10
$region0: #{basic_transformer_block.10}
  #allocation0 [shape = 'u32[]', space=smem, size = 0x4, offset = 0x4, fixed_abs, tag = 'smem constant byte address 0x4 - core index']
  #allocation1 [shape = 'u32[72,128]{1,0:T(1,128)}', space=vmem, size = 0x9000, scoped, tag = 'internal scratch']
  %s0 = inlined_call_operand.vmem [shape: f32[128,128], index: 0, kind: input, shape index: {}]
  %s1 = inlined_call_operand.vmem [shape: f32[1,128], index: 1, kind: input, shape index: {}]
  %s2 = inlined_call_operand.vmem [shape: f32[1,128], index: 2, kind: input, shape index: {}]
  %s3 = inlined_call_operand.vmem [shape: bf16[128,384], index: 3, kind: input, shape index: {}]
  %s4 = inlined_call_operand.vmem [shape: bf16[128,384], index: 4, kind: output, shape index: {}]
  %s5 = sld [smem:[#allocation0]]
  $region26: #{basic_transformer_block.10} parent=0
    _
  %s7 = ssub.s32 1, %s5
  %s8 = scalar_select 0, %s7, %s5
  // Predicated region
  $region2: #{basic_transformer_block.10} parent=0 // pred_check
    _
  $region3: #{basic_transformer_block.10} parent=0 // pred_check_branch
    %10 = sbr.rel (0) target = $region5
  $region4: #{basic_transformer_block.10} parent=0 // pred_region
    _
  $region5: #{basic_transformer_block.10} parent=0 // pred_fallthru
    _
  // Predicated region
  $region6: #{basic_transformer_block.10} parent=0 // pred_check
    _
  $region7: #{basic_transformer_block.10} parent=0 // pred_check_branch
    %12 = sbr.rel (0) target = $region9
  $region8: #{basic_transformer_block.10} parent=0 // pred_region
    _
  $region9: #{basic_transformer_block.10} parent=0 // pred_fallthru
    _
  // Predicated region
  $region10: #{basic_transformer_block.10} parent=0 // pred_check
    _
  $region11: #{basic_transformer_block.10} parent=0 // pred_check_branch
    %14 = sbr.rel (0) target = $region13
  $region12: #{basic_transformer_block.10} parent=0 // pred_region
    _
  $region13: #{basic_transformer_block.10} parent=0 // pred_fallthru
    _
  // Predicated region
  $region14: #{basic_transformer_block.10} parent=0 // pred_check
    _
  $region15: #{basic_transformer_block.10} parent=0 // pred_check_branch
    %16 = sbr.rel (0) target = $region17
  $region16: #{basic_transformer_block.10} parent=0 // pred_region
    _
  $region17: #{basic_transformer_block.10} parent=0 // pred_fallthru
    _
  %v17 = vld [vmem:[%s0] sm:$0xff]
  %v18 = vld [vmem:[%s0 + $0x8] sm:$0xff]
  %v19 = vld [vmem:[%s0 + $0x10] sm:$0xff]
  %v20 = vld [vmem:[%s0 + $0x18] sm:$0xff]
  %v21 = vld [vmem:[%s0 + $0x20] sm:$0xff]
  %v22 = vld [vmem:[%s0 + $0x28] sm:$0xff]
  %v23 = vld [vmem:[%s0 + $0x30] sm:$0xff]
  %v24 = vld [vmem:[%s0 + $0x38] sm:$0xff]
  %v25 = vld [vmem:[%s0 + $0x40] sm:$0xff]
  %v26 = vld [vmem:[%s0 + $0x48] sm:$0xff]
  %v27 = vld [vmem:[%s0 + $0x50] sm:$0xff]
  %v28 = vld [vmem:[%s0 + $0x58] sm:$0xff]
  %v29 = vld [vmem:[%s0 + $0x60] sm:$0xff]
  %v30 = vld [vmem:[%s0 + $0x68] sm:$0xff]
  %v31 = vld [vmem:[%s0 + $0x70] sm:$0xff]
  %v32 = vld [vmem:[%s0 + $0x78] sm:$0xff]
  %33 = vadd.xlane.f32.xlu0 %v17
  %v34 = vpop.xlane.xlu0 %33
  %35 = vadd.xlane.f32.xlu0 %v18
  %v36 = vpop.xlane.xlu0 %35
  %37 = vadd.xlane.f32.xlu0 %v19
  %v38 = vpop.xlane.xlu0 %37
  %39 = vadd.xlane.f32.xlu0 %v20
  %v40 = vpop.xlane.xlu0 %39
  %41 = vadd.xlane.f32.xlu0 %v21
  %v42 = vpop.xlane.xlu0 %41
  %43 = vadd.xlane.f32.xlu0 %v22
  %v44 = vpop.xlane.xlu0 %43
  %45 = vadd.xlane.f32.xlu0 %v23
  %v46 = vpop.xlane.xlu0 %45
  %47 = vadd.xlane.f32.xlu0 %v24
  %v48 = vpop.xlane.xlu0 %47
  %49 = vadd.xlane.f32.xlu0 %v25
  %v50 = vpop.xlane.xlu0 %49
  %51 = vadd.xlane.f32.xlu0 %v26
  %v52 = vpop.xlane.xlu0 %51
  %53 = vadd.xlane.f32.xlu0 %v27
  %v54 = vpop.xlane.xlu0 %53
  %55 = vadd.xlane.f32.xlu0 %v28
  %v56 = vpop.xlane.xlu0 %55
  %57 = vadd.xlane.f32.xlu0 %v29
  %v58 = vpop.xlane.xlu0 %57
  %59 = vadd.xlane.f32.xlu0 %v30
  %v60 = vpop.xlane.xlu0 %59
  %61 = vadd.xlane.f32.xlu0 %v31
  %v62 = vpop.xlane.xlu0 %61
  %63 = vadd.xlane.f32.xlu0 %v32
  %v64 = vpop.xlane.xlu0 %63
  %v65 = vrcp.pop 128.0
  %v66 = vmul.f32 128.0, %v65
  %v67 = vsub.f32 1.0, %v66
  %v68 = vmul.f32 %v65, %v67
  %v69 = vadd.f32 %v65, %v68
  %vm70 = vweird.f32 %v65
  %v71 = vsel %vm70, %v65, %v69
  %v72 = vmul.f32 %v34, %v71
  %v73 = vmul.f32 %v36, %v71
  %v74 = vmul.f32 %v38, %v71
  %v75 = vmul.f32 %v40, %v71
  %v76 = vmul.f32 %v42, %v71
  %v77 = vmul.f32 %v44, %v71
  %v78 = vmul.f32 %v46, %v71
  %v79 = vmul.f32 %v48, %v71
  %v80 = vmul.f32 %v50, %v71
  %v81 = vmul.f32 %v52, %v71
  %v82 = vmul.f32 %v54, %v71
  %v83 = vmul.f32 %v56, %v71
  %v84 = vmul.f32 %v58, %v71
  %v85 = vmul.f32 %v60, %v71
  %v86 = vmul.f32 %v62, %v71
  %v87 = vmul.f32 %v64, %v71
  %v88 = vsub.f32 %v17, %v72
  %v89 = vsub.f32 %v18, %v73
  %v90 = vsub.f32 %v19, %v74
  %v91 = vsub.f32 %v20, %v75
  %v92 = vsub.f32 %v21, %v76
  %v93 = vsub.f32 %v22, %v77
  %v94 = vsub.f32 %v23, %v78
  %v95 = vsub.f32 %v24, %v79
  %v96 = vsub.f32 %v25, %v80
  %v97 = vsub.f32 %v26, %v81
  %v98 = vsub.f32 %v27, %v82
  %v99 = vsub.f32 %v28, %v83
  %v100 = vsub.f32 %v29, %v84
  %v101 = vsub.f32 %v30, %v85
  %v102 = vsub.f32 %v31, %v86
  %v103 = vsub.f32 %v32, %v87
  %v104 = vmul.f32 %v88, %v88
  %v105 = vmul.f32 %v89, %v89
  %v106 = vmul.f32 %v90, %v90
  %v107 = vmul.f32 %v91, %v91
  %v108 = vmul.f32 %v92, %v92
  %v109 = vmul.f32 %v93, %v93
  %v110 = vmul.f32 %v94, %v94
  %v111 = vmul.f32 %v95, %v95
  %v112 = vmul.f32 %v96, %v96
  %v113 = vmul.f32 %v97, %v97
  %v114 = vmul.f32 %v98, %v98
  %v115 = vmul.f32 %v99, %v99
  %v116 = vmul.f32 %v100, %v100
  %v117 = vmul.f32 %v101, %v101
  %v118 = vmul.f32 %v102, %v102
  %v119 = vmul.f32 %v103, %v103
  %120 = vadd.xlane.f32.xlu0 %v104
  %v121 = vpop.xlane.xlu0 %120
  %122 = vadd.xlane.f32.xlu0 %v105
  %v123 = vpop.xlane.xlu0 %122
  %124 = vadd.xlane.f32.xlu0 %v106
  %v125 = vpop.xlane.xlu0 %124
  %126 = vadd.xlane.f32.xlu0 %v107
  %v127 = vpop.xlane.xlu0 %126
  %128 = vadd.xlane.f32.xlu0 %v108
  %v129 = vpop.xlane.xlu0 %128
  %130 = vadd.xlane.f32.xlu0 %v109
  %v131 = vpop.xlane.xlu0 %130
  %132 = vadd.xlane.f32.xlu0 %v110
  %v133 = vpop.xlane.xlu0 %132
  %134 = vadd.xlane.f32.xlu0 %v111
  %v135 = vpop.xlane.xlu0 %134
  %136 = vadd.xlane.f32.xlu0 %v112
  %v137 = vpop.xlane.xlu0 %136
  %138 = vadd.xlane.f32.xlu0 %v113
  %v139 = vpop.xlane.xlu0 %138
  %140 = vadd.xlane.f32.xlu0 %v114
  %v141 = vpop.xlane.xlu0 %140
  %142 = vadd.xlane.f32.xlu0 %v115
  %v143 = vpop.xlane.xlu0 %142
  %144 = vadd.xlane.f32.xlu0 %v116
  %v145 = vpop.xlane.xlu0 %144
  %146 = vadd.xlane.f32.xlu0 %v117
  %v147 = vpop.xlane.xlu0 %146
  %148 = vadd.xlane.f32.xlu0 %v118
  %v149 = vpop.xlane.xlu0 %148
  %150 = vadd.xlane.f32.xlu0 %v119
  %v151 = vpop.xlane.xlu0 %150
  %v152 = vmul.f32 %v121, %v71
  %v153 = vmul.f32 %v123, %v71
  %v154 = vmul.f32 %v125, %v71
  %v155 = vmul.f32 %v127, %v71
  %v156 = vmul.f32 %v129, %v71
  %v157 = vmul.f32 %v131, %v71
  %v158 = vmul.f32 %v133, %v71
  %v159 = vmul.f32 %v135, %v71
  %v160 = vmul.f32 %v137, %v71
  %v161 = vmul.f32 %v139, %v71
  %v162 = vmul.f32 %v141, %v71
  %v163 = vmul.f32 %v143, %v71
  %v164 = vmul.f32 %v145, %v71
  %v165 = vmul.f32 %v147, %v71
  %v166 = vmul.f32 %v149, %v71
  %v167 = vmul.f32 %v151, %v71
  %v168 = vadd.f32 %v152, 1e-05
  %v169 = vadd.f32 %v153, 1e-05
  %v170 = vadd.f32 %v154, 1e-05
  %v171 = vadd.f32 %v155, 1e-05
  %v172 = vadd.f32 %v156, 1e-05
  %v173 = vadd.f32 %v157, 1e-05
  %v174 = vadd.f32 %v158, 1e-05
  %v175 = vadd.f32 %v159, 1e-05
  %v176 = vadd.f32 %v160, 1e-05
  %v177 = vadd.f32 %v161, 1e-05
  %v178 = vadd.f32 %v162, 1e-05
  %v179 = vadd.f32 %v163, 1e-05
  %v180 = vadd.f32 %v164, 1e-05
  %v181 = vadd.f32 %v165, 1e-05
  %v182 = vadd.f32 %v166, 1e-05
  %v183 = vadd.f32 %v167, 1e-05
  %v184 = vrsqrt.pop %v168
  %v185 = vmul.f32 %v184, %v168
  %v186 = vmul.f32 %v185, %v184
  %v187 = vmul.f32 0.5, %v186
  %v188 = vsub.f32 1.5, %v187
  %v189 = vmul.f32 %v184, %v188
  %vm190 = vweird.f32 %v168
  %vm191 = vweird.f32 %v184
  %vm192 = vmor %vm190, %vm191
  %v193 = vsel %vm192, %v184, %v189
  %v194 = vrsqrt.pop %v169
  %v195 = vmul.f32 %v194, %v169
  %v196 = vmul.f32 %v195, %v194
  %v197 = vmul.f32 0.5, %v196
  %v198 = vsub.f32 1.5, %v197
  %v199 = vmul.f32 %v194, %v198
  %vm200 = vweird.f32 %v169
  %vm201 = vweird.f32 %v194
  %vm202 = vmor %vm200, %vm201
  %v203 = vsel %vm202, %v194, %v199
  %v204 = vrsqrt.pop %v170
  %v205 = vmul.f32 %v204, %v170
  %v206 = vmul.f32 %v205, %v204
  %v207 = vmul.f32 0.5, %v206
  %v208 = vsub.f32 1.5, %v207
  %v209 = vmul.f32 %v204, %v208
  %vm210 = vweird.f32 %v170
  %vm211 = vweird.f32 %v204
  %vm212 = vmor %vm210, %vm211
  %v213 = vsel %vm212, %v204, %v209
  %v214 = vrsqrt.pop %v171
  %v215 = vmul.f32 %v214, %v171
  %v216 = vmul.f32 %v215, %v214
  %v217 = vmul.f32 0.5, %v216
  %v218 = vsub.f32 1.5, %v217
  %v219 = vmul.f32 %v214, %v218
  %vm220 = vweird.f32 %v171
  %vm221 = vweird.f32 %v214
  %vm222 = vmor %vm220, %vm221
  %v223 = vsel %vm222, %v214, %v219
  %v224 = vrsqrt.pop %v172
  %v225 = vmul.f32 %v224, %v172
  %v226 = vmul.f32 %v225, %v224
  %v227 = vmul.f32 0.5, %v226
  %v228 = vsub.f32 1.5, %v227
  %v229 = vmul.f32 %v224, %v228
  %vm230 = vweird.f32 %v172
  %vm231 = vweird.f32 %v224
  %vm232 = vmor %vm230, %vm231
  %v233 = vsel %vm232, %v224, %v229
  %v234 = vrsqrt.pop %v173
  %v235 = vmul.f32 %v234, %v173
  %v236 = vmul.f32 %v235, %v234
  %v237 = vmul.f32 0.5, %v236
  %v238 = vsub.f32 1.5, %v237
  %v239 = vmul.f32 %v234, %v238
  %vm240 = vweird.f32 %v173
  %vm241 = vweird.f32 %v234
  %vm242 = vmor %vm240, %vm241
  %v243 = vsel %vm242, %v234, %v239
  %v244 = vrsqrt.pop %v174
  %v245 = vmul.f32 %v244, %v174
  %v246 = vmul.f32 %v245, %v244
  %v247 = vmul.f32 0.5, %v246
  %v248 = vsub.f32 1.5, %v247
  %v249 = vmul.f32 %v244, %v248
  %vm250 = vweird.f32 %v174
  %vm251 = vweird.f32 %v244
  %vm252 = vmor %vm250, %vm251
  %v253 = vsel %vm252, %v244, %v249
  %v254 = vrsqrt.pop %v175
  %v255 = vmul.f32 %v254, %v175
  %v256 = vmul.f32 %v255, %v254
  %v257 = vmul.f32 0.5, %v256
  %v258 = vsub.f32 1.5, %v257
  %v259 = vmul.f32 %v254, %v258
  %vm260 = vweird.f32 %v175
  %vm261 = vweird.f32 %v254
  %vm262 = vmor %vm260, %vm261
  %v263 = vsel %vm262, %v254, %v259
  %v264 = vrsqrt.pop %v176
  %v265 = vmul.f32 %v264, %v176
  %v266 = vmul.f32 %v265, %v264
  %v267 = vmul.f32 0.5, %v266
  %v268 = vsub.f32 1.5, %v267
  %v269 = vmul.f32 %v264, %v268
  %vm270 = vweird.f32 %v176
  %vm271 = vweird.f32 %v264
  %vm272 = vmor %vm270, %vm271
  %v273 = vsel %vm272, %v264, %v269
  %v274 = vrsqrt.pop %v177
  %v275 = vmul.f32 %v274, %v177
  %v276 = vmul.f32 %v275, %v274
  %v277 = vmul.f32 0.5, %v276
  %v278 = vsub.f32 1.5, %v277
  %v279 = vmul.f32 %v274, %v278
  %vm280 = vweird.f32 %v177
  %vm281 = vweird.f32 %v274
  %vm282 = vmor %vm280, %vm281
  %v283 = vsel %vm282, %v274, %v279
  %v284 = vrsqrt.pop %v178
  %v285 = vmul.f32 %v284, %v178
  %v286 = vmul.f32 %v285, %v284
  %v287 = vmul.f32 0.5, %v286
  %v288 = vsub.f32 1.5, %v287
  %v289 = vmul.f32 %v284, %v288
  %vm290 = vweird.f32 %v178
  %vm291 = vweird.f32 %v284
  %vm292 = vmor %vm290, %vm291
  %v293 = vsel %vm292, %v284, %v289
  %v294 = vrsqrt.pop %v179
  %v295 = vmul.f32 %v294, %v179
  %v296 = vmul.f32 %v295, %v294
  %v297 = vmul.f32 0.5, %v296
  %v298 = vsub.f32 1.5, %v297
  %v299 = vmul.f32 %v294, %v298
  %vm300 = vweird.f32 %v179
  %vm301 = vweird.f32 %v294
  %vm302 = vmor %vm300, %vm301
  %v303 = vsel %vm302, %v294, %v299
  %v304 = vrsqrt.pop %v180
  %v305 = vmul.f32 %v304, %v180
  %v306 = vmul.f32 %v305, %v304
  %v307 = vmul.f32 0.5, %v306
  %v308 = vsub.f32 1.5, %v307
  %v309 = vmul.f32 %v304, %v308
  %vm310 = vweird.f32 %v180
  %vm311 = vweird.f32 %v304
  %vm312 = vmor %vm310, %vm311
  %v313 = vsel %vm312, %v304, %v309
  %v314 = vrsqrt.pop %v181
  %v315 = vmul.f32 %v314, %v181
  %v316 = vmul.f32 %v315, %v314
  %v317 = vmul.f32 0.5, %v316
  %v318 = vsub.f32 1.5, %v317
  %v319 = vmul.f32 %v314, %v318
  %vm320 = vweird.f32 %v181
  %vm321 = vweird.f32 %v314
  %vm322 = vmor %vm320, %vm321
  %v323 = vsel %vm322, %v314, %v319
  %v324 = vrsqrt.pop %v182
  %v325 = vmul.f32 %v324, %v182
  %v326 = vmul.f32 %v325, %v324
  %v327 = vmul.f32 0.5, %v326
  %v328 = vsub.f32 1.5, %v327
  %v329 = vmul.f32 %v324, %v328
  %vm330 = vweird.f32 %v182
  %vm331 = vweird.f32 %v324
  %vm332 = vmor %vm330, %vm331
  %v333 = vsel %vm332, %v324, %v329
  %v334 = vrsqrt.pop %v183
  %v335 = vmul.f32 %v334, %v183
  %v336 = vmul.f32 %v335, %v334
  %v337 = vmul.f32 0.5, %v336
  %v338 = vsub.f32 1.5, %v337
  %v339 = vmul.f32 %v334, %v338
  %vm340 = vweird.f32 %v183
  %vm341 = vweird.f32 %v334
  %vm342 = vmor %vm340, %vm341
  %v343 = vsel %vm342, %v334, %v339
  %v344 = vmul.f32 %v88, %v193
  %v345 = vmul.f32 %v89, %v203
  %v346 = vmul.f32 %v90, %v213
  %v347 = vmul.f32 %v91, %v223
  %v348 = vmul.f32 %v92, %v233
  %v349 = vmul.f32 %v93, %v243
  %v350 = vmul.f32 %v94, %v253
  %v351 = vmul.f32 %v95, %v263
  %v352 = vmul.f32 %v96, %v273
  %v353 = vmul.f32 %v97, %v283
  %v354 = vmul.f32 %v98, %v293
  %v355 = vmul.f32 %v99, %v303
  %v356 = vmul.f32 %v100, %v313
  %v357 = vmul.f32 %v101, %v323
  %v358 = vmul.f32 %v102, %v333
  %v359 = vmul.f32 %v103, %v343
  %v360 = vld [vmem:[%s1] sm:$0x1]
  %v362 = vperm.slane %v360, 0
  %v364 = vmul.f32 %v344, %v362
  %v365 = vmul.f32 %v345, %v362
  %v366 = vmul.f32 %v346, %v362
  %v367 = vmul.f32 %v347, %v362
  %v368 = vmul.f32 %v348, %v362
  %v369 = vmul.f32 %v349, %v362
  %v370 = vmul.f32 %v350, %v362
  %v371 = vmul.f32 %v351, %v362
  %v372 = vmul.f32 %v352, %v362
  %v373 = vmul.f32 %v353, %v362
  %v374 = vmul.f32 %v354, %v362
  %v375 = vmul.f32 %v355, %v362
  %v376 = vmul.f32 %v356, %v362
  %v377 = vmul.f32 %v357, %v362
  %v378 = vmul.f32 %v358, %v362
  %v379 = vmul.f32 %v359, %v362
  %v380 = vld [vmem:[%s2] sm:$0x1]
  %v382 = vperm.slane %v380, 0
  %v384 = vadd.f32 %v364, %v382
  %v385 = vadd.f32 %v365, %v382
  %v386 = vadd.f32 %v366, %v382
  %v387 = vadd.f32 %v367, %v382
  %v388 = vadd.f32 %v368, %v382
  %v389 = vadd.f32 %v369, %v382
  %v390 = vadd.f32 %v370, %v382
  %v391 = vadd.f32 %v371, %v382
  %v392 = vadd.f32 %v372, %v382
  %v393 = vadd.f32 %v373, %v382
  %v394 = vadd.f32 %v374, %v382
  %v395 = vadd.f32 %v375, %v382
  %v396 = vadd.f32 %v376, %v382
  %v397 = vadd.f32 %v377, %v382
  %v398 = vadd.f32 %v378, %v382
  %v399 = vadd.f32 %v379, %v382
  %v400 = vpack.c.bf16 %v385, %v384
  %v401 = vpack.c.bf16 %v387, %v386
  %v402 = vpack.c.bf16 %v389, %v388
  %v403 = vpack.c.bf16 %v391, %v390
  %v404 = vpack.c.bf16 %v393, %v392
  %v405 = vpack.c.bf16 %v395, %v394
  %v406 = vpack.c.bf16 %v397, %v396
  %v407 = vpack.c.bf16 %v399, %v398
  %v408 = vld [vmem:[%s3] sm:$0xff]
  %v409 = vld [vmem:[%s3 + $0x8] sm:$0xf]
  %v410 = vld [vmem:[%s3 + $0xc] sm:$0xff]
  %v411 = vld [vmem:[%s3 + $0x14] sm:$0xf]
  %v412 = vld [vmem:[%s3 + $0x18] sm:$0xff]
  %v413 = vld [vmem:[%s3 + $0x20] sm:$0xf]
  %v414 = vld [vmem:[%s3 + $0x24] sm:$0xff]
  %v415 = vld [vmem:[%s3 + $0x2c] sm:$0xf]
  %v416 = vld [vmem:[%s3 + $0x30] sm:$0xff]
  %v417 = vld [vmem:[%s3 + $0x38] sm:$0xf]
  %v418 = vld [vmem:[%s3 + $0x3c] sm:$0xff]
  %v419 = vld [vmem:[%s3 + $0x44] sm:$0xf]
  %v420 = vld [vmem:[%s3 + $0x48] sm:$0xff]
  %v421 = vld [vmem:[%s3 + $0x50] sm:$0xf]
  %v422 = vld [vmem:[%s3 + $0x54] sm:$0xff]
  %v423 = vld [vmem:[%s3 + $0x5c] sm:$0xf]
  %v424 = vld [vmem:[%s3 + $0x60] sm:$0xff]
  %v425 = vld [vmem:[%s3 + $0x68] sm:$0xf]
  %v426 = vld [vmem:[%s3 + $0x6c] sm:$0xff]
  %v427 = vld [vmem:[%s3 + $0x74] sm:$0xf]
  %v428 = vld [vmem:[%s3 + $0x78] sm:$0xff]
  %v429 = vld [vmem:[%s3 + $0x80] sm:$0xf]
  %v430 = vld [vmem:[%s3 + $0x84] sm:$0xff]
  %v431 = vld [vmem:[%s3 + $0x8c] sm:$0xf]
  %v432 = vld [vmem:[%s3 + $0x90] sm:$0xff]
  %v433 = vld [vmem:[%s3 + $0x98] sm:$0xf]
  %v434 = vld [vmem:[%s3 + $0x9c] sm:$0xff]
  %v435 = vld [vmem:[%s3 + $0xa4] sm:$0xf]
  %v436 = vld [vmem:[%s3 + $0xa8] sm:$0xff]
  %v437 = vld [vmem:[%s3 + $0xb0] sm:$0xf]
  %v438 = vld [vmem:[%s3 + $0xb4] sm:$0xff]
  %v439 = vld [vmem:[%s3 + $0xbc] sm:$0xf]
  %v472 = vunpack.c.l.b16 %v408
  %v473 = vunpack.c.h.b16 %v408
  %v474 = vunpack.c.l.b16 %v409
  %v475 = vunpack.c.l.b16 %v410
  %v476 = vunpack.c.h.b16 %v410
  %v477 = vunpack.c.l.b16 %v411
  %v478 = vunpack.c.l.b16 %v412
  %v479 = vunpack.c.h.b16 %v412
  %v480 = vunpack.c.l.b16 %v413
  %v481 = vunpack.c.l.b16 %v414
  %v482 = vunpack.c.h.b16 %v414
  %v483 = vunpack.c.l.b16 %v415
  %v484 = vunpack.c.l.b16 %v416
  %v485 = vunpack.c.h.b16 %v416
  %v486 = vunpack.c.l.b16 %v417
  %v487 = vunpack.c.l.b16 %v418
  %v488 = vunpack.c.h.b16 %v418
  %v489 = vunpack.c.l.b16 %v419
  %v490 = vunpack.c.l.b16 %v420
  %v491 = vunpack.c.h.b16 %v420
  %v492 = vunpack.c.l.b16 %v421
  %v493 = vunpack.c.l.b16 %v422
  %v494 = vunpack.c.h.b16 %v422
  %v495 = vunpack.c.l.b16 %v423
  %v496 = vunpack.c.l.b16 %v424
  %v497 = vunpack.c.h.b16 %v424
  %v498 = vunpack.c.l.b16 %v425
  %v499 = vunpack.c.l.b16 %v426
  %v500 = vunpack.c.h.b16 %v426
  %v501 = vunpack.c.l.b16 %v427
  %v502 = vunpack.c.l.b16 %v428
  %v503 = vunpack.c.h.b16 %v428
  %v504 = vunpack.c.l.b16 %v429
  %v505 = vunpack.c.l.b16 %v430
  %v506 = vunpack.c.h.b16 %v430
  %v507 = vunpack.c.l.b16 %v431
  %v508 = vunpack.c.l.b16 %v432
  %v509 = vunpack.c.h.b16 %v432
  %v510 = vunpack.c.l.b16 %v433
  %v511 = vunpack.c.l.b16 %v434
  %v512 = vunpack.c.h.b16 %v434
  %v513 = vunpack.c.l.b16 %v435
  %v514 = vunpack.c.l.b16 %v436
  %v515 = vunpack.c.h.b16 %v436
  %v516 = vunpack.c.l.b16 %v437
  %v517 = vunpack.c.l.b16 %v438
  %v518 = vunpack.c.h.b16 %v438
  %v519 = vunpack.c.l.b16 %v439
  %v520 = vpack.c.b16 %v475, %v472
  %v521 = vpack.c.b16 %v476, %v473
  %v522 = vpack.c.b16 %v477, %v474
  %v523 = vpack.c.b16 %v481, %v478
  %v524 = vpack.c.b16 %v482, %v479
  %v525 = vpack.c.b16 %v483, %v480
  %v526 = vpack.c.b16 %v487, %v484
  %v527 = vpack.c.b16 %v488, %v485
  %v528 = vpack.c.b16 %v489, %v486
  %v529 = vpack.c.b16 %v493, %v490
  %v530 = vpack.c.b16 %v494, %v491
  %v531 = vpack.c.b16 %v495, %v492
  %v532 = vpack.c.b16 %v499, %v496
  %v533 = vpack.c.b16 %v500, %v497
  %v534 = vpack.c.b16 %v501, %v498
  %v535 = vpack.c.b16 %v505, %v502
  %v536 = vpack.c.b16 %v506, %v503
  %v537 = vpack.c.b16 %v507, %v504
  %v538 = vpack.c.b16 %v511, %v508
  %v539 = vpack.c.b16 %v512, %v509
  %v540 = vpack.c.b16 %v513, %v510
  %v541 = vpack.c.b16 %v517, %v514
  %v542 = vpack.c.b16 %v518, %v515
  %v543 = vpack.c.b16 %v519, %v516
  %568 = vmatpush.bf16.msra.mxu0 %v541
  %569 = vmatpush.bf16.msra.mxu0 %v538
  %570 = vmatpush.bf16.msra.mxu0 %v535
  %571 = vmatpush.bf16.msra.mxu0 %v532
  %572 = vmatpush.bf16.msra.mxu0 %v529
  %573 = vmatpush.bf16.msra.mxu0 %v526
  %574 = vmatpush.bf16.msra.mxu0 %v523
  %575 = vmatpush.bf16.msra.mxu0 %v520
  %576 = vmatmul.bf16.gmra.mxu0 %v400
  %v577 = vpop.f32.mrf.mxu0
  %v578 = vadd.f32 0.0, %v577
  %v579 = vpop.f32.mrf.mxu0
  %v580 = vadd.f32 0.0, %v579
  %581 = vmatmul.bf16.gmra.mxu0 %v401
  %v582 = vpop.f32.mrf.mxu0
  %v583 = vadd.f32 0.0, %v582
  %v584 = vpop.f32.mrf.mxu0
  %v585 = vadd.f32 0.0, %v584
  %586 = vmatmul.bf16.gmra.mxu0 %v402
  %v587 = vpop.f32.mrf.mxu0
  %v588 = vadd.f32 0.0, %v587
  %v589 = vpop.f32.mrf.mxu0
  %v590 = vadd.f32 0.0, %v589
  %591 = vmatmul.bf16.gmra.mxu0 %v403
  %v592 = vpop.f32.mrf.mxu0
  %v593 = vadd.f32 0.0, %v592
  %v594 = vpop.f32.mrf.mxu0
  %v595 = vadd.f32 0.0, %v594
  %596 = vmatmul.bf16.gmra.mxu0 %v404
  %v597 = vpop.f32.mrf.mxu0
  %v598 = vadd.f32 0.0, %v597
  %v599 = vpop.f32.mrf.mxu0
  %v600 = vadd.f32 0.0, %v599
  %601 = vmatmul.bf16.gmra.mxu0 %v405
  %v602 = vpop.f32.mrf.mxu0
  %v603 = vadd.f32 0.0, %v602
  %v604 = vpop.f32.mrf.mxu0
  %v605 = vadd.f32 0.0, %v604
  %606 = vmatmul.bf16.gmra.mxu0 %v406
  %v607 = vpop.f32.mrf.mxu0
  %v608 = vadd.f32 0.0, %v607
  %v609 = vpop.f32.mrf.mxu0
  %v610 = vadd.f32 0.0, %v609
  %611 = vmatmul.bf16.gmra.mxu0 %v407
  %v612 = vpop.f32.mrf.mxu0
  %v613 = vadd.f32 0.0, %v612
  %v614 = vpop.f32.mrf.mxu0
  %v615 = vadd.f32 0.0, %v614
  %616 = vdwg.mxu0
  %617 = vmatpush.bf16.msra.mxu0 %v542
  %618 = vmatpush.bf16.msra.mxu0 %v539
  %619 = vmatpush.bf16.msra.mxu0 %v536
  %620 = vmatpush.bf16.msra.mxu0 %v533
  %621 = vmatpush.bf16.msra.mxu0 %v530
  %622 = vmatpush.bf16.msra.mxu0 %v527
  %623 = vmatpush.bf16.msra.mxu0 %v524
  %624 = vmatpush.bf16.msra.mxu0 %v521
  %625 = vmatmul.bf16.gmra.mxu0 %v400
  %v626 = vpop.f32.mrf.mxu0
  %v627 = vadd.f32 0.0, %v626
  %v628 = vpop.f32.mrf.mxu0
  %v629 = vadd.f32 0.0, %v628
  %630 = vmatmul.bf16.gmra.mxu0 %v401
  %v631 = vpop.f32.mrf.mxu0
  %v632 = vadd.f32 0.0, %v631
  %v633 = vpop.f32.mrf.mxu0
  %v634 = vadd.f32 0.0, %v633
  %635 = vmatmul.bf16.gmra.mxu0 %v402
  %v636 = vpop.f32.mrf.mxu0
  %v637 = vadd.f32 0.0, %v636
  %v638 = vpop.f32.mrf.mxu0
  %v639 = vadd.f32 0.0, %v638
  %640 = vmatmul.bf16.gmra.mxu0 %v403
  %v641 = vpop.f32.mrf.mxu0
  %v642 = vadd.f32 0.0, %v641
  %v643 = vpop.f32.mrf.mxu0
  %v644 = vadd.f32 0.0, %v643
  %645 = vmatmul.bf16.gmra.mxu0 %v404
  %v646 = vpop.f32.mrf.mxu0
  %v647 = vadd.f32 0.0, %v646
  %v648 = vpop.f32.mrf.mxu0
  %v649 = vadd.f32 0.0, %v648
  %650 = vmatmul.bf16.gmra.mxu0 %v405
  %v651 = vpop.f32.mrf.mxu0
  %v652 = vadd.f32 0.0, %v651
  %v653 = vpop.f32.mrf.mxu0
  %v654 = vadd.f32 0.0, %v653
  %655 = vmatmul.bf16.gmra.mxu0 %v406
  %v656 = vpop.f32.mrf.mxu0
  %v657 = vadd.f32 0.0, %v656
  %v658 = vpop.f32.mrf.mxu0
  %v659 = vadd.f32 0.0, %v658
  %660 = vmatmul.bf16.gmra.mxu0 %v407
  %v661 = vpop.f32.mrf.mxu0
  %v662 = vadd.f32 0.0, %v661
  %v663 = vpop.f32.mrf.mxu0
  %v664 = vadd.f32 0.0, %v663
  %665 = vdwg.mxu0
  %666 = vmatpush.bf16.msra.mxu0 %v543
  %667 = vmatpush.bf16.msra.mxu0 %v540
  %668 = vmatpush.bf16.msra.mxu0 %v537
  %669 = vmatpush.bf16.msra.mxu0 %v534
  %670 = vmatpush.bf16.msra.mxu0 %v531
  %671 = vmatpush.bf16.msra.mxu0 %v528
  %672 = vmatpush.bf16.msra.mxu0 %v525
  %673 = vmatpush.bf16.msra.mxu0 %v522
  %674 = vmatmul.bf16.gmra.mxu0 %v400
  %v675 = vpop.f32.mrf.mxu0
  %v676 = vadd.f32 0.0, %v675
  %v677 = vpop.f32.mrf.mxu0
  %v678 = vadd.f32 0.0, %v677
  %679 = vmatmul.bf16.gmra.mxu0 %v401
  %v680 = vpop.f32.mrf.mxu0
  %v681 = vadd.f32 0.0, %v680
  %v682 = vpop.f32.mrf.mxu0
  %v683 = vadd.f32 0.0, %v682
  %684 = vmatmul.bf16.gmra.mxu0 %v402
  %v685 = vpop.f32.mrf.mxu0
  %v686 = vadd.f32 0.0, %v685
  %v687 = vpop.f32.mrf.mxu0
  %v688 = vadd.f32 0.0, %v687
  %689 = vmatmul.bf16.gmra.mxu0 %v403
  %v690 = vpop.f32.mrf.mxu0
  %v691 = vadd.f32 0.0, %v690
  %v692 = vpop.f32.mrf.mxu0
  %v693 = vadd.f32 0.0, %v692
  %694 = vmatmul.bf16.gmra.mxu0 %v404
  %v695 = vpop.f32.mrf.mxu0
  %v696 = vadd.f32 0.0, %v695
  %v697 = vpop.f32.mrf.mxu0
  %v698 = vadd.f32 0.0, %v697
  %699 = vmatmul.bf16.gmra.mxu0 %v405
  %v700 = vpop.f32.mrf.mxu0
  %v701 = vadd.f32 0.0, %v700
  %v702 = vpop.f32.mrf.mxu0
  %v703 = vadd.f32 0.0, %v702
  %704 = vmatmul.bf16.gmra.mxu0 %v406
  %v705 = vpop.f32.mrf.mxu0
  %v706 = vadd.f32 0.0, %v705
  %v707 = vpop.f32.mrf.mxu0
  %v708 = vadd.f32 0.0, %v707
  %709 = vmatmul.bf16.gmra.mxu0 %v407
  %v710 = vpop.f32.mrf.mxu0
  %v711 = vadd.f32 0.0, %v710
  %v712 = vpop.f32.mrf.mxu0
  %v713 = vadd.f32 0.0, %v712
  %714 = vdwg.mxu0
  %v715 = vpack.c.bf16 %v627, %v578
  %v716 = vpack.c.bf16 %v676, %v676
  %v717 = vpack.c.bf16 %v629, %v580
  %v718 = vpack.c.bf16 %v678, %v678
  %v719 = vpack.c.bf16 %v632, %v583
  %v720 = vpack.c.bf16 %v681, %v681
  %v721 = vpack.c.bf16 %v634, %v585
  %v722 = vpack.c.bf16 %v683, %v683
  %v723 = vpack.c.bf16 %v637, %v588
  %v724 = vpack.c.bf16 %v686, %v686
  %v725 = vpack.c.bf16 %v639, %v590
  %v726 = vpack.c.bf16 %v688, %v688
  %v727 = vpack.c.bf16 %v642, %v593
  %v728 = vpack.c.bf16 %v691, %v691
  %v729 = vpack.c.bf16 %v644, %v595
  %v730 = vpack.c.bf16 %v693, %v693
  %v731 = vpack.c.bf16 %v647, %v598
  %v732 = vpack.c.bf16 %v696, %v696
  %v733 = vpack.c.bf16 %v649, %v600
  %v734 = vpack.c.bf16 %v698, %v698
  %v735 = vpack.c.bf16 %v652, %v603
  %v736 = vpack.c.bf16 %v701, %v701
  %v737 = vpack.c.bf16 %v654, %v605
  %v738 = vpack.c.bf16 %v703, %v703
  %v739 = vpack.c.bf16 %v657, %v608
  %v740 = vpack.c.bf16 %v706, %v706
  %v741 = vpack.c.bf16 %v659, %v610
  %v742 = vpack.c.bf16 %v708, %v708
  %v743 = vpack.c.bf16 %v662, %v613
  %v744 = vpack.c.bf16 %v711, %v711
  %v745 = vpack.c.bf16 %v664, %v615
  %v746 = vpack.c.bf16 %v713, %v713
  %747 = vst [vmem:[%s4] sm:$0xff] %v715
  %748 = vst [vmem:[%s4 + $0x8] sm:$0xf] %v716
  %749 = vst [vmem:[%s4 + $0xc] sm:$0xff] %v717
  %750 = vst [vmem:[%s4 + $0x14] sm:$0xf] %v718
  %751 = vst [vmem:[%s4 + $0x18] sm:$0xff] %v719
  %752 = vst [vmem:[%s4 + $0x20] sm:$0xf] %v720
  %753 = vst [vmem:[%s4 + $0x24] sm:$0xff] %v721
  %754 = vst [vmem:[%s4 + $0x2c] sm:$0xf] %v722
  %755 = vst [vmem:[%s4 + $0x30] sm:$0xff] %v723
  %756 = vst [vmem:[%s4 + $0x38] sm:$0xf] %v724
  %757 = vst [vmem:[%s4 + $0x3c] sm:$0xff] %v725
  %758 = vst [vmem:[%s4 + $0x44] sm:$0xf] %v726
  %759 = vst [vmem:[%s4 + $0x48] sm:$0xff] %v727
  %760 = vst [vmem:[%s4 + $0x50] sm:$0xf] %v728
  %761 = vst [vmem:[%s4 + $0x54] sm:$0xff] %v729
  %762 = vst [vmem:[%s4 + $0x5c] sm:$0xf] %v730
  %763 = vst [vmem:[%s4 + $0x60] sm:$0xff] %v731
  %764 = vst [vmem:[%s4 + $0x68] sm:$0xf] %v732
  %765 = vst [vmem:[%s4 + $0x6c] sm:$0xff] %v733
  %766 = vst [vmem:[%s4 + $0x74] sm:$0xf] %v734
  %767 = vst [vmem:[%s4 + $0x78] sm:$0xff] %v735
  %768 = vst [vmem:[%s4 + $0x80] sm:$0xf] %v736
  %769 = vst [vmem:[%s4 + $0x84] sm:$0xff] %v737
  %770 = vst [vmem:[%s4 + $0x8c] sm:$0xf] %v738
  %771 = vst [vmem:[%s4 + $0x90] sm:$0xff] %v739
  %772 = vst [vmem:[%s4 + $0x98] sm:$0xf] %v740
  %773 = vst [vmem:[%s4 + $0x9c] sm:$0xff] %v741
  %774 = vst [vmem:[%s4 + $0xa4] sm:$0xf] %v742
  %775 = vst [vmem:[%s4 + $0xa8] sm:$0xff] %v743
  %776 = vst [vmem:[%s4 + $0xb0] sm:$0xf] %v744
  %777 = vst [vmem:[%s4 + $0xb4] sm:$0xff] %v745
  %778 = vst [vmem:[%s4 + $0xbc] sm:$0xf] %v746
  // Predicated region
  $region18: #{basic_transformer_block.10} parent=0 // pred_check
    _
  $region19: #{basic_transformer_block.10} parent=0 // pred_check_branch
    %780 = sbr.rel (0) target = $region21
  $region20: #{basic_transformer_block.10} parent=0 // pred_region
    _
  $region21: #{basic_transformer_block.10} parent=0 // pred_fallthru
    _
  // Predicated region
  $region22: #{basic_transformer_block.10} parent=0 // pred_check
    _
  $region23: #{basic_transformer_block.10} parent=0 // pred_check_branch
    %782 = sbr.rel (0) target = $region25
  $region24: #{basic_transformer_block.10} parent=0 // pred_region
    _
  $region25: #{basic_transformer_block.10} parent=0 // pred_fallthru
    _

// kernel: custom-call.14
$region0: #{custom-call.14}
  %s0 = inlined_call_operand.vmem [shape: f32[16,16], index: 0, kind: input, shape index: {}]
  %s1 = inlined_call_operand.vmem [shape: f32[16,16], index: 1, kind: output, shape index: {0}]
  %s2 = inlined_call_operand.hbm [shape: s32[16], index: 2, kind: output, shape index: {1}]
  %s3 = inlined_call_operand.vmem [shape: s32[16], index: 3, kind: output, shape index: {2}]
  %4 = xla_tuple %s1, %s2, %s3
  $region1: #{custom-call.14} parent=0
    #allocation0 [shape = 'u8[8192]{0}', space=vmem, size = 0x2000, scoped, tag = 'operand span for operand 0']
    #allocation1 [shape = 'u8[8192]{0}', space=vmem, size = 0x2000, scoped, tag = 'operand span for operand 1']
    #allocation2 [shape = 'u8[4096]{0}', space=vmem, size = 0x1000, scoped, tag = 'operand span for operand 2']
    #allocation3 [shape = 'u8[512]{0}', space=vmem, size = 0x400, scoped, tag = 'packed  for operand 2']
    #allocation4 [shape = 's32[1]{0}', space=sflag, size = 0x4, scoped, tag = 'scoped memory for custom-call.14']
    #allocation5 [shape = 'u8[4096]{0}', space=vmem, size = 0x1000, scoped, tag = 'operand span for operand 3']
    #allocation6 [shape = 'u8[512]{0}', space=vmem, size = 0x400, scoped, tag = 'packed  for operand 3']
    #allocation7 [shape = 's32[16,128]{1,0}', space=vmem, size = 0x2000, scoped, tag = 'scratch for permutations']
    %5 = vsyncpa [#allocation4], 0
    // Predicated region
    $region2: #{custom-call.14} parent=1 // pred_check
      _
    $region3: #{custom-call.14} parent=1 // pred_check_branch
      %7 = sbr.rel (0) target = $region5
    $region4: #{custom-call.14} parent=1 // pred_region
      %p9 = scmp.gt.s32.totalorder 2, 0
      // Predicated region
      $region6: #{custom-call.14} parent=4 // pred_check
        %p10 = pneg %p9
      $region7: #{custom-call.14} parent=4 // pred_check_branch
        %12 = sbr.rel (%p10) target = $region9
      $region8: #{custom-call.14} parent=4 // pred_region
        %s13 = ssub.s32 2, 1
        %s14 = smul.u32 %s13, 8
        %s15 = scalar_lea.vmem %s0, %s14
        %v16 = vld [vmem:[%s0] sm:$0xff]
        // While loop
        $region10: #{custom-call.14} parent=8 // loop_pre_header
          _
        $region11: #{custom-call.14} parent=8 // loop_header
          %s17 = sphi %s0, %s39
          %s18 = sphi [#allocation0], %s40
          %v19 = vphi %v16, %v41
          %s20 = ssub.s32 %s15, 64
          %p21 = scmp.gt.s32.totalorder %s17, %s20
        $region12: #{custom-call.14} parent=8 // loop_header_branch
          %23 = sbr.rel (%p21) target = $region16
        $region13: #{custom-call.14} parent=8 // loop_body
          %24 = vst [vmem:[%s18] sm:$0xff] %v19
          %v25 = vld [vmem:[%s17 + $0x8] sm:$0xff]
          %26 = vst [vmem:[%s18 + $0x8] sm:$0xff] %v25
          %v27 = vld [vmem:[%s17 + $0x10] sm:$0xff]
          %28 = vst [vmem:[%s18 + $0x10] sm:$0xff] %v27
          %v29 = vld [vmem:[%s17 + $0x18] sm:$0xff]
          %30 = vst [vmem:[%s18 + $0x18] sm:$0xff] %v29
          %v31 = vld [vmem:[%s17 + $0x20] sm:$0xff]
          %32 = vst [vmem:[%s18 + $0x20] sm:$0xff] %v31
          %v33 = vld [vmem:[%s17 + $0x28] sm:$0xff]
          %34 = vst [vmem:[%s18 + $0x28] sm:$0xff] %v33
          %v35 = vld [vmem:[%s17 + $0x30] sm:$0xff]
          %36 = vst [vmem:[%s18 + $0x30] sm:$0xff] %v35
          %v37 = vld [vmem:[%s17 + $0x38] sm:$0xff]
          %38 = vst [vmem:[%s18 + $0x38] sm:$0xff] %v37
        $region14: #{custom-call.14} parent=8 // loop_footer
          %s39 = scalar_lea.vmem %s17, 64
          %s40 = scalar_lea.vmem %s18, 64
          %v41 = vld [vmem:[%s17 + $0x40] sm:$0xff]
        $region15: #{custom-call.14} parent=8 // loop_footer_branch
          %42 = sbr.rel target = $region11
        $region16: #{custom-call.14} parent=8 // loop_exit
          _
        // While loop
        $region17: #{custom-call.14} parent=8 // loop_pre_header
          _
        $region18: #{custom-call.14} parent=8 // loop_header
          %s43 = sphi %s17, %s51
          %s44 = sphi %s18, %s52
          %v45 = vphi %v19, %v45
          %p46 = scmp.gt.s32.totalorder %s43, %s15
        $region19: #{custom-call.14} parent=8 // loop_header_branch
          %48 = sbr.rel (%p46) target = $region23
        $region20: #{custom-call.14} parent=8 // loop_body
          %v49 = vld [vmem:[%s43] sm:$0xff]
          %50 = vst [vmem:[%s44] sm:$0xff] %v49
        $region21: #{custom-call.14} parent=8 // loop_footer
          %s51 = scalar_lea.vmem %s43, 8
          %s52 = scalar_lea.vmem %s44, 8
        $region22: #{custom-call.14} parent=8 // loop_footer_branch
          %53 = sbr.rel target = $region18
        $region23: #{custom-call.14} parent=8 // loop_exit
          _
      $region9: #{custom-call.14} parent=4 // pred_fallthru
        _
      %s55 = ssub.s32 1, 1
      %s56 = smul.u32 2, 8
      %s57 = scalar_lea.vmem [#allocation0], %s56
      %s58 = smul.u32 2, 8
      %s59 = scalar_lea.vmem %s0, %s58
      %v60 = vld [vmem:[%s59] sm:%s55]
      %61 = vst [vmem:[%s57] sm:%s55] %v60
    $region5: #{custom-call.14} parent=1 // pred_fallthru
      _
    %v62 = vld [vmem:[#allocation0] sm:$0xff]
    %63 = vst [vmem:[#allocation1] sm:$0xff] %v62
    %s64 = scalar_lea.vmem [#allocation1], 8
    %s65 = scalar_lea.vmem [#allocation0], 8
    %v66 = vld [vmem:[%s65] sm:$0xff]
    %67 = vst [vmem:[%s64] sm:$0xff] %v66
    %68 = vst [vmem:[#allocation2] sm:$0x1] 0
    %v69 = vlaneseq
    %v70 = vshrl.u32 %v69, 7
    %v71 = vmov %v70
    loop: start=0, step=1, limit=2
    $region24: #{custom-call.14} parent=1 // loop_pre_header
      _
    $region25: #{custom-call.14} parent=1 // loop_header
      %s73 = sphi 0, %s77
      %p74 = scmp.ge.s32.totalorder %s73, 2
    $region26: #{custom-call.14} parent=1 // loop_header_branch
      %76 = sbr.rel (%p74) target = $region30
    $region27: #{custom-call.14} parent=1 // loop_body
      %s78 = smul.addr %s73, 8
      %s79 = scalar_lea.vmem [#allocation7], %s78
      %s80 = smul.u32 %s73, 8
      %v81 = vstv %s80
      %v82 = vadd.s32 %v71, %v81
      %83 = vst [vmem:[%s79] sm:$0xff] %v82
    $region28: #{custom-call.14} parent=1 // loop_footer
      %s77 = sadd.s32 1, %s73
    $region29: #{custom-call.14} parent=1 // loop_footer_branch
      %72 = sbr.rel target = $region25
    $region30: #{custom-call.14} parent=1 // loop_exit
      _
    loop: start=0, step=1, limit=16
    $region31: #{custom-call.14} parent=1 // loop_pre_header
      _
    $region32: #{custom-call.14} parent=1 // loop_header
      %s85 = sphi 0, %s89
      %p86 = scmp.ge.s32.totalorder %s85, 16
    $region33: #{custom-call.14} parent=1 // loop_header_branch
      %88 = sbr.rel (%p86) target = $region37
    $region34: #{custom-call.14} parent=1 // loop_body
      %v90 = vstv %s85
      %v91 = vlaneseq
      %v92 = vshrl.u32 %v91, 7
      %v93 = vmov %v92
      %v94 = vld [vmem:[#allocation1] sm:$0xff]
      %v95 = vand.u32 2147483647, %v94
      %v97 = vstv %s85
      %vm98 = vcmp.ge.s32.totalorder %v93, %v97
      %vm99 = vcmp.lt.s32.totalorder %v93, 16
      %vm100 = vmand %vm98, %vm99
      %vm101 = vcmp.lt.f32.partialorder -inf, %v95
      %vm102 = vmand %vm100, %vm101
      %v103 = vsel %vm102, %v93, %v90
      %v104 = vsel %vm102, %v95, -inf
      %s105 = scalar_lea.vmem [#allocation1], 8
      %v106 = vld [vmem:[%s105] sm:$0xff]
      %v107 = vand.u32 2147483647, %v106
      %v108 = vadd.s32 %v93, 8
      %v109 = vstv %s85
      %vm110 = vcmp.ge.s32.totalorder %v108, %v109
      %vm111 = vcmp.lt.s32.totalorder %v108, 16
      %vm112 = vmand %vm110, %vm111
      %vm113 = vcmp.lt.f32.partialorder %v104, %v107
      %vm114 = vmand %vm112, %vm113
      %v115 = vsel %vm114, %v108, %v103
      %v116 = vsel %vm114, %v107, %v104
      %v117 = vrot.slane %v116, 1
      %v118 = vrot.slane %v115, 1
      %vm119 = vcmp.ge.f32.partialorder %v117, %v116
      %v120 = vsel %vm119, %v117, %v116
      %v121 = vsel %vm119, %v118, %v115
      %v122 = vrot.slane %v117, 1
      %v123 = vrot.slane %v118, 1
      %vm124 = vcmp.ge.f32.partialorder %v122, %v120
      %v125 = vsel %vm124, %v122, %v120
      %v126 = vsel %vm124, %v123, %v121
      %v127 = vrot.slane %v122, 1
      %v128 = vrot.slane %v123, 1
      %vm129 = vcmp.ge.f32.partialorder %v127, %v125
      %v130 = vsel %vm129, %v127, %v125
      %v131 = vsel %vm129, %v128, %v126
      %v132 = vrot.slane %v127, 1
      %v133 = vrot.slane %v128, 1
      %vm134 = vcmp.ge.f32.partialorder %v132, %v130
      %v135 = vsel %vm134, %v132, %v130
      %v136 = vsel %vm134, %v133, %v131
      %v137 = vrot.slane %v132, 1
      %v138 = vrot.slane %v133, 1
      %vm139 = vcmp.ge.f32.partialorder %v137, %v135
      %v140 = vsel %vm139, %v137, %v135
      %v141 = vsel %vm139, %v138, %v136
      %v142 = vrot.slane %v137, 1
      %v143 = vrot.slane %v138, 1
      %vm144 = vcmp.ge.f32.partialorder %v142, %v140
      %v145 = vsel %vm144, %v142, %v140
      %v146 = vsel %vm144, %v143, %v141
      %v147 = vrot.slane %v142, 1
      %v148 = vrot.slane %v143, 1
      %vm149 = vcmp.ge.f32.partialorder %v147, %v145
      %v150 = vsel %vm149, %v147, %v145
      %v151 = vsel %vm149, %v148, %v146
      %s152 = ssub.s32 128, %s85
      %153 = vrot.lane.b32.xlu0 %v151, %s152
      %v154 = vpop.permute.xlu0 %153
      %s155 = vtos %v154
      %v156 = vstv %s85
      %v157 = vlaneseq
      %v158 = vand.u32 %v157, 127
      %vm159 = vcmp.eq.s32.totalorder %v158, %v156
      %v160 = vstv %s155
      %v161 = vld [vmem:[#allocation2] ss:$0 sm:$0xff]
      %v162 = vsel %vm159, %v160, %v161
      %163 = vst [vmem:[#allocation2] sm:$0x1] %v162
      %s164 = scalar_lea.vmem [#allocation1], %s85
      %s165 = scalar_lea.vmem [#allocation1], %s155
      %v166 = vld [vmem:[%s164] ss:$0 sm:$0xff]
      %v167 = vld [vmem:[%s165] ss:$0 sm:$0xff]
      %168 = vst [vmem:[%s165] sm:$0x1] %v166
      %169 = vst [vmem:[%s164] sm:$0x1] %v167
      %s170 = scalar_lea.vmem [#allocation7], %s85
      %s171 = scalar_lea.vmem [#allocation7], %s155
      %v172 = vld [vmem:[%s170] ss:$0 sm:$0xff]
      %v173 = vld [vmem:[%s171] ss:$0 sm:$0xff]
      %174 = vst [vmem:[%s171] sm:$0x1] %v172
      %175 = vst [vmem:[%s170] sm:$0x1] %v173
      %vm176 = vcmp.ne.f32.partialorder %v167, 0.0
      %vm177 = vmand %vm159, %vm176
      %v178 = vsel %vm177, %v167, 1.0
      %v179 = vlaneseq
      %v180 = vand.u32 %v179, 127
      %v181 = vstv %s85
      %vm182 = vcmp.gt.s32.totalorder %v180, %v181
      %v183 = vsel %vm182, %v167, 0.0
      %v184 = vlaneseq
      %v185 = vshrl.u32 %v184, 7
      %v186 = vmov %v185
      %v187 = vld [vmem:[#allocation1] sm:$0xff]
      %v189 = vstv %s85
      %vm190 = vcmp.gt.s32.totalorder %v186, %v189
      %v191 = vsel %vm190, %v178, 1.0
      %v192 = vrcp.pop %v191
      %v193 = vmul.f32 %v191, %v192
      %v194 = vsub.f32 1.0, %v193
      %v195 = vmul.f32 %v192, %v194
      %v196 = vadd.f32 %v192, %v195
      %vm197 = vweird.f32 %v191
      %vm198 = vweird.f32 %v192
      %vm199 = vmor %vm197, %vm198
      %v200 = vsel %vm199, %v192, %v196
      %v201 = vand.u32 2147483647, %v191
      %vm202 = vcmp.eq.f32.partialorder %v201, 8.507059e+37
      %v203 = vand.u32 %v191, 2147483648
      %v204 = vor.u32 1.1754944e-38, %v203
      %v205 = vsel %vm202, %v204, %v200
      %v206 = vmul.f32 %v187, %v205
      %vm207 = vmand %vm190, %vm159
      %v208 = vsel %vm207, %v206, 0.0
      %209 = vadd.xlane.f32.xlu0 %v208
      %v210 = vpop.xlane.xlu0 %209
      %v211 = vmul.f32 %v210, %v183
      %v212 = vsub.f32 %v206, %v211
      %213 = vst [vmem:[#allocation1] sm:$0xff] %v212
      %s214 = scalar_lea.vmem [#allocation1], 8
      %v215 = vld [vmem:[%s214] sm:$0xff]
      %v216 = vadd.s32 %v186, 8
      %v217 = vstv %s85
      %vm218 = vcmp.gt.s32.totalorder %v216, %v217
      %v219 = vsel %vm218, %v178, 1.0
      %v220 = vrcp.pop %v219
      %v221 = vmul.f32 %v219, %v220
      %v222 = vsub.f32 1.0, %v221
      %v223 = vmul.f32 %v220, %v222
      %v224 = vadd.f32 %v220, %v223
      %vm225 = vweird.f32 %v219
      %vm226 = vweird.f32 %v220
      %vm227 = vmor %vm225, %vm226
      %v228 = vsel %vm227, %v220, %v224
      %v229 = vand.u32 2147483647, %v219
      %vm230 = vcmp.eq.f32.partialorder %v229, 8.507059e+37
      %v231 = vand.u32 %v219, 2147483648
      %v232 = vor.u32 1.1754944e-38, %v231
      %v233 = vsel %vm230, %v232, %v228
      %v234 = vmul.f32 %v215, %v233
      %vm235 = vmand %vm218, %vm159
      %v236 = vsel %vm235, %v234, 0.0
      %237 = vadd.xlane.f32.xlu0 %v236
      %v238 = vpop.xlane.xlu0 %237
      %v239 = vmul.f32 %v238, %v183
      %v240 = vsub.f32 %v234, %v239
      %241 = vst [vmem:[%s214] sm:$0xff] %v240
    $region35: #{custom-call.14} parent=1 // loop_footer
      %s89 = sadd.s32 1, %s85
    $region36: #{custom-call.14} parent=1 // loop_footer_branch
      %84 = sbr.rel target = $region32
    $region37: #{custom-call.14} parent=1 // loop_exit
      _
    %v242 = vld [vmem:[#allocation7] sm:$0xff]
    %s243 = scalar_lea.vmem [#allocation7], 8
    %v244 = vld [vmem:[%s243] sm:$0xff]
    %s245 = scalar_lea.vmem [#allocation7], 16
    %s246 = scalar_lea.vmem [#allocation7], 24
    %s247 = scalar_lea.vmem [#allocation7], 32
    %s248 = scalar_lea.vmem [#allocation7], 40
    %s249 = scalar_lea.vmem [#allocation7], 48
    %s250 = scalar_lea.vmem [#allocation7], 56
    %s251 = scalar_lea.vmem [#allocation7], 64
    %s252 = scalar_lea.vmem [#allocation7], 72
    %s253 = scalar_lea.vmem [#allocation7], 80
    %s254 = scalar_lea.vmem [#allocation7], 88
    %s255 = scalar_lea.vmem [#allocation7], 96
    %s256 = scalar_lea.vmem [#allocation7], 104
    %s257 = scalar_lea.vmem [#allocation7], 112
    %s258 = scalar_lea.vmem [#allocation7], 120
    %259 = vxpose.xlu0.b32.start [1/16] %v242, 128
    %260 = vxpose.xlu0.b32.cont [2/16] %v244, 128
    %261 = vxpose.xlu0.b32.cont [3/16] 0, 128
    %262 = vxpose.xlu0.b32.cont [4/16] 0, 128
    %263 = vxpose.xlu0.b32.cont [5/16] 0, 128
    %264 = vxpose.xlu0.b32.cont [6/16] 0, 128
    %265 = vxpose.xlu0.b32.cont [7/16] 0, 128
    %266 = vxpose.xlu0.b32.cont [8/16] 0, 128
    %267 = vxpose.xlu0.b32.cont [9/16] 0, 128
    %268 = vxpose.xlu0.b32.cont [10/16] 0, 128
    %269 = vxpose.xlu0.b32.cont [11/16] 0, 128
    %270 = vxpose.xlu0.b32.cont [12/16] 0, 128
    %271 = vxpose.xlu0.b32.cont [13/16] 0, 128
    %272 = vxpose.xlu0.b32.cont [14/16] 0, 128
    %273 = vxpose.xlu0.b32.cont [15/16] 0, 128
    %274 = vxpose.xlu0.b32.end [16/16] 0, 128
    %v275 = vpop.trf.xlu0
    %v276 = vpop.trf.xlu0
    %v277 = vpop.trf.xlu0
    %v278 = vpop.trf.xlu0
    %v279 = vpop.trf.xlu0
    %v280 = vpop.trf.xlu0
    %v281 = vpop.trf.xlu0
    %v282 = vpop.trf.xlu0
    %v283 = vpop.trf.xlu0
    %v284 = vpop.trf.xlu0
    %v285 = vpop.trf.xlu0
    %v286 = vpop.trf.xlu0
    %v287 = vpop.trf.xlu0
    %v288 = vpop.trf.xlu0
    %v289 = vpop.trf.xlu0
    %v290 = vpop.trf.xlu0
    %291 = vst [vmem:[#allocation5] sm:$0x1] %v275
    %s293 = ssub.s32 2, 1
    %v294 = vld [vmem:[#allocation2] sm:%s293]
    %s296 = ssub.s32 2, 1
    %297 = vst [vmem:[#allocation3] sm:%s296] %v294
    %s299 = ssub.s32 2, 1
    %v300 = vld [vmem:[#allocation5] sm:%s299]
    %s302 = ssub.s32 2, 1
    %303 = vst [vmem:[#allocation6] sm:%s302] %v300
    // Predicated region
    $region38: #{custom-call.14} parent=1 // pred_check
      _
    $region39: #{custom-call.14} parent=1 // pred_check_branch
      %305 = sbr.rel (0) target = $region41
    $region40: #{custom-call.14} parent=1 // pred_region
      %p307 = scmp.gt.s32.totalorder 2, 0
      // Predicated region
      $region42: #{custom-call.14} parent=40 // pred_check
        %p308 = pneg %p307
      $region43: #{custom-call.14} parent=40 // pred_check_branch
        %310 = sbr.rel (%p308) target = $region45
      $region44: #{custom-call.14} parent=40 // pred_region
        %s311 = ssub.s32 2, 1
        %s312 = smul.u32 %s311, 8
        %s313 = scalar_lea.vmem [#allocation1], %s312
        %v314 = vld [vmem:[#allocation1] sm:$0xff]
        // While loop
        $region46: #{custom-call.14} parent=44 // loop_pre_header
          _
        $region47: #{custom-call.14} parent=44 // loop_header
          %s315 = sphi [#allocation1], %s337
          %s316 = sphi %s1, %s338
          %v317 = vphi %v314, %v339
          %s318 = ssub.s32 %s313, 64
          %p319 = scmp.gt.s32.totalorder %s315, %s318
        $region48: #{custom-call.14} parent=44 // loop_header_branch
          %321 = sbr.rel (%p319) target = $region52
        $region49: #{custom-call.14} parent=44 // loop_body
          %322 = vst [vmem:[%s316] sm:$0xff] %v317
          %v323 = vld [vmem:[%s315 + $0x8] sm:$0xff]
          %324 = vst [vmem:[%s316 + $0x8] sm:$0xff] %v323
          %v325 = vld [vmem:[%s315 + $0x10] sm:$0xff]
          %326 = vst [vmem:[%s316 + $0x10] sm:$0xff] %v325
          %v327 = vld [vmem:[%s315 + $0x18] sm:$0xff]
          %328 = vst [vmem:[%s316 + $0x18] sm:$0xff] %v327
          %v329 = vld [vmem:[%s315 + $0x20] sm:$0xff]
          %330 = vst [vmem:[%s316 + $0x20] sm:$0xff] %v329
          %v331 = vld [vmem:[%s315 + $0x28] sm:$0xff]
          %332 = vst [vmem:[%s316 + $0x28] sm:$0xff] %v331
          %v333 = vld [vmem:[%s315 + $0x30] sm:$0xff]
          %334 = vst [vmem:[%s316 + $0x30] sm:$0xff] %v333
          %v335 = vld [vmem:[%s315 + $0x38] sm:$0xff]
          %336 = vst [vmem:[%s316 + $0x38] sm:$0xff] %v335
        $region50: #{custom-call.14} parent=44 // loop_footer
          %s337 = scalar_lea.vmem %s315, 64
          %s338 = scalar_lea.vmem %s316, 64
          %v339 = vld [vmem:[%s315 + $0x40] sm:$0xff]
        $region51: #{custom-call.14} parent=44 // loop_footer_branch
          %340 = sbr.rel target = $region47
        $region52: #{custom-call.14} parent=44 // loop_exit
          _
        // While loop
        $region53: #{custom-call.14} parent=44 // loop_pre_header
          _
        $region54: #{custom-call.14} parent=44 // loop_header
          %s341 = sphi %s315, %s349
          %s342 = sphi %s316, %s350
          %v343 = vphi %v317, %v343
          %p344 = scmp.gt.s32.totalorder %s341, %s313
        $region55: #{custom-call.14} parent=44 // loop_header_branch
          %346 = sbr.rel (%p344) target = $region59
        $region56: #{custom-call.14} parent=44 // loop_body
          %v347 = vld [vmem:[%s341] sm:$0xff]
          %348 = vst [vmem:[%s342] sm:$0xff] %v347
        $region57: #{custom-call.14} parent=44 // loop_footer
          %s349 = scalar_lea.vmem %s341, 8
          %s350 = scalar_lea.vmem %s342, 8
        $region58: #{custom-call.14} parent=44 // loop_footer_branch
          %351 = sbr.rel target = $region54
        $region59: #{custom-call.14} parent=44 // loop_exit
          _
      $region45: #{custom-call.14} parent=40 // pred_fallthru
        _
      %s353 = ssub.s32 1, 1
      %s354 = smul.u32 2, 8
      %s355 = scalar_lea.vmem %s1, %s354
      %s356 = smul.u32 2, 8
      %s357 = scalar_lea.vmem [#allocation1], %s356
      %v358 = vld [vmem:[%s357] sm:%s353]
      %359 = vst [vmem:[%s355] sm:%s353] %v358
    $region41: #{custom-call.14} parent=1 // pred_fallthru
      _
    // Predicated region
    $region60: #{custom-call.14} parent=1 // pred_check
      _
    $region61: #{custom-call.14} parent=1 // pred_check_branch
      %361 = sbr.rel (0) target = $region63
    $region62: #{custom-call.14} parent=1 // pred_region
      %363 = vsyncadd [#allocation4], 0
      %s365 = sshll.u32 [#allocation3], 4
      %s366 = int_to_ptr.vmem [resolvable:$true] %s365
      %s367 = sshll.u32 %s2, 4
      %s368 = int_to_ptr.hbm [resolvable:$true] %s367
      %370 = dma.vmem_to_hbm [thread:$0]  %s366, 16, %s368, [#allocation4]
    $region63: #{custom-call.14} parent=1 // pred_fallthru
      _
    // Predicated region
    $region64: #{custom-call.14} parent=1 // pred_check
      _
    $region65: #{custom-call.14} parent=1 // pred_check_branch
      %372 = sbr.rel (0) target = $region67
    $region66: #{custom-call.14} parent=1 // pred_region
      // Predicated region
      $region68: #{custom-call.14} parent=66 // pred_check
        _
      $region69: #{custom-call.14} parent=66 // pred_check_branch
        %374 = sbr.rel (0) target = $region71
      $region70: #{custom-call.14} parent=66 // pred_region
        %p376 = scmp.gt.s32.totalorder 0, 0
        // Predicated region
        $region72: #{custom-call.14} parent=70 // pred_check
          %p377 = pneg %p376
        $region73: #{custom-call.14} parent=70 // pred_check_branch
          %379 = sbr.rel (%p377) target = $region75
        $region74: #{custom-call.14} parent=70 // pred_region
          %s380 = ssub.s32 0, 1
          %s381 = smul.u32 %s380, 8
          %s382 = scalar_lea.vmem [#allocation6], %s381
          %v383 = vld [vmem:[#allocation6] sm:$0xff]
          // While loop
          $region76: #{custom-call.14} parent=74 // loop_pre_header
            _
          $region77: #{custom-call.14} parent=74 // loop_header
            %s384 = sphi [#allocation6], %s406
            %s385 = sphi %s3, %s407
            %v386 = vphi %v383, %v408
            %s387 = ssub.s32 %s382, 64
            %p388 = scmp.gt.s32.totalorder %s384, %s387
          $region78: #{custom-call.14} parent=74 // loop_header_branch
            %390 = sbr.rel (%p388) target = $region82
          $region79: #{custom-call.14} parent=74 // loop_body
            %391 = vst [vmem:[%s385] sm:$0xff] %v386
            %v392 = vld [vmem:[%s384 + $0x8] sm:$0xff]
            %393 = vst [vmem:[%s385 + $0x8] sm:$0xff] %v392
            %v394 = vld [vmem:[%s384 + $0x10] sm:$0xff]
            %395 = vst [vmem:[%s385 + $0x10] sm:$0xff] %v394
            %v396 = vld [vmem:[%s384 + $0x18] sm:$0xff]
            %397 = vst [vmem:[%s385 + $0x18] sm:$0xff] %v396
            %v398 = vld [vmem:[%s384 + $0x20] sm:$0xff]
            %399 = vst [vmem:[%s385 + $0x20] sm:$0xff] %v398
            %v400 = vld [vmem:[%s384 + $0x28] sm:$0xff]
            %401 = vst [vmem:[%s385 + $0x28] sm:$0xff] %v400
            %v402 = vld [vmem:[%s384 + $0x30] sm:$0xff]
            %403 = vst [vmem:[%s385 + $0x30] sm:$0xff] %v402
            %v404 = vld [vmem:[%s384 + $0x38] sm:$0xff]
            %405 = vst [vmem:[%s385 + $0x38] sm:$0xff] %v404
          $region80: #{custom-call.14} parent=74 // loop_footer
            %s406 = scalar_lea.vmem %s384, 64
            %s407 = scalar_lea.vmem %s385, 64
            %v408 = vld [vmem:[%s384 + $0x40] sm:$0xff]
          $region81: #{custom-call.14} parent=74 // loop_footer_branch
            %409 = sbr.rel target = $region77
          $region82: #{custom-call.14} parent=74 // loop_exit
            _
          // While loop
          $region83: #{custom-call.14} parent=74 // loop_pre_header
            _
          $region84: #{custom-call.14} parent=74 // loop_header
            %s410 = sphi %s384, %s418
            %s411 = sphi %s385, %s419
            %v412 = vphi %v386, %v412
            %p413 = scmp.gt.s32.totalorder %s410, %s382
          $region85: #{custom-call.14} parent=74 // loop_header_branch
            %415 = sbr.rel (%p413) target = $region89
          $region86: #{custom-call.14} parent=74 // loop_body
            %v416 = vld [vmem:[%s410] sm:$0xff]
            %417 = vst [vmem:[%s411] sm:$0xff] %v416
          $region87: #{custom-call.14} parent=74 // loop_footer
            %s418 = scalar_lea.vmem %s410, 8
            %s419 = scalar_lea.vmem %s411, 8
          $region88: #{custom-call.14} parent=74 // loop_footer_branch
            %420 = sbr.rel target = $region84
          $region89: #{custom-call.14} parent=74 // loop_exit
            _
        $region75: #{custom-call.14} parent=70 // pred_fallthru
          _
        %s422 = ssub.s32 2, 1
        %s423 = smul.u32 0, 8
        %s424 = scalar_lea.vmem %s3, %s423
        %s425 = smul.u32 0, 8
        %s426 = scalar_lea.vmem [#allocation6], %s425
        %v427 = vld [vmem:[%s426] sm:%s422]
        %428 = vst [vmem:[%s424] sm:%s422] %v427
      $region71: #{custom-call.14} parent=66 // pred_fallthru
        _
    $region67: #{custom-call.14} parent=1 // pred_fallthru
      _
    // Predicated region
    $region90: #{custom-call.14} parent=1 // pred_check
      _
    $region91: #{custom-call.14} parent=1 // pred_check_branch
      %430 = sbr.rel (0) target = $region93
    $region92: #{custom-call.14} parent=1 // pred_region
      %432 = dma.done [#allocation4], 16
    $region93: #{custom-call.14} parent=1 // pred_fallthru
      _
    // Predicated region
    $region94: #{custom-call.14} parent=1 // pred_check
      _
    $region95: #{custom-call.14} parent=1 // pred_check_branch
      %434 = sbr.rel (0) target = $region97
    $region96: #{custom-call.14} parent=1 // pred_region
      _
    $region97: #{custom-call.14} parent=1 // pred_fallthru
      _
    %435 = vsyncpa [#allocation4], 1

// kernel: basic_transformer_block.11
$region0: #{basic_transformer_block.11}
  #allocation0 [shape = 'u32[]', space=smem, size = 0x4, offset = 0x4, fixed_abs, tag = 'smem constant byte address 0x4 - core index']
  #allocation1 [shape = 'u32[72,128]{1,0:T(1,128)}', space=vmem, size = 0x9000, scoped, tag = 'internal scratch']
  #allocation2 [shape = 'f32[2,16,1]{2,1,0:T(8,128)}', space=vmem, size = 0x4000, scoped, tag = 'scratch operand']
  #allocation3 [shape = 'f32[2,16,1]{2,1,0:T(8,128)}', space=vmem, size = 0x4000, scoped, tag = 'scratch operand']
  #allocation4 [shape = 'f32[2,16,64]{2,1,0:T(8,128)}', space=vmem, size = 0x4000, scoped, tag = 'scratch operand']
  %s0 = inlined_call_operand.vmem [shape: bf16[8,2,16,64], index: 0, kind: input, shape index: {}]
  %s1 = inlined_call_operand.vmem [shape: bf16[8,2,16,64], index: 1, kind: input, shape index: {}]
  %s2 = inlined_call_operand.vmem [shape: bf16[8,2,16,64], index: 2, kind: input, shape index: {}]
  %s3 = inlined_call_operand.vmem [shape: bf16[2,64,128], index: 3, kind: input, shape index: {}]
  %s4 = inlined_call_operand.vmem [shape: f32[1,128], index: 4, kind: input, shape index: {}]
  %s5 = inlined_call_operand.vmem [shape: f32[8,16,128], index: 5, kind: input, shape index: {}]
  %s6 = inlined_call_operand.vmem [shape: f32[8,16,128], index: 6, kind: output, shape index: {}]
  %s7 = sld [smem:[#allocation0]]
  $region65: #{basic_transformer_block.11} parent=0
    _
  %s9 = ssub.s32 1, %s7
  %s10 = scalar_select 0, %s9, %s7
  loop: start=0, step=1, limit=10
  $region2: #{basic_transformer_block.11} parent=0 // loop_pre_header
    _
  $region3: #{basic_transformer_block.11} parent=0 // loop_header
    %s12 = sphi 0, %s16
    %p13 = scmp.ge.s32.totalorder %s12, 10
    %s19 = sphi 0, %s38
    %s20 = sphi 0, %s34
    %s21 = sphi 0, %s30
    %s22 = sphi 0, %s19
    %s23 = sphi 0, %s20
    %s24 = sphi 0, %s21
    %s25 = sphi 0, %s22
    %s26 = sphi 0, %s23
    %s27 = sphi 0, %s24
    %s43 = sphi 0, %s45
    %s46 = sphi 0, %s43
    %s47 = sphi 0, %s46
    %s63 = sphi 0, %s47
    %s71 = sphi 0, %s73
    %s74 = sphi 0, %s71
    %s75 = sphi 0, %s74
    %s91 = sphi 0, %s75
    %s99 = sphi 0, %s101
    %s102 = sphi 0, %s99
    %s103 = sphi 0, %s102
    %s119 = sphi 0, %s103
    %s123 = sphi 0, %s123
    %s125 = sphi 0, %s123
    %s126 = sphi 0, %s125
    %s140 = sphi 0, %s126
    %s144 = sphi 0, %s144
    %s146 = sphi 0, %s144
    %s147 = sphi 0, %s146
    %s161 = sphi 0, %s147
    %s169 = sphi 0, %s171
    %s172 = sphi 0, %s169
    %s173 = sphi 0, %s172
    %s189 = sphi 0, %s173
    %s197 = sphi 0, %s199
    %s200 = sphi 0, %s197
    %s201 = sphi 0, %s200
    %s217 = sphi 0, %s201
  $region4: #{basic_transformer_block.11} parent=0 // loop_header_branch
    %15 = sbr.rel (%p13) target = $region8
  $region5: #{basic_transformer_block.11} parent=0 // loop_body
    %s17 = ssub.s32 %s12, 1
    %s18 = ssub.s32 %s12, 2
    %s28 = sadd.s32 1, %s21
    %p29 = scmp.ge.s32.totalorder %s28, 1
    %s30 = scalar_select %p29, 0, %s28
    %s31 = sadd.s32 1, %s20
    %s32 = scalar_select %p29, %s31, %s20
    %p33 = scmp.ge.s32.totalorder %s32, 1
    %s34 = scalar_select %p33, 0, %s32
    %s35 = sadd.s32 1, %s19
    %s36 = scalar_select %p33, %s35, %s19
    %p37 = scmp.ge.s32.totalorder %s36, 8
    %s38 = scalar_select %p37, 0, %s36
    %s39 = ssub.s32 %s19, %s38
    %s40 = ssub.s32 %s20, %s34
    %s41 = sor.u32 %s39, %s40
    %p42 = scmp.eq.s32.totalorder %s41, 0
    %s44 = sadd.s32 %s43, 1
    %s45 = scalar_select %p42, %s43, %s44
    %p48 = pneg %p42
    %p49 = scmp.eq.s32.totalorder %s12, 7
    %p50 = por %p48, %p49
    %p51 = scmp.ne.s32.totalorder %s43, %s46
    %p52 = scmp.eq.s32.totalorder %s12, 0
    %p53 = por %p51, %p52
    %p54 = scmp.ne.s32.totalorder %s43, %s46
    %p55 = scmp.eq.s32.totalorder %s17, 7
    %p56 = por %p54, %p55
    %p57 = scmp.ne.s32.totalorder %s46, %s47
    %p58 = scmp.eq.s32.totalorder %s17, 0
    %p59 = por %p57, %p58
    %p60 = scmp.ne.s32.totalorder %s46, %s47
    %p61 = scmp.eq.s32.totalorder %s18, 7
    %p62 = por %p60, %p61
    %p64 = scmp.ne.s32.totalorder %s47, %s63
    %p65 = scmp.eq.s32.totalorder %s18, 0
    %p66 = por %p64, %p65
    %s67 = ssub.s32 %s19, %s38
    %s68 = ssub.s32 %s21, %s30
    %s69 = sor.u32 %s67, %s68
    %p70 = scmp.eq.s32.totalorder %s69, 0
    %s72 = sadd.s32 %s71, 1
    %s73 = scalar_select %p70, %s71, %s72
    %p76 = pneg %p70
    %p77 = scmp.eq.s32.totalorder %s12, 7
    %p78 = por %p76, %p77
    %p79 = scmp.ne.s32.totalorder %s71, %s74
    %p80 = scmp.eq.s32.totalorder %s12, 0
    %p81 = por %p79, %p80
    %p82 = scmp.ne.s32.totalorder %s71, %s74
    %p83 = scmp.eq.s32.totalorder %s17, 7
    %p84 = por %p82, %p83
    %p85 = scmp.ne.s32.totalorder %s74, %s75
    %p86 = scmp.eq.s32.totalorder %s17, 0
    %p87 = por %p85, %p86
    %p88 = scmp.ne.s32.totalorder %s74, %s75
    %p89 = scmp.eq.s32.totalorder %s18, 7
    %p90 = por %p88, %p89
    %p92 = scmp.ne.s32.totalorder %s75, %s91
    %p93 = scmp.eq.s32.totalorder %s18, 0
    %p94 = por %p92, %p93
    %s95 = ssub.s32 %s19, %s38
    %s96 = ssub.s32 %s21, %s30
    %s97 = sor.u32 %s95, %s96
    %p98 = scmp.eq.s32.totalorder %s97, 0
    %s100 = sadd.s32 %s99, 1
    %s101 = scalar_select %p98, %s99, %s100
    %p104 = pneg %p98
    %p105 = scmp.eq.s32.totalorder %s12, 7
    %p106 = por %p104, %p105
    %p107 = scmp.ne.s32.totalorder %s99, %s102
    %p108 = scmp.eq.s32.totalorder %s12, 0
    %p109 = por %p107, %p108
    %p110 = scmp.ne.s32.totalorder %s99, %s102
    %p111 = scmp.eq.s32.totalorder %s17, 7
    %p112 = por %p110, %p111
    %p113 = scmp.ne.s32.totalorder %s102, %s103
    %p114 = scmp.eq.s32.totalorder %s17, 0
    %p115 = por %p113, %p114
    %p116 = scmp.ne.s32.totalorder %s102, %s103
    %p117 = scmp.eq.s32.totalorder %s18, 7
    %p118 = por %p116, %p117
    %p120 = scmp.ne.s32.totalorder %s103, %s119
    %p121 = scmp.eq.s32.totalorder %s18, 0
    %p122 = por %p120, %p121
    %s124 = sadd.s32 %s123, 1
    %p127 = scmp.eq.s32.totalorder %s12, 7
    %p128 = scmp.ne.s32.totalorder %s123, %s125
    %p129 = scmp.eq.s32.totalorder %s12, 0
    %p130 = por %p128, %p129
    %p131 = scmp.ne.s32.totalorder %s123, %s125
    %p132 = scmp.eq.s32.totalorder %s17, 7
    %p133 = por %p131, %p132
    %p134 = scmp.ne.s32.totalorder %s125, %s126
    %p135 = scmp.eq.s32.totalorder %s17, 0
    %p136 = por %p134, %p135
    %p137 = scmp.ne.s32.totalorder %s125, %s126
    %p138 = scmp.eq.s32.totalorder %s18, 7
    %p139 = por %p137, %p138
    %p141 = scmp.ne.s32.totalorder %s126, %s140
    %p142 = scmp.eq.s32.totalorder %s18, 0
    %p143 = por %p141, %p142
    %s145 = sadd.s32 %s144, 1
    %p148 = scmp.eq.s32.totalorder %s12, 7
    %p149 = scmp.ne.s32.totalorder %s144, %s146
    %p150 = scmp.eq.s32.totalorder %s12, 0
    %p151 = por %p149, %p150
    %p152 = scmp.ne.s32.totalorder %s144, %s146
    %p153 = scmp.eq.s32.totalorder %s17, 7
    %p154 = por %p152, %p153
    %p155 = scmp.ne.s32.totalorder %s146, %s147
    %p156 = scmp.eq.s32.totalorder %s17, 0
    %p157 = por %p155, %p156
    %p158 = scmp.ne.s32.totalorder %s146, %s147
    %p159 = scmp.eq.s32.totalorder %s18, 7
    %p160 = por %p158, %p159
    %p162 = scmp.ne.s32.totalorder %s147, %s161
    %p163 = scmp.eq.s32.totalorder %s18, 0
    %p164 = por %p162, %p163
    %s165 = ssub.s32 %s19, %s38
    %s166 = ssub.s32 %s20, %s34
    %s167 = sor.u32 %s165, %s166
    %p168 = scmp.eq.s32.totalorder %s167, 0
    %s170 = sadd.s32 %s169, 1
    %s171 = scalar_select %p168, %s169, %s170
    %p174 = pneg %p168
    %p175 = scmp.eq.s32.totalorder %s12, 7
    %p176 = por %p174, %p175
    %p177 = scmp.ne.s32.totalorder %s169, %s172
    %p178 = scmp.eq.s32.totalorder %s12, 0
    %p179 = por %p177, %p178
    %p180 = scmp.ne.s32.totalorder %s169, %s172
    %p181 = scmp.eq.s32.totalorder %s17, 7
    %p182 = por %p180, %p181
    %p183 = scmp.ne.s32.totalorder %s172, %s173
    %p184 = scmp.eq.s32.totalorder %s17, 0
    %p185 = por %p183, %p184
    %p186 = scmp.ne.s32.totalorder %s172, %s173
    %p187 = scmp.eq.s32.totalorder %s18, 7
    %p188 = por %p186, %p187
    %p190 = scmp.ne.s32.totalorder %s173, %s189
    %p191 = scmp.eq.s32.totalorder %s18, 0
    %p192 = por %p190, %p191
    %s193 = ssub.s32 %s19, %s38
    %s194 = ssub.s32 %s20, %s34
    %s195 = sor.u32 %s193, %s194
    %p196 = scmp.eq.s32.totalorder %s195, 0
    %s198 = sadd.s32 %s197, 1
    %s199 = scalar_select %p196, %s197, %s198
    %p202 = pneg %p196
    %p203 = scmp.eq.s32.totalorder %s12, 7
    %p204 = por %p202, %p203
    %p205 = scmp.ne.s32.totalorder %s197, %s200
    %p206 = scmp.eq.s32.totalorder %s12, 0
    %p207 = por %p205, %p206
    %p208 = scmp.ne.s32.totalorder %s197, %s200
    %p209 = scmp.eq.s32.totalorder %s17, 7
    %p210 = por %p208, %p209
    %p211 = scmp.ne.s32.totalorder %s200, %s201
    %p212 = scmp.eq.s32.totalorder %s17, 0
    %p213 = por %p211, %p212
    %p214 = scmp.ne.s32.totalorder %s200, %s201
    %p215 = scmp.eq.s32.totalorder %s18, 7
    %p216 = por %p214, %p215
    %p218 = scmp.ne.s32.totalorder %s201, %s217
    %p219 = scmp.eq.s32.totalorder %s18, 0
    %p220 = por %p218, %p219
    %p221 = scmp.le.s32.totalorder 1, %s12
    %p222 = scmp.lt.s32.totalorder %s12, 9
    %p223 = pnand %p221, %p222
    %p224 = pneg %p223
    // Predicated region
    $region9: #{basic_transformer_block.11} parent=5 // pred_check
      _
    $region10: #{basic_transformer_block.11} parent=5 // pred_check_branch
      %226 = sbr.rel (%p223) target = $region12
    $region11: #{basic_transformer_block.11} parent=5 // pred_region
      %s227 = ssub.s32 %s12, 1
      // Predicated region
      $region13: #{basic_transformer_block.11} parent=11 // pred_check
        %p228 = pneg %p136
      $region14: #{basic_transformer_block.11} parent=11 // pred_check_branch
        %230 = sbr.rel (%p228) target = $region16
      $region15: #{basic_transformer_block.11} parent=11 // pred_region
        _
      $region16: #{basic_transformer_block.11} parent=11 // pred_fallthru
        _
      // Predicated region
      $region17: #{basic_transformer_block.11} parent=11 // pred_check
        %p231 = pneg %p157
      $region18: #{basic_transformer_block.11} parent=11 // pred_check_branch
        %233 = sbr.rel (%p231) target = $region20
      $region19: #{basic_transformer_block.11} parent=11 // pred_region
        _
      $region20: #{basic_transformer_block.11} parent=11 // pred_fallthru
        _
    $region12: #{basic_transformer_block.11} parent=5 // pred_fallthru
      _
    %p234 = scmp.lt.s32.totalorder %s12, 8
    // Predicated region
    $region21: #{basic_transformer_block.11} parent=5 // pred_check
      %p235 = pneg %p234
    $region22: #{basic_transformer_block.11} parent=5 // pred_check_branch
      %237 = sbr.rel (%p235) target = $region24
    $region23: #{basic_transformer_block.11} parent=5 // pred_region
      // Predicated region
      $region25: #{basic_transformer_block.11} parent=23 // pred_check
        %p238 = pneg %p53
      $region26: #{basic_transformer_block.11} parent=23 // pred_check_branch
        %240 = sbr.rel (%p238) target = $region28
      $region27: #{basic_transformer_block.11} parent=23 // pred_region
        %s241 = smul.u32 2, %s20
        %p242 = scmp.lt.s32.totalorder %s19, 7
        %s243 = scalar_select %p242, %s19, 7
        %p244 = scmp.lt.s32.totalorder %s241, 1
        %s245 = scalar_select %p244, %s241, 1
        %s246 = smul.addr %s243, 4
        %s247 = sadd.s32 %s245, %s246
        %s248 = smul.addr %s247, 4
        %s249 = scalar_lea.vmem %s0, %s248
        %s250 = smul.u32 2, %s20
      $region28: #{basic_transformer_block.11} parent=23 // pred_fallthru
        _
      // Predicated region
      $region29: #{basic_transformer_block.11} parent=23 // pred_check
        %p251 = pneg %p81
      $region30: #{basic_transformer_block.11} parent=23 // pred_check_branch
        %253 = sbr.rel (%p251) target = $region32
      $region31: #{basic_transformer_block.11} parent=23 // pred_region
        %s254 = smul.u32 2, %s21
        %p255 = scmp.lt.s32.totalorder %s19, 7
        %s256 = scalar_select %p255, %s19, 7
        %p257 = scmp.lt.s32.totalorder %s254, 1
        %s258 = scalar_select %p257, %s254, 1
        %s259 = smul.addr %s256, 4
        %s260 = sadd.s32 %s258, %s259
        %s261 = smul.addr %s260, 4
        %s262 = scalar_lea.vmem %s1, %s261
        %s263 = smul.u32 2, %s21
      $region32: #{basic_transformer_block.11} parent=23 // pred_fallthru
        _
      // Predicated region
      $region33: #{basic_transformer_block.11} parent=23 // pred_check
        %p264 = pneg %p109
      $region34: #{basic_transformer_block.11} parent=23 // pred_check_branch
        %266 = sbr.rel (%p264) target = $region36
      $region35: #{basic_transformer_block.11} parent=23 // pred_region
        %s267 = smul.u32 2, %s21
        %p268 = scmp.lt.s32.totalorder %s19, 7
        %s269 = scalar_select %p268, %s19, 7
        %p270 = scmp.lt.s32.totalorder %s267, 1
        %s271 = scalar_select %p270, %s267, 1
        %s272 = smul.addr %s269, 4
        %s273 = sadd.s32 %s271, %s272
        %s274 = smul.addr %s273, 4
        %s275 = scalar_lea.vmem %s2, %s274
        %s276 = smul.u32 2, %s21
      $region36: #{basic_transformer_block.11} parent=23 // pred_fallthru
        _
      // Predicated region
      $region37: #{basic_transformer_block.11} parent=23 // pred_check
        %p277 = pneg %p179
      $region38: #{basic_transformer_block.11} parent=23 // pred_check_branch
        %279 = sbr.rel (%p277) target = $region40
      $region39: #{basic_transformer_block.11} parent=23 // pred_region
        %s280 = smul.u32 2, %s20
        %p281 = scmp.lt.s32.totalorder %s19, 7
        %s282 = scalar_select %p281, %s19, 7
        %p283 = scmp.lt.s32.totalorder %s280, 1
        %s284 = scalar_select %p283, %s280, 1
        %s285 = smul.addr %s282, 2
        %s286 = sadd.s32 %s284, %s285
        %s287 = smul.addr %s286, 8
        %s288 = scalar_lea.vmem %s5, %s287
        %s289 = smul.u32 2, %s20
      $region40: #{basic_transformer_block.11} parent=23 // pred_fallthru
        _
    $region24: #{basic_transformer_block.11} parent=5 // pred_fallthru
      _
    %p290 = scmp.le.s32.totalorder 1, %s12
    %p291 = scmp.lt.s32.totalorder %s12, 9
    %p292 = pnand %p290, %p291
    %p293 = pneg %p292
    // Predicated region
    $region41: #{basic_transformer_block.11} parent=5 // pred_check
      _
    $region42: #{basic_transformer_block.11} parent=5 // pred_check_branch
      %295 = sbr.rel (%p292) target = $region44
    $region43: #{basic_transformer_block.11} parent=5 // pred_region
      %s296 = ssub.s32 %s12, 1
      %s297 = smul.u32 2, %s23
      %p298 = scmp.lt.s32.totalorder %s22, 7
      %s299 = scalar_select %p298, %s22, 7
      %p300 = scmp.lt.s32.totalorder %s297, 1
      %s301 = scalar_select %p300, %s297, 1
      %s302 = smul.addr %s299, 4
      %s303 = sadd.s32 %s301, %s302
      %s304 = smul.addr %s303, 4
      %s305 = scalar_lea.vmem %s0, %s304
      %p306 = pneg %p59
      %p307 = pneg %p56
      %s308 = smul.u32 2, %s24
      %p309 = scmp.lt.s32.totalorder %s22, 7
      %s310 = scalar_select %p309, %s22, 7
      %p311 = scmp.lt.s32.totalorder %s308, 1
      %s312 = scalar_select %p311, %s308, 1
      %s313 = smul.addr %s310, 4
      %s314 = sadd.s32 %s312, %s313
      %s315 = smul.addr %s314, 4
      %s316 = scalar_lea.vmem %s1, %s315
      %p317 = pneg %p87
      %p318 = pneg %p84
      %s319 = smul.u32 2, %s24
      %p320 = scmp.lt.s32.totalorder %s22, 7
      %s321 = scalar_select %p320, %s22, 7
      %p322 = scmp.lt.s32.totalorder %s319, 1
      %s323 = scalar_select %p322, %s319, 1
      %s324 = smul.addr %s321, 4
      %s325 = sadd.s32 %s323, %s324
      %s326 = smul.addr %s325, 4
      %s327 = scalar_lea.vmem %s2, %s326
      %p328 = pneg %p115
      %p329 = pneg %p112
      %p330 = pneg %p136
      %p331 = pneg %p133
      %p332 = pneg %p157
      %p333 = pneg %p154
      %s334 = smul.u32 2, %s23
      %p335 = scmp.lt.s32.totalorder %s22, 7
      %s336 = scalar_select %p335, %s22, 7
      %p337 = scmp.lt.s32.totalorder %s334, 1
      %s338 = scalar_select %p337, %s334, 1
      %s339 = smul.addr %s336, 2
      %s340 = sadd.s32 %s338, %s339
      %s341 = smul.addr %s340, 8
      %s342 = scalar_lea.vmem %s5, %s341
      %p343 = pneg %p185
      %p344 = pneg %p182
      %p345 = pneg %p213
      %p346 = pneg %p210
      %s347 = smul.u32 2, %s23
      %p348 = scmp.lt.s32.totalorder %s22, 7
      %s349 = scalar_select %p348, %s22, 7
      %p350 = scmp.lt.s32.totalorder %s347, 1
      %s351 = scalar_select %p350, %s347, 1
      %s352 = smul.addr %s349, 2
      %s353 = sadd.s32 %s351, %s352
      %s354 = smul.addr %s353, 8
      %s355 = scalar_lea.vmem %s6, %s354
      %s356 = smul.u32 2, %s23
      %p357 = scmp.lt.s32.totalorder %s22, 7
      %s358 = scalar_select %p357, %s22, 7
      %p359 = scmp.lt.s32.totalorder %s356, 1
      %s360 = scalar_select %p359, %s356, 1
      %s361 = smul.addr %s358, 4
      %s362 = sadd.s32 %s360, %s361
      %s363 = smul.addr %s362, 4
      %s364 = scalar_lea.vmem %s0, %s363
      %s365 = smul.u32 2, %s23
      %s366 = smul.u32 2, %s24
      %p367 = scmp.lt.s32.totalorder %s22, 7
      %s368 = scalar_select %p367, %s22, 7
      %p369 = scmp.lt.s32.totalorder %s366, 1
      %s370 = scalar_select %p369, %s366, 1
      %s371 = smul.addr %s368, 4
      %s372 = sadd.s32 %s370, %s371
      %s373 = smul.addr %s372, 4
      %s374 = scalar_lea.vmem %s1, %s373
      %s375 = smul.u32 2, %s24
      %s376 = smul.u32 2, %s24
      %p377 = scmp.lt.s32.totalorder %s22, 7
      %s378 = scalar_select %p377, %s22, 7
      %p379 = scmp.lt.s32.totalorder %s376, 1
      %s380 = scalar_select %p379, %s376, 1
      %s381 = smul.addr %s378, 4
      %s382 = sadd.s32 %s380, %s381
      %s383 = smul.addr %s382, 4
      %s384 = scalar_lea.vmem %s2, %s383
      %s385 = smul.u32 2, %s24
      %s386 = smul.u32 2, %s23
      %p387 = scmp.lt.s32.totalorder %s22, 7
      %s388 = scalar_select %p387, %s22, 7
      %p389 = scmp.lt.s32.totalorder %s386, 1
      %s390 = scalar_select %p389, %s386, 1
      %s391 = smul.addr %s388, 2
      %s392 = sadd.s32 %s390, %s391
      %s393 = smul.addr %s392, 8
      %s394 = scalar_lea.vmem %s5, %s393
      %s395 = smul.u32 2, %s23
      %s396 = smul.u32 2, %s23
      %p397 = scmp.lt.s32.totalorder %s22, 7
      %s398 = scalar_select %p397, %s22, 7
      %p399 = scmp.lt.s32.totalorder %s396, 1
      %s400 = scalar_select %p399, %s396, 1
      %s401 = smul.addr %s398, 2
      %s402 = sadd.s32 %s400, %s401
      %s403 = smul.addr %s402, 8
      %s404 = scalar_lea.vmem %s6, %s403
      %s405 = smul.u32 2, %s23
      %p407 = scmp.eq.s32.totalorder %s24, 0
      // Predicated region
      $region45: #{basic_transformer_block.11} parent=43 // pred_check
        %p408 = pneg %p407
      $region46: #{basic_transformer_block.11} parent=43 // pred_check_branch
        %410 = sbr.rel (%p408) target = $region48
      $region47: #{basic_transformer_block.11} parent=43 // pred_region
        %vm411 = vcmask 7168
        %412 = vst.msk [vmem:[#allocation2] sm:$0xff] %vm411, -inf
        %413 = vst.msk [vmem:[#allocation2 + $0x8] sm:$0xff] %vm411, -inf
        %414 = vst.msk [vmem:[#allocation2 + $0x10] sm:$0xff] %vm411, -inf
        %415 = vst.msk [vmem:[#allocation2 + $0x18] sm:$0xff] %vm411, -inf
        %416 = vst.msk [vmem:[#allocation3] sm:$0xff] %vm411, 0.0
        %417 = vst.msk [vmem:[#allocation3 + $0x8] sm:$0xff] %vm411, 0.0
        %418 = vst.msk [vmem:[#allocation3 + $0x10] sm:$0xff] %vm411, 0.0
        %419 = vst.msk [vmem:[#allocation3 + $0x18] sm:$0xff] %vm411, 0.0
        %vm420 = vcmask 523264
        %421 = vst.msk [vmem:[#allocation4] sm:$0xff] %vm420, 0.0
        %422 = vst.msk [vmem:[#allocation4 + $0x8] sm:$0xff] %vm420, 0.0
        %423 = vst.msk [vmem:[#allocation4 + $0x10] sm:$0xff] %vm420, 0.0
        %424 = vst.msk [vmem:[#allocation4 + $0x18] sm:$0xff] %vm420, 0.0
      $region48: #{basic_transformer_block.11} parent=43 // pred_fallthru
        _
      %v425 = vld [vmem:[%s364] sm:$0xf]
      %v426 = vld [vmem:[%s364 + $0x4] sm:$0xf]
      %v427 = vld [vmem:[%s364 + $0x8] sm:$0xf]
      %v428 = vld [vmem:[%s364 + $0xc] sm:$0xf]
      %v429 = vld [vmem:[%s374] sm:$0xf]
      %v430 = vld [vmem:[%s374 + $0x4] sm:$0xf]
      %v431 = vld [vmem:[%s374 + $0x8] sm:$0xf]
      %v432 = vld [vmem:[%s374 + $0xc] sm:$0xf]
      %v433 = vld [vmem:[%s384] sm:$0xf]
      %v434 = vld [vmem:[%s384 + $0x4] sm:$0xf]
      %v435 = vld [vmem:[%s384 + $0x8] sm:$0xf]
      %v436 = vld [vmem:[%s384 + $0xc] sm:$0xf]
      %v439 = vunpack.c.l.b16 %v425
      %v440 = vunpack.c.l.b16 %v426
      %v441 = vpack.c.b16 %v440, %v439
      %v444 = vunpack.c.l.b16 %v429
      %v445 = vunpack.c.l.b16 %v430
      %v446 = vpack.c.b16 %v445, %v444
      %vm447 = vcmask 523264
      %v449 = vsel %vm447, %v441, 0
      %v452 = vsel %vm447, %v446, 0
      %454 = vmatpush.bf16.xpose.msra.mxu0 0
      %455 = vmatpush.bf16.xpose.msra.mxu0 0
      %456 = vmatpush.bf16.xpose.msra.mxu0 0
      %457 = vmatpush.bf16.xpose.msra.mxu0 0
      %458 = vmatpush.bf16.xpose.msra.mxu0 0
      %459 = vmatpush.bf16.xpose.msra.mxu0 0
      %460 = vmatpush.bf16.xpose.msra.mxu0 0
      %461 = vmatpush.bf16.xpose.msra.mxu0 %v452
      %462 = vmatmul.bf16.gmra.mxu0 %v449
      %v463 = vpop.f32.mrf.mxu0
      %v464 = vadd.f32 0.0, %v463
      %v465 = vpop.f32.mrf.mxu0
      %v466 = vadd.f32 0.0, %v465
      %467 = vdwg.mxu0
      %v470 = vunpack.c.l.b16 %v427
      %v471 = vunpack.c.l.b16 %v428
      %v472 = vpack.c.b16 %v471, %v470
      %v475 = vunpack.c.l.b16 %v431
      %v476 = vunpack.c.l.b16 %v432
      %v477 = vpack.c.b16 %v476, %v475
      %v479 = vsel %vm447, %v472, 0
      %v482 = vsel %vm447, %v477, 0
      %484 = vmatpush.bf16.xpose.msra.mxu0 0
      %485 = vmatpush.bf16.xpose.msra.mxu0 0
      %486 = vmatpush.bf16.xpose.msra.mxu0 0
      %487 = vmatpush.bf16.xpose.msra.mxu0 0
      %488 = vmatpush.bf16.xpose.msra.mxu0 0
      %489 = vmatpush.bf16.xpose.msra.mxu0 0
      %490 = vmatpush.bf16.xpose.msra.mxu0 0
      %491 = vmatpush.bf16.xpose.msra.mxu0 %v482
      %492 = vmatmul.bf16.gmra.mxu0 %v479
      %v493 = vpop.f32.mrf.mxu0
      %v494 = vadd.f32 0.0, %v493
      %v495 = vpop.f32.mrf.mxu0
      %v496 = vadd.f32 0.0, %v495
      %497 = vdwg.mxu0
      %v498 = vmul.f32 %v464, 0.125
      %v499 = vmul.f32 %v466, 0.125
      %v500 = vmul.f32 %v494, 0.125
      %v501 = vmul.f32 %v496, 0.125
      %v502 = vld [vmem:[#allocation2] sm:$0xff]
      %v503 = vld [vmem:[#allocation2 + $0x8] sm:$0xff]
      %v504 = vld [vmem:[#allocation2 + $0x10] sm:$0xff]
      %v505 = vld [vmem:[#allocation2 + $0x18] sm:$0xff]
      %vm506 = vcmask 130048
      %v507 = vsel %vm506, %v498, -inf
      %508 = vmax.xlane.f32.xlu0 %v507
      %v509 = vpop.xlane.xlu0 %508
      %v510 = vsel %vm506, %v499, -inf
      %511 = vmax.xlane.f32.xlu0 %v510
      %v512 = vpop.xlane.xlu0 %511
      %v513 = vsel %vm506, %v500, -inf
      %514 = vmax.xlane.f32.xlu0 %v513
      %v515 = vpop.xlane.xlu0 %514
      %v516 = vsel %vm506, %v501, -inf
      %517 = vmax.xlane.f32.xlu0 %v516
      %v518 = vpop.xlane.xlu0 %517
      %v519 = vmax.f32 %v502, %v509
      %v520 = vmax.f32 %v503, %v512
      %v521 = vmax.f32 %v504, %v515
      %v522 = vmax.f32 %v505, %v518
      %v523 = vsub.f32 %v502, %v519
      %v524 = vsub.f32 %v503, %v520
      %v525 = vsub.f32 %v504, %v521
      %v526 = vsub.f32 %v505, %v522
      %v527 = vmul.f32 %v523, 1.442695
      %v528 = vpow.pop %v527
      %v529 = vmul.f32 %v524, 1.442695
      %v530 = vpow.pop %v529
      %v531 = vmul.f32 %v525, 1.442695
      %v532 = vpow.pop %v531
      %v533 = vmul.f32 %v526, 1.442695
      %v534 = vpow.pop %v533
      %536 = vset.pattern.permute.xlu0 0
      %537 = vperm.xlu0 %536, %v519
      %v538 = vpop.permute.xlu0 %537
      %541 = vset.pattern.permute.xlu0 0
      %542 = vperm.xlu0 %541, %v520
      %v543 = vpop.permute.xlu0 %542
      %546 = vset.pattern.permute.xlu0 0
      %547 = vperm.xlu0 %546, %v521
      %v548 = vpop.permute.xlu0 %547
      %551 = vset.pattern.permute.xlu0 0
      %552 = vperm.xlu0 %551, %v522
      %v553 = vpop.permute.xlu0 %552
      %v555 = vsub.f32 %v498, %v538
      %v556 = vsub.f32 %v499, %v543
      %v557 = vsub.f32 %v500, %v548
      %v558 = vsub.f32 %v501, %v553
      %v559 = vmul.f32 %v555, 1.442695
      %v560 = vpow.pop %v559
      %v561 = vmul.f32 %v556, 1.442695
      %v562 = vpow.pop %v561
      %v563 = vmul.f32 %v557, 1.442695
      %v564 = vpow.pop %v563
      %v565 = vmul.f32 %v558, 1.442695
      %v566 = vpow.pop %v565
      %v567 = vld [vmem:[#allocation3] sm:$0xff]
      %v568 = vld [vmem:[#allocation3 + $0x8] sm:$0xff]
      %v569 = vld [vmem:[#allocation3 + $0x10] sm:$0xff]
      %v570 = vld [vmem:[#allocation3 + $0x18] sm:$0xff]
      %v571 = vmul.f32 %v528, %v567
      %v572 = vmul.f32 %v530, %v568
      %v573 = vmul.f32 %v532, %v569
      %v574 = vmul.f32 %v534, %v570
      %v575 = vsel %vm506, %v560, 0.0
      %576 = vadd.xlane.f32.xlu0 %v575
      %v577 = vpop.xlane.xlu0 %576
      %v578 = vsel %vm506, %v562, 0.0
      %579 = vadd.xlane.f32.xlu0 %v578
      %v580 = vpop.xlane.xlu0 %579
      %v581 = vsel %vm506, %v564, 0.0
      %582 = vadd.xlane.f32.xlu0 %v581
      %v583 = vpop.xlane.xlu0 %582
      %v584 = vsel %vm506, %v566, 0.0
      %585 = vadd.xlane.f32.xlu0 %v584
      %v586 = vpop.xlane.xlu0 %585
      %v587 = vadd.f32 %v571, %v577
      %v588 = vadd.f32 %v572, %v580
      %v589 = vadd.f32 %v573, %v583
      %v590 = vadd.f32 %v574, %v586
      %vm591 = vcmask 7168
      %592 = vst.msk [vmem:[#allocation3] sm:$0xff] %vm591, %v587
      %593 = vst.msk [vmem:[#allocation3 + $0x8] sm:$0xff] %vm591, %v588
      %594 = vst.msk [vmem:[#allocation3 + $0x10] sm:$0xff] %vm591, %v589
      %595 = vst.msk [vmem:[#allocation3 + $0x18] sm:$0xff] %vm591, %v590
      %v596 = vld [vmem:[#allocation4] sm:$0xff]
      %v597 = vld [vmem:[#allocation4 + $0x8] sm:$0xff]
      %v598 = vld [vmem:[#allocation4 + $0x10] sm:$0xff]
      %v599 = vld [vmem:[#allocation4 + $0x18] sm:$0xff]
      %601 = vset.pattern.permute.xlu0 0
      %602 = vperm.xlu0 %601, %v528
      %v603 = vpop.permute.xlu0 %602
      %606 = vset.pattern.permute.xlu0 0
      %607 = vperm.xlu0 %606, %v530
      %v608 = vpop.permute.xlu0 %607
      %611 = vset.pattern.permute.xlu0 0
      %612 = vperm.xlu0 %611, %v532
      %v613 = vpop.permute.xlu0 %612
      %616 = vset.pattern.permute.xlu0 0
      %617 = vperm.xlu0 %616, %v534
      %v618 = vpop.permute.xlu0 %617
      %v620 = vmul.f32 %v603, %v596
      %v621 = vmul.f32 %v608, %v597
      %v622 = vmul.f32 %v613, %v598
      %v623 = vmul.f32 %v618, %v599
      %v624 = vpack.c.bf16 %v560, %v560
      %v625 = vpack.c.bf16 %v562, %v562
      %v626 = vpack.c.bf16 %v564, %v564
      %v627 = vpack.c.bf16 %v566, %v566
      %v630 = vunpack.c.l.b16 %v624
      %v631 = vunpack.c.l.b16 %v625
      %v632 = vpack.c.b16 %v631, %v630
      %v635 = vunpack.c.l.b16 %v433
      %v636 = vunpack.c.l.b16 %v434
      %v637 = vpack.c.b16 %v636, %v635
      %v640 = vsel %vm506, %v632, 0
      %642 = vmatpush.bf16.msra.mxu0 0
      %643 = vmatpush.bf16.msra.mxu0 0
      %644 = vmatpush.bf16.msra.mxu0 0
      %645 = vmatpush.bf16.msra.mxu0 0
      %646 = vmatpush.bf16.msra.mxu0 0
      %647 = vmatpush.bf16.msra.mxu0 0
      %648 = vmatpush.bf16.msra.mxu0 0
      %649 = vmatpush.bf16.msra.mxu0 %v637
      %650 = vmatmul.bf16.gmra.mxu0 %v640
      %v651 = vpop.f32.mrf.mxu0
      %v652 = vadd.f32 0.0, %v651
      %v653 = vpop.f32.mrf.mxu0
      %v654 = vadd.f32 0.0, %v653
      %655 = vdwg.mxu0
      %v658 = vunpack.c.l.b16 %v626
      %v659 = vunpack.c.l.b16 %v627
      %v660 = vpack.c.b16 %v659, %v658
      %v663 = vunpack.c.l.b16 %v435
      %v664 = vunpack.c.l.b16 %v436
      %v665 = vpack.c.b16 %v664, %v663
      %v668 = vsel %vm506, %v660, 0
      %670 = vmatpush.bf16.msra.mxu0 0
      %671 = vmatpush.bf16.msra.mxu0 0
      %672 = vmatpush.bf16.msra.mxu0 0
      %673 = vmatpush.bf16.msra.mxu0 0
      %674 = vmatpush.bf16.msra.mxu0 0
      %675 = vmatpush.bf16.msra.mxu0 0
      %676 = vmatpush.bf16.msra.mxu0 0
      %677 = vmatpush.bf16.msra.mxu0 %v665
      %678 = vmatmul.bf16.gmra.mxu0 %v668
      %v679 = vpop.f32.mrf.mxu0
      %v680 = vadd.f32 0.0, %v679
      %v681 = vpop.f32.mrf.mxu0
      %v682 = vadd.f32 0.0, %v681
      %683 = vdwg.mxu0
      %v684 = vadd.f32 %v620, %v652
      %v685 = vadd.f32 %v621, %v654
      %v686 = vadd.f32 %v622, %v680
      %v687 = vadd.f32 %v623, %v682
      %688 = vst.msk [vmem:[#allocation4] sm:$0xff] %vm447, %v684
      %689 = vst.msk [vmem:[#allocation4 + $0x8] sm:$0xff] %vm447, %v685
      %690 = vst.msk [vmem:[#allocation4 + $0x10] sm:$0xff] %vm447, %v686
      %691 = vst.msk [vmem:[#allocation4 + $0x18] sm:$0xff] %vm447, %v687
      %692 = vst.msk [vmem:[#allocation2] sm:$0xff] %vm591, %v519
      %693 = vst.msk [vmem:[#allocation2 + $0x8] sm:$0xff] %vm591, %v520
      %694 = vst.msk [vmem:[#allocation2 + $0x10] sm:$0xff] %vm591, %v521
      %695 = vst.msk [vmem:[#allocation2 + $0x18] sm:$0xff] %vm591, %v522
      // Predicated region
      $region49: #{basic_transformer_block.11} parent=43 // pred_check
        %p696 = pneg %p407
      $region50: #{basic_transformer_block.11} parent=43 // pred_check_branch
        %698 = sbr.rel (%p696) target = $region52
      $region51: #{basic_transformer_block.11} parent=43 // pred_region
        %v699 = vld [vmem:[#allocation3] sm:$0xff]
        %v700 = vld [vmem:[#allocation3 + $0x8] sm:$0xff]
        %v701 = vld [vmem:[#allocation3 + $0x10] sm:$0xff]
        %v702 = vld [vmem:[#allocation3 + $0x18] sm:$0xff]
        %v703 = vrcp.pop %v699
        %v704 = vrcp.pop %v700
        %v705 = vrcp.pop %v701
        %v706 = vrcp.pop %v702
        %v707 = vld [vmem:[#allocation4] sm:$0xff]
        %v708 = vld [vmem:[#allocation4 + $0x8] sm:$0xff]
        %v709 = vld [vmem:[#allocation4 + $0x10] sm:$0xff]
        %v710 = vld [vmem:[#allocation4 + $0x18] sm:$0xff]
        %712 = vset.pattern.permute.xlu0 0
        %713 = vperm.xlu0 %712, %v703
        %v714 = vpop.permute.xlu0 %713
        %717 = vset.pattern.permute.xlu0 0
        %718 = vperm.xlu0 %717, %v704
        %v719 = vpop.permute.xlu0 %718
        %722 = vset.pattern.permute.xlu0 0
        %723 = vperm.xlu0 %722, %v705
        %v724 = vpop.permute.xlu0 %723
        %727 = vset.pattern.permute.xlu0 0
        %728 = vperm.xlu0 %727, %v706
        %v729 = vpop.permute.xlu0 %728
        %v731 = vmul.f32 %v707, %v714
        %v732 = vmul.f32 %v708, %v719
        %v733 = vmul.f32 %v709, %v724
        %v734 = vmul.f32 %v710, %v729
        %v735 = vpack.c.bf16 %v731, %v731
        %v736 = vpack.c.bf16 %v732, %v732
        %v737 = vpack.c.bf16 %v733, %v733
        %v738 = vpack.c.bf16 %v734, %v734
        %v739 = vld [vmem:[%s3] sm:$0xf]
        %v740 = vld [vmem:[%s3 + $0x4] sm:$0xf]
        %v741 = vld [vmem:[%s3 + $0x8] sm:$0xf]
        %v742 = vld [vmem:[%s3 + $0xc] sm:$0xf]
        %v743 = vld [vmem:[%s3 + $0x10] sm:$0xf]
        %v744 = vld [vmem:[%s3 + $0x14] sm:$0xf]
        %v745 = vld [vmem:[%s3 + $0x18] sm:$0xf]
        %v746 = vld [vmem:[%s3 + $0x1c] sm:$0xf]
        %v747 = vld [vmem:[%s3 + $0x20] sm:$0xf]
        %v748 = vld [vmem:[%s3 + $0x24] sm:$0xf]
        %v749 = vld [vmem:[%s3 + $0x28] sm:$0xf]
        %v750 = vld [vmem:[%s3 + $0x2c] sm:$0xf]
        %v751 = vld [vmem:[%s3 + $0x30] sm:$0xf]
        %v752 = vld [vmem:[%s3 + $0x34] sm:$0xf]
        %v753 = vld [vmem:[%s3 + $0x38] sm:$0xf]
        %v754 = vld [vmem:[%s3 + $0x3c] sm:$0xf]
        %v757 = vunpack.c.l.b16 %v737
        %v758 = vunpack.c.l.b16 %v738
        %v759 = vpack.c.b16 %v758, %v757
        %v768 = vunpack.c.l.b16 %v747
        %v769 = vunpack.c.l.b16 %v748
        %v770 = vunpack.c.l.b16 %v749
        %v771 = vunpack.c.l.b16 %v750
        %v772 = vunpack.c.l.b16 %v751
        %v773 = vunpack.c.l.b16 %v752
        %v774 = vunpack.c.l.b16 %v753
        %v775 = vunpack.c.l.b16 %v754
        %v776 = vpack.c.b16 %v769, %v768
        %v777 = vpack.c.b16 %v771, %v770
        %v778 = vpack.c.b16 %v773, %v772
        %v779 = vpack.c.b16 %v775, %v774
        %v785 = vsel %vm447, %v759, 0
        %787 = vmatpush.bf16.msra.mxu0 0
        %788 = vmatpush.bf16.msra.mxu0 0
        %789 = vmatpush.bf16.msra.mxu0 0
        %790 = vmatpush.bf16.msra.mxu0 0
        %791 = vmatpush.bf16.msra.mxu0 %v779
        %792 = vmatpush.bf16.msra.mxu0 %v778
        %793 = vmatpush.bf16.msra.mxu0 %v777
        %794 = vmatpush.bf16.msra.mxu0 %v776
        %795 = vmatmul.bf16.gmra.mxu0 %v785
        %v796 = vpop.f32.mrf.mxu0
        %v797 = vadd.f32 0.0, %v796
        %v798 = vpop.f32.mrf.mxu0
        %v799 = vadd.f32 0.0, %v798
        %800 = vdwg.mxu0
        %v803 = vunpack.c.l.b16 %v735
        %v804 = vunpack.c.l.b16 %v736
        %v805 = vpack.c.b16 %v804, %v803
        %v814 = vunpack.c.l.b16 %v739
        %v815 = vunpack.c.l.b16 %v740
        %v816 = vunpack.c.l.b16 %v741
        %v817 = vunpack.c.l.b16 %v742
        %v818 = vunpack.c.l.b16 %v743
        %v819 = vunpack.c.l.b16 %v744
        %v820 = vunpack.c.l.b16 %v745
        %v821 = vunpack.c.l.b16 %v746
        %v822 = vpack.c.b16 %v815, %v814
        %v823 = vpack.c.b16 %v817, %v816
        %v824 = vpack.c.b16 %v819, %v818
        %v825 = vpack.c.b16 %v821, %v820
        %v831 = vsel %vm447, %v805, 0
        %833 = vmatpush.bf16.msra.mxu0 0
        %834 = vmatpush.bf16.msra.mxu0 0
        %835 = vmatpush.bf16.msra.mxu0 0
        %836 = vmatpush.bf16.msra.mxu0 0
        %837 = vmatpush.bf16.msra.mxu0 %v825
        %838 = vmatpush.bf16.msra.mxu0 %v824
        %839 = vmatpush.bf16.msra.mxu0 %v823
        %840 = vmatpush.bf16.msra.mxu0 %v822
        %841 = vmatmul.bf16.gmra.mxu0 %v831
        %v842 = vpop.f32.mrf.mxu0
        %v843 = vadd.f32 %v797, %v842
        %v844 = vpop.f32.mrf.mxu0
        %v845 = vadd.f32 %v799, %v844
        %846 = vdwg.mxu0
        %v847 = vld [vmem:[%s4] sm:$0x1]
        %v849 = vperm.slane %v847, 0
        %v851 = vadd.f32 %v843, %v849
        %v852 = vadd.f32 %v845, %v849
        %v853 = vld [vmem:[%s394] sm:$0xff]
        %v854 = vld [vmem:[%s394 + $0x8] sm:$0xff]
        %v855 = vmul.f32 %v853, 0.9
        %v856 = vmul.f32 %v854, 0.9
        %v857 = vadd.f32 %v851, %v855
        %v858 = vadd.f32 %v852, %v856
        %859 = vst [vmem:[%s404] sm:$0xff] %v857
        %860 = vst [vmem:[%s404 + $0x8] sm:$0xff] %v858
      $region52: #{basic_transformer_block.11} parent=43 // pred_fallthru
        _
      %s861 = smul.u32 2, %s23
      %p862 = scmp.lt.s32.totalorder %s22, 7
      %s863 = scalar_select %p862, %s22, 7
      %p864 = scmp.lt.s32.totalorder %s861, 1
      %s865 = scalar_select %p864, %s861, 1
      %s866 = smul.addr %s863, 2
      %s867 = sadd.s32 %s865, %s866
      %s868 = smul.addr %s867, 8
      %s869 = scalar_lea.vmem %s6, %s868
      // Predicated region
      $region53: #{basic_transformer_block.11} parent=43 // pred_check
        %p870 = pneg %p210
      $region54: #{basic_transformer_block.11} parent=43 // pred_check_branch
        %872 = sbr.rel (%p870) target = $region56
      $region55: #{basic_transformer_block.11} parent=43 // pred_region
        %s873 = smul.u32 2, %s23
      $region56: #{basic_transformer_block.11} parent=43 // pred_fallthru
        _
    $region44: #{basic_transformer_block.11} parent=5 // pred_fallthru
      _
    %p874 = scmp.le.s32.totalorder 2, %s12
    // Predicated region
    $region57: #{basic_transformer_block.11} parent=5 // pred_check
      %p875 = pneg %p874
    $region58: #{basic_transformer_block.11} parent=5 // pred_check_branch
      %877 = sbr.rel (%p875) target = $region60
    $region59: #{basic_transformer_block.11} parent=5 // pred_region
      %s878 = ssub.s32 %s12, 2
      // Predicated region
      $region61: #{basic_transformer_block.11} parent=59 // pred_check
        %p879 = pneg %p216
      $region62: #{basic_transformer_block.11} parent=59 // pred_check_branch
        %881 = sbr.rel (%p879) target = $region64
      $region63: #{basic_transformer_block.11} parent=59 // pred_region
        %s882 = smul.u32 2, %s26
        %p883 = scmp.lt.s32.totalorder %s25, 7
        %s884 = scalar_select %p883, %s25, 7
        %p885 = scmp.lt.s32.totalorder %s882, 1
        %s886 = scalar_select %p885, %s882, 1
        %s887 = smul.addr %s884, 2
        %s888 = sadd.s32 %s886, %s887
        %s889 = smul.addr %s888, 8
        %s890 = scalar_lea.vmem %s6, %s889
      $region64: #{basic_transformer_block.11} parent=59 // pred_fallthru
        _
    $region60: #{basic_transformer_block.11} parent=5 // pred_fallthru
      _
  $region6: #{basic_transformer_block.11} parent=0 // loop_footer
    %s16 = sadd.s32 1, %s12
  $region7: #{basic_transformer_block.11} parent=0 // loop_footer_branch
    %11 = sbr.rel target = $region3
  $region8: #{basic_transformer_block.11} parent=0 // loop_exit
    _

// kernel: basic_transformer_block.12
$region0: #{basic_transformer_block.12}
  #allocation0 [shape = 'u32[]', space=smem, size = 0x4, offset = 0x4, fixed_abs, tag = 'smem constant byte address 0x4 - core index']
  #allocation1 [shape = 'u32[72,128]{1,0:T(1,128)}', space=vmem, size = 0x9000, scoped, tag = 'internal scratch']
  %s0 = inlined_call_operand.vmem [shape: f32[16,128], index: 0, kind: input, shape index: {}]
  %s1 = inlined_call_operand.vmem [shape: f32[16,1], index: 1, kind: input, shape index: {}]
  %s2 = inlined_call_operand.vmem [shape: f32[1,16], index: 2, kind: input, shape index: {}]
  %s3 = inlined_call_operand.vmem [shape: f32[16,16], index: 3, kind: output, shape index: {}]
  %s4 = sld [smem:[#allocation0]]
  $region22: #{basic_transformer_block.12} parent=0
    _
  %s6 = ssub.s32 1, %s4
  %s7 = scalar_select 0, %s6, %s4
  // Predicated region
  $region2: #{basic_transformer_block.12} parent=0 // pred_check
    _
  $region3: #{basic_transformer_block.12} parent=0 // pred_check_branch
    %9 = sbr.rel (0) target = $region5
  $region4: #{basic_transformer_block.12} parent=0 // pred_region
    _
  $region5: #{basic_transformer_block.12} parent=0 // pred_fallthru
    _
  // Predicated region
  $region6: #{basic_transformer_block.12} parent=0 // pred_check
    _
  $region7: #{basic_transformer_block.12} parent=0 // pred_check_branch
    %11 = sbr.rel (0) target = $region9
  $region8: #{basic_transformer_block.12} parent=0 // pred_region
    _
  $region9: #{basic_transformer_block.12} parent=0 // pred_fallthru
    _
  // Predicated region
  $region10: #{basic_transformer_block.12} parent=0 // pred_check
    _
  $region11: #{basic_transformer_block.12} parent=0 // pred_check_branch
    %13 = sbr.rel (0) target = $region13
  $region12: #{basic_transformer_block.12} parent=0 // pred_region
    _
  $region13: #{basic_transformer_block.12} parent=0 // pred_fallthru
    _
  %v14 = vld [vmem:[%s0] sm:$0xff]
  %v15 = vld [vmem:[%s0 + $0x8] sm:$0xff]
  %16 = vmatpush.xpose.msra.mxu0 0.0
  %17 = vmatpush.xpose.msra.mxu0 0.0
  %18 = vmatpush.xpose.msra.mxu0 0.0
  %19 = vmatpush.xpose.msra.mxu0 0.0
  %20 = vmatpush.xpose.msra.mxu0 0.0
  %21 = vmatpush.xpose.msra.mxu0 0.0
  %22 = vmatpush.xpose.msra.mxu0 0.0
  %23 = vmatpush.xpose.msra.mxu0 0.0
  %24 = vmatpush.xpose.msra.mxu0 0.0
  %25 = vmatpush.xpose.msra.mxu0 0.0
  %26 = vmatpush.xpose.msra.mxu0 0.0
  %27 = vmatpush.xpose.msra.mxu0 0.0
  %28 = vmatpush.xpose.msra.mxu0 0.0
  %29 = vmatpush.xpose.msra.mxu0 0.0
  %30 = vmatpush.xpose.msra.mxu0 %v15
  %31 = vmatpush.xpose.msra.mxu0 %v14
  %32 = vmatmul.f32.gmra.mxu0 %v14
  %v33 = vpop.f32.mrf.mxu0
  %v34 = vadd.f32 0.0, %v33
  %35 = vmatmul.f32.gmra.mxu0 %v15
  %v36 = vpop.f32.mrf.mxu0
  %v37 = vadd.f32 0.0, %v36
  %38 = vdwg.mxu0
  %v39 = vld [vmem:[%s1] sm:$0xff]
  %v40 = vld [vmem:[%s1 + $0x8] sm:$0xff]
  %v41 = vld [vmem:[%s2] sm:$0x1]
  %43 = vset.pattern.permute.xlu0 0
  %44 = vperm.xlu0 %43, %v39
  %v45 = vpop.permute.xlu0 %44
  %48 = vset.pattern.permute.xlu0 0
  %49 = vperm.xlu0 %48, %v40
  %v50 = vpop.permute.xlu0 %49
  %v53 = vperm.slane %v41, 0
  %v55 = vadd.f32 %v45, %v53
  %v56 = vadd.f32 %v50, %v53
  %v57 = vmul.f32 %v34, 2.0
  %v58 = vmul.f32 %v37, 2.0
  %v59 = vsub.f32 %v55, %v57
  %v60 = vsub.f32 %v56, %v58
  %v61 = vmax.f32 %v59, 0.0
  %v62 = vmax.f32 %v60, 0.0
  %v63 = vmul.f32 %v61, -0.5
  %v64 = vmul.f32 %v62, -0.5
  %v65 = vmul.f32 %v63, 1.442695
  %v66 = vpow.pop %v65
  %v67 = vmul.f32 %v64, 1.442695
  %v68 = vpow.pop %v67
  %vm69 = vcmask 130048
  %70 = vst.msk [vmem:[%s3] sm:$0xff] %vm69, %v66
  %71 = vst.msk [vmem:[%s3 + $0x8] sm:$0xff] %vm69, %v68
  // Predicated region
  $region14: #{basic_transformer_block.12} parent=0 // pred_check
    _
  $region15: #{basic_transformer_block.12} parent=0 // pred_check_branch
    %73 = sbr.rel (0) target = $region17
  $region16: #{basic_transformer_block.12} parent=0 // pred_region
    _
  $region17: #{basic_transformer_block.12} parent=0 // pred_fallthru
    _
  // Predicated region
  $region18: #{basic_transformer_block.12} parent=0 // pred_check
    _
  $region19: #{basic_transformer_block.12} parent=0 // pred_check_branch
    %75 = sbr.rel (0) target = $region21
  $region20: #{basic_transformer_block.12} parent=0 // pred_region
    _
  $region21: #{basic_transformer_block.12} parent=0 // pred_fallthru
    _

// kernel: custom-call.16
$region0: #{custom-call.16}
  %s0 = inlined_call_operand.vmem [shape: f32[1,16,16], index: 0, kind: input, shape index: {}]
  %s1 = inlined_call_operand.vmem [shape: f32[1,16,16], index: 1, kind: output, shape index: {}]
  $region1: #{custom-call.16} parent=0
    #allocation0 [shape = 'u8[8192]{0}', space=vmem, size = 0x2000, scoped, tag = 'operand span for operand 0']
    #allocation1 [shape = 'u8[8192]{0}', space=vmem, size = 0x2000, scoped, tag = 'operand span for operand 1']
    #allocation2 [shape = 'f32[16,16]{1,0}', space=vmem, size = 0x2000, scoped, tag = 'rescaled input a']
    // Predicated region
    $region2: #{custom-call.16} parent=1 // pred_check
      _
    $region3: #{custom-call.16} parent=1 // pred_check_branch
      %3 = sbr.rel (0) target = $region5
    $region4: #{custom-call.16} parent=1 // pred_region
      // Predicated region
      $region6: #{custom-call.16} parent=4 // pred_check
        _
      $region7: #{custom-call.16} parent=4 // pred_check_branch
        %5 = sbr.rel (0) target = $region9
      $region8: #{custom-call.16} parent=4 // pred_region
        // Predicated region
        $region21: #{custom-call.16} parent=8 // pred_check
          _
        $region22: #{custom-call.16} parent=8 // pred_check_branch
          %23 = sbr.rel (0) target = $region24
        $region23: #{custom-call.16} parent=8 // pred_region
          loop: start=0, step=1, limit=1
          $region25: #{custom-call.16} parent=23 // loop_pre_header
            _
          $region26: #{custom-call.16} parent=23 // loop_header
            %s25 = sphi 0, %s29
            %p26 = scmp.ge.s32.totalorder %s25, 1
            %s30 = sphi %s0, %s0
            %s31 = sphi [#allocation0], [#allocation0]
          $region27: #{custom-call.16} parent=23 // loop_header_branch
            %28 = sbr.rel (%p26) target = $region31
          $region28: #{custom-call.16} parent=23 // loop_body
            %v32 = vld [vmem:[%s30] sm:$0xff]
            %33 = vst [vmem:[%s31] sm:$0xff] %v32
            %v34 = vld [vmem:[%s30 + $0x8] sm:$0xff]
            %35 = vst [vmem:[%s31 + $0x8] sm:$0xff] %v34
          $region29: #{custom-call.16} parent=23 // loop_footer
            %s29 = sadd.s32 1, %s25
          $region30: #{custom-call.16} parent=23 // loop_footer_branch
            %24 = sbr.rel target = $region26
          $region31: #{custom-call.16} parent=23 // loop_exit
            _
        $region24: #{custom-call.16} parent=8 // pred_fallthru
          _
        // Predicated region
        $region32: #{custom-call.16} parent=8 // pred_check
          _
        $region33: #{custom-call.16} parent=8 // pred_check_branch
          %37 = sbr.rel target = $region35
        $region34: #{custom-call.16} parent=8 // pred_region
          _
        $region35: #{custom-call.16} parent=8 // pred_fallthru
          _
      $region9: #{custom-call.16} parent=4 // pred_fallthru
        _
      // Predicated region
      $region10: #{custom-call.16} parent=4 // pred_check
        _
      $region11: #{custom-call.16} parent=4 // pred_check_branch
        %7 = sbr.rel target = $region13
      $region12: #{custom-call.16} parent=4 // pred_region
        %s9 = ssub.s32 256, 1
        loop: start=0, step=1, limit=1
        $region14: #{custom-call.16} parent=12 // loop_pre_header
          _
        $region15: #{custom-call.16} parent=12 // loop_header
          %s11 = sphi 0, %s15
          %p12 = scmp.ge.s32.totalorder %s11, 1
          %s16 = sphi %s0, %s0
          %s17 = sphi [#allocation0], [#allocation0]
        $region16: #{custom-call.16} parent=12 // loop_header_branch
          %14 = sbr.rel (%p12) target = $region20
        $region17: #{custom-call.16} parent=12 // loop_body
          %v18 = vld [vmem:[%s16] sm:%s9]
          %19 = vst [vmem:[%s17] sm:%s9] %v18
          %v20 = vld [vmem:[%s16 + $0x8] sm:%s9]
          %21 = vst [vmem:[%s17 + $0x8] sm:%s9] %v20
        $region18: #{custom-call.16} parent=12 // loop_footer
          %s15 = sadd.s32 1, %s11
        $region19: #{custom-call.16} parent=12 // loop_footer_branch
          %10 = sbr.rel target = $region15
        $region20: #{custom-call.16} parent=12 // loop_exit
          _
      $region13: #{custom-call.16} parent=4 // pred_fallthru
        _
    $region5: #{custom-call.16} parent=1 // pred_fallthru
      _
    %38 = vnop
    %v39 = vlaneseq
    %v40 = vand.u32 %v39, 127
    %vm41 = vcmp.lt.s32.totalorder %v40, 16
    %v42 = vlaneseq
    %v43 = vshrl.u32 %v42, 7
    %vm45 = vcmp.eq.s32.totalorder %v43, %v40
    %v46 = vld [vmem:[#allocation0] sm:$0xff]
    %v47 = vsel %vm45, %v46, 0.0
    %48 = vadd.xlane.f32.xlu0 %v47
    %v49 = vpop.xlane.xlu0 %48
    %vm50 = vcmp.ge.s32.totalorder %v43, %v40
    %vm51 = vmand %vm50, %vm41
    %v52 = vsel %vm51, %v46, 0.0
    %v53 = vrcp.pop %v49
    %v54 = vmul.f32 %v49, %v53
    %v55 = vsub.f32 1.0, %v54
    %v56 = vmul.f32 %v53, %v55
    %v57 = vadd.f32 %v53, %v56
    %vm58 = vweird.f32 %v49
    %vm59 = vweird.f32 %v53
    %vm60 = vmor %vm58, %vm59
    %v61 = vsel %vm60, %v53, %v57
    %v62 = vand.u32 2147483647, %v49
    %vm63 = vcmp.eq.f32.partialorder %v62, 8.507059e+37
    %v64 = vand.u32 %v49, 2147483648
    %v65 = vor.u32 1.1754944e-38, %v64
    %v66 = vsel %vm63, %v65, %v61
    %v67 = vmul.f32 %v52, %v66
    %68 = vst [vmem:[#allocation2] sm:$0xff] %v67
    %s69 = scalar_lea.vmem [#allocation0], 8
    %s70 = scalar_lea.vmem [#allocation2], 8
    %v71 = vlaneseq
    %v72 = vshrl.u32 %v71, 7
    %v73 = vadd.s32 %v72, 8
    %vm74 = vcmp.eq.s32.totalorder %v73, %v40
    %v75 = vld [vmem:[%s69] sm:$0xff]
    %v76 = vsel %vm74, %v75, 0.0
    %77 = vadd.xlane.f32.xlu0 %v76
    %v78 = vpop.xlane.xlu0 %77
    %vm79 = vcmp.ge.s32.totalorder %v73, %v40
    %vm80 = vmand %vm79, %vm41
    %v81 = vsel %vm80, %v75, 0.0
    %v82 = vrcp.pop %v78
    %v83 = vmul.f32 %v78, %v82
    %v84 = vsub.f32 1.0, %v83
    %v85 = vmul.f32 %v82, %v84
    %v86 = vadd.f32 %v82, %v85
    %vm87 = vweird.f32 %v78
    %vm88 = vweird.f32 %v82
    %vm89 = vmor %vm87, %vm88
    %v90 = vsel %vm89, %v82, %v86
    %v91 = vand.u32 2147483647, %v78
    %vm92 = vcmp.eq.f32.partialorder %v91, 8.507059e+37
    %v93 = vand.u32 %v78, 2147483648
    %v94 = vor.u32 1.1754944e-38, %v93
    %v95 = vsel %vm92, %v94, %v90
    %v96 = vmul.f32 %v81, %v95
    %97 = vst [vmem:[%s70] sm:$0xff] %v96
    %v98 = vlaneseq
    %v99 = vand.u32 %v98, 127
    %v100 = vlaneseq
    %v101 = vshrl.u32 %v100, 7
    %vm103 = vcmp.eq.s32.totalorder %v99, %v101
    %v104 = vlaneseq
    %v105 = vand.u32 %v104, 127
    %vm106 = vcmp.eq.s32.totalorder %v105, 0
    %v107 = vsel %vm106, 1.0, -1.0
    %v108 = vsel %vm103, %v107, 0.0
    %v109 = vlaneseq
    %v110 = vand.u32 %v109, 127
    %v111 = vlaneseq
    %v112 = vshrl.u32 %v111, 7
    %v113 = vadd.s32 %v112, 8
    %vm114 = vcmp.eq.s32.totalorder %v110, %v113
    %v115 = vsel %vm114, -1.0, 0.0
    %s116 = scalar_lea.vmem [#allocation2], 1
    %v117 = vld [vmem:[%s116] ss:$0 sm:$0xff]
    %v118 = vxor.u32 %v117, 2147483648
    %v119 = vlaneseq
    %v120 = vand.u32 %v119, 127
    %vm121 = vcmp.eq.s32.totalorder %v120, 1
    %v122 = vmul.f32 %v118, %v108
    %123 = vadd.xlane.f32.xlu0 %v122
    %v124 = vpop.xlane.xlu0 %123
    %v125 = vsel %vm121, %v124, %v108
    %s126 = scalar_lea.vmem [#allocation2], 2
    %v127 = vld [vmem:[%s126] ss:$0 sm:$0xff]
    %v128 = vxor.u32 %v127, 2147483648
    %v129 = vlaneseq
    %v130 = vand.u32 %v129, 127
    %vm131 = vcmp.eq.s32.totalorder %v130, 2
    %v132 = vmul.f32 %v128, %v125
    %133 = vadd.xlane.f32.xlu0 %v132
    %v134 = vpop.xlane.xlu0 %133
    %v135 = vsel %vm131, %v134, %v125
    %s136 = scalar_lea.vmem [#allocation2], 3
    %v137 = vld [vmem:[%s136] ss:$0 sm:$0xff]
    %v138 = vxor.u32 %v137, 2147483648
    %v139 = vlaneseq
    %v140 = vand.u32 %v139, 127
    %vm141 = vcmp.eq.s32.totalorder %v140, 3
    %v142 = vmul.f32 %v138, %v135
    %143 = vadd.xlane.f32.xlu0 %v142
    %v144 = vpop.xlane.xlu0 %143
    %v145 = vsel %vm141, %v144, %v135
    %s146 = scalar_lea.vmem [#allocation2], 4
    %v147 = vld [vmem:[%s146] ss:$0 sm:$0xff]
    %v148 = vxor.u32 %v147, 2147483648
    %v149 = vlaneseq
    %v150 = vand.u32 %v149, 127
    %vm151 = vcmp.eq.s32.totalorder %v150, 4
    %v152 = vmul.f32 %v148, %v145
    %153 = vadd.xlane.f32.xlu0 %v152
    %v154 = vpop.xlane.xlu0 %153
    %v155 = vsel %vm151, %v154, %v145
    %s156 = scalar_lea.vmem [#allocation2], 5
    %v157 = vld [vmem:[%s156] ss:$0 sm:$0xff]
    %v158 = vxor.u32 %v157, 2147483648
    %v159 = vlaneseq
    %v160 = vand.u32 %v159, 127
    %vm161 = vcmp.eq.s32.totalorder %v160, 5
    %v162 = vmul.f32 %v158, %v155
    %163 = vadd.xlane.f32.xlu0 %v162
    %v164 = vpop.xlane.xlu0 %163
    %v165 = vsel %vm161, %v164, %v155
    %s166 = scalar_lea.vmem [#allocation2], 6
    %v167 = vld [vmem:[%s166] ss:$0 sm:$0xff]
    %v168 = vxor.u32 %v167, 2147483648
    %v169 = vlaneseq
    %v170 = vand.u32 %v169, 127
    %vm171 = vcmp.eq.s32.totalorder %v170, 6
    %v172 = vmul.f32 %v168, %v165
    %173 = vadd.xlane.f32.xlu0 %v172
    %v174 = vpop.xlane.xlu0 %173
    %v175 = vsel %vm171, %v174, %v165
    %s176 = scalar_lea.vmem [#allocation2], 7
    %v177 = vld [vmem:[%s176] ss:$0 sm:$0xff]
    %v178 = vxor.u32 %v177, 2147483648
    %v179 = vlaneseq
    %v180 = vand.u32 %v179, 127
    %vm181 = vcmp.eq.s32.totalorder %v180, 7
    %v182 = vmul.f32 %v178, %v175
    %183 = vadd.xlane.f32.xlu0 %v182
    %v184 = vpop.xlane.xlu0 %183
    %v185 = vsel %vm181, %v184, %v175
    %s186 = scalar_lea.vmem [#allocation2], 8
    %v187 = vld [vmem:[%s186] ss:$0 sm:$0xff]
    %v188 = vxor.u32 %v187, 2147483648
    %v189 = vlaneseq
    %v190 = vand.u32 %v189, 127
    %vm191 = vcmp.eq.s32.totalorder %v190, 8
    %v192 = vmul.f32 %v188, %v185
    %193 = vadd.xlane.f32.xlu0 %v192
    %v194 = vpop.xlane.xlu0 %193
    %v195 = vsel %vm191, %v194, %v185
    %v196 = vmul.f32 %v188, %v115
    %197 = vadd.xlane.f32.xlu0 %v196
    %v198 = vpop.xlane.xlu0 %197
    %v199 = vsel %vm191, %v198, %v115
    %s200 = scalar_lea.vmem [#allocation2], 9
    %v201 = vld [vmem:[%s200] ss:$0 sm:$0xff]
    %v202 = vxor.u32 %v201, 2147483648
    %v203 = vlaneseq
    %v204 = vand.u32 %v203, 127
    %vm205 = vcmp.eq.s32.totalorder %v204, 9
    %v206 = vmul.f32 %v202, %v195
    %207 = vadd.xlane.f32.xlu0 %v206
    %v208 = vpop.xlane.xlu0 %207
    %v209 = vsel %vm205, %v208, %v195
    %v210 = vmul.f32 %v202, %v199
    %211 = vadd.xlane.f32.xlu0 %v210
    %v212 = vpop.xlane.xlu0 %211
    %v213 = vsel %vm205, %v212, %v199
    %s214 = scalar_lea.vmem [#allocation2], 10
    %v215 = vld [vmem:[%s214] ss:$0 sm:$0xff]
    %v216 = vxor.u32 %v215, 2147483648
    %v217 = vlaneseq
    %v218 = vand.u32 %v217, 127
    %vm219 = vcmp.eq.s32.totalorder %v218, 10
    %v220 = vmul.f32 %v216, %v209
    %221 = vadd.xlane.f32.xlu0 %v220
    %v222 = vpop.xlane.xlu0 %221
    %v223 = vsel %vm219, %v222, %v209
    %v224 = vmul.f32 %v216, %v213
    %225 = vadd.xlane.f32.xlu0 %v224
    %v226 = vpop.xlane.xlu0 %225
    %v227 = vsel %vm219, %v226, %v213
    %s228 = scalar_lea.vmem [#allocation2], 11
    %v229 = vld [vmem:[%s228] ss:$0 sm:$0xff]
    %v230 = vxor.u32 %v229, 2147483648
    %v231 = vlaneseq
    %v232 = vand.u32 %v231, 127
    %vm233 = vcmp.eq.s32.totalorder %v232, 11
    %v234 = vmul.f32 %v230, %v223
    %235 = vadd.xlane.f32.xlu0 %v234
    %v236 = vpop.xlane.xlu0 %235
    %v237 = vsel %vm233, %v236, %v223
    %v238 = vmul.f32 %v230, %v227
    %239 = vadd.xlane.f32.xlu0 %v238
    %v240 = vpop.xlane.xlu0 %239
    %v241 = vsel %vm233, %v240, %v227
    %s242 = scalar_lea.vmem [#allocation2], 12
    %v243 = vld [vmem:[%s242] ss:$0 sm:$0xff]
    %v244 = vxor.u32 %v243, 2147483648
    %v245 = vlaneseq
    %v246 = vand.u32 %v245, 127
    %vm247 = vcmp.eq.s32.totalorder %v246, 12
    %v248 = vmul.f32 %v244, %v237
    %249 = vadd.xlane.f32.xlu0 %v248
    %v250 = vpop.xlane.xlu0 %249
    %v251 = vsel %vm247, %v250, %v237
    %v252 = vmul.f32 %v244, %v241
    %253 = vadd.xlane.f32.xlu0 %v252
    %v254 = vpop.xlane.xlu0 %253
    %v255 = vsel %vm247, %v254, %v241
    %s256 = scalar_lea.vmem [#allocation2], 13
    %v257 = vld [vmem:[%s256] ss:$0 sm:$0xff]
    %v258 = vxor.u32 %v257, 2147483648
    %v259 = vlaneseq
    %v260 = vand.u32 %v259, 127
    %vm261 = vcmp.eq.s32.totalorder %v260, 13
    %v262 = vmul.f32 %v258, %v251
    %263 = vadd.xlane.f32.xlu0 %v262
    %v264 = vpop.xlane.xlu0 %263
    %v265 = vsel %vm261, %v264, %v251
    %v266 = vmul.f32 %v258, %v255
    %267 = vadd.xlane.f32.xlu0 %v266
    %v268 = vpop.xlane.xlu0 %267
    %v269 = vsel %vm261, %v268, %v255
    %s270 = scalar_lea.vmem [#allocation2], 14
    %v271 = vld [vmem:[%s270] ss:$0 sm:$0xff]
    %v272 = vxor.u32 %v271, 2147483648
    %v273 = vlaneseq
    %v274 = vand.u32 %v273, 127
    %vm275 = vcmp.eq.s32.totalorder %v274, 14
    %v276 = vmul.f32 %v272, %v265
    %277 = vadd.xlane.f32.xlu0 %v276
    %v278 = vpop.xlane.xlu0 %277
    %v279 = vsel %vm275, %v278, %v265
    %v280 = vmul.f32 %v272, %v269
    %281 = vadd.xlane.f32.xlu0 %v280
    %v282 = vpop.xlane.xlu0 %281
    %v283 = vsel %vm275, %v282, %v269
    %s284 = scalar_lea.vmem [#allocation2], 15
    %v285 = vld [vmem:[%s284] ss:$0 sm:$0xff]
    %v286 = vxor.u32 %v285, 2147483648
    %v287 = vlaneseq
    %v288 = vand.u32 %v287, 127
    %vm289 = vcmp.eq.s32.totalorder %v288, 15
    %v290 = vmul.f32 %v286, %v279
    %291 = vadd.xlane.f32.xlu0 %v290
    %v292 = vpop.xlane.xlu0 %291
    %v293 = vsel %vm289, %v292, %v279
    %v294 = vmul.f32 %v286, %v283
    %295 = vadd.xlane.f32.xlu0 %v294
    %v296 = vpop.xlane.xlu0 %295
    %v297 = vsel %vm289, %v296, %v283
    %v298 = vrcp.pop %v49
    %v299 = vmul.f32 %v49, %v298
    %v300 = vsub.f32 1.0, %v299
    %v301 = vmul.f32 %v298, %v300
    %v302 = vadd.f32 %v298, %v301
    %vm303 = vweird.f32 %v49
    %vm304 = vweird.f32 %v298
    %vm305 = vmor %vm303, %vm304
    %v306 = vsel %vm305, %v298, %v302
    %v307 = vand.u32 2147483647, %v49
    %vm308 = vcmp.eq.f32.partialorder %v307, 8.507059e+37
    %v309 = vand.u32 %v49, 2147483648
    %v310 = vor.u32 1.1754944e-38, %v309
    %v311 = vsel %vm308, %v310, %v306
    %v312 = vmul.f32 %v293, %v311
    %vm313 = vweird.f32 %v49
    %v314 = vsel %vm313, %v293, %v312
    %315 = vst [vmem:[#allocation1] sm:$0xff] %v314
    %v316 = vrcp.pop %v78
    %v317 = vmul.f32 %v78, %v316
    %v318 = vsub.f32 1.0, %v317
    %v319 = vmul.f32 %v316, %v318
    %v320 = vadd.f32 %v316, %v319
    %vm321 = vweird.f32 %v78
    %vm322 = vweird.f32 %v316
    %vm323 = vmor %vm321, %vm322
    %v324 = vsel %vm323, %v316, %v320
    %v325 = vand.u32 2147483647, %v78
    %vm326 = vcmp.eq.f32.partialorder %v325, 8.507059e+37
    %v327 = vand.u32 %v78, 2147483648
    %v328 = vor.u32 1.1754944e-38, %v327
    %v329 = vsel %vm326, %v328, %v324
    %v330 = vmul.f32 %v297, %v329
    %vm331 = vweird.f32 %v78
    %v332 = vsel %vm331, %v297, %v330
    %s333 = scalar_lea.vmem [#allocation1], 8
    %334 = vst [vmem:[%s333] sm:$0xff] %v332
    // Predicated region
    $region36: #{custom-call.16} parent=1 // pred_check
      _
    $region37: #{custom-call.16} parent=1 // pred_check_branch
      %336 = sbr.rel (0) target = $region39
    $region38: #{custom-call.16} parent=1 // pred_region
      // Predicated region
      $region40: #{custom-call.16} parent=38 // pred_check
        _
      $region41: #{custom-call.16} parent=38 // pred_check_branch
        %338 = sbr.rel (0) target = $region43
      $region42: #{custom-call.16} parent=38 // pred_region
        // Predicated region
        $region55: #{custom-call.16} parent=42 // pred_check
          _
        $region56: #{custom-call.16} parent=42 // pred_check_branch
          %356 = sbr.rel (0) target = $region58
        $region57: #{custom-call.16} parent=42 // pred_region
          loop: start=0, step=1, limit=1
          $region59: #{custom-call.16} parent=57 // loop_pre_header
            _
          $region60: #{custom-call.16} parent=57 // loop_header
            %s358 = sphi 0, %s362
            %p359 = scmp.ge.s32.totalorder %s358, 1
            %s363 = sphi [#allocation1], [#allocation1]
            %s364 = sphi %s1, %s1
          $region61: #{custom-call.16} parent=57 // loop_header_branch
            %361 = sbr.rel (%p359) target = $region65
          $region62: #{custom-call.16} parent=57 // loop_body
            %v365 = vld [vmem:[%s363] sm:$0xff]
            %366 = vst [vmem:[%s364] sm:$0xff] %v365
            %v367 = vld [vmem:[%s363 + $0x8] sm:$0xff]
            %368 = vst [vmem:[%s364 + $0x8] sm:$0xff] %v367
          $region63: #{custom-call.16} parent=57 // loop_footer
            %s362 = sadd.s32 1, %s358
          $region64: #{custom-call.16} parent=57 // loop_footer_branch
            %357 = sbr.rel target = $region60
          $region65: #{custom-call.16} parent=57 // loop_exit
            _
        $region58: #{custom-call.16} parent=42 // pred_fallthru
          _
        // Predicated region
        $region66: #{custom-call.16} parent=42 // pred_check
          _
        $region67: #{custom-call.16} parent=42 // pred_check_branch
          %370 = sbr.rel target = $region69
        $region68: #{custom-call.16} parent=42 // pred_region
          _
        $region69: #{custom-call.16} parent=42 // pred_fallthru
          _
      $region43: #{custom-call.16} parent=38 // pred_fallthru
        _
      // Predicated region
      $region44: #{custom-call.16} parent=38 // pred_check
        _
      $region45: #{custom-call.16} parent=38 // pred_check_branch
        %340 = sbr.rel target = $region47
      $region46: #{custom-call.16} parent=38 // pred_region
        %s342 = ssub.s32 256, 1
        loop: start=0, step=1, limit=1
        $region48: #{custom-call.16} parent=46 // loop_pre_header
          _
        $region49: #{custom-call.16} parent=46 // loop_header
          %s344 = sphi 0, %s348
          %p345 = scmp.ge.s32.totalorder %s344, 1
          %s349 = sphi [#allocation1], [#allocation1]
          %s350 = sphi %s1, %s1
        $region50: #{custom-call.16} parent=46 // loop_header_branch
          %347 = sbr.rel (%p345) target = $region54
        $region51: #{custom-call.16} parent=46 // loop_body
          %v351 = vld [vmem:[%s349] sm:%s342]
          %352 = vst [vmem:[%s350] sm:%s342] %v351
          %v353 = vld [vmem:[%s349 + $0x8] sm:%s342]
          %354 = vst [vmem:[%s350 + $0x8] sm:%s342] %v353
        $region52: #{custom-call.16} parent=46 // loop_footer
          %s348 = sadd.s32 1, %s344
        $region53: #{custom-call.16} parent=46 // loop_footer_branch
          %343 = sbr.rel target = $region49
        $region54: #{custom-call.16} parent=46 // loop_exit
          _
      $region47: #{custom-call.16} parent=38 // pred_fallthru
        _
    $region39: #{custom-call.16} parent=1 // pred_fallthru
      _
    %371 = vnop

// kernel: custom-call.15
$region0: #{custom-call.15}
  %s0 = inlined_call_operand.vmem [shape: f32[1,16,16], index: 0, kind: input, shape index: {}]
  %s1 = inlined_call_operand.vmem [shape: f32[1,16,16], index: 1, kind: output, shape index: {}]
  $region1: #{custom-call.15} parent=0
    #allocation0 [shape = 'u8[8192]{0}', space=vmem, size = 0x2000, scoped, tag = 'operand span for operand 0']
    #allocation1 [shape = 'u8[8192]{0}', space=vmem, size = 0x2000, scoped, tag = 'operand span for operand 1']
    #allocation2 [shape = 'f32[16,16]{1,0}', space=vmem, size = 0x2000, scoped, tag = 'rescaled input a']
    // Predicated region
    $region2: #{custom-call.15} parent=1 // pred_check
      _
    $region3: #{custom-call.15} parent=1 // pred_check_branch
      %3 = sbr.rel (0) target = $region5
    $region4: #{custom-call.15} parent=1 // pred_region
      // Predicated region
      $region6: #{custom-call.15} parent=4 // pred_check
        _
      $region7: #{custom-call.15} parent=4 // pred_check_branch
        %5 = sbr.rel (0) target = $region9
      $region8: #{custom-call.15} parent=4 // pred_region
        // Predicated region
        $region21: #{custom-call.15} parent=8 // pred_check
          _
        $region22: #{custom-call.15} parent=8 // pred_check_branch
          %23 = sbr.rel (0) target = $region24
        $region23: #{custom-call.15} parent=8 // pred_region
          loop: start=0, step=1, limit=1
          $region25: #{custom-call.15} parent=23 // loop_pre_header
            _
          $region26: #{custom-call.15} parent=23 // loop_header
            %s25 = sphi 0, %s29
            %p26 = scmp.ge.s32.totalorder %s25, 1
            %s30 = sphi %s0, %s0
            %s31 = sphi [#allocation0], [#allocation0]
          $region27: #{custom-call.15} parent=23 // loop_header_branch
            %28 = sbr.rel (%p26) target = $region31
          $region28: #{custom-call.15} parent=23 // loop_body
            %v32 = vld [vmem:[%s30] sm:$0xff]
            %33 = vst [vmem:[%s31] sm:$0xff] %v32
            %v34 = vld [vmem:[%s30 + $0x8] sm:$0xff]
            %35 = vst [vmem:[%s31 + $0x8] sm:$0xff] %v34
          $region29: #{custom-call.15} parent=23 // loop_footer
            %s29 = sadd.s32 1, %s25
          $region30: #{custom-call.15} parent=23 // loop_footer_branch
            %24 = sbr.rel target = $region26
          $region31: #{custom-call.15} parent=23 // loop_exit
            _
        $region24: #{custom-call.15} parent=8 // pred_fallthru
          _
        // Predicated region
        $region32: #{custom-call.15} parent=8 // pred_check
          _
        $region33: #{custom-call.15} parent=8 // pred_check_branch
          %37 = sbr.rel target = $region35
        $region34: #{custom-call.15} parent=8 // pred_region
          _
        $region35: #{custom-call.15} parent=8 // pred_fallthru
          _
      $region9: #{custom-call.15} parent=4 // pred_fallthru
        _
      // Predicated region
      $region10: #{custom-call.15} parent=4 // pred_check
        _
      $region11: #{custom-call.15} parent=4 // pred_check_branch
        %7 = sbr.rel target = $region13
      $region12: #{custom-call.15} parent=4 // pred_region
        %s9 = ssub.s32 256, 1
        loop: start=0, step=1, limit=1
        $region14: #{custom-call.15} parent=12 // loop_pre_header
          _
        $region15: #{custom-call.15} parent=12 // loop_header
          %s11 = sphi 0, %s15
          %p12 = scmp.ge.s32.totalorder %s11, 1
          %s16 = sphi %s0, %s0
          %s17 = sphi [#allocation0], [#allocation0]
        $region16: #{custom-call.15} parent=12 // loop_header_branch
          %14 = sbr.rel (%p12) target = $region20
        $region17: #{custom-call.15} parent=12 // loop_body
          %v18 = vld [vmem:[%s16] sm:%s9]
          %19 = vst [vmem:[%s17] sm:%s9] %v18
          %v20 = vld [vmem:[%s16 + $0x8] sm:%s9]
          %21 = vst [vmem:[%s17 + $0x8] sm:%s9] %v20
        $region18: #{custom-call.15} parent=12 // loop_footer
          %s15 = sadd.s32 1, %s11
        $region19: #{custom-call.15} parent=12 // loop_footer_branch
          %10 = sbr.rel target = $region15
        $region20: #{custom-call.15} parent=12 // loop_exit
          _
      $region13: #{custom-call.15} parent=4 // pred_fallthru
        _
    $region5: #{custom-call.15} parent=1 // pred_fallthru
      _
    %38 = vnop
    %v39 = vlaneseq
    %v40 = vand.u32 %v39, 127
    %vm41 = vcmp.lt.s32.totalorder %v40, 16
    %v42 = vlaneseq
    %v43 = vshrl.u32 %v42, 7
    %vm45 = vcmp.eq.s32.totalorder %v43, %v40
    %v46 = vld [vmem:[#allocation0] sm:$0xff]
    %v47 = vsel %vm45, %v46, 0.0
    %48 = vadd.xlane.f32.xlu0 %v47
    %v49 = vpop.xlane.xlu0 %48
    %vm50 = vcmp.le.s32.totalorder %v43, %v40
    %vm51 = vmand %vm50, %vm41
    %v52 = vsel %vm51, %v46, 0.0
    %v53 = vrcp.pop %v49
    %v54 = vmul.f32 %v49, %v53
    %v55 = vsub.f32 1.0, %v54
    %v56 = vmul.f32 %v53, %v55
    %v57 = vadd.f32 %v53, %v56
    %vm58 = vweird.f32 %v49
    %vm59 = vweird.f32 %v53
    %vm60 = vmor %vm58, %vm59
    %v61 = vsel %vm60, %v53, %v57
    %v62 = vand.u32 2147483647, %v49
    %vm63 = vcmp.eq.f32.partialorder %v62, 8.507059e+37
    %v64 = vand.u32 %v49, 2147483648
    %v65 = vor.u32 1.1754944e-38, %v64
    %v66 = vsel %vm63, %v65, %v61
    %v67 = vmul.f32 %v52, %v66
    %68 = vst [vmem:[#allocation2] sm:$0xff] %v67
    %s69 = scalar_lea.vmem [#allocation0], 8
    %s70 = scalar_lea.vmem [#allocation2], 8
    %v71 = vlaneseq
    %v72 = vshrl.u32 %v71, 7
    %v73 = vadd.s32 %v72, 8
    %vm74 = vcmp.eq.s32.totalorder %v73, %v40
    %v75 = vld [vmem:[%s69] sm:$0xff]
    %v76 = vsel %vm74, %v75, 0.0
    %77 = vadd.xlane.f32.xlu0 %v76
    %v78 = vpop.xlane.xlu0 %77
    %vm79 = vcmp.le.s32.totalorder %v73, %v40
    %vm80 = vmand %vm79, %vm41
    %v81 = vsel %vm80, %v75, 0.0
    %v82 = vrcp.pop %v78
    %v83 = vmul.f32 %v78, %v82
    %v84 = vsub.f32 1.0, %v83
    %v85 = vmul.f32 %v82, %v84
    %v86 = vadd.f32 %v82, %v85
    %vm87 = vweird.f32 %v78
    %vm88 = vweird.f32 %v82
    %vm89 = vmor %vm87, %vm88
    %v90 = vsel %vm89, %v82, %v86
    %v91 = vand.u32 2147483647, %v78
    %vm92 = vcmp.eq.f32.partialorder %v91, 8.507059e+37
    %v93 = vand.u32 %v78, 2147483648
    %v94 = vor.u32 1.1754944e-38, %v93
    %v95 = vsel %vm92, %v94, %v90
    %v96 = vmul.f32 %v81, %v95
    %97 = vst [vmem:[%s70] sm:$0xff] %v96
    %v98 = vlaneseq
    %v99 = vand.u32 %v98, 127
    %v100 = vlaneseq
    %v101 = vshrl.u32 %v100, 7
    %vm103 = vcmp.eq.s32.totalorder %v99, %v101
    %v104 = vsel %vm103, -1.0, 0.0
    %v105 = vlaneseq
    %v106 = vand.u32 %v105, 127
    %v107 = vlaneseq
    %v108 = vshrl.u32 %v107, 7
    %v109 = vadd.s32 %v108, 8
    %vm110 = vcmp.eq.s32.totalorder %v106, %v109
    %v111 = vlaneseq
    %v112 = vand.u32 %v111, 127
    %vm113 = vcmp.eq.s32.totalorder %v112, 15
    %v114 = vsel %vm113, 1.0, -1.0
    %v115 = vsel %vm110, %v114, 0.0
    %s116 = scalar_lea.vmem [#allocation2], 14
    %v117 = vld [vmem:[%s116] ss:$0 sm:$0xff]
    %v118 = vxor.u32 %v117, 2147483648
    %v119 = vlaneseq
    %v120 = vand.u32 %v119, 127
    %vm121 = vcmp.eq.s32.totalorder %v120, 14
    %v122 = vmul.f32 %v118, %v115
    %123 = vadd.xlane.f32.xlu0 %v122
    %v124 = vpop.xlane.xlu0 %123
    %v125 = vsel %vm121, %v124, %v115
    %s126 = scalar_lea.vmem [#allocation2], 13
    %v127 = vld [vmem:[%s126] ss:$0 sm:$0xff]
    %v128 = vxor.u32 %v127, 2147483648
    %v129 = vlaneseq
    %v130 = vand.u32 %v129, 127
    %vm131 = vcmp.eq.s32.totalorder %v130, 13
    %v132 = vmul.f32 %v128, %v125
    %133 = vadd.xlane.f32.xlu0 %v132
    %v134 = vpop.xlane.xlu0 %133
    %v135 = vsel %vm131, %v134, %v125
    %s136 = scalar_lea.vmem [#allocation2], 12
    %v137 = vld [vmem:[%s136] ss:$0 sm:$0xff]
    %v138 = vxor.u32 %v137, 2147483648
    %v139 = vlaneseq
    %v140 = vand.u32 %v139, 127
    %vm141 = vcmp.eq.s32.totalorder %v140, 12
    %v142 = vmul.f32 %v138, %v135
    %143 = vadd.xlane.f32.xlu0 %v142
    %v144 = vpop.xlane.xlu0 %143
    %v145 = vsel %vm141, %v144, %v135
    %s146 = scalar_lea.vmem [#allocation2], 11
    %v147 = vld [vmem:[%s146] ss:$0 sm:$0xff]
    %v148 = vxor.u32 %v147, 2147483648
    %v149 = vlaneseq
    %v150 = vand.u32 %v149, 127
    %vm151 = vcmp.eq.s32.totalorder %v150, 11
    %v152 = vmul.f32 %v148, %v145
    %153 = vadd.xlane.f32.xlu0 %v152
    %v154 = vpop.xlane.xlu0 %153
    %v155 = vsel %vm151, %v154, %v145
    %s156 = scalar_lea.vmem [#allocation2], 10
    %v157 = vld [vmem:[%s156] ss:$0 sm:$0xff]
    %v158 = vxor.u32 %v157, 2147483648
    %v159 = vlaneseq
    %v160 = vand.u32 %v159, 127
    %vm161 = vcmp.eq.s32.totalorder %v160, 10
    %v162 = vmul.f32 %v158, %v155
    %163 = vadd.xlane.f32.xlu0 %v162
    %v164 = vpop.xlane.xlu0 %163
    %v165 = vsel %vm161, %v164, %v155
    %s166 = scalar_lea.vmem [#allocation2], 9
    %v167 = vld [vmem:[%s166] ss:$0 sm:$0xff]
    %v168 = vxor.u32 %v167, 2147483648
    %v169 = vlaneseq
    %v170 = vand.u32 %v169, 127
    %vm171 = vcmp.eq.s32.totalorder %v170, 9
    %v172 = vmul.f32 %v168, %v165
    %173 = vadd.xlane.f32.xlu0 %v172
    %v174 = vpop.xlane.xlu0 %173
    %v175 = vsel %vm171, %v174, %v165
    %s176 = scalar_lea.vmem [#allocation2], 8
    %v177 = vld [vmem:[%s176] ss:$0 sm:$0xff]
    %v178 = vxor.u32 %v177, 2147483648
    %v179 = vlaneseq
    %v180 = vand.u32 %v179, 127
    %vm181 = vcmp.eq.s32.totalorder %v180, 8
    %v182 = vmul.f32 %v178, %v175
    %183 = vadd.xlane.f32.xlu0 %v182
    %v184 = vpop.xlane.xlu0 %183
    %v185 = vsel %vm181, %v184, %v175
    %s186 = scalar_lea.vmem [#allocation2], 7
    %v187 = vld [vmem:[%s186] ss:$0 sm:$0xff]
    %v188 = vxor.u32 %v187, 2147483648
    %v189 = vlaneseq
    %v190 = vand.u32 %v189, 127
    %vm191 = vcmp.eq.s32.totalorder %v190, 7
    %v192 = vmul.f32 %v188, %v104
    %193 = vadd.xlane.f32.xlu0 %v192
    %v194 = vpop.xlane.xlu0 %193
    %v195 = vsel %vm191, %v194, %v104
    %v196 = vmul.f32 %v188, %v185
    %197 = vadd.xlane.f32.xlu0 %v196
    %v198 = vpop.xlane.xlu0 %197
    %v199 = vsel %vm191, %v198, %v185
    %s200 = scalar_lea.vmem [#allocation2], 6
    %v201 = vld [vmem:[%s200] ss:$0 sm:$0xff]
    %v202 = vxor.u32 %v201, 2147483648
    %v203 = vlaneseq
    %v204 = vand.u32 %v203, 127
    %vm205 = vcmp.eq.s32.totalorder %v204, 6
    %v206 = vmul.f32 %v202, %v195
    %207 = vadd.xlane.f32.xlu0 %v206
    %v208 = vpop.xlane.xlu0 %207
    %v209 = vsel %vm205, %v208, %v195
    %v210 = vmul.f32 %v202, %v199
    %211 = vadd.xlane.f32.xlu0 %v210
    %v212 = vpop.xlane.xlu0 %211
    %v213 = vsel %vm205, %v212, %v199
    %s214 = scalar_lea.vmem [#allocation2], 5
    %v215 = vld [vmem:[%s214] ss:$0 sm:$0xff]
    %v216 = vxor.u32 %v215, 2147483648
    %v217 = vlaneseq
    %v218 = vand.u32 %v217, 127
    %vm219 = vcmp.eq.s32.totalorder %v218, 5
    %v220 = vmul.f32 %v216, %v209
    %221 = vadd.xlane.f32.xlu0 %v220
    %v222 = vpop.xlane.xlu0 %221
    %v223 = vsel %vm219, %v222, %v209
    %v224 = vmul.f32 %v216, %v213
    %225 = vadd.xlane.f32.xlu0 %v224
    %v226 = vpop.xlane.xlu0 %225
    %v227 = vsel %vm219, %v226, %v213
    %s228 = scalar_lea.vmem [#allocation2], 4
    %v229 = vld [vmem:[%s228] ss:$0 sm:$0xff]
    %v230 = vxor.u32 %v229, 2147483648
    %v231 = vlaneseq
    %v232 = vand.u32 %v231, 127
    %vm233 = vcmp.eq.s32.totalorder %v232, 4
    %v234 = vmul.f32 %v230, %v223
    %235 = vadd.xlane.f32.xlu0 %v234
    %v236 = vpop.xlane.xlu0 %235
    %v237 = vsel %vm233, %v236, %v223
    %v238 = vmul.f32 %v230, %v227
    %239 = vadd.xlane.f32.xlu0 %v238
    %v240 = vpop.xlane.xlu0 %239
    %v241 = vsel %vm233, %v240, %v227
    %s242 = scalar_lea.vmem [#allocation2], 3
    %v243 = vld [vmem:[%s242] ss:$0 sm:$0xff]
    %v244 = vxor.u32 %v243, 2147483648
    %v245 = vlaneseq
    %v246 = vand.u32 %v245, 127
    %vm247 = vcmp.eq.s32.totalorder %v246, 3
    %v248 = vmul.f32 %v244, %v237
    %249 = vadd.xlane.f32.xlu0 %v248
    %v250 = vpop.xlane.xlu0 %249
    %v251 = vsel %vm247, %v250, %v237
    %v252 = vmul.f32 %v244, %v241
    %253 = vadd.xlane.f32.xlu0 %v252
    %v254 = vpop.xlane.xlu0 %253
    %v255 = vsel %vm247, %v254, %v241
    %s256 = scalar_lea.vmem [#allocation2], 2
    %v257 = vld [vmem:[%s256] ss:$0 sm:$0xff]
    %v258 = vxor.u32 %v257, 2147483648
    %v259 = vlaneseq
    %v260 = vand.u32 %v259, 127
    %vm261 = vcmp.eq.s32.totalorder %v260, 2
    %v262 = vmul.f32 %v258, %v251
    %263 = vadd.xlane.f32.xlu0 %v262
    %v264 = vpop.xlane.xlu0 %263
    %v265 = vsel %vm261, %v264, %v251
    %v266 = vmul.f32 %v258, %v255
    %267 = vadd.xlane.f32.xlu0 %v266
    %v268 = vpop.xlane.xlu0 %267
    %v269 = vsel %vm261, %v268, %v255
    %s270 = scalar_lea.vmem [#allocation2], 1
    %v271 = vld [vmem:[%s270] ss:$0 sm:$0xff]
    %v272 = vxor.u32 %v271, 2147483648
    %v273 = vlaneseq
    %v274 = vand.u32 %v273, 127
    %vm275 = vcmp.eq.s32.totalorder %v274, 1
    %v276 = vmul.f32 %v272, %v265
    %277 = vadd.xlane.f32.xlu0 %v276
    %v278 = vpop.xlane.xlu0 %277
    %v279 = vsel %vm275, %v278, %v265
    %v280 = vmul.f32 %v272, %v269
    %281 = vadd.xlane.f32.xlu0 %v280
    %v282 = vpop.xlane.xlu0 %281
    %v283 = vsel %vm275, %v282, %v269
    %v284 = vld [vmem:[#allocation2] ss:$0 sm:$0xff]
    %v285 = vxor.u32 %v284, 2147483648
    %v286 = vlaneseq
    %v287 = vand.u32 %v286, 127
    %vm288 = vcmp.eq.s32.totalorder %v287, 0
    %v289 = vmul.f32 %v285, %v279
    %290 = vadd.xlane.f32.xlu0 %v289
    %v291 = vpop.xlane.xlu0 %290
    %v292 = vsel %vm288, %v291, %v279
    %v293 = vmul.f32 %v285, %v283
    %294 = vadd.xlane.f32.xlu0 %v293
    %v295 = vpop.xlane.xlu0 %294
    %v296 = vsel %vm288, %v295, %v283
    %v297 = vrcp.pop %v49
    %v298 = vmul.f32 %v49, %v297
    %v299 = vsub.f32 1.0, %v298
    %v300 = vmul.f32 %v297, %v299
    %v301 = vadd.f32 %v297, %v300
    %vm302 = vweird.f32 %v49
    %vm303 = vweird.f32 %v297
    %vm304 = vmor %vm302, %vm303
    %v305 = vsel %vm304, %v297, %v301
    %v306 = vand.u32 2147483647, %v49
    %vm307 = vcmp.eq.f32.partialorder %v306, 8.507059e+37
    %v308 = vand.u32 %v49, 2147483648
    %v309 = vor.u32 1.1754944e-38, %v308
    %v310 = vsel %vm307, %v309, %v305
    %v311 = vmul.f32 %v292, %v310
    %vm312 = vweird.f32 %v49
    %v313 = vsel %vm312, %v292, %v311
    %314 = vst [vmem:[#allocation1] sm:$0xff] %v313
    %v315 = vrcp.pop %v78
    %v316 = vmul.f32 %v78, %v315
    %v317 = vsub.f32 1.0, %v316
    %v318 = vmul.f32 %v315, %v317
    %v319 = vadd.f32 %v315, %v318
    %vm320 = vweird.f32 %v78
    %vm321 = vweird.f32 %v315
    %vm322 = vmor %vm320, %vm321
    %v323 = vsel %vm322, %v315, %v319
    %v324 = vand.u32 2147483647, %v78
    %vm325 = vcmp.eq.f32.partialorder %v324, 8.507059e+37
    %v326 = vand.u32 %v78, 2147483648
    %v327 = vor.u32 1.1754944e-38, %v326
    %v328 = vsel %vm325, %v327, %v323
    %v329 = vmul.f32 %v296, %v328
    %vm330 = vweird.f32 %v78
    %v331 = vsel %vm330, %v296, %v329
    %s332 = scalar_lea.vmem [#allocation1], 8
    %333 = vst [vmem:[%s332] sm:$0xff] %v331
    // Predicated region
    $region36: #{custom-call.15} parent=1 // pred_check
      _
    $region37: #{custom-call.15} parent=1 // pred_check_branch
      %335 = sbr.rel (0) target = $region39
    $region38: #{custom-call.15} parent=1 // pred_region
      // Predicated region
      $region40: #{custom-call.15} parent=38 // pred_check
        _
      $region41: #{custom-call.15} parent=38 // pred_check_branch
        %337 = sbr.rel (0) target = $region43
      $region42: #{custom-call.15} parent=38 // pred_region
        // Predicated region
        $region55: #{custom-call.15} parent=42 // pred_check
          _
        $region56: #{custom-call.15} parent=42 // pred_check_branch
          %355 = sbr.rel (0) target = $region58
        $region57: #{custom-call.15} parent=42 // pred_region
          loop: start=0, step=1, limit=1
          $region59: #{custom-call.15} parent=57 // loop_pre_header
            _
          $region60: #{custom-call.15} parent=57 // loop_header
            %s357 = sphi 0, %s361
            %p358 = scmp.ge.s32.totalorder %s357, 1
            %s362 = sphi [#allocation1], [#allocation1]
            %s363 = sphi %s1, %s1
          $region61: #{custom-call.15} parent=57 // loop_header_branch
            %360 = sbr.rel (%p358) target = $region65
          $region62: #{custom-call.15} parent=57 // loop_body
            %v364 = vld [vmem:[%s362] sm:$0xff]
            %365 = vst [vmem:[%s363] sm:$0xff] %v364
            %v366 = vld [vmem:[%s362 + $0x8] sm:$0xff]
            %367 = vst [vmem:[%s363 + $0x8] sm:$0xff] %v366
          $region63: #{custom-call.15} parent=57 // loop_footer
            %s361 = sadd.s32 1, %s357
          $region64: #{custom-call.15} parent=57 // loop_footer_branch
            %356 = sbr.rel target = $region60
          $region65: #{custom-call.15} parent=57 // loop_exit
            _
        $region58: #{custom-call.15} parent=42 // pred_fallthru
          _
        // Predicated region
        $region66: #{custom-call.15} parent=42 // pred_check
          _
        $region67: #{custom-call.15} parent=42 // pred_check_branch
          %369 = sbr.rel target = $region69
        $region68: #{custom-call.15} parent=42 // pred_region
          _
        $region69: #{custom-call.15} parent=42 // pred_fallthru
          _
      $region43: #{custom-call.15} parent=38 // pred_fallthru
        _
      // Predicated region
      $region44: #{custom-call.15} parent=38 // pred_check
        _
      $region45: #{custom-call.15} parent=38 // pred_check_branch
        %339 = sbr.rel target = $region47
      $region46: #{custom-call.15} parent=38 // pred_region
        %s341 = ssub.s32 256, 1
        loop: start=0, step=1, limit=1
        $region48: #{custom-call.15} parent=46 // loop_pre_header
          _
        $region49: #{custom-call.15} parent=46 // loop_header
          %s343 = sphi 0, %s347
          %p344 = scmp.ge.s32.totalorder %s343, 1
          %s348 = sphi [#allocation1], [#allocation1]
          %s349 = sphi %s1, %s1
        $region50: #{custom-call.15} parent=46 // loop_header_branch
          %346 = sbr.rel (%p344) target = $region54
        $region51: #{custom-call.15} parent=46 // loop_body
          %v350 = vld [vmem:[%s348] sm:%s341]
          %351 = vst [vmem:[%s349] sm:%s341] %v350
          %v352 = vld [vmem:[%s348 + $0x8] sm:%s341]
          %353 = vst [vmem:[%s349 + $0x8] sm:%s341] %v352
        $region52: #{custom-call.15} parent=46 // loop_footer
          %s347 = sadd.s32 1, %s343
        $region53: #{custom-call.15} parent=46 // loop_footer_branch
          %342 = sbr.rel target = $region49
        $region54: #{custom-call.15} parent=46 // loop_exit
          _
      $region47: #{custom-call.15} parent=38 // pred_fallthru
        _
    $region39: #{custom-call.15} parent=1 // pred_fallthru
      _
    %370 = vnop

// kernel: basic_transformer_block.13
$region0: #{basic_transformer_block.13}
  #allocation0 [shape = 'u32[]', space=smem, size = 0x4, offset = 0x4, fixed_abs, tag = 'smem constant byte address 0x4 - core index']
  #allocation1 [shape = 'u32[72,128]{1,0:T(1,128)}', space=vmem, size = 0x9000, scoped, tag = 'internal scratch']
  %s0 = inlined_call_operand.vmem [shape: f32[16,128], index: 0, kind: input, shape index: {}]
  %s1 = inlined_call_operand.vmem [shape: f32[16,1], index: 1, kind: input, shape index: {}]
  %s2 = inlined_call_operand.vmem [shape: f32[5,16,128], index: 2, kind: input, shape index: {}]
  %s3 = inlined_call_operand.vmem [shape: f32[5,1,16], index: 3, kind: input, shape index: {}]
  %s4 = inlined_call_operand.vmem [shape: f32[16,128], index: 4, kind: input, shape index: {}]
  %s5 = inlined_call_operand.vmem [shape: f32[5,16,128], index: 5, kind: output, shape index: {}]
  %s6 = sld [smem:[#allocation0]]
  $region53: #{basic_transformer_block.13} parent=0
    _
  %s8 = ssub.s32 1, %s6
  %s9 = scalar_select 0, %s8, %s6
  loop: start=0, step=1, limit=7
  $region2: #{basic_transformer_block.13} parent=0 // loop_pre_header
    _
  $region3: #{basic_transformer_block.13} parent=0 // loop_header
    %s11 = sphi 0, %s15
    %p12 = scmp.ge.s32.totalorder %s11, 7
    %s19 = sphi 0, %s19
    %s21 = sphi 0, %s19
    %s22 = sphi 0, %s21
    %s36 = sphi 0, %s22
    %s40 = sphi 0, %s40
    %s42 = sphi 0, %s40
    %s43 = sphi 0, %s42
    %s57 = sphi 0, %s43
    %s63 = sphi 0, %s65
    %s66 = sphi 0, %s63
    %s67 = sphi 0, %s66
    %s83 = sphi 0, %s67
    %s89 = sphi 0, %s91
    %s92 = sphi 0, %s89
    %s93 = sphi 0, %s92
    %s109 = sphi 0, %s93
    %s113 = sphi 0, %s113
    %s115 = sphi 0, %s113
    %s116 = sphi 0, %s115
    %s130 = sphi 0, %s116
    %s136 = sphi 0, %s138
    %s139 = sphi 0, %s136
    %s140 = sphi 0, %s139
    %s156 = sphi 0, %s140
  $region4: #{basic_transformer_block.13} parent=0 // loop_header_branch
    %14 = sbr.rel (%p12) target = $region8
  $region5: #{basic_transformer_block.13} parent=0 // loop_body
    %s16 = ssub.s32 %s11, 1
    %s17 = ssub.s32 %s11, 2
    %s18 = sadd.s32 %s11, 1
    %s20 = sadd.s32 %s19, 1
    %p23 = scmp.eq.s32.totalorder %s11, 4
    %p24 = scmp.ne.s32.totalorder %s19, %s21
    %p25 = scmp.eq.s32.totalorder %s11, 0
    %p26 = por %p24, %p25
    %p27 = scmp.ne.s32.totalorder %s19, %s21
    %p28 = scmp.eq.s32.totalorder %s16, 4
    %p29 = por %p27, %p28
    %p30 = scmp.ne.s32.totalorder %s21, %s22
    %p31 = scmp.eq.s32.totalorder %s16, 0
    %p32 = por %p30, %p31
    %p33 = scmp.ne.s32.totalorder %s21, %s22
    %p34 = scmp.eq.s32.totalorder %s17, 4
    %p35 = por %p33, %p34
    %p37 = scmp.ne.s32.totalorder %s22, %s36
    %p38 = scmp.eq.s32.totalorder %s17, 0
    %p39 = por %p37, %p38
    %s41 = sadd.s32 %s40, 1
    %p44 = scmp.eq.s32.totalorder %s11, 4
    %p45 = scmp.ne.s32.totalorder %s40, %s42
    %p46 = scmp.eq.s32.totalorder %s11, 0
    %p47 = por %p45, %p46
    %p48 = scmp.ne.s32.totalorder %s40, %s42
    %p49 = scmp.eq.s32.totalorder %s16, 4
    %p50 = por %p48, %p49
    %p51 = scmp.ne.s32.totalorder %s42, %s43
    %p52 = scmp.eq.s32.totalorder %s16, 0
    %p53 = por %p51, %p52
    %p54 = scmp.ne.s32.totalorder %s42, %s43
    %p55 = scmp.eq.s32.totalorder %s17, 4
    %p56 = por %p54, %p55
    %p58 = scmp.ne.s32.totalorder %s43, %s57
    %p59 = scmp.eq.s32.totalorder %s17, 0
    %p60 = por %p58, %p59
    %s61 = ssub.s32 %s11, %s18
    %p62 = scmp.eq.s32.totalorder %s61, 0
    %s64 = sadd.s32 %s63, 1
    %s65 = scalar_select %p62, %s63, %s64
    %p68 = pneg %p62
    %p69 = scmp.eq.s32.totalorder %s11, 4
    %p70 = por %p68, %p69
    %p71 = scmp.ne.s32.totalorder %s63, %s66
    %p72 = scmp.eq.s32.totalorder %s11, 0
    %p73 = por %p71, %p72
    %p74 = scmp.ne.s32.totalorder %s63, %s66
    %p75 = scmp.eq.s32.totalorder %s16, 4
    %p76 = por %p74, %p75
    %p77 = scmp.ne.s32.totalorder %s66, %s67
    %p78 = scmp.eq.s32.totalorder %s16, 0
    %p79 = por %p77, %p78
    %p80 = scmp.ne.s32.totalorder %s66, %s67
    %p81 = scmp.eq.s32.totalorder %s17, 4
    %p82 = por %p80, %p81
    %p84 = scmp.ne.s32.totalorder %s67, %s83
    %p85 = scmp.eq.s32.totalorder %s17, 0
    %p86 = por %p84, %p85
    %s87 = ssub.s32 %s11, %s18
    %p88 = scmp.eq.s32.totalorder %s87, 0
    %s90 = sadd.s32 %s89, 1
    %s91 = scalar_select %p88, %s89, %s90
    %p94 = pneg %p88
    %p95 = scmp.eq.s32.totalorder %s11, 4
    %p96 = por %p94, %p95
    %p97 = scmp.ne.s32.totalorder %s89, %s92
    %p98 = scmp.eq.s32.totalorder %s11, 0
    %p99 = por %p97, %p98
    %p100 = scmp.ne.s32.totalorder %s89, %s92
    %p101 = scmp.eq.s32.totalorder %s16, 4
    %p102 = por %p100, %p101
    %p103 = scmp.ne.s32.totalorder %s92, %s93
    %p104 = scmp.eq.s32.totalorder %s16, 0
    %p105 = por %p103, %p104
    %p106 = scmp.ne.s32.totalorder %s92, %s93
    %p107 = scmp.eq.s32.totalorder %s17, 4
    %p108 = por %p106, %p107
    %p110 = scmp.ne.s32.totalorder %s93, %s109
    %p111 = scmp.eq.s32.totalorder %s17, 0
    %p112 = por %p110, %p111
    %s114 = sadd.s32 %s113, 1
    %p117 = scmp.eq.s32.totalorder %s11, 4
    %p118 = scmp.ne.s32.totalorder %s113, %s115
    %p119 = scmp.eq.s32.totalorder %s11, 0
    %p120 = por %p118, %p119
    %p121 = scmp.ne.s32.totalorder %s113, %s115
    %p122 = scmp.eq.s32.totalorder %s16, 4
    %p123 = por %p121, %p122
    %p124 = scmp.ne.s32.totalorder %s115, %s116
    %p125 = scmp.eq.s32.totalorder %s16, 0
    %p126 = por %p124, %p125
    %p127 = scmp.ne.s32.totalorder %s115, %s116
    %p128 = scmp.eq.s32.totalorder %s17, 4
    %p129 = por %p127, %p128
    %p131 = scmp.ne.s32.totalorder %s116, %s130
    %p132 = scmp.eq.s32.totalorder %s17, 0
    %p133 = por %p131, %p132
    %s134 = ssub.s32 %s11, %s18
    %p135 = scmp.eq.s32.totalorder %s134, 0
    %s137 = sadd.s32 %s136, 1
    %s138 = scalar_select %p135, %s136, %s137
    %p141 = pneg %p135
    %p142 = scmp.eq.s32.totalorder %s11, 4
    %p143 = por %p141, %p142
    %p144 = scmp.ne.s32.totalorder %s136, %s139
    %p145 = scmp.eq.s32.totalorder %s11, 0
    %p146 = por %p144, %p145
    %p147 = scmp.ne.s32.totalorder %s136, %s139
    %p148 = scmp.eq.s32.totalorder %s16, 4
    %p149 = por %p147, %p148
    %p150 = scmp.ne.s32.totalorder %s139, %s140
    %p151 = scmp.eq.s32.totalorder %s16, 0
    %p152 = por %p150, %p151
    %p153 = scmp.ne.s32.totalorder %s139, %s140
    %p154 = scmp.eq.s32.totalorder %s17, 4
    %p155 = por %p153, %p154
    %p157 = scmp.ne.s32.totalorder %s140, %s156
    %p158 = scmp.eq.s32.totalorder %s17, 0
    %p159 = por %p157, %p158
    %p160 = scmp.le.s32.totalorder 1, %s11
    %p161 = scmp.lt.s32.totalorder %s11, 6
    %p162 = pnand %p160, %p161
    %p163 = pneg %p162
    // Predicated region
    $region9: #{basic_transformer_block.13} parent=5 // pred_check
      _
    $region10: #{basic_transformer_block.13} parent=5 // pred_check_branch
      %165 = sbr.rel (%p162) target = $region12
    $region11: #{basic_transformer_block.13} parent=5 // pred_region
      %s166 = ssub.s32 %s11, 1
      // Predicated region
      $region13: #{basic_transformer_block.13} parent=11 // pred_check
        %p167 = pneg %p32
      $region14: #{basic_transformer_block.13} parent=11 // pred_check_branch
        %169 = sbr.rel (%p167) target = $region16
      $region15: #{basic_transformer_block.13} parent=11 // pred_region
        _
      $region16: #{basic_transformer_block.13} parent=11 // pred_fallthru
        _
      // Predicated region
      $region17: #{basic_transformer_block.13} parent=11 // pred_check
        %p170 = pneg %p53
      $region18: #{basic_transformer_block.13} parent=11 // pred_check_branch
        %172 = sbr.rel (%p170) target = $region20
      $region19: #{basic_transformer_block.13} parent=11 // pred_region
        _
      $region20: #{basic_transformer_block.13} parent=11 // pred_fallthru
        _
      // Predicated region
      $region21: #{basic_transformer_block.13} parent=11 // pred_check
        %p173 = pneg %p126
      $region22: #{basic_transformer_block.13} parent=11 // pred_check_branch
        %175 = sbr.rel (%p173) target = $region24
      $region23: #{basic_transformer_block.13} parent=11 // pred_region
        _
      $region24: #{basic_transformer_block.13} parent=11 // pred_fallthru
        _
    $region12: #{basic_transformer_block.13} parent=5 // pred_fallthru
      _
    %p176 = scmp.lt.s32.totalorder %s11, 5
    // Predicated region
    $region25: #{basic_transformer_block.13} parent=5 // pred_check
      %p177 = pneg %p176
    $region26: #{basic_transformer_block.13} parent=5 // pred_check_branch
      %179 = sbr.rel (%p177) target = $region28
    $region27: #{basic_transformer_block.13} parent=5 // pred_region
      // Predicated region
      $region29: #{basic_transformer_block.13} parent=27 // pred_check
        %p180 = pneg %p73
      $region30: #{basic_transformer_block.13} parent=27 // pred_check_branch
        %182 = sbr.rel (%p180) target = $region32
      $region31: #{basic_transformer_block.13} parent=27 // pred_region
        %p183 = scmp.lt.s32.totalorder %s11, 4
        %s184 = scalar_select %p183, %s11, 4
        %s185 = smul.addr %s184, 2
        %s186 = smul.addr %s185, 8
        %s187 = scalar_lea.vmem %s2, %s186
      $region32: #{basic_transformer_block.13} parent=27 // pred_fallthru
        _
      // Predicated region
      $region33: #{basic_transformer_block.13} parent=27 // pred_check
        %p188 = pneg %p99
      $region34: #{basic_transformer_block.13} parent=27 // pred_check_branch
        %190 = sbr.rel (%p188) target = $region36
      $region35: #{basic_transformer_block.13} parent=27 // pred_region
        %p191 = scmp.lt.s32.totalorder %s11, 4
        %s192 = scalar_select %p191, %s11, 4
        %s193 = scalar_lea.vmem %s3, %s192
      $region36: #{basic_transformer_block.13} parent=27 // pred_fallthru
        _
    $region28: #{basic_transformer_block.13} parent=5 // pred_fallthru
      _
    %p194 = scmp.le.s32.totalorder 1, %s11
    %p195 = scmp.lt.s32.totalorder %s11, 6
    %p196 = pnand %p194, %p195
    %p197 = pneg %p196
    // Predicated region
    $region37: #{basic_transformer_block.13} parent=5 // pred_check
      _
    $region38: #{basic_transformer_block.13} parent=5 // pred_check_branch
      %199 = sbr.rel (%p196) target = $region40
    $region39: #{basic_transformer_block.13} parent=5 // pred_region
      %s200 = ssub.s32 %s11, 1
      %p201 = pneg %p32
      %p202 = pneg %p29
      %p203 = pneg %p53
      %p204 = pneg %p50
      %p205 = scmp.lt.s32.totalorder %s16, 4
      %s206 = scalar_select %p205, %s16, 4
      %s207 = smul.addr %s206, 2
      %s208 = smul.addr %s207, 8
      %s209 = scalar_lea.vmem %s2, %s208
      %p210 = pneg %p79
      %p211 = pneg %p76
      %p212 = scmp.lt.s32.totalorder %s16, 4
      %s213 = scalar_select %p212, %s16, 4
      %s214 = scalar_lea.vmem %s3, %s213
      %p215 = pneg %p105
      %p216 = pneg %p102
      %p217 = pneg %p126
      %p218 = pneg %p123
      %p219 = pneg %p152
      %p220 = pneg %p149
      %p221 = scmp.lt.s32.totalorder %s16, 4
      %s222 = scalar_select %p221, %s16, 4
      %s223 = smul.addr %s222, 2
      %s224 = smul.addr %s223, 8
      %s225 = scalar_lea.vmem %s5, %s224
      %p226 = scmp.lt.s32.totalorder %s16, 4
      %s227 = scalar_select %p226, %s16, 4
      %s228 = smul.addr %s227, 2
      %s229 = smul.addr %s228, 8
      %s230 = scalar_lea.vmem %s2, %s229
      %p231 = scmp.lt.s32.totalorder %s16, 4
      %s232 = scalar_select %p231, %s16, 4
      %s233 = scalar_lea.vmem %s3, %s232
      %p234 = scmp.lt.s32.totalorder %s16, 4
      %s235 = scalar_select %p234, %s16, 4
      %s236 = smul.addr %s235, 2
      %s237 = smul.addr %s236, 8
      %s238 = scalar_lea.vmem %s5, %s237
      %v239 = vld [vmem:[%s0] sm:$0xff]
      %v240 = vld [vmem:[%s0 + $0x8] sm:$0xff]
      %v241 = vld [vmem:[%s230] sm:$0xff]
      %v242 = vld [vmem:[%s230 + $0x8] sm:$0xff]
      %243 = vmatpush.xpose.msra.mxu0 0.0
      %244 = vmatpush.xpose.msra.mxu0 0.0
      %245 = vmatpush.xpose.msra.mxu0 0.0
      %246 = vmatpush.xpose.msra.mxu0 0.0
      %247 = vmatpush.xpose.msra.mxu0 0.0
      %248 = vmatpush.xpose.msra.mxu0 0.0
      %249 = vmatpush.xpose.msra.mxu0 0.0
      %250 = vmatpush.xpose.msra.mxu0 0.0
      %251 = vmatpush.xpose.msra.mxu0 0.0
      %252 = vmatpush.xpose.msra.mxu0 0.0
      %253 = vmatpush.xpose.msra.mxu0 0.0
      %254 = vmatpush.xpose.msra.mxu0 0.0
      %255 = vmatpush.xpose.msra.mxu0 0.0
      %256 = vmatpush.xpose.msra.mxu0 0.0
      %257 = vmatpush.xpose.msra.mxu0 %v242
      %258 = vmatpush.xpose.msra.mxu0 %v241
      %259 = vmatmul.f32.gmra.mxu0 %v239
      %v260 = vpop.f32.mrf.mxu0
      %v261 = vadd.f32 0.0, %v260
      %262 = vmatmul.f32.gmra.mxu0 %v240
      %v263 = vpop.f32.mrf.mxu0
      %v264 = vadd.f32 0.0, %v263
      %265 = vdwg.mxu0
      %v266 = vld [vmem:[%s1] sm:$0xff]
      %v267 = vld [vmem:[%s1 + $0x8] sm:$0xff]
      %v268 = vld [vmem:[%s233] sm:$0x1]
      %270 = vset.pattern.permute.xlu0 0
      %271 = vperm.xlu0 %270, %v266
      %v272 = vpop.permute.xlu0 %271
      %275 = vset.pattern.permute.xlu0 0
      %276 = vperm.xlu0 %275, %v267
      %v277 = vpop.permute.xlu0 %276
      %v280 = vperm.slane %v268, 0
      %v282 = vadd.f32 %v272, %v280
      %v283 = vadd.f32 %v277, %v280
      %v284 = vmul.f32 %v261, 2.0
      %v285 = vmul.f32 %v264, 2.0
      %v286 = vsub.f32 %v282, %v284
      %v287 = vsub.f32 %v283, %v285
      %v288 = vmax.f32 %v286, 0.0
      %v289 = vmax.f32 %v287, 0.0
      %v290 = vmul.f32 %v288, -0.5
      %v291 = vmul.f32 %v289, -0.5
      %v292 = vmul.f32 %v290, 1.442695
      %v293 = vpow.pop %v292
      %v294 = vmul.f32 %v291, 1.442695
      %v295 = vpow.pop %v294
      %v296 = vld [vmem:[%s4] sm:$0xff]
      %v297 = vld [vmem:[%s4 + $0x8] sm:$0xff]
      %vm298 = vcmask 130048
      %v300 = vsel %vm298, %v293, 0
      %v303 = vsel %vm298, %v295, 0
      %305 = vmatpush.msra.mxu0 0.0
      %306 = vmatpush.msra.mxu0 0.0
      %307 = vmatpush.msra.mxu0 0.0
      %308 = vmatpush.msra.mxu0 0.0
      %309 = vmatpush.msra.mxu0 0.0
      %310 = vmatpush.msra.mxu0 0.0
      %311 = vmatpush.msra.mxu0 0.0
      %312 = vmatpush.msra.mxu0 0.0
      %313 = vmatpush.msra.mxu0 0.0
      %314 = vmatpush.msra.mxu0 0.0
      %315 = vmatpush.msra.mxu0 0.0
      %316 = vmatpush.msra.mxu0 0.0
      %317 = vmatpush.msra.mxu0 0.0
      %318 = vmatpush.msra.mxu0 0.0
      %319 = vmatpush.msra.mxu0 %v297
      %320 = vmatpush.msra.mxu0 %v296
      %321 = vmatmul.f32.gmra.mxu0 %v300
      %v322 = vpop.f32.mrf.mxu0
      %v323 = vadd.f32 0.0, %v322
      %324 = vmatmul.f32.gmra.mxu0 %v303
      %v325 = vpop.f32.mrf.mxu0
      %v326 = vadd.f32 0.0, %v325
      %327 = vdwg.mxu0
      %328 = vst [vmem:[%s238] sm:$0xff] %v323
      %329 = vst [vmem:[%s238 + $0x8] sm:$0xff] %v326
      %p330 = scmp.lt.s32.totalorder %s16, 4
      %s331 = scalar_select %p330, %s16, 4
      %s332 = smul.addr %s331, 2
      %s333 = smul.addr %s332, 8
      %s334 = scalar_lea.vmem %s5, %s333
      // Predicated region
      $region41: #{basic_transformer_block.13} parent=39 // pred_check
        %p335 = pneg %p149
      $region42: #{basic_transformer_block.13} parent=39 // pred_check_branch
        %337 = sbr.rel (%p335) target = $region44
      $region43: #{basic_transformer_block.13} parent=39 // pred_region
        _
      $region44: #{basic_transformer_block.13} parent=39 // pred_fallthru
        _
    $region40: #{basic_transformer_block.13} parent=5 // pred_fallthru
      _
    %p338 = scmp.le.s32.totalorder 2, %s11
    // Predicated region
    $region45: #{basic_transformer_block.13} parent=5 // pred_check
      %p339 = pneg %p338
    $region46: #{basic_transformer_block.13} parent=5 // pred_check_branch
      %341 = sbr.rel (%p339) target = $region48
    $region47: #{basic_transformer_block.13} parent=5 // pred_region
      %s342 = ssub.s32 %s11, 2
      // Predicated region
      $region49: #{basic_transformer_block.13} parent=47 // pred_check
        %p343 = pneg %p155
      $region50: #{basic_transformer_block.13} parent=47 // pred_check_branch
        %345 = sbr.rel (%p343) target = $region52
      $region51: #{basic_transformer_block.13} parent=47 // pred_region
        %p346 = scmp.lt.s32.totalorder %s17, 4
        %s347 = scalar_select %p346, %s17, 4
        %s348 = smul.addr %s347, 2
        %s349 = smul.addr %s348, 8
        %s350 = scalar_lea.vmem %s5, %s349
      $region52: #{basic_transformer_block.13} parent=47 // pred_fallthru
        _
    $region48: #{basic_transformer_block.13} parent=5 // pred_fallthru
      _
  $region6: #{basic_transformer_block.13} parent=0 // loop_footer
    %s15 = sadd.s32 1, %s11
  $region7: #{basic_transformer_block.13} parent=0 // loop_footer_branch
    %10 = sbr.rel target = $region3
  $region8: #{basic_transformer_block.13} parent=0 // loop_exit
    _

// kernel: basic_transformer_block.14
$region0: #{basic_transformer_block.14}
  #allocation0 [shape = 'u32[]', space=smem, size = 0x4, offset = 0x4, fixed_abs, tag = 'smem constant byte address 0x4 - core index']
  #allocation1 [shape = 'u32[72,128]{1,0:T(1,128)}', space=vmem, size = 0x9000, scoped, tag = 'internal scratch']
  %s0 = inlined_call_operand.vmem [shape: f32[128,128], index: 0, kind: input, shape index: {}]
  %s1 = inlined_call_operand.vmem [shape: f32[1,128], index: 1, kind: input, shape index: {}]
  %s2 = inlined_call_operand.vmem [shape: f32[1,128], index: 2, kind: input, shape index: {}]
  %s3 = inlined_call_operand.vmem [shape: bf16[128,128], index: 3, kind: input, shape index: {}]
  %s4 = inlined_call_operand.vmem [shape: bf16[128,128], index: 4, kind: output, shape index: {}]
  %s5 = sld [smem:[#allocation0]]
  $region26: #{basic_transformer_block.14} parent=0
    _
  %s7 = ssub.s32 1, %s5
  %s8 = scalar_select 0, %s7, %s5
  // Predicated region
  $region2: #{basic_transformer_block.14} parent=0 // pred_check
    _
  $region3: #{basic_transformer_block.14} parent=0 // pred_check_branch
    %10 = sbr.rel (0) target = $region5
  $region4: #{basic_transformer_block.14} parent=0 // pred_region
    _
  $region5: #{basic_transformer_block.14} parent=0 // pred_fallthru
    _
  // Predicated region
  $region6: #{basic_transformer_block.14} parent=0 // pred_check
    _
  $region7: #{basic_transformer_block.14} parent=0 // pred_check_branch
    %12 = sbr.rel (0) target = $region9
  $region8: #{basic_transformer_block.14} parent=0 // pred_region
    _
  $region9: #{basic_transformer_block.14} parent=0 // pred_fallthru
    _
  // Predicated region
  $region10: #{basic_transformer_block.14} parent=0 // pred_check
    _
  $region11: #{basic_transformer_block.14} parent=0 // pred_check_branch
    %14 = sbr.rel (0) target = $region13
  $region12: #{basic_transformer_block.14} parent=0 // pred_region
    _
  $region13: #{basic_transformer_block.14} parent=0 // pred_fallthru
    _
  // Predicated region
  $region14: #{basic_transformer_block.14} parent=0 // pred_check
    _
  $region15: #{basic_transformer_block.14} parent=0 // pred_check_branch
    %16 = sbr.rel (0) target = $region17
  $region16: #{basic_transformer_block.14} parent=0 // pred_region
    _
  $region17: #{basic_transformer_block.14} parent=0 // pred_fallthru
    _
  %v17 = vld [vmem:[%s0] sm:$0xff]
  %v18 = vld [vmem:[%s0 + $0x8] sm:$0xff]
  %v19 = vld [vmem:[%s0 + $0x10] sm:$0xff]
  %v20 = vld [vmem:[%s0 + $0x18] sm:$0xff]
  %v21 = vld [vmem:[%s0 + $0x20] sm:$0xff]
  %v22 = vld [vmem:[%s0 + $0x28] sm:$0xff]
  %v23 = vld [vmem:[%s0 + $0x30] sm:$0xff]
  %v24 = vld [vmem:[%s0 + $0x38] sm:$0xff]
  %v25 = vld [vmem:[%s0 + $0x40] sm:$0xff]
  %v26 = vld [vmem:[%s0 + $0x48] sm:$0xff]
  %v27 = vld [vmem:[%s0 + $0x50] sm:$0xff]
  %v28 = vld [vmem:[%s0 + $0x58] sm:$0xff]
  %v29 = vld [vmem:[%s0 + $0x60] sm:$0xff]
  %v30 = vld [vmem:[%s0 + $0x68] sm:$0xff]
  %v31 = vld [vmem:[%s0 + $0x70] sm:$0xff]
  %v32 = vld [vmem:[%s0 + $0x78] sm:$0xff]
  %33 = vadd.xlane.f32.xlu0 %v17
  %v34 = vpop.xlane.xlu0 %33
  %35 = vadd.xlane.f32.xlu0 %v18
  %v36 = vpop.xlane.xlu0 %35
  %37 = vadd.xlane.f32.xlu0 %v19
  %v38 = vpop.xlane.xlu0 %37
  %39 = vadd.xlane.f32.xlu0 %v20
  %v40 = vpop.xlane.xlu0 %39
  %41 = vadd.xlane.f32.xlu0 %v21
  %v42 = vpop.xlane.xlu0 %41
  %43 = vadd.xlane.f32.xlu0 %v22
  %v44 = vpop.xlane.xlu0 %43
  %45 = vadd.xlane.f32.xlu0 %v23
  %v46 = vpop.xlane.xlu0 %45
  %47 = vadd.xlane.f32.xlu0 %v24
  %v48 = vpop.xlane.xlu0 %47
  %49 = vadd.xlane.f32.xlu0 %v25
  %v50 = vpop.xlane.xlu0 %49
  %51 = vadd.xlane.f32.xlu0 %v26
  %v52 = vpop.xlane.xlu0 %51
  %53 = vadd.xlane.f32.xlu0 %v27
  %v54 = vpop.xlane.xlu0 %53
  %55 = vadd.xlane.f32.xlu0 %v28
  %v56 = vpop.xlane.xlu0 %55
  %57 = vadd.xlane.f32.xlu0 %v29
  %v58 = vpop.xlane.xlu0 %57
  %59 = vadd.xlane.f32.xlu0 %v30
  %v60 = vpop.xlane.xlu0 %59
  %61 = vadd.xlane.f32.xlu0 %v31
  %v62 = vpop.xlane.xlu0 %61
  %63 = vadd.xlane.f32.xlu0 %v32
  %v64 = vpop.xlane.xlu0 %63
  %v65 = vrcp.pop 128.0
  %v66 = vmul.f32 128.0, %v65
  %v67 = vsub.f32 1.0, %v66
  %v68 = vmul.f32 %v65, %v67
  %v69 = vadd.f32 %v65, %v68
  %vm70 = vweird.f32 %v65
  %v71 = vsel %vm70, %v65, %v69
  %v72 = vmul.f32 %v34, %v71
  %v73 = vmul.f32 %v36, %v71
  %v74 = vmul.f32 %v38, %v71
  %v75 = vmul.f32 %v40, %v71
  %v76 = vmul.f32 %v42, %v71
  %v77 = vmul.f32 %v44, %v71
  %v78 = vmul.f32 %v46, %v71
  %v79 = vmul.f32 %v48, %v71
  %v80 = vmul.f32 %v50, %v71
  %v81 = vmul.f32 %v52, %v71
  %v82 = vmul.f32 %v54, %v71
  %v83 = vmul.f32 %v56, %v71
  %v84 = vmul.f32 %v58, %v71
  %v85 = vmul.f32 %v60, %v71
  %v86 = vmul.f32 %v62, %v71
  %v87 = vmul.f32 %v64, %v71
  %v88 = vsub.f32 %v17, %v72
  %v89 = vsub.f32 %v18, %v73
  %v90 = vsub.f32 %v19, %v74
  %v91 = vsub.f32 %v20, %v75
  %v92 = vsub.f32 %v21, %v76
  %v93 = vsub.f32 %v22, %v77
  %v94 = vsub.f32 %v23, %v78
  %v95 = vsub.f32 %v24, %v79
  %v96 = vsub.f32 %v25, %v80
  %v97 = vsub.f32 %v26, %v81
  %v98 = vsub.f32 %v27, %v82
  %v99 = vsub.f32 %v28, %v83
  %v100 = vsub.f32 %v29, %v84
  %v101 = vsub.f32 %v30, %v85
  %v102 = vsub.f32 %v31, %v86
  %v103 = vsub.f32 %v32, %v87
  %v104 = vmul.f32 %v88, %v88
  %v105 = vmul.f32 %v89, %v89
  %v106 = vmul.f32 %v90, %v90
  %v107 = vmul.f32 %v91, %v91
  %v108 = vmul.f32 %v92, %v92
  %v109 = vmul.f32 %v93, %v93
  %v110 = vmul.f32 %v94, %v94
  %v111 = vmul.f32 %v95, %v95
  %v112 = vmul.f32 %v96, %v96
  %v113 = vmul.f32 %v97, %v97
  %v114 = vmul.f32 %v98, %v98
  %v115 = vmul.f32 %v99, %v99
  %v116 = vmul.f32 %v100, %v100
  %v117 = vmul.f32 %v101, %v101
  %v118 = vmul.f32 %v102, %v102
  %v119 = vmul.f32 %v103, %v103
  %120 = vadd.xlane.f32.xlu0 %v104
  %v121 = vpop.xlane.xlu0 %120
  %122 = vadd.xlane.f32.xlu0 %v105
  %v123 = vpop.xlane.xlu0 %122
  %124 = vadd.xlane.f32.xlu0 %v106
  %v125 = vpop.xlane.xlu0 %124
  %126 = vadd.xlane.f32.xlu0 %v107
  %v127 = vpop.xlane.xlu0 %126
  %128 = vadd.xlane.f32.xlu0 %v108
  %v129 = vpop.xlane.xlu0 %128
  %130 = vadd.xlane.f32.xlu0 %v109
  %v131 = vpop.xlane.xlu0 %130
  %132 = vadd.xlane.f32.xlu0 %v110
  %v133 = vpop.xlane.xlu0 %132
  %134 = vadd.xlane.f32.xlu0 %v111
  %v135 = vpop.xlane.xlu0 %134
  %136 = vadd.xlane.f32.xlu0 %v112
  %v137 = vpop.xlane.xlu0 %136
  %138 = vadd.xlane.f32.xlu0 %v113
  %v139 = vpop.xlane.xlu0 %138
  %140 = vadd.xlane.f32.xlu0 %v114
  %v141 = vpop.xlane.xlu0 %140
  %142 = vadd.xlane.f32.xlu0 %v115
  %v143 = vpop.xlane.xlu0 %142
  %144 = vadd.xlane.f32.xlu0 %v116
  %v145 = vpop.xlane.xlu0 %144
  %146 = vadd.xlane.f32.xlu0 %v117
  %v147 = vpop.xlane.xlu0 %146
  %148 = vadd.xlane.f32.xlu0 %v118
  %v149 = vpop.xlane.xlu0 %148
  %150 = vadd.xlane.f32.xlu0 %v119
  %v151 = vpop.xlane.xlu0 %150
  %v152 = vmul.f32 %v121, %v71
  %v153 = vmul.f32 %v123, %v71
  %v154 = vmul.f32 %v125, %v71
  %v155 = vmul.f32 %v127, %v71
  %v156 = vmul.f32 %v129, %v71
  %v157 = vmul.f32 %v131, %v71
  %v158 = vmul.f32 %v133, %v71
  %v159 = vmul.f32 %v135, %v71
  %v160 = vmul.f32 %v137, %v71
  %v161 = vmul.f32 %v139, %v71
  %v162 = vmul.f32 %v141, %v71
  %v163 = vmul.f32 %v143, %v71
  %v164 = vmul.f32 %v145, %v71
  %v165 = vmul.f32 %v147, %v71
  %v166 = vmul.f32 %v149, %v71
  %v167 = vmul.f32 %v151, %v71
  %v168 = vadd.f32 %v152, 1e-05
  %v169 = vadd.f32 %v153, 1e-05
  %v170 = vadd.f32 %v154, 1e-05
  %v171 = vadd.f32 %v155, 1e-05
  %v172 = vadd.f32 %v156, 1e-05
  %v173 = vadd.f32 %v157, 1e-05
  %v174 = vadd.f32 %v158, 1e-05
  %v175 = vadd.f32 %v159, 1e-05
  %v176 = vadd.f32 %v160, 1e-05
  %v177 = vadd.f32 %v161, 1e-05
  %v178 = vadd.f32 %v162, 1e-05
  %v179 = vadd.f32 %v163, 1e-05
  %v180 = vadd.f32 %v164, 1e-05
  %v181 = vadd.f32 %v165, 1e-05
  %v182 = vadd.f32 %v166, 1e-05
  %v183 = vadd.f32 %v167, 1e-05
  %v184 = vrsqrt.pop %v168
  %v185 = vmul.f32 %v184, %v168
  %v186 = vmul.f32 %v185, %v184
  %v187 = vmul.f32 0.5, %v186
  %v188 = vsub.f32 1.5, %v187
  %v189 = vmul.f32 %v184, %v188
  %vm190 = vweird.f32 %v168
  %vm191 = vweird.f32 %v184
  %vm192 = vmor %vm190, %vm191
  %v193 = vsel %vm192, %v184, %v189
  %v194 = vrsqrt.pop %v169
  %v195 = vmul.f32 %v194, %v169
  %v196 = vmul.f32 %v195, %v194
  %v197 = vmul.f32 0.5, %v196
  %v198 = vsub.f32 1.5, %v197
  %v199 = vmul.f32 %v194, %v198
  %vm200 = vweird.f32 %v169
  %vm201 = vweird.f32 %v194
  %vm202 = vmor %vm200, %vm201
  %v203 = vsel %vm202, %v194, %v199
  %v204 = vrsqrt.pop %v170
  %v205 = vmul.f32 %v204, %v170
  %v206 = vmul.f32 %v205, %v204
  %v207 = vmul.f32 0.5, %v206
  %v208 = vsub.f32 1.5, %v207
  %v209 = vmul.f32 %v204, %v208
  %vm210 = vweird.f32 %v170
  %vm211 = vweird.f32 %v204
  %vm212 = vmor %vm210, %vm211
  %v213 = vsel %vm212, %v204, %v209
  %v214 = vrsqrt.pop %v171
  %v215 = vmul.f32 %v214, %v171
  %v216 = vmul.f32 %v215, %v214
  %v217 = vmul.f32 0.5, %v216
  %v218 = vsub.f32 1.5, %v217
  %v219 = vmul.f32 %v214, %v218
  %vm220 = vweird.f32 %v171
  %vm221 = vweird.f32 %v214
  %vm222 = vmor %vm220, %vm221
  %v223 = vsel %vm222, %v214, %v219
  %v224 = vrsqrt.pop %v172
  %v225 = vmul.f32 %v224, %v172
  %v226 = vmul.f32 %v225, %v224
  %v227 = vmul.f32 0.5, %v226
  %v228 = vsub.f32 1.5, %v227
  %v229 = vmul.f32 %v224, %v228
  %vm230 = vweird.f32 %v172
  %vm231 = vweird.f32 %v224
  %vm232 = vmor %vm230, %vm231
  %v233 = vsel %vm232, %v224, %v229
  %v234 = vrsqrt.pop %v173
  %v235 = vmul.f32 %v234, %v173
  %v236 = vmul.f32 %v235, %v234
  %v237 = vmul.f32 0.5, %v236
  %v238 = vsub.f32 1.5, %v237
  %v239 = vmul.f32 %v234, %v238
  %vm240 = vweird.f32 %v173
  %vm241 = vweird.f32 %v234
  %vm242 = vmor %vm240, %vm241
  %v243 = vsel %vm242, %v234, %v239
  %v244 = vrsqrt.pop %v174
  %v245 = vmul.f32 %v244, %v174
  %v246 = vmul.f32 %v245, %v244
  %v247 = vmul.f32 0.5, %v246
  %v248 = vsub.f32 1.5, %v247
  %v249 = vmul.f32 %v244, %v248
  %vm250 = vweird.f32 %v174
  %vm251 = vweird.f32 %v244
  %vm252 = vmor %vm250, %vm251
  %v253 = vsel %vm252, %v244, %v249
  %v254 = vrsqrt.pop %v175
  %v255 = vmul.f32 %v254, %v175
  %v256 = vmul.f32 %v255, %v254
  %v257 = vmul.f32 0.5, %v256
  %v258 = vsub.f32 1.5, %v257
  %v259 = vmul.f32 %v254, %v258
  %vm260 = vweird.f32 %v175
  %vm261 = vweird.f32 %v254
  %vm262 = vmor %vm260, %vm261
  %v263 = vsel %vm262, %v254, %v259
  %v264 = vrsqrt.pop %v176
  %v265 = vmul.f32 %v264, %v176
  %v266 = vmul.f32 %v265, %v264
  %v267 = vmul.f32 0.5, %v266
  %v268 = vsub.f32 1.5, %v267
  %v269 = vmul.f32 %v264, %v268
  %vm270 = vweird.f32 %v176
  %vm271 = vweird.f32 %v264
  %vm272 = vmor %vm270, %vm271
  %v273 = vsel %vm272, %v264, %v269
  %v274 = vrsqrt.pop %v177
  %v275 = vmul.f32 %v274, %v177
  %v276 = vmul.f32 %v275, %v274
  %v277 = vmul.f32 0.5, %v276
  %v278 = vsub.f32 1.5, %v277
  %v279 = vmul.f32 %v274, %v278
  %vm280 = vweird.f32 %v177
  %vm281 = vweird.f32 %v274
  %vm282 = vmor %vm280, %vm281
  %v283 = vsel %vm282, %v274, %v279
  %v284 = vrsqrt.pop %v178
  %v285 = vmul.f32 %v284, %v178
  %v286 = vmul.f32 %v285, %v284
  %v287 = vmul.f32 0.5, %v286
  %v288 = vsub.f32 1.5, %v287
  %v289 = vmul.f32 %v284, %v288
  %vm290 = vweird.f32 %v178
  %vm291 = vweird.f32 %v284
  %vm292 = vmor %vm290, %vm291
  %v293 = vsel %vm292, %v284, %v289
  %v294 = vrsqrt.pop %v179
  %v295 = vmul.f32 %v294, %v179
  %v296 = vmul.f32 %v295, %v294
  %v297 = vmul.f32 0.5, %v296
  %v298 = vsub.f32 1.5, %v297
  %v299 = vmul.f32 %v294, %v298
  %vm300 = vweird.f32 %v179
  %vm301 = vweird.f32 %v294
  %vm302 = vmor %vm300, %vm301
  %v303 = vsel %vm302, %v294, %v299
  %v304 = vrsqrt.pop %v180
  %v305 = vmul.f32 %v304, %v180
  %v306 = vmul.f32 %v305, %v304
  %v307 = vmul.f32 0.5, %v306
  %v308 = vsub.f32 1.5, %v307
  %v309 = vmul.f32 %v304, %v308
  %vm310 = vweird.f32 %v180
  %vm311 = vweird.f32 %v304
  %vm312 = vmor %vm310, %vm311
  %v313 = vsel %vm312, %v304, %v309
  %v314 = vrsqrt.pop %v181
  %v315 = vmul.f32 %v314, %v181
  %v316 = vmul.f32 %v315, %v314
  %v317 = vmul.f32 0.5, %v316
  %v318 = vsub.f32 1.5, %v317
  %v319 = vmul.f32 %v314, %v318
  %vm320 = vweird.f32 %v181
  %vm321 = vweird.f32 %v314
  %vm322 = vmor %vm320, %vm321
  %v323 = vsel %vm322, %v314, %v319
  %v324 = vrsqrt.pop %v182
  %v325 = vmul.f32 %v324, %v182
  %v326 = vmul.f32 %v325, %v324
  %v327 = vmul.f32 0.5, %v326
  %v328 = vsub.f32 1.5, %v327
  %v329 = vmul.f32 %v324, %v328
  %vm330 = vweird.f32 %v182
  %vm331 = vweird.f32 %v324
  %vm332 = vmor %vm330, %vm331
  %v333 = vsel %vm332, %v324, %v329
  %v334 = vrsqrt.pop %v183
  %v335 = vmul.f32 %v334, %v183
  %v336 = vmul.f32 %v335, %v334
  %v337 = vmul.f32 0.5, %v336
  %v338 = vsub.f32 1.5, %v337
  %v339 = vmul.f32 %v334, %v338
  %vm340 = vweird.f32 %v183
  %vm341 = vweird.f32 %v334
  %vm342 = vmor %vm340, %vm341
  %v343 = vsel %vm342, %v334, %v339
  %v344 = vmul.f32 %v88, %v193
  %v345 = vmul.f32 %v89, %v203
  %v346 = vmul.f32 %v90, %v213
  %v347 = vmul.f32 %v91, %v223
  %v348 = vmul.f32 %v92, %v233
  %v349 = vmul.f32 %v93, %v243
  %v350 = vmul.f32 %v94, %v253
  %v351 = vmul.f32 %v95, %v263
  %v352 = vmul.f32 %v96, %v273
  %v353 = vmul.f32 %v97, %v283
  %v354 = vmul.f32 %v98, %v293
  %v355 = vmul.f32 %v99, %v303
  %v356 = vmul.f32 %v100, %v313
  %v357 = vmul.f32 %v101, %v323
  %v358 = vmul.f32 %v102, %v333
  %v359 = vmul.f32 %v103, %v343
  %v360 = vld [vmem:[%s1] sm:$0x1]
  %v362 = vperm.slane %v360, 0
  %v364 = vmul.f32 %v344, %v362
  %v365 = vmul.f32 %v345, %v362
  %v366 = vmul.f32 %v346, %v362
  %v367 = vmul.f32 %v347, %v362
  %v368 = vmul.f32 %v348, %v362
  %v369 = vmul.f32 %v349, %v362
  %v370 = vmul.f32 %v350, %v362
  %v371 = vmul.f32 %v351, %v362
  %v372 = vmul.f32 %v352, %v362
  %v373 = vmul.f32 %v353, %v362
  %v374 = vmul.f32 %v354, %v362
  %v375 = vmul.f32 %v355, %v362
  %v376 = vmul.f32 %v356, %v362
  %v377 = vmul.f32 %v357, %v362
  %v378 = vmul.f32 %v358, %v362
  %v379 = vmul.f32 %v359, %v362
  %v380 = vld [vmem:[%s2] sm:$0x1]
  %v382 = vperm.slane %v380, 0
  %v384 = vadd.f32 %v364, %v382
  %v385 = vadd.f32 %v365, %v382
  %v386 = vadd.f32 %v366, %v382
  %v387 = vadd.f32 %v367, %v382
  %v388 = vadd.f32 %v368, %v382
  %v389 = vadd.f32 %v369, %v382
  %v390 = vadd.f32 %v370, %v382
  %v391 = vadd.f32 %v371, %v382
  %v392 = vadd.f32 %v372, %v382
  %v393 = vadd.f32 %v373, %v382
  %v394 = vadd.f32 %v374, %v382
  %v395 = vadd.f32 %v375, %v382
  %v396 = vadd.f32 %v376, %v382
  %v397 = vadd.f32 %v377, %v382
  %v398 = vadd.f32 %v378, %v382
  %v399 = vadd.f32 %v379, %v382
  %v400 = vpack.c.bf16 %v385, %v384
  %v401 = vpack.c.bf16 %v387, %v386
  %v402 = vpack.c.bf16 %v389, %v388
  %v403 = vpack.c.bf16 %v391, %v390
  %v404 = vpack.c.bf16 %v393, %v392
  %v405 = vpack.c.bf16 %v395, %v394
  %v406 = vpack.c.bf16 %v397, %v396
  %v407 = vpack.c.bf16 %v399, %v398
  %v408 = vld [vmem:[%s3] sm:$0xf]
  %v409 = vld [vmem:[%s3 + $0x4] sm:$0xf]
  %v410 = vld [vmem:[%s3 + $0x8] sm:$0xf]
  %v411 = vld [vmem:[%s3 + $0xc] sm:$0xf]
  %v412 = vld [vmem:[%s3 + $0x10] sm:$0xf]
  %v413 = vld [vmem:[%s3 + $0x14] sm:$0xf]
  %v414 = vld [vmem:[%s3 + $0x18] sm:$0xf]
  %v415 = vld [vmem:[%s3 + $0x1c] sm:$0xf]
  %v416 = vld [vmem:[%s3 + $0x20] sm:$0xf]
  %v417 = vld [vmem:[%s3 + $0x24] sm:$0xf]
  %v418 = vld [vmem:[%s3 + $0x28] sm:$0xf]
  %v419 = vld [vmem:[%s3 + $0x2c] sm:$0xf]
  %v420 = vld [vmem:[%s3 + $0x30] sm:$0xf]
  %v421 = vld [vmem:[%s3 + $0x34] sm:$0xf]
  %v422 = vld [vmem:[%s3 + $0x38] sm:$0xf]
  %v423 = vld [vmem:[%s3 + $0x3c] sm:$0xf]
  %v440 = vunpack.c.l.b16 %v408
  %v441 = vunpack.c.l.b16 %v409
  %v442 = vunpack.c.l.b16 %v410
  %v443 = vunpack.c.l.b16 %v411
  %v444 = vunpack.c.l.b16 %v412
  %v445 = vunpack.c.l.b16 %v413
  %v446 = vunpack.c.l.b16 %v414
  %v447 = vunpack.c.l.b16 %v415
  %v448 = vunpack.c.l.b16 %v416
  %v449 = vunpack.c.l.b16 %v417
  %v450 = vunpack.c.l.b16 %v418
  %v451 = vunpack.c.l.b16 %v419
  %v452 = vunpack.c.l.b16 %v420
  %v453 = vunpack.c.l.b16 %v421
  %v454 = vunpack.c.l.b16 %v422
  %v455 = vunpack.c.l.b16 %v423
  %v456 = vpack.c.b16 %v441, %v440
  %v457 = vpack.c.b16 %v443, %v442
  %v458 = vpack.c.b16 %v445, %v444
  %v459 = vpack.c.b16 %v447, %v446
  %v460 = vpack.c.b16 %v449, %v448
  %v461 = vpack.c.b16 %v451, %v450
  %v462 = vpack.c.b16 %v453, %v452
  %v463 = vpack.c.b16 %v455, %v454
  %472 = vmatpush.bf16.msra.mxu0 %v463
  %473 = vmatpush.bf16.msra.mxu0 %v462
  %474 = vmatpush.bf16.msra.mxu0 %v461
  %475 = vmatpush.bf16.msra.mxu0 %v460
  %476 = vmatpush.bf16.msra.mxu0 %v459
  %477 = vmatpush.bf16.msra.mxu0 %v458
  %478 = vmatpush.bf16.msra.mxu0 %v457
  %479 = vmatpush.bf16.msra.mxu0 %v456
  %480 = vmatmul.bf16.gmra.mxu0 %v400
  %v481 = vpop.f32.mrf.mxu0
  %v482 = vadd.f32 0.0, %v481
  %v483 = vpop.f32.mrf.mxu0
  %v484 = vadd.f32 0.0, %v483
  %485 = vmatmul.bf16.gmra.mxu0 %v401
  %v486 = vpop.f32.mrf.mxu0
  %v487 = vadd.f32 0.0, %v486
  %v488 = vpop.f32.mrf.mxu0
  %v489 = vadd.f32 0.0, %v488
  %490 = vmatmul.bf16.gmra.mxu0 %v402
  %v491 = vpop.f32.mrf.mxu0
  %v492 = vadd.f32 0.0, %v491
  %v493 = vpop.f32.mrf.mxu0
  %v494 = vadd.f32 0.0, %v493
  %495 = vmatmul.bf16.gmra.mxu0 %v403
  %v496 = vpop.f32.mrf.mxu0
  %v497 = vadd.f32 0.0, %v496
  %v498 = vpop.f32.mrf.mxu0
  %v499 = vadd.f32 0.0, %v498
  %500 = vmatmul.bf16.gmra.mxu0 %v404
  %v501 = vpop.f32.mrf.mxu0
  %v502 = vadd.f32 0.0, %v501
  %v503 = vpop.f32.mrf.mxu0
  %v504 = vadd.f32 0.0, %v503
  %505 = vmatmul.bf16.gmra.mxu0 %v405
  %v506 = vpop.f32.mrf.mxu0
  %v507 = vadd.f32 0.0, %v506
  %v508 = vpop.f32.mrf.mxu0
  %v509 = vadd.f32 0.0, %v508
  %510 = vmatmul.bf16.gmra.mxu0 %v406
  %v511 = vpop.f32.mrf.mxu0
  %v512 = vadd.f32 0.0, %v511
  %v513 = vpop.f32.mrf.mxu0
  %v514 = vadd.f32 0.0, %v513
  %515 = vmatmul.bf16.gmra.mxu0 %v407
  %v516 = vpop.f32.mrf.mxu0
  %v517 = vadd.f32 0.0, %v516
  %v518 = vpop.f32.mrf.mxu0
  %v519 = vadd.f32 0.0, %v518
  %520 = vdwg.mxu0
  %v521 = vpack.c.bf16 %v482, %v482
  %v522 = vpack.c.bf16 %v484, %v484
  %v523 = vpack.c.bf16 %v487, %v487
  %v524 = vpack.c.bf16 %v489, %v489
  %v525 = vpack.c.bf16 %v492, %v492
  %v526 = vpack.c.bf16 %v494, %v494
  %v527 = vpack.c.bf16 %v497, %v497
  %v528 = vpack.c.bf16 %v499, %v499
  %v529 = vpack.c.bf16 %v502, %v502
  %v530 = vpack.c.bf16 %v504, %v504
  %v531 = vpack.c.bf16 %v507, %v507
  %v532 = vpack.c.bf16 %v509, %v509
  %v533 = vpack.c.bf16 %v512, %v512
  %v534 = vpack.c.bf16 %v514, %v514
  %v535 = vpack.c.bf16 %v517, %v517
  %v536 = vpack.c.bf16 %v519, %v519
  %537 = vst [vmem:[%s4] sm:$0xf] %v521
  %538 = vst [vmem:[%s4 + $0x4] sm:$0xf] %v522
  %539 = vst [vmem:[%s4 + $0x8] sm:$0xf] %v523
  %540 = vst [vmem:[%s4 + $0xc] sm:$0xf] %v524
  %541 = vst [vmem:[%s4 + $0x10] sm:$0xf] %v525
  %542 = vst [vmem:[%s4 + $0x14] sm:$0xf] %v526
  %543 = vst [vmem:[%s4 + $0x18] sm:$0xf] %v527
  %544 = vst [vmem:[%s4 + $0x1c] sm:$0xf] %v528
  %545 = vst [vmem:[%s4 + $0x20] sm:$0xf] %v529
  %546 = vst [vmem:[%s4 + $0x24] sm:$0xf] %v530
  %547 = vst [vmem:[%s4 + $0x28] sm:$0xf] %v531
  %548 = vst [vmem:[%s4 + $0x2c] sm:$0xf] %v532
  %549 = vst [vmem:[%s4 + $0x30] sm:$0xf] %v533
  %550 = vst [vmem:[%s4 + $0x34] sm:$0xf] %v534
  %551 = vst [vmem:[%s4 + $0x38] sm:$0xf] %v535
  %552 = vst [vmem:[%s4 + $0x3c] sm:$0xf] %v536
  // Predicated region
  $region18: #{basic_transformer_block.14} parent=0 // pred_check
    _
  $region19: #{basic_transformer_block.14} parent=0 // pred_check_branch
    %554 = sbr.rel (0) target = $region21
  $region20: #{basic_transformer_block.14} parent=0 // pred_region
    _
  $region21: #{basic_transformer_block.14} parent=0 // pred_fallthru
    _
  // Predicated region
  $region22: #{basic_transformer_block.14} parent=0 // pred_check
    _
  $region23: #{basic_transformer_block.14} parent=0 // pred_check_branch
    %556 = sbr.rel (0) target = $region25
  $region24: #{basic_transformer_block.14} parent=0 // pred_region
    _
  $region25: #{basic_transformer_block.14} parent=0 // pred_fallthru
    _

// kernel: basic_transformer_block.15
$region0: #{basic_transformer_block.15}
  #allocation0 [shape = 'u32[]', space=smem, size = 0x4, offset = 0x4, fixed_abs, tag = 'smem constant byte address 0x4 - core index']
  #allocation1 [shape = 'u32[72,128]{1,0:T(1,128)}', space=vmem, size = 0x9000, scoped, tag = 'internal scratch']
  %s0 = inlined_call_operand.vmem [shape: f32[192,128], index: 0, kind: input, shape index: {}]
  %s1 = inlined_call_operand.vmem [shape: bf16[128,256], index: 1, kind: input, shape index: {}]
  %s2 = inlined_call_operand.vmem [shape: bf16[192,256], index: 2, kind: output, shape index: {}]
  %s3 = sld [smem:[#allocation0]]
  $region18: #{basic_transformer_block.15} parent=0
    _
  %s5 = ssub.s32 1, %s3
  %s6 = scalar_select 0, %s5, %s3
  // Predicated region
  $region2: #{basic_transformer_block.15} parent=0 // pred_check
    _
  $region3: #{basic_transformer_block.15} parent=0 // pred_check_branch
    %8 = sbr.rel (0) target = $region5
  $region4: #{basic_transformer_block.15} parent=0 // pred_region
    _
  $region5: #{basic_transformer_block.15} parent=0 // pred_fallthru
    _
  // Predicated region
  $region6: #{basic_transformer_block.15} parent=0 // pred_check
    _
  $region7: #{basic_transformer_block.15} parent=0 // pred_check_branch
    %10 = sbr.rel (0) target = $region9
  $region8: #{basic_transformer_block.15} parent=0 // pred_region
    _
  $region9: #{basic_transformer_block.15} parent=0 // pred_fallthru
    _
  %v11 = vld [vmem:[%s0] sm:$0xff]
  %v12 = vld [vmem:[%s0 + $0x8] sm:$0xff]
  %v13 = vld [vmem:[%s0 + $0x10] sm:$0xff]
  %v14 = vld [vmem:[%s0 + $0x18] sm:$0xff]
  %v15 = vld [vmem:[%s0 + $0x20] sm:$0xff]
  %v16 = vld [vmem:[%s0 + $0x28] sm:$0xff]
  %v17 = vld [vmem:[%s0 + $0x30] sm:$0xff]
  %v18 = vld [vmem:[%s0 + $0x38] sm:$0xff]
  %v19 = vld [vmem:[%s0 + $0x40] sm:$0xff]
  %v20 = vld [vmem:[%s0 + $0x48] sm:$0xff]
  %v21 = vld [vmem:[%s0 + $0x50] sm:$0xff]
  %v22 = vld [vmem:[%s0 + $0x58] sm:$0xff]
  %v23 = vld [vmem:[%s0 + $0x60] sm:$0xff]
  %v24 = vld [vmem:[%s0 + $0x68] sm:$0xff]
  %v25 = vld [vmem:[%s0 + $0x70] sm:$0xff]
  %v26 = vld [vmem:[%s0 + $0x78] sm:$0xff]
  %v27 = vld [vmem:[%s0 + $0x80] sm:$0xff]
  %v28 = vld [vmem:[%s0 + $0x88] sm:$0xff]
  %v29 = vld [vmem:[%s0 + $0x90] sm:$0xff]
  %v30 = vld [vmem:[%s0 + $0x98] sm:$0xff]
  %v31 = vld [vmem:[%s0 + $0xa0] sm:$0xff]
  %v32 = vld [vmem:[%s0 + $0xa8] sm:$0xff]
  %v33 = vld [vmem:[%s0 + $0xb0] sm:$0xff]
  %v34 = vld [vmem:[%s0 + $0xb8] sm:$0xff]
  %v35 = vpack.c.bf16 %v12, %v11
  %v36 = vpack.c.bf16 %v14, %v13
  %v37 = vpack.c.bf16 %v16, %v15
  %v38 = vpack.c.bf16 %v18, %v17
  %v39 = vpack.c.bf16 %v20, %v19
  %v40 = vpack.c.bf16 %v22, %v21
  %v41 = vpack.c.bf16 %v24, %v23
  %v42 = vpack.c.bf16 %v26, %v25
  %v43 = vpack.c.bf16 %v28, %v27
  %v44 = vpack.c.bf16 %v30, %v29
  %v45 = vpack.c.bf16 %v32, %v31
  %v46 = vpack.c.bf16 %v34, %v33
  %v47 = vld [vmem:[%s1] sm:$0xff]
  %v48 = vld [vmem:[%s1 + $0x8] sm:$0xff]
  %v49 = vld [vmem:[%s1 + $0x10] sm:$0xff]
  %v50 = vld [vmem:[%s1 + $0x18] sm:$0xff]
  %v51 = vld [vmem:[%s1 + $0x20] sm:$0xff]
  %v52 = vld [vmem:[%s1 + $0x28] sm:$0xff]
  %v53 = vld [vmem:[%s1 + $0x30] sm:$0xff]
  %v54 = vld [vmem:[%s1 + $0x38] sm:$0xff]
  %v55 = vld [vmem:[%s1 + $0x40] sm:$0xff]
  %v56 = vld [vmem:[%s1 + $0x48] sm:$0xff]
  %v57 = vld [vmem:[%s1 + $0x50] sm:$0xff]
  %v58 = vld [vmem:[%s1 + $0x58] sm:$0xff]
  %v59 = vld [vmem:[%s1 + $0x60] sm:$0xff]
  %v60 = vld [vmem:[%s1 + $0x68] sm:$0xff]
  %v61 = vld [vmem:[%s1 + $0x70] sm:$0xff]
  %v62 = vld [vmem:[%s1 + $0x78] sm:$0xff]
  %v79 = vunpack.c.l.b16 %v47
  %v80 = vunpack.c.h.b16 %v47
  %v81 = vunpack.c.l.b16 %v48
  %v82 = vunpack.c.h.b16 %v48
  %v83 = vunpack.c.l.b16 %v49
  %v84 = vunpack.c.h.b16 %v49
  %v85 = vunpack.c.l.b16 %v50
  %v86 = vunpack.c.h.b16 %v50
  %v87 = vunpack.c.l.b16 %v51
  %v88 = vunpack.c.h.b16 %v51
  %v89 = vunpack.c.l.b16 %v52
  %v90 = vunpack.c.h.b16 %v52
  %v91 = vunpack.c.l.b16 %v53
  %v92 = vunpack.c.h.b16 %v53
  %v93 = vunpack.c.l.b16 %v54
  %v94 = vunpack.c.h.b16 %v54
  %v95 = vunpack.c.l.b16 %v55
  %v96 = vunpack.c.h.b16 %v55
  %v97 = vunpack.c.l.b16 %v56
  %v98 = vunpack.c.h.b16 %v56
  %v99 = vunpack.c.l.b16 %v57
  %v100 = vunpack.c.h.b16 %v57
  %v101 = vunpack.c.l.b16 %v58
  %v102 = vunpack.c.h.b16 %v58
  %v103 = vunpack.c.l.b16 %v59
  %v104 = vunpack.c.h.b16 %v59
  %v105 = vunpack.c.l.b16 %v60
  %v106 = vunpack.c.h.b16 %v60
  %v107 = vunpack.c.l.b16 %v61
  %v108 = vunpack.c.h.b16 %v61
  %v109 = vunpack.c.l.b16 %v62
  %v110 = vunpack.c.h.b16 %v62
  %v111 = vpack.c.b16 %v81, %v79
  %v112 = vpack.c.b16 %v82, %v80
  %v113 = vpack.c.b16 %v85, %v83
  %v114 = vpack.c.b16 %v86, %v84
  %v115 = vpack.c.b16 %v89, %v87
  %v116 = vpack.c.b16 %v90, %v88
  %v117 = vpack.c.b16 %v93, %v91
  %v118 = vpack.c.b16 %v94, %v92
  %v119 = vpack.c.b16 %v97, %v95
  %v120 = vpack.c.b16 %v98, %v96
  %v121 = vpack.c.b16 %v101, %v99
  %v122 = vpack.c.b16 %v102, %v100
  %v123 = vpack.c.b16 %v105, %v103
  %v124 = vpack.c.b16 %v106, %v104
  %v125 = vpack.c.b16 %v109, %v107
  %v126 = vpack.c.b16 %v110, %v108
  %143 = vmatpush.bf16.msra.mxu0 %v125
  %144 = vmatpush.bf16.msra.mxu0 %v123
  %145 = vmatpush.bf16.msra.mxu0 %v121
  %146 = vmatpush.bf16.msra.mxu0 %v119
  %147 = vmatpush.bf16.msra.mxu0 %v117
  %148 = vmatpush.bf16.msra.mxu0 %v115
  %149 = vmatpush.bf16.msra.mxu0 %v113
  %150 = vmatpush.bf16.msra.mxu0 %v111
  %151 = vmatmul.bf16.gmra.mxu0 %v35
  %v152 = vpop.f32.mrf.mxu0
  %v153 = vadd.f32 0.0, %v152
  %v154 = vpop.f32.mrf.mxu0
  %v155 = vadd.f32 0.0, %v154
  %156 = vmatmul.bf16.gmra.mxu0 %v36
  %v157 = vpop.f32.mrf.mxu0
  %v158 = vadd.f32 0.0, %v157
  %v159 = vpop.f32.mrf.mxu0
  %v160 = vadd.f32 0.0, %v159
  %161 = vmatmul.bf16.gmra.mxu0 %v37
  %v162 = vpop.f32.mrf.mxu0
  %v163 = vadd.f32 0.0, %v162
  %v164 = vpop.f32.mrf.mxu0
  %v165 = vadd.f32 0.0, %v164
  %166 = vmatmul.bf16.gmra.mxu0 %v38
  %v167 = vpop.f32.mrf.mxu0
  %v168 = vadd.f32 0.0, %v167
  %v169 = vpop.f32.mrf.mxu0
  %v170 = vadd.f32 0.0, %v169
  %171 = vmatmul.bf16.gmra.mxu0 %v39
  %v172 = vpop.f32.mrf.mxu0
  %v173 = vadd.f32 0.0, %v172
  %v174 = vpop.f32.mrf.mxu0
  %v175 = vadd.f32 0.0, %v174
  %176 = vmatmul.bf16.gmra.mxu0 %v40
  %v177 = vpop.f32.mrf.mxu0
  %v178 = vadd.f32 0.0, %v177
  %v179 = vpop.f32.mrf.mxu0
  %v180 = vadd.f32 0.0, %v179
  %181 = vmatmul.bf16.gmra.mxu0 %v41
  %v182 = vpop.f32.mrf.mxu0
  %v183 = vadd.f32 0.0, %v182
  %v184 = vpop.f32.mrf.mxu0
  %v185 = vadd.f32 0.0, %v184
  %186 = vmatmul.bf16.gmra.mxu0 %v42
  %v187 = vpop.f32.mrf.mxu0
  %v188 = vadd.f32 0.0, %v187
  %v189 = vpop.f32.mrf.mxu0
  %v190 = vadd.f32 0.0, %v189
  %191 = vmatmul.bf16.gmra.mxu0 %v43
  %v192 = vpop.f32.mrf.mxu0
  %v193 = vadd.f32 0.0, %v192
  %v194 = vpop.f32.mrf.mxu0
  %v195 = vadd.f32 0.0, %v194
  %196 = vmatmul.bf16.gmra.mxu0 %v44
  %v197 = vpop.f32.mrf.mxu0
  %v198 = vadd.f32 0.0, %v197
  %v199 = vpop.f32.mrf.mxu0
  %v200 = vadd.f32 0.0, %v199
  %201 = vmatmul.bf16.gmra.mxu0 %v45
  %v202 = vpop.f32.mrf.mxu0
  %v203 = vadd.f32 0.0, %v202
  %v204 = vpop.f32.mrf.mxu0
  %v205 = vadd.f32 0.0, %v204
  %206 = vmatmul.bf16.gmra.mxu0 %v46
  %v207 = vpop.f32.mrf.mxu0
  %v208 = vadd.f32 0.0, %v207
  %v209 = vpop.f32.mrf.mxu0
  %v210 = vadd.f32 0.0, %v209
  %211 = vdwg.mxu0
  %212 = vmatpush.bf16.msra.mxu0 %v126
  %213 = vmatpush.bf16.msra.mxu0 %v124
  %214 = vmatpush.bf16.msra.mxu0 %v122
  %215 = vmatpush.bf16.msra.mxu0 %v120
  %216 = vmatpush.bf16.msra.mxu0 %v118
  %217 = vmatpush.bf16.msra.mxu0 %v116
  %218 = vmatpush.bf16.msra.mxu0 %v114
  %219 = vmatpush.bf16.msra.mxu0 %v112
  %220 = vmatmul.bf16.gmra.mxu0 %v35
  %v221 = vpop.f32.mrf.mxu0
  %v222 = vadd.f32 0.0, %v221
  %v223 = vpop.f32.mrf.mxu0
  %v224 = vadd.f32 0.0, %v223
  %225 = vmatmul.bf16.gmra.mxu0 %v36
  %v226 = vpop.f32.mrf.mxu0
  %v227 = vadd.f32 0.0, %v226
  %v228 = vpop.f32.mrf.mxu0
  %v229 = vadd.f32 0.0, %v228
  %230 = vmatmul.bf16.gmra.mxu0 %v37
  %v231 = vpop.f32.mrf.mxu0
  %v232 = vadd.f32 0.0, %v231
  %v233 = vpop.f32.mrf.mxu0
  %v234 = vadd.f32 0.0, %v233
  %235 = vmatmul.bf16.gmra.mxu0 %v38
  %v236 = vpop.f32.mrf.mxu0
  %v237 = vadd.f32 0.0, %v236
  %v238 = vpop.f32.mrf.mxu0
  %v239 = vadd.f32 0.0, %v238
  %240 = vmatmul.bf16.gmra.mxu0 %v39
  %v241 = vpop.f32.mrf.mxu0
  %v242 = vadd.f32 0.0, %v241
  %v243 = vpop.f32.mrf.mxu0
  %v244 = vadd.f32 0.0, %v243
  %245 = vmatmul.bf16.gmra.mxu0 %v40
  %v246 = vpop.f32.mrf.mxu0
  %v247 = vadd.f32 0.0, %v246
  %v248 = vpop.f32.mrf.mxu0
  %v249 = vadd.f32 0.0, %v248
  %250 = vmatmul.bf16.gmra.mxu0 %v41
  %v251 = vpop.f32.mrf.mxu0
  %v252 = vadd.f32 0.0, %v251
  %v253 = vpop.f32.mrf.mxu0
  %v254 = vadd.f32 0.0, %v253
  %255 = vmatmul.bf16.gmra.mxu0 %v42
  %v256 = vpop.f32.mrf.mxu0
  %v257 = vadd.f32 0.0, %v256
  %v258 = vpop.f32.mrf.mxu0
  %v259 = vadd.f32 0.0, %v258
  %260 = vmatmul.bf16.gmra.mxu0 %v43
  %v261 = vpop.f32.mrf.mxu0
  %v262 = vadd.f32 0.0, %v261
  %v263 = vpop.f32.mrf.mxu0
  %v264 = vadd.f32 0.0, %v263
  %265 = vmatmul.bf16.gmra.mxu0 %v44
  %v266 = vpop.f32.mrf.mxu0
  %v267 = vadd.f32 0.0, %v266
  %v268 = vpop.f32.mrf.mxu0
  %v269 = vadd.f32 0.0, %v268
  %270 = vmatmul.bf16.gmra.mxu0 %v45
  %v271 = vpop.f32.mrf.mxu0
  %v272 = vadd.f32 0.0, %v271
  %v273 = vpop.f32.mrf.mxu0
  %v274 = vadd.f32 0.0, %v273
  %275 = vmatmul.bf16.gmra.mxu0 %v46
  %v276 = vpop.f32.mrf.mxu0
  %v277 = vadd.f32 0.0, %v276
  %v278 = vpop.f32.mrf.mxu0
  %v279 = vadd.f32 0.0, %v278
  %280 = vdwg.mxu0
  %v281 = vpack.c.bf16 %v222, %v153
  %v282 = vpack.c.bf16 %v224, %v155
  %v283 = vpack.c.bf16 %v227, %v158
  %v284 = vpack.c.bf16 %v229, %v160
  %v285 = vpack.c.bf16 %v232, %v163
  %v286 = vpack.c.bf16 %v234, %v165
  %v287 = vpack.c.bf16 %v237, %v168
  %v288 = vpack.c.bf16 %v239, %v170
  %v289 = vpack.c.bf16 %v242, %v173
  %v290 = vpack.c.bf16 %v244, %v175
  %v291 = vpack.c.bf16 %v247, %v178
  %v292 = vpack.c.bf16 %v249, %v180
  %v293 = vpack.c.bf16 %v252, %v183
  %v294 = vpack.c.bf16 %v254, %v185
  %v295 = vpack.c.bf16 %v257, %v188
  %v296 = vpack.c.bf16 %v259, %v190
  %v297 = vpack.c.bf16 %v262, %v193
  %v298 = vpack.c.bf16 %v264, %v195
  %v299 = vpack.c.bf16 %v267, %v198
  %v300 = vpack.c.bf16 %v269, %v200
  %v301 = vpack.c.bf16 %v272, %v203
  %v302 = vpack.c.bf16 %v274, %v205
  %v303 = vpack.c.bf16 %v277, %v208
  %v304 = vpack.c.bf16 %v279, %v210
  %305 = vst [vmem:[%s2] sm:$0xff] %v281
  %306 = vst [vmem:[%s2 + $0x8] sm:$0xff] %v282
  %307 = vst [vmem:[%s2 + $0x10] sm:$0xff] %v283
  %308 = vst [vmem:[%s2 + $0x18] sm:$0xff] %v284
  %309 = vst [vmem:[%s2 + $0x20] sm:$0xff] %v285
  %310 = vst [vmem:[%s2 + $0x28] sm:$0xff] %v286
  %311 = vst [vmem:[%s2 + $0x30] sm:$0xff] %v287
  %312 = vst [vmem:[%s2 + $0x38] sm:$0xff] %v288
  %313 = vst [vmem:[%s2 + $0x40] sm:$0xff] %v289
  %314 = vst [vmem:[%s2 + $0x48] sm:$0xff] %v290
  %315 = vst [vmem:[%s2 + $0x50] sm:$0xff] %v291
  %316 = vst [vmem:[%s2 + $0x58] sm:$0xff] %v292
  %317 = vst [vmem:[%s2 + $0x60] sm:$0xff] %v293
  %318 = vst [vmem:[%s2 + $0x68] sm:$0xff] %v294
  %319 = vst [vmem:[%s2 + $0x70] sm:$0xff] %v295
  %320 = vst [vmem:[%s2 + $0x78] sm:$0xff] %v296
  %321 = vst [vmem:[%s2 + $0x80] sm:$0xff] %v297
  %322 = vst [vmem:[%s2 + $0x88] sm:$0xff] %v298
  %323 = vst [vmem:[%s2 + $0x90] sm:$0xff] %v299
  %324 = vst [vmem:[%s2 + $0x98] sm:$0xff] %v300
  %325 = vst [vmem:[%s2 + $0xa0] sm:$0xff] %v301
  %326 = vst [vmem:[%s2 + $0xa8] sm:$0xff] %v302
  %327 = vst [vmem:[%s2 + $0xb0] sm:$0xff] %v303
  %328 = vst [vmem:[%s2 + $0xb8] sm:$0xff] %v304
  // Predicated region
  $region10: #{basic_transformer_block.15} parent=0 // pred_check
    _
  $region11: #{basic_transformer_block.15} parent=0 // pred_check_branch
    %330 = sbr.rel (0) target = $region13
  $region12: #{basic_transformer_block.15} parent=0 // pred_region
    _
  $region13: #{basic_transformer_block.15} parent=0 // pred_fallthru
    _
  // Predicated region
  $region14: #{basic_transformer_block.15} parent=0 // pred_check
    _
  $region15: #{basic_transformer_block.15} parent=0 // pred_check_branch
    %332 = sbr.rel (0) target = $region17
  $region16: #{basic_transformer_block.15} parent=0 // pred_region
    _
  $region17: #{basic_transformer_block.15} parent=0 // pred_fallthru
    _

// kernel: basic_transformer_block.16
$region0: #{basic_transformer_block.16}
  #allocation0 [shape = 'u32[]', space=smem, size = 0x4, offset = 0x4, fixed_abs, tag = 'smem constant byte address 0x4 - core index']
  #allocation1 [shape = 'u32[72,128]{1,0:T(1,128)}', space=vmem, size = 0x9000, scoped, tag = 'internal scratch']
  #allocation2 [shape = 'f32[2,16,1]{2,1,0:T(8,128)}', space=vmem, size = 0x4000, scoped, tag = 'scratch operand']
  #allocation3 [shape = 'f32[2,16,1]{2,1,0:T(8,128)}', space=vmem, size = 0x4000, scoped, tag = 'scratch operand']
  #allocation4 [shape = 'f32[2,16,64]{2,1,0:T(8,128)}', space=vmem, size = 0x4000, scoped, tag = 'scratch operand']
  %s0 = inlined_call_operand.vmem [shape: bf16[8,2,16,64], index: 0, kind: input, shape index: {}]
  %s1 = inlined_call_operand.vmem [shape: bf16[8,2,24,64], index: 1, kind: input, shape index: {}]
  %s2 = inlined_call_operand.vmem [shape: bf16[8,2,24,64], index: 2, kind: input, shape index: {}]
  %s3 = inlined_call_operand.vmem [shape: bf16[2,64,128], index: 3, kind: input, shape index: {}]
  %s4 = inlined_call_operand.vmem [shape: f32[1,128], index: 4, kind: input, shape index: {}]
  %s5 = inlined_call_operand.vmem [shape: f32[8,16,128], index: 5, kind: input, shape index: {}]
  %s6 = inlined_call_operand.vmem [shape: f32[8,16,128], index: 6, kind: output, shape index: {}]
  %s7 = sld [smem:[#allocation0]]
  $region65: #{basic_transformer_block.16} parent=0
    _
  %s9 = ssub.s32 1, %s7
  %s10 = scalar_select 0, %s9, %s7
  loop: start=0, step=1, limit=10
  $region2: #{basic_transformer_block.16} parent=0 // loop_pre_header
    _
  $region3: #{basic_transformer_block.16} parent=0 // loop_header
    %s12 = sphi 0, %s16
    %p13 = scmp.ge.s32.totalorder %s12, 10
    %s19 = sphi 0, %s38
    %s20 = sphi 0, %s34
    %s21 = sphi 0, %s30
    %s22 = sphi 0, %s19
    %s23 = sphi 0, %s20
    %s24 = sphi 0, %s21
    %s25 = sphi 0, %s22
    %s26 = sphi 0, %s23
    %s27 = sphi 0, %s24
    %s43 = sphi 0, %s45
    %s46 = sphi 0, %s43
    %s47 = sphi 0, %s46
    %s63 = sphi 0, %s47
    %s71 = sphi 0, %s73
    %s74 = sphi 0, %s71
    %s75 = sphi 0, %s74
    %s91 = sphi 0, %s75
    %s99 = sphi 0, %s101
    %s102 = sphi 0, %s99
    %s103 = sphi 0, %s102
    %s119 = sphi 0, %s103
    %s123 = sphi 0, %s123
    %s125 = sphi 0, %s123
    %s126 = sphi 0, %s125
    %s140 = sphi 0, %s126
    %s144 = sphi 0, %s144
    %s146 = sphi 0, %s144
    %s147 = sphi 0, %s146
    %s161 = sphi 0, %s147
    %s169 = sphi 0, %s171
    %s172 = sphi 0, %s169
    %s173 = sphi 0, %s172
    %s189 = sphi 0, %s173
    %s197 = sphi 0, %s199
    %s200 = sphi 0, %s197
    %s201 = sphi 0, %s200
    %s217 = sphi 0, %s201
  $region4: #{basic_transformer_block.16} parent=0 // loop_header_branch
    %15 = sbr.rel (%p13) target = $region8
  $region5: #{basic_transformer_block.16} parent=0 // loop_body
    %s17 = ssub.s32 %s12, 1
    %s18 = ssub.s32 %s12, 2
    %s28 = sadd.s32 1, %s21
    %p29 = scmp.ge.s32.totalorder %s28, 1
    %s30 = scalar_select %p29, 0, %s28
    %s31 = sadd.s32 1, %s20
    %s32 = scalar_select %p29, %s31, %s20
    %p33 = scmp.ge.s32.totalorder %s32, 1
    %s34 = scalar_select %p33, 0, %s32
    %s35 = sadd.s32 1, %s19
    %s36 = scalar_select %p33, %s35, %s19
    %p37 = scmp.ge.s32.totalorder %s36, 8
    %s38 = scalar_select %p37, 0, %s36
    %s39 = ssub.s32 %s19, %s38
    %s40 = ssub.s32 %s20, %s34
    %s41 = sor.u32 %s39, %s40
    %p42 = scmp.eq.s32.totalorder %s41, 0
    %s44 = sadd.s32 %s43, 1
    %s45 = scalar_select %p42, %s43, %s44
    %p48 = pneg %p42
    %p49 = scmp.eq.s32.totalorder %s12, 7
    %p50 = por %p48, %p49
    %p51 = scmp.ne.s32.totalorder %s43, %s46
    %p52 = scmp.eq.s32.totalorder %s12, 0
    %p53 = por %p51, %p52
    %p54 = scmp.ne.s32.totalorder %s43, %s46
    %p55 = scmp.eq.s32.totalorder %s17, 7
    %p56 = por %p54, %p55
    %p57 = scmp.ne.s32.totalorder %s46, %s47
    %p58 = scmp.eq.s32.totalorder %s17, 0
    %p59 = por %p57, %p58
    %p60 = scmp.ne.s32.totalorder %s46, %s47
    %p61 = scmp.eq.s32.totalorder %s18, 7
    %p62 = por %p60, %p61
    %p64 = scmp.ne.s32.totalorder %s47, %s63
    %p65 = scmp.eq.s32.totalorder %s18, 0
    %p66 = por %p64, %p65
    %s67 = ssub.s32 %s19, %s38
    %s68 = ssub.s32 %s21, %s30
    %s69 = sor.u32 %s67, %s68
    %p70 = scmp.eq.s32.totalorder %s69, 0
    %s72 = sadd.s32 %s71, 1
    %s73 = scalar_select %p70, %s71, %s72
    %p76 = pneg %p70
    %p77 = scmp.eq.s32.totalorder %s12, 7
    %p78 = por %p76, %p77
    %p79 = scmp.ne.s32.totalorder %s71, %s74
    %p80 = scmp.eq.s32.totalorder %s12, 0
    %p81 = por %p79, %p80
    %p82 = scmp.ne.s32.totalorder %s71, %s74
    %p83 = scmp.eq.s32.totalorder %s17, 7
    %p84 = por %p82, %p83
    %p85 = scmp.ne.s32.totalorder %s74, %s75
    %p86 = scmp.eq.s32.totalorder %s17, 0
    %p87 = por %p85, %p86
    %p88 = scmp.ne.s32.totalorder %s74, %s75
    %p89 = scmp.eq.s32.totalorder %s18, 7
    %p90 = por %p88, %p89
    %p92 = scmp.ne.s32.totalorder %s75, %s91
    %p93 = scmp.eq.s32.totalorder %s18, 0
    %p94 = por %p92, %p93
    %s95 = ssub.s32 %s19, %s38
    %s96 = ssub.s32 %s21, %s30
    %s97 = sor.u32 %s95, %s96
    %p98 = scmp.eq.s32.totalorder %s97, 0
    %s100 = sadd.s32 %s99, 1
    %s101 = scalar_select %p98, %s99, %s100
    %p104 = pneg %p98
    %p105 = scmp.eq.s32.totalorder %s12, 7
    %p106 = por %p104, %p105
    %p107 = scmp.ne.s32.totalorder %s99, %s102
    %p108 = scmp.eq.s32.totalorder %s12, 0
    %p109 = por %p107, %p108
    %p110 = scmp.ne.s32.totalorder %s99, %s102
    %p111 = scmp.eq.s32.totalorder %s17, 7
    %p112 = por %p110, %p111
    %p113 = scmp.ne.s32.totalorder %s102, %s103
    %p114 = scmp.eq.s32.totalorder %s17, 0
    %p115 = por %p113, %p114
    %p116 = scmp.ne.s32.totalorder %s102, %s103
    %p117 = scmp.eq.s32.totalorder %s18, 7
    %p118 = por %p116, %p117
    %p120 = scmp.ne.s32.totalorder %s103, %s119
    %p121 = scmp.eq.s32.totalorder %s18, 0
    %p122 = por %p120, %p121
    %s124 = sadd.s32 %s123, 1
    %p127 = scmp.eq.s32.totalorder %s12, 7
    %p128 = scmp.ne.s32.totalorder %s123, %s125
    %p129 = scmp.eq.s32.totalorder %s12, 0
    %p130 = por %p128, %p129
    %p131 = scmp.ne.s32.totalorder %s123, %s125
    %p132 = scmp.eq.s32.totalorder %s17, 7
    %p133 = por %p131, %p132
    %p134 = scmp.ne.s32.totalorder %s125, %s126
    %p135 = scmp.eq.s32.totalorder %s17, 0
    %p136 = por %p134, %p135
    %p137 = scmp.ne.s32.totalorder %s125, %s126
    %p138 = scmp.eq.s32.totalorder %s18, 7
    %p139 = por %p137, %p138
    %p141 = scmp.ne.s32.totalorder %s126, %s140
    %p142 = scmp.eq.s32.totalorder %s18, 0
    %p143 = por %p141, %p142
    %s145 = sadd.s32 %s144, 1
    %p148 = scmp.eq.s32.totalorder %s12, 7
    %p149 = scmp.ne.s32.totalorder %s144, %s146
    %p150 = scmp.eq.s32.totalorder %s12, 0
    %p151 = por %p149, %p150
    %p152 = scmp.ne.s32.totalorder %s144, %s146
    %p153 = scmp.eq.s32.totalorder %s17, 7
    %p154 = por %p152, %p153
    %p155 = scmp.ne.s32.totalorder %s146, %s147
    %p156 = scmp.eq.s32.totalorder %s17, 0
    %p157 = por %p155, %p156
    %p158 = scmp.ne.s32.totalorder %s146, %s147
    %p159 = scmp.eq.s32.totalorder %s18, 7
    %p160 = por %p158, %p159
    %p162 = scmp.ne.s32.totalorder %s147, %s161
    %p163 = scmp.eq.s32.totalorder %s18, 0
    %p164 = por %p162, %p163
    %s165 = ssub.s32 %s19, %s38
    %s166 = ssub.s32 %s20, %s34
    %s167 = sor.u32 %s165, %s166
    %p168 = scmp.eq.s32.totalorder %s167, 0
    %s170 = sadd.s32 %s169, 1
    %s171 = scalar_select %p168, %s169, %s170
    %p174 = pneg %p168
    %p175 = scmp.eq.s32.totalorder %s12, 7
    %p176 = por %p174, %p175
    %p177 = scmp.ne.s32.totalorder %s169, %s172
    %p178 = scmp.eq.s32.totalorder %s12, 0
    %p179 = por %p177, %p178
    %p180 = scmp.ne.s32.totalorder %s169, %s172
    %p181 = scmp.eq.s32.totalorder %s17, 7
    %p182 = por %p180, %p181
    %p183 = scmp.ne.s32.totalorder %s172, %s173
    %p184 = scmp.eq.s32.totalorder %s17, 0
    %p185 = por %p183, %p184
    %p186 = scmp.ne.s32.totalorder %s172, %s173
    %p187 = scmp.eq.s32.totalorder %s18, 7
    %p188 = por %p186, %p187
    %p190 = scmp.ne.s32.totalorder %s173, %s189
    %p191 = scmp.eq.s32.totalorder %s18, 0
    %p192 = por %p190, %p191
    %s193 = ssub.s32 %s19, %s38
    %s194 = ssub.s32 %s20, %s34
    %s195 = sor.u32 %s193, %s194
    %p196 = scmp.eq.s32.totalorder %s195, 0
    %s198 = sadd.s32 %s197, 1
    %s199 = scalar_select %p196, %s197, %s198
    %p202 = pneg %p196
    %p203 = scmp.eq.s32.totalorder %s12, 7
    %p204 = por %p202, %p203
    %p205 = scmp.ne.s32.totalorder %s197, %s200
    %p206 = scmp.eq.s32.totalorder %s12, 0
    %p207 = por %p205, %p206
    %p208 = scmp.ne.s32.totalorder %s197, %s200
    %p209 = scmp.eq.s32.totalorder %s17, 7
    %p210 = por %p208, %p209
    %p211 = scmp.ne.s32.totalorder %s200, %s201
    %p212 = scmp.eq.s32.totalorder %s17, 0
    %p213 = por %p211, %p212
    %p214 = scmp.ne.s32.totalorder %s200, %s201
    %p215 = scmp.eq.s32.totalorder %s18, 7
    %p216 = por %p214, %p215
    %p218 = scmp.ne.s32.totalorder %s201, %s217
    %p219 = scmp.eq.s32.totalorder %s18, 0
    %p220 = por %p218, %p219
    %p221 = scmp.le.s32.totalorder 1, %s12
    %p222 = scmp.lt.s32.totalorder %s12, 9
    %p223 = pnand %p221, %p222
    %p224 = pneg %p223
    // Predicated region
    $region9: #{basic_transformer_block.16} parent=5 // pred_check
      _
    $region10: #{basic_transformer_block.16} parent=5 // pred_check_branch
      %226 = sbr.rel (%p223) target = $region12
    $region11: #{basic_transformer_block.16} parent=5 // pred_region
      %s227 = ssub.s32 %s12, 1
      // Predicated region
      $region13: #{basic_transformer_block.16} parent=11 // pred_check
        %p228 = pneg %p136
      $region14: #{basic_transformer_block.16} parent=11 // pred_check_branch
        %230 = sbr.rel (%p228) target = $region16
      $region15: #{basic_transformer_block.16} parent=11 // pred_region
        _
      $region16: #{basic_transformer_block.16} parent=11 // pred_fallthru
        _
      // Predicated region
      $region17: #{basic_transformer_block.16} parent=11 // pred_check
        %p231 = pneg %p157
      $region18: #{basic_transformer_block.16} parent=11 // pred_check_branch
        %233 = sbr.rel (%p231) target = $region20
      $region19: #{basic_transformer_block.16} parent=11 // pred_region
        _
      $region20: #{basic_transformer_block.16} parent=11 // pred_fallthru
        _
    $region12: #{basic_transformer_block.16} parent=5 // pred_fallthru
      _
    %p234 = scmp.lt.s32.totalorder %s12, 8
    // Predicated region
    $region21: #{basic_transformer_block.16} parent=5 // pred_check
      %p235 = pneg %p234
    $region22: #{basic_transformer_block.16} parent=5 // pred_check_branch
      %237 = sbr.rel (%p235) target = $region24
    $region23: #{basic_transformer_block.16} parent=5 // pred_region
      // Predicated region
      $region25: #{basic_transformer_block.16} parent=23 // pred_check
        %p238 = pneg %p53
      $region26: #{basic_transformer_block.16} parent=23 // pred_check_branch
        %240 = sbr.rel (%p238) target = $region28
      $region27: #{basic_transformer_block.16} parent=23 // pred_region
        %s241 = smul.u32 2, %s20
        %p242 = scmp.lt.s32.totalorder %s19, 7
        %s243 = scalar_select %p242, %s19, 7
        %p244 = scmp.lt.s32.totalorder %s241, 1
        %s245 = scalar_select %p244, %s241, 1
        %s246 = smul.addr %s243, 4
        %s247 = sadd.s32 %s245, %s246
        %s248 = smul.addr %s247, 4
        %s249 = scalar_lea.vmem %s0, %s248
        %s250 = smul.u32 2, %s20
      $region28: #{basic_transformer_block.16} parent=23 // pred_fallthru
        _
      // Predicated region
      $region29: #{basic_transformer_block.16} parent=23 // pred_check
        %p251 = pneg %p81
      $region30: #{basic_transformer_block.16} parent=23 // pred_check_branch
        %253 = sbr.rel (%p251) target = $region32
      $region31: #{basic_transformer_block.16} parent=23 // pred_region
        %s254 = smul.u32 3, %s21
        %p255 = scmp.lt.s32.totalorder %s19, 7
        %s256 = scalar_select %p255, %s19, 7
        %p257 = scmp.lt.s32.totalorder %s254, 2
        %s258 = scalar_select %p257, %s254, 2
        %s259 = smul.addr %s256, 6
        %s260 = sadd.s32 %s258, %s259
        %s261 = smul.addr %s260, 4
        %s262 = scalar_lea.vmem %s1, %s261
        %s263 = smul.u32 3, %s21
      $region32: #{basic_transformer_block.16} parent=23 // pred_fallthru
        _
      // Predicated region
      $region33: #{basic_transformer_block.16} parent=23 // pred_check
        %p264 = pneg %p109
      $region34: #{basic_transformer_block.16} parent=23 // pred_check_branch
        %266 = sbr.rel (%p264) target = $region36
      $region35: #{basic_transformer_block.16} parent=23 // pred_region
        %s267 = smul.u32 3, %s21
        %p268 = scmp.lt.s32.totalorder %s19, 7
        %s269 = scalar_select %p268, %s19, 7
        %p270 = scmp.lt.s32.totalorder %s267, 2
        %s271 = scalar_select %p270, %s267, 2
        %s272 = smul.addr %s269, 6
        %s273 = sadd.s32 %s271, %s272
        %s274 = smul.addr %s273, 4
        %s275 = scalar_lea.vmem %s2, %s274
        %s276 = smul.u32 3, %s21
      $region36: #{basic_transformer_block.16} parent=23 // pred_fallthru
        _
      // Predicated region
      $region37: #{basic_transformer_block.16} parent=23 // pred_check
        %p277 = pneg %p179
      $region38: #{basic_transformer_block.16} parent=23 // pred_check_branch
        %279 = sbr.rel (%p277) target = $region40
      $region39: #{basic_transformer_block.16} parent=23 // pred_region
        %s280 = smul.u32 2, %s20
        %p281 = scmp.lt.s32.totalorder %s19, 7
        %s282 = scalar_select %p281, %s19, 7
        %p283 = scmp.lt.s32.totalorder %s280, 1
        %s284 = scalar_select %p283, %s280, 1
        %s285 = smul.addr %s282, 2
        %s286 = sadd.s32 %s284, %s285
        %s287 = smul.addr %s286, 8
        %s288 = scalar_lea.vmem %s5, %s287
        %s289 = smul.u32 2, %s20
      $region40: #{basic_transformer_block.16} parent=23 // pred_fallthru
        _
    $region24: #{basic_transformer_block.16} parent=5 // pred_fallthru
      _
    %p290 = scmp.le.s32.totalorder 1, %s12
    %p291 = scmp.lt.s32.totalorder %s12, 9
    %p292 = pnand %p290, %p291
    %p293 = pneg %p292
    // Predicated region
    $region41: #{basic_transformer_block.16} parent=5 // pred_check
      _
    $region42: #{basic_transformer_block.16} parent=5 // pred_check_branch
      %295 = sbr.rel (%p292) target = $region44
    $region43: #{basic_transformer_block.16} parent=5 // pred_region
      %s296 = ssub.s32 %s12, 1
      %s297 = smul.u32 2, %s23
      %p298 = scmp.lt.s32.totalorder %s22, 7
      %s299 = scalar_select %p298, %s22, 7
      %p300 = scmp.lt.s32.totalorder %s297, 1
      %s301 = scalar_select %p300, %s297, 1
      %s302 = smul.addr %s299, 4
      %s303 = sadd.s32 %s301, %s302
      %s304 = smul.addr %s303, 4
      %s305 = scalar_lea.vmem %s0, %s304
      %p306 = pneg %p59
      %p307 = pneg %p56
      %s308 = smul.u32 3, %s24
      %p309 = scmp.lt.s32.totalorder %s22, 7
      %s310 = scalar_select %p309, %s22, 7
      %p311 = scmp.lt.s32.totalorder %s308, 2
      %s312 = scalar_select %p311, %s308, 2
      %s313 = smul.addr %s310, 6
      %s314 = sadd.s32 %s312, %s313
      %s315 = smul.addr %s314, 4
      %s316 = scalar_lea.vmem %s1, %s315
      %p317 = pneg %p87
      %p318 = pneg %p84
      %s319 = smul.u32 3, %s24
      %p320 = scmp.lt.s32.totalorder %s22, 7
      %s321 = scalar_select %p320, %s22, 7
      %p322 = scmp.lt.s32.totalorder %s319, 2
      %s323 = scalar_select %p322, %s319, 2
      %s324 = smul.addr %s321, 6
      %s325 = sadd.s32 %s323, %s324
      %s326 = smul.addr %s325, 4
      %s327 = scalar_lea.vmem %s2, %s326
      %p328 = pneg %p115
      %p329 = pneg %p112
      %p330 = pneg %p136
      %p331 = pneg %p133
      %p332 = pneg %p157
      %p333 = pneg %p154
      %s334 = smul.u32 2, %s23
      %p335 = scmp.lt.s32.totalorder %s22, 7
      %s336 = scalar_select %p335, %s22, 7
      %p337 = scmp.lt.s32.totalorder %s334, 1
      %s338 = scalar_select %p337, %s334, 1
      %s339 = smul.addr %s336, 2
      %s340 = sadd.s32 %s338, %s339
      %s341 = smul.addr %s340, 8
      %s342 = scalar_lea.vmem %s5, %s341
      %p343 = pneg %p185
      %p344 = pneg %p182
      %p345 = pneg %p213
      %p346 = pneg %p210
      %s347 = smul.u32 2, %s23
      %p348 = scmp.lt.s32.totalorder %s22, 7
      %s349 = scalar_select %p348, %s22, 7
      %p350 = scmp.lt.s32.totalorder %s347, 1
      %s351 = scalar_select %p350, %s347, 1
      %s352 = smul.addr %s349, 2
      %s353 = sadd.s32 %s351, %s352
      %s354 = smul.addr %s353, 8
      %s355 = scalar_lea.vmem %s6, %s354
      %s356 = smul.u32 2, %s23
      %p357 = scmp.lt.s32.totalorder %s22, 7
      %s358 = scalar_select %p357, %s22, 7
      %p359 = scmp.lt.s32.totalorder %s356, 1
      %s360 = scalar_select %p359, %s356, 1
      %s361 = smul.addr %s358, 4
      %s362 = sadd.s32 %s360, %s361
      %s363 = smul.addr %s362, 4
      %s364 = scalar_lea.vmem %s0, %s363
      %s365 = smul.u32 2, %s23
      %s366 = smul.u32 3, %s24
      %p367 = scmp.lt.s32.totalorder %s22, 7
      %s368 = scalar_select %p367, %s22, 7
      %p369 = scmp.lt.s32.totalorder %s366, 2
      %s370 = scalar_select %p369, %s366, 2
      %s371 = smul.addr %s368, 6
      %s372 = sadd.s32 %s370, %s371
      %s373 = smul.addr %s372, 4
      %s374 = scalar_lea.vmem %s1, %s373
      %s375 = smul.u32 3, %s24
      %s376 = smul.u32 3, %s24
      %p377 = scmp.lt.s32.totalorder %s22, 7
      %s378 = scalar_select %p377, %s22, 7
      %p379 = scmp.lt.s32.totalorder %s376, 2
      %s380 = scalar_select %p379, %s376, 2
      %s381 = smul.addr %s378, 6
      %s382 = sadd.s32 %s380, %s381
      %s383 = smul.addr %s382, 4
      %s384 = scalar_lea.vmem %s2, %s383
      %s385 = smul.u32 3, %s24
      %s386 = smul.u32 2, %s23
      %p387 = scmp.lt.s32.totalorder %s22, 7
      %s388 = scalar_select %p387, %s22, 7
      %p389 = scmp.lt.s32.totalorder %s386, 1
      %s390 = scalar_select %p389, %s386, 1
      %s391 = smul.addr %s388, 2
      %s392 = sadd.s32 %s390, %s391
      %s393 = smul.addr %s392, 8
      %s394 = scalar_lea.vmem %s5, %s393
      %s395 = smul.u32 2, %s23
      %s396 = smul.u32 2, %s23
      %p397 = scmp.lt.s32.totalorder %s22, 7
      %s398 = scalar_select %p397, %s22, 7
      %p399 = scmp.lt.s32.totalorder %s396, 1
      %s400 = scalar_select %p399, %s396, 1
      %s401 = smul.addr %s398, 2
      %s402 = sadd.s32 %s400, %s401
      %s403 = smul.addr %s402, 8
      %s404 = scalar_lea.vmem %s6, %s403
      %s405 = smul.u32 2, %s23
      %p407 = scmp.eq.s32.totalorder %s24, 0
      // Predicated region
      $region45: #{basic_transformer_block.16} parent=43 // pred_check
        %p408 = pneg %p407
      $region46: #{basic_transformer_block.16} parent=43 // pred_check_branch
        %410 = sbr.rel (%p408) target = $region48
      $region47: #{basic_transformer_block.16} parent=43 // pred_region
        %vm411 = vcmask 7168
        %412 = vst.msk [vmem:[#allocation2] sm:$0xff] %vm411, -inf
        %413 = vst.msk [vmem:[#allocation2 + $0x8] sm:$0xff] %vm411, -inf
        %414 = vst.msk [vmem:[#allocation2 + $0x10] sm:$0xff] %vm411, -inf
        %415 = vst.msk [vmem:[#allocation2 + $0x18] sm:$0xff] %vm411, -inf
        %416 = vst.msk [vmem:[#allocation3] sm:$0xff] %vm411, 0.0
        %417 = vst.msk [vmem:[#allocation3 + $0x8] sm:$0xff] %vm411, 0.0
        %418 = vst.msk [vmem:[#allocation3 + $0x10] sm:$0xff] %vm411, 0.0
        %419 = vst.msk [vmem:[#allocation3 + $0x18] sm:$0xff] %vm411, 0.0
        %vm420 = vcmask 523264
        %421 = vst.msk [vmem:[#allocation4] sm:$0xff] %vm420, 0.0
        %422 = vst.msk [vmem:[#allocation4 + $0x8] sm:$0xff] %vm420, 0.0
        %423 = vst.msk [vmem:[#allocation4 + $0x10] sm:$0xff] %vm420, 0.0
        %424 = vst.msk [vmem:[#allocation4 + $0x18] sm:$0xff] %vm420, 0.0
      $region48: #{basic_transformer_block.16} parent=43 // pred_fallthru
        _
      %v425 = vld [vmem:[%s364] sm:$0xf]
      %v426 = vld [vmem:[%s364 + $0x4] sm:$0xf]
      %v427 = vld [vmem:[%s364 + $0x8] sm:$0xf]
      %v428 = vld [vmem:[%s364 + $0xc] sm:$0xf]
      %v429 = vld [vmem:[%s374] sm:$0xf]
      %v430 = vld [vmem:[%s374 + $0x4] sm:$0xf]
      %v431 = vld [vmem:[%s374 + $0x8] sm:$0xf]
      %v432 = vld [vmem:[%s374 + $0xc] sm:$0xf]
      %v433 = vld [vmem:[%s374 + $0x10] sm:$0xf]
      %v434 = vld [vmem:[%s374 + $0x14] sm:$0xf]
      %v435 = vld [vmem:[%s384] sm:$0xf]
      %v436 = vld [vmem:[%s384 + $0x4] sm:$0xf]
      %v437 = vld [vmem:[%s384 + $0x8] sm:$0xf]
      %v438 = vld [vmem:[%s384 + $0xc] sm:$0xf]
      %v439 = vld [vmem:[%s384 + $0x10] sm:$0xf]
      %v440 = vld [vmem:[%s384 + $0x14] sm:$0xf]
      %v443 = vunpack.c.l.b16 %v425
      %v444 = vunpack.c.l.b16 %v426
      %v445 = vpack.c.b16 %v444, %v443
      %v449 = vunpack.c.l.b16 %v429
      %v450 = vunpack.c.l.b16 %v430
      %v451 = vunpack.c.l.b16 %v431
      %v452 = vpack.c.b16 %v450, %v449
      %v453 = vpack.c.b16 %v451, %v451
      %vm454 = vcmask 523264
      %v456 = vsel %vm454, %v445, 0
      %v459 = vsel %vm454, %v452, 0
      %v462 = vsel %vm454, %v453, 0
      %464 = vmatpush.bf16.xpose.msra.mxu0 0
      %465 = vmatpush.bf16.xpose.msra.mxu0 0
      %466 = vmatpush.bf16.xpose.msra.mxu0 0
      %467 = vmatpush.bf16.xpose.msra.mxu0 0
      %468 = vmatpush.bf16.xpose.msra.mxu0 0
      %469 = vmatpush.bf16.xpose.msra.mxu0 0
      %470 = vmatpush.bf16.xpose.msra.mxu0 %v462
      %471 = vmatpush.bf16.xpose.msra.mxu0 %v459
      %472 = vmatmul.bf16.gmra.mxu0 %v456
      %v473 = vpop.f32.mrf.mxu0
      %v474 = vadd.f32 0.0, %v473
      %v475 = vpop.f32.mrf.mxu0
      %v476 = vadd.f32 0.0, %v475
      %477 = vdwg.mxu0
      %v480 = vunpack.c.l.b16 %v427
      %v481 = vunpack.c.l.b16 %v428
      %v482 = vpack.c.b16 %v481, %v480
      %v486 = vunpack.c.l.b16 %v432
      %v487 = vunpack.c.l.b16 %v433
      %v488 = vunpack.c.l.b16 %v434
      %v489 = vpack.c.b16 %v487, %v486
      %v490 = vpack.c.b16 %v488, %v488
      %v492 = vsel %vm454, %v482, 0
      %v495 = vsel %vm454, %v489, 0
      %v498 = vsel %vm454, %v490, 0
      %500 = vmatpush.bf16.xpose.msra.mxu0 0
      %501 = vmatpush.bf16.xpose.msra.mxu0 0
      %502 = vmatpush.bf16.xpose.msra.mxu0 0
      %503 = vmatpush.bf16.xpose.msra.mxu0 0
      %504 = vmatpush.bf16.xpose.msra.mxu0 0
      %505 = vmatpush.bf16.xpose.msra.mxu0 0
      %506 = vmatpush.bf16.xpose.msra.mxu0 %v498
      %507 = vmatpush.bf16.xpose.msra.mxu0 %v495
      %508 = vmatmul.bf16.gmra.mxu0 %v492
      %v509 = vpop.f32.mrf.mxu0
      %v510 = vadd.f32 0.0, %v509
      %v511 = vpop.f32.mrf.mxu0
      %v512 = vadd.f32 0.0, %v511
      %513 = vdwg.mxu0
      %v514 = vmul.f32 %v474, 0.125
      %v515 = vmul.f32 %v476, 0.125
      %v516 = vmul.f32 %v510, 0.125
      %v517 = vmul.f32 %v512, 0.125
      %v518 = vld [vmem:[#allocation2] sm:$0xff]
      %v519 = vld [vmem:[#allocation2 + $0x8] sm:$0xff]
      %v520 = vld [vmem:[#allocation2 + $0x10] sm:$0xff]
      %v521 = vld [vmem:[#allocation2 + $0x18] sm:$0xff]
      %vm522 = vcmask 195584
      %v523 = vsel %vm522, %v514, -inf
      %524 = vmax.xlane.f32.xlu0 %v523
      %v525 = vpop.xlane.xlu0 %524
      %v526 = vsel %vm522, %v515, -inf
      %527 = vmax.xlane.f32.xlu0 %v526
      %v528 = vpop.xlane.xlu0 %527
      %v529 = vsel %vm522, %v516, -inf
      %530 = vmax.xlane.f32.xlu0 %v529
      %v531 = vpop.xlane.xlu0 %530
      %v532 = vsel %vm522, %v517, -inf
      %533 = vmax.xlane.f32.xlu0 %v532
      %v534 = vpop.xlane.xlu0 %533
      %v535 = vmax.f32 %v518, %v525
      %v536 = vmax.f32 %v519, %v528
      %v537 = vmax.f32 %v520, %v531
      %v538 = vmax.f32 %v521, %v534
      %v539 = vsub.f32 %v518, %v535
      %v540 = vsub.f32 %v519, %v536
      %v541 = vsub.f32 %v520, %v537
      %v542 = vsub.f32 %v521, %v538
      %v543 = vmul.f32 %v539, 1.442695
      %v544 = vpow.pop %v543
      %v545 = vmul.f32 %v540, 1.442695
      %v546 = vpow.pop %v545
      %v547 = vmul.f32 %v541, 1.442695
      %v548 = vpow.pop %v547
      %v549 = vmul.f32 %v542, 1.442695
      %v550 = vpow.pop %v549
      %552 = vset.pattern.permute.xlu0 0
      %553 = vperm.xlu0 %552, %v535
      %v554 = vpop.permute.xlu0 %553
      %557 = vset.pattern.permute.xlu0 0
      %558 = vperm.xlu0 %557, %v536
      %v559 = vpop.permute.xlu0 %558
      %562 = vset.pattern.permute.xlu0 0
      %563 = vperm.xlu0 %562, %v537
      %v564 = vpop.permute.xlu0 %563
      %567 = vset.pattern.permute.xlu0 0
      %568 = vperm.xlu0 %567, %v538
      %v569 = vpop.permute.xlu0 %568
      %v571 = vsub.f32 %v514, %v554
      %v572 = vsub.f32 %v515, %v559
      %v573 = vsub.f32 %v516, %v564
      %v574 = vsub.f32 %v517, %v569
      %v575 = vmul.f32 %v571, 1.442695
      %v576 = vpow.pop %v575
      %v577 = vmul.f32 %v572, 1.442695
      %v578 = vpow.pop %v577
      %v579 = vmul.f32 %v573, 1.442695
      %v580 = vpow.pop %v579
      %v581 = vmul.f32 %v574, 1.442695
      %v582 = vpow.pop %v581
      %v583 = vld [vmem:[#allocation3] sm:$0xff]
      %v584 = vld [vmem:[#allocation3 + $0x8] sm:$0xff]
      %v585 = vld [vmem:[#allocation3 + $0x10] sm:$0xff]
      %v586 = vld [vmem:[#allocation3 + $0x18] sm:$0xff]
      %v587 = vmul.f32 %v544, %v583
      %v588 = vmul.f32 %v546, %v584
      %v589 = vmul.f32 %v548, %v585
      %v590 = vmul.f32 %v550, %v586
      %v591 = vsel %vm522, %v576, 0.0
      %592 = vadd.xlane.f32.xlu0 %v591
      %v593 = vpop.xlane.xlu0 %592
      %v594 = vsel %vm522, %v578, 0.0
      %595 = vadd.xlane.f32.xlu0 %v594
      %v596 = vpop.xlane.xlu0 %595
      %v597 = vsel %vm522, %v580, 0.0
      %598 = vadd.xlane.f32.xlu0 %v597
      %v599 = vpop.xlane.xlu0 %598
      %v600 = vsel %vm522, %v582, 0.0
      %601 = vadd.xlane.f32.xlu0 %v600
      %v602 = vpop.xlane.xlu0 %601
      %v603 = vadd.f32 %v587, %v593
      %v604 = vadd.f32 %v588, %v596
      %v605 = vadd.f32 %v589, %v599
      %v606 = vadd.f32 %v590, %v602
      %vm607 = vcmask 7168
      %608 = vst.msk [vmem:[#allocation3] sm:$0xff] %vm607, %v603
      %609 = vst.msk [vmem:[#allocation3 + $0x8] sm:$0xff] %vm607, %v604
      %610 = vst.msk [vmem:[#allocation3 + $0x10] sm:$0xff] %vm607, %v605
      %611 = vst.msk [vmem:[#allocation3 + $0x18] sm:$0xff] %vm607, %v606
      %v612 = vld [vmem:[#allocation4] sm:$0xff]
      %v613 = vld [vmem:[#allocation4 + $0x8] sm:$0xff]
      %v614 = vld [vmem:[#allocation4 + $0x10] sm:$0xff]
      %v615 = vld [vmem:[#allocation4 + $0x18] sm:$0xff]
      %617 = vset.pattern.permute.xlu0 0
      %618 = vperm.xlu0 %617, %v544
      %v619 = vpop.permute.xlu0 %618
      %622 = vset.pattern.permute.xlu0 0
      %623 = vperm.xlu0 %622, %v546
      %v624 = vpop.permute.xlu0 %623
      %627 = vset.pattern.permute.xlu0 0
      %628 = vperm.xlu0 %627, %v548
      %v629 = vpop.permute.xlu0 %628
      %632 = vset.pattern.permute.xlu0 0
      %633 = vperm.xlu0 %632, %v550
      %v634 = vpop.permute.xlu0 %633
      %v636 = vmul.f32 %v619, %v612
      %v637 = vmul.f32 %v624, %v613
      %v638 = vmul.f32 %v629, %v614
      %v639 = vmul.f32 %v634, %v615
      %v640 = vpack.c.bf16 %v576, %v576
      %v641 = vpack.c.bf16 %v578, %v578
      %v642 = vpack.c.bf16 %v580, %v580
      %v643 = vpack.c.bf16 %v582, %v582
      %v646 = vunpack.c.l.b16 %v640
      %v647 = vunpack.c.l.b16 %v641
      %v648 = vpack.c.b16 %v647, %v646
      %v652 = vunpack.c.l.b16 %v435
      %v653 = vunpack.c.l.b16 %v436
      %v654 = vunpack.c.l.b16 %v437
      %v655 = vpack.c.b16 %v653, %v652
      %v656 = vpack.c.b16 %v654, %v654
      %v659 = vsel %vm522, %v648, 0
      %vm661 = vcmask 1043456
      %v663 = vsel %vm661, %v656, 0
      %665 = vmatpush.bf16.msra.mxu0 0
      %666 = vmatpush.bf16.msra.mxu0 0
      %667 = vmatpush.bf16.msra.mxu0 0
      %668 = vmatpush.bf16.msra.mxu0 0
      %669 = vmatpush.bf16.msra.mxu0 0
      %670 = vmatpush.bf16.msra.mxu0 0
      %671 = vmatpush.bf16.msra.mxu0 %v663
      %672 = vmatpush.bf16.msra.mxu0 %v655
      %673 = vmatmul.bf16.gmra.mxu0 %v659
      %v674 = vpop.f32.mrf.mxu0
      %v675 = vadd.f32 0.0, %v674
      %v676 = vpop.f32.mrf.mxu0
      %v677 = vadd.f32 0.0, %v676
      %678 = vdwg.mxu0
      %v681 = vunpack.c.l.b16 %v642
      %v682 = vunpack.c.l.b16 %v643
      %v683 = vpack.c.b16 %v682, %v681
      %v687 = vunpack.c.l.b16 %v438
      %v688 = vunpack.c.l.b16 %v439
      %v689 = vunpack.c.l.b16 %v440
      %v690 = vpack.c.b16 %v688, %v687
      %v691 = vpack.c.b16 %v689, %v689
      %v694 = vsel %vm522, %v683, 0
      %v697 = vsel %vm661, %v691, 0
      %699 = vmatpush.bf16.msra.mxu0 0
      %700 = vmatpush.bf16.msra.mxu0 0
      %701 = vmatpush.bf16.msra.mxu0 0
      %702 = vmatpush.bf16.msra.mxu0 0
      %703 = vmatpush.bf16.msra.mxu0 0
      %704 = vmatpush.bf16.msra.mxu0 0
      %705 = vmatpush.bf16.msra.mxu0 %v697
      %706 = vmatpush.bf16.msra.mxu0 %v690
      %707 = vmatmul.bf16.gmra.mxu0 %v694
      %v708 = vpop.f32.mrf.mxu0
      %v709 = vadd.f32 0.0, %v708
      %v710 = vpop.f32.mrf.mxu0
      %v711 = vadd.f32 0.0, %v710
      %712 = vdwg.mxu0
      %v713 = vadd.f32 %v636, %v675
      %v714 = vadd.f32 %v637, %v677
      %v715 = vadd.f32 %v638, %v709
      %v716 = vadd.f32 %v639, %v711
      %717 = vst.msk [vmem:[#allocation4] sm:$0xff] %vm454, %v713
      %718 = vst.msk [vmem:[#allocation4 + $0x8] sm:$0xff] %vm454, %v714
      %719 = vst.msk [vmem:[#allocation4 + $0x10] sm:$0xff] %vm454, %v715
      %720 = vst.msk [vmem:[#allocation4 + $0x18] sm:$0xff] %vm454, %v716
      %721 = vst.msk [vmem:[#allocation2] sm:$0xff] %vm607, %v535
      %722 = vst.msk [vmem:[#allocation2 + $0x8] sm:$0xff] %vm607, %v536
      %723 = vst.msk [vmem:[#allocation2 + $0x10] sm:$0xff] %vm607, %v537
      %724 = vst.msk [vmem:[#allocation2 + $0x18] sm:$0xff] %vm607, %v538
      // Predicated region
      $region49: #{basic_transformer_block.16} parent=43 // pred_check
        %p725 = pneg %p407
      $region50: #{basic_transformer_block.16} parent=43 // pred_check_branch
        %727 = sbr.rel (%p725) target = $region52
      $region51: #{basic_transformer_block.16} parent=43 // pred_region
        %v728 = vld [vmem:[#allocation3] sm:$0xff]
        %v729 = vld [vmem:[#allocation3 + $0x8] sm:$0xff]
        %v730 = vld [vmem:[#allocation3 + $0x10] sm:$0xff]
        %v731 = vld [vmem:[#allocation3 + $0x18] sm:$0xff]
        %v732 = vrcp.pop %v728
        %v733 = vrcp.pop %v729
        %v734 = vrcp.pop %v730
        %v735 = vrcp.pop %v731
        %v736 = vld [vmem:[#allocation4] sm:$0xff]
        %v737 = vld [vmem:[#allocation4 + $0x8] sm:$0xff]
        %v738 = vld [vmem:[#allocation4 + $0x10] sm:$0xff]
        %v739 = vld [vmem:[#allocation4 + $0x18] sm:$0xff]
        %741 = vset.pattern.permute.xlu0 0
        %742 = vperm.xlu0 %741, %v732
        %v743 = vpop.permute.xlu0 %742
        %746 = vset.pattern.permute.xlu0 0
        %747 = vperm.xlu0 %746, %v733
        %v748 = vpop.permute.xlu0 %747
        %751 = vset.pattern.permute.xlu0 0
        %752 = vperm.xlu0 %751, %v734
        %v753 = vpop.permute.xlu0 %752
        %756 = vset.pattern.permute.xlu0 0
        %757 = vperm.xlu0 %756, %v735
        %v758 = vpop.permute.xlu0 %757
        %v760 = vmul.f32 %v736, %v743
        %v761 = vmul.f32 %v737, %v748
        %v762 = vmul.f32 %v738, %v753
        %v763 = vmul.f32 %v739, %v758
        %v764 = vpack.c.bf16 %v760, %v760
        %v765 = vpack.c.bf16 %v761, %v761
        %v766 = vpack.c.bf16 %v762, %v762
        %v767 = vpack.c.bf16 %v763, %v763
        %v768 = vld [vmem:[%s3] sm:$0xf]
        %v769 = vld [vmem:[%s3 + $0x4] sm:$0xf]
        %v770 = vld [vmem:[%s3 + $0x8] sm:$0xf]
        %v771 = vld [vmem:[%s3 + $0xc] sm:$0xf]
        %v772 = vld [vmem:[%s3 + $0x10] sm:$0xf]
        %v773 = vld [vmem:[%s3 + $0x14] sm:$0xf]
        %v774 = vld [vmem:[%s3 + $0x18] sm:$0xf]
        %v775 = vld [vmem:[%s3 + $0x1c] sm:$0xf]
        %v776 = vld [vmem:[%s3 + $0x20] sm:$0xf]
        %v777 = vld [vmem:[%s3 + $0x24] sm:$0xf]
        %v778 = vld [vmem:[%s3 + $0x28] sm:$0xf]
        %v779 = vld [vmem:[%s3 + $0x2c] sm:$0xf]
        %v780 = vld [vmem:[%s3 + $0x30] sm:$0xf]
        %v781 = vld [vmem:[%s3 + $0x34] sm:$0xf]
        %v782 = vld [vmem:[%s3 + $0x38] sm:$0xf]
        %v783 = vld [vmem:[%s3 + $0x3c] sm:$0xf]
        %v786 = vunpack.c.l.b16 %v766
        %v787 = vunpack.c.l.b16 %v767
        %v788 = vpack.c.b16 %v787, %v786
        %v797 = vunpack.c.l.b16 %v776
        %v798 = vunpack.c.l.b16 %v777
        %v799 = vunpack.c.l.b16 %v778
        %v800 = vunpack.c.l.b16 %v779
        %v801 = vunpack.c.l.b16 %v780
        %v802 = vunpack.c.l.b16 %v781
        %v803 = vunpack.c.l.b16 %v782
        %v804 = vunpack.c.l.b16 %v783
        %v805 = vpack.c.b16 %v798, %v797
        %v806 = vpack.c.b16 %v800, %v799
        %v807 = vpack.c.b16 %v802, %v801
        %v808 = vpack.c.b16 %v804, %v803
        %v814 = vsel %vm454, %v788, 0
        %816 = vmatpush.bf16.msra.mxu0 0
        %817 = vmatpush.bf16.msra.mxu0 0
        %818 = vmatpush.bf16.msra.mxu0 0
        %819 = vmatpush.bf16.msra.mxu0 0
        %820 = vmatpush.bf16.msra.mxu0 %v808
        %821 = vmatpush.bf16.msra.mxu0 %v807
        %822 = vmatpush.bf16.msra.mxu0 %v806
        %823 = vmatpush.bf16.msra.mxu0 %v805
        %824 = vmatmul.bf16.gmra.mxu0 %v814
        %v825 = vpop.f32.mrf.mxu0
        %v826 = vadd.f32 0.0, %v825
        %v827 = vpop.f32.mrf.mxu0
        %v828 = vadd.f32 0.0, %v827
        %829 = vdwg.mxu0
        %v832 = vunpack.c.l.b16 %v764
        %v833 = vunpack.c.l.b16 %v765
        %v834 = vpack.c.b16 %v833, %v832
        %v843 = vunpack.c.l.b16 %v768
        %v844 = vunpack.c.l.b16 %v769
        %v845 = vunpack.c.l.b16 %v770
        %v846 = vunpack.c.l.b16 %v771
        %v847 = vunpack.c.l.b16 %v772
        %v848 = vunpack.c.l.b16 %v773
        %v849 = vunpack.c.l.b16 %v774
        %v850 = vunpack.c.l.b16 %v775
        %v851 = vpack.c.b16 %v844, %v843
        %v852 = vpack.c.b16 %v846, %v845
        %v853 = vpack.c.b16 %v848, %v847
        %v854 = vpack.c.b16 %v850, %v849
        %v860 = vsel %vm454, %v834, 0
        %862 = vmatpush.bf16.msra.mxu0 0
        %863 = vmatpush.bf16.msra.mxu0 0
        %864 = vmatpush.bf16.msra.mxu0 0
        %865 = vmatpush.bf16.msra.mxu0 0
        %866 = vmatpush.bf16.msra.mxu0 %v854
        %867 = vmatpush.bf16.msra.mxu0 %v853
        %868 = vmatpush.bf16.msra.mxu0 %v852
        %869 = vmatpush.bf16.msra.mxu0 %v851
        %870 = vmatmul.bf16.gmra.mxu0 %v860
        %v871 = vpop.f32.mrf.mxu0
        %v872 = vadd.f32 %v826, %v871
        %v873 = vpop.f32.mrf.mxu0
        %v874 = vadd.f32 %v828, %v873
        %875 = vdwg.mxu0
        %v876 = vld [vmem:[%s4] sm:$0x1]
        %v878 = vperm.slane %v876, 0
        %v880 = vadd.f32 %v872, %v878
        %v881 = vadd.f32 %v874, %v878
        %v882 = vld [vmem:[%s394] sm:$0xff]
        %v883 = vld [vmem:[%s394 + $0x8] sm:$0xff]
        %v884 = vmul.f32 %v882, 0.9
        %v885 = vmul.f32 %v883, 0.9
        %v886 = vadd.f32 %v880, %v884
        %v887 = vadd.f32 %v881, %v885
        %888 = vst [vmem:[%s404] sm:$0xff] %v886
        %889 = vst [vmem:[%s404 + $0x8] sm:$0xff] %v887
      $region52: #{basic_transformer_block.16} parent=43 // pred_fallthru
        _
      %s890 = smul.u32 2, %s23
      %p891 = scmp.lt.s32.totalorder %s22, 7
      %s892 = scalar_select %p891, %s22, 7
      %p893 = scmp.lt.s32.totalorder %s890, 1
      %s894 = scalar_select %p893, %s890, 1
      %s895 = smul.addr %s892, 2
      %s896 = sadd.s32 %s894, %s895
      %s897 = smul.addr %s896, 8
      %s898 = scalar_lea.vmem %s6, %s897
      // Predicated region
      $region53: #{basic_transformer_block.16} parent=43 // pred_check
        %p899 = pneg %p210
      $region54: #{basic_transformer_block.16} parent=43 // pred_check_branch
        %901 = sbr.rel (%p899) target = $region56
      $region55: #{basic_transformer_block.16} parent=43 // pred_region
        %s902 = smul.u32 2, %s23
      $region56: #{basic_transformer_block.16} parent=43 // pred_fallthru
        _
    $region44: #{basic_transformer_block.16} parent=5 // pred_fallthru
      _
    %p903 = scmp.le.s32.totalorder 2, %s12
    // Predicated region
    $region57: #{basic_transformer_block.16} parent=5 // pred_check
      %p904 = pneg %p903
    $region58: #{basic_transformer_block.16} parent=5 // pred_check_branch
      %906 = sbr.rel (%p904) target = $region60
    $region59: #{basic_transformer_block.16} parent=5 // pred_region
      %s907 = ssub.s32 %s12, 2
      // Predicated region
      $region61: #{basic_transformer_block.16} parent=59 // pred_check
        %p908 = pneg %p216
      $region62: #{basic_transformer_block.16} parent=59 // pred_check_branch
        %910 = sbr.rel (%p908) target = $region64
      $region63: #{basic_transformer_block.16} parent=59 // pred_region
        %s911 = smul.u32 2, %s26
        %p912 = scmp.lt.s32.totalorder %s25, 7
        %s913 = scalar_select %p912, %s25, 7
        %p914 = scmp.lt.s32.totalorder %s911, 1
        %s915 = scalar_select %p914, %s911, 1
        %s916 = smul.addr %s913, 2
        %s917 = sadd.s32 %s915, %s916
        %s918 = smul.addr %s917, 8
        %s919 = scalar_lea.vmem %s6, %s918
      $region64: #{basic_transformer_block.16} parent=59 // pred_fallthru
        _
    $region60: #{basic_transformer_block.16} parent=5 // pred_fallthru
      _
  $region6: #{basic_transformer_block.16} parent=0 // loop_footer
    %s16 = sadd.s32 1, %s12
  $region7: #{basic_transformer_block.16} parent=0 // loop_footer_branch
    %11 = sbr.rel target = $region3
  $region8: #{basic_transformer_block.16} parent=0 // loop_exit
    _

// kernel: basic_transformer_block.19
$region0: #{basic_transformer_block.19}
  #allocation0 [shape = 'u32[]', space=smem, size = 0x4, offset = 0x4, fixed_abs, tag = 'smem constant byte address 0x4 - core index']
  #allocation1 [shape = 'u32[72,128]{1,0:T(1,128)}', space=vmem, size = 0x9000, scoped, tag = 'internal scratch']
  #allocation2 [shape = 'bf16[128,128]{1,0:T(8,128)(2,1)}', space=vmem, size = 0x8000, scoped, tag = 'scratch operand']
  #allocation3 [shape = 'f32[128,128]{1,0:T(8,128)}', space=vmem, size = 0x10000, scoped, tag = 'scratch operand']
  %s0 = inlined_call_operand.vmem [shape: f32[128,128], index: 0, kind: input, shape index: {}]
  %s1 = inlined_call_operand.vmem [shape: f32[1,128], index: 1, kind: input, shape index: {}]
  %s2 = inlined_call_operand.vmem [shape: f32[1,128], index: 2, kind: input, shape index: {}]
  %s3 = inlined_call_operand.vmem [shape: bf16[128,512], index: 3, kind: input, shape index: {}]
  %s4 = inlined_call_operand.vmem [shape: f32[1,512], index: 4, kind: input, shape index: {}]
  %s5 = inlined_call_operand.vmem [shape: bf16[128,512], index: 5, kind: input, shape index: {}]
  %s6 = inlined_call_operand.vmem [shape: f32[1,512], index: 6, kind: input, shape index: {}]
  %s7 = inlined_call_operand.vmem [shape: bf16[512,128], index: 7, kind: input, shape index: {}]
  %s8 = inlined_call_operand.vmem [shape: f32[1,128], index: 8, kind: input, shape index: {}]
  %s9 = inlined_call_operand.hbm [shape: f32[128,128], index: 9, kind: output, shape index: {}]
  %s10 = sld [smem:[#allocation0]]
  $region54: #{basic_transformer_block.19} parent=0
    _
  %s12 = ssub.s32 1, %s10
  %s13 = scalar_select 0, %s12, %s10
  $region1: #{basic_transformer_block.19} parent=0
    #allocation4 [shape = 'u8[65536]{0}', space=vmem, size = 0x10000, scoped, tag = 'output window, operand 0, single buffered']
    #allocation5 [shape = 's32[1]{0}', space=sflag, size = 0x4, scoped, tag = 'scoped memory for basic_transformer_block.19']
    %14 = vsyncpa [#allocation5], 0
    // Predicated region
    $region2: #{basic_transformer_block.19} parent=1 // pred_check
      _
    $region3: #{basic_transformer_block.19} parent=1 // pred_check_branch
      %16 = sbr.rel (0) target = $region5
    $region4: #{basic_transformer_block.19} parent=1 // pred_region
      _
    $region5: #{basic_transformer_block.19} parent=1 // pred_fallthru
      _
    // Predicated region
    $region6: #{basic_transformer_block.19} parent=1 // pred_check
      _
    $region7: #{basic_transformer_block.19} parent=1 // pred_check_branch
      %18 = sbr.rel (0) target = $region9
    $region8: #{basic_transformer_block.19} parent=1 // pred_region
      _
    $region9: #{basic_transformer_block.19} parent=1 // pred_fallthru
      _
    // Predicated region
    $region10: #{basic_transformer_block.19} parent=1 // pred_check
      _
    $region11: #{basic_transformer_block.19} parent=1 // pred_check_branch
      %20 = sbr.rel (0) target = $region13
    $region12: #{basic_transformer_block.19} parent=1 // pred_region
      _
    $region13: #{basic_transformer_block.19} parent=1 // pred_fallthru
      _
    // Predicated region
    $region14: #{basic_transformer_block.19} parent=1 // pred_check
      _
    $region15: #{basic_transformer_block.19} parent=1 // pred_check_branch
      %22 = sbr.rel (0) target = $region17
    $region16: #{basic_transformer_block.19} parent=1 // pred_region
      _
    $region17: #{basic_transformer_block.19} parent=1 // pred_fallthru
      _
    // Predicated region
    $region18: #{basic_transformer_block.19} parent=1 // pred_check
      _
    $region19: #{basic_transformer_block.19} parent=1 // pred_check_branch
      %24 = sbr.rel (0) target = $region21
    $region20: #{basic_transformer_block.19} parent=1 // pred_region
      _
    $region21: #{basic_transformer_block.19} parent=1 // pred_fallthru
      _
    // Predicated region
    $region22: #{basic_transformer_block.19} parent=1 // pred_check
      _
    $region23: #{basic_transformer_block.19} parent=1 // pred_check_branch
      %26 = sbr.rel (0) target = $region25
    $region24: #{basic_transformer_block.19} parent=1 // pred_region
      _
    $region25: #{basic_transformer_block.19} parent=1 // pred_fallthru
      _
    // Predicated region
    $region26: #{basic_transformer_block.19} parent=1 // pred_check
      _
    $region27: #{basic_transformer_block.19} parent=1 // pred_check_branch
      %28 = sbr.rel (0) target = $region29
    $region28: #{basic_transformer_block.19} parent=1 // pred_region
      _
    $region29: #{basic_transformer_block.19} parent=1 // pred_fallthru
      _
    // Predicated region
    $region30: #{basic_transformer_block.19} parent=1 // pred_check
      _
    $region31: #{basic_transformer_block.19} parent=1 // pred_check_branch
      %30 = sbr.rel (0) target = $region33
    $region32: #{basic_transformer_block.19} parent=1 // pred_region
      _
    $region33: #{basic_transformer_block.19} parent=1 // pred_fallthru
      _
    // Predicated region
    $region34: #{basic_transformer_block.19} parent=1 // pred_check
      _
    $region35: #{basic_transformer_block.19} parent=1 // pred_check_branch
      %32 = sbr.rel (0) target = $region37
    $region36: #{basic_transformer_block.19} parent=1 // pred_region
      _
    $region37: #{basic_transformer_block.19} parent=1 // pred_fallthru
      _
    %p33 = scmp.eq.s32.totalorder 0, 0
    // Predicated region
    $region38: #{basic_transformer_block.19} parent=1 // pred_check
      %p34 = pneg %p33
    $region39: #{basic_transformer_block.19} parent=1 // pred_check_branch
      %36 = sbr.rel (%p34) target = $region41
    $region40: #{basic_transformer_block.19} parent=1 // pred_region
      %v37 = vld [vmem:[%s0] sm:$0xff]
      %v38 = vld [vmem:[%s0 + $0x8] sm:$0xff]
      %v39 = vld [vmem:[%s0 + $0x10] sm:$0xff]
      %v40 = vld [vmem:[%s0 + $0x18] sm:$0xff]
      %v41 = vld [vmem:[%s0 + $0x20] sm:$0xff]
      %v42 = vld [vmem:[%s0 + $0x28] sm:$0xff]
      %v43 = vld [vmem:[%s0 + $0x30] sm:$0xff]
      %v44 = vld [vmem:[%s0 + $0x38] sm:$0xff]
      %v45 = vld [vmem:[%s0 + $0x40] sm:$0xff]
      %v46 = vld [vmem:[%s0 + $0x48] sm:$0xff]
      %v47 = vld [vmem:[%s0 + $0x50] sm:$0xff]
      %v48 = vld [vmem:[%s0 + $0x58] sm:$0xff]
      %v49 = vld [vmem:[%s0 + $0x60] sm:$0xff]
      %v50 = vld [vmem:[%s0 + $0x68] sm:$0xff]
      %v51 = vld [vmem:[%s0 + $0x70] sm:$0xff]
      %v52 = vld [vmem:[%s0 + $0x78] sm:$0xff]
      %53 = vadd.xlane.f32.xlu0 %v37
      %v54 = vpop.xlane.xlu0 %53
      %55 = vadd.xlane.f32.xlu0 %v38
      %v56 = vpop.xlane.xlu0 %55
      %57 = vadd.xlane.f32.xlu0 %v39
      %v58 = vpop.xlane.xlu0 %57
      %59 = vadd.xlane.f32.xlu0 %v40
      %v60 = vpop.xlane.xlu0 %59
      %61 = vadd.xlane.f32.xlu0 %v41
      %v62 = vpop.xlane.xlu0 %61
      %63 = vadd.xlane.f32.xlu0 %v42
      %v64 = vpop.xlane.xlu0 %63
      %65 = vadd.xlane.f32.xlu0 %v43
      %v66 = vpop.xlane.xlu0 %65
      %67 = vadd.xlane.f32.xlu0 %v44
      %v68 = vpop.xlane.xlu0 %67
      %69 = vadd.xlane.f32.xlu0 %v45
      %v70 = vpop.xlane.xlu0 %69
      %71 = vadd.xlane.f32.xlu0 %v46
      %v72 = vpop.xlane.xlu0 %71
      %73 = vadd.xlane.f32.xlu0 %v47
      %v74 = vpop.xlane.xlu0 %73
      %75 = vadd.xlane.f32.xlu0 %v48
      %v76 = vpop.xlane.xlu0 %75
      %77 = vadd.xlane.f32.xlu0 %v49
      %v78 = vpop.xlane.xlu0 %77
      %79 = vadd.xlane.f32.xlu0 %v50
      %v80 = vpop.xlane.xlu0 %79
      %81 = vadd.xlane.f32.xlu0 %v51
      %v82 = vpop.xlane.xlu0 %81
      %83 = vadd.xlane.f32.xlu0 %v52
      %v84 = vpop.xlane.xlu0 %83
      %v85 = vrcp.pop 128.0
      %v86 = vmul.f32 128.0, %v85
      %v87 = vsub.f32 1.0, %v86
      %v88 = vmul.f32 %v85, %v87
      %v89 = vadd.f32 %v85, %v88
      %vm90 = vweird.f32 %v85
      %v91 = vsel %vm90, %v85, %v89
      %v92 = vmul.f32 %v54, %v91
      %v93 = vmul.f32 %v56, %v91
      %v94 = vmul.f32 %v58, %v91
      %v95 = vmul.f32 %v60, %v91
      %v96 = vmul.f32 %v62, %v91
      %v97 = vmul.f32 %v64, %v91
      %v98 = vmul.f32 %v66, %v91
      %v99 = vmul.f32 %v68, %v91
      %v100 = vmul.f32 %v70, %v91
      %v101 = vmul.f32 %v72, %v91
      %v102 = vmul.f32 %v74, %v91
      %v103 = vmul.f32 %v76, %v91
      %v104 = vmul.f32 %v78, %v91
      %v105 = vmul.f32 %v80, %v91
      %v106 = vmul.f32 %v82, %v91
      %v107 = vmul.f32 %v84, %v91
      %v108 = vsub.f32 %v37, %v92
      %v109 = vsub.f32 %v38, %v93
      %v110 = vsub.f32 %v39, %v94
      %v111 = vsub.f32 %v40, %v95
      %v112 = vsub.f32 %v41, %v96
      %v113 = vsub.f32 %v42, %v97
      %v114 = vsub.f32 %v43, %v98
      %v115 = vsub.f32 %v44, %v99
      %v116 = vsub.f32 %v45, %v100
      %v117 = vsub.f32 %v46, %v101
      %v118 = vsub.f32 %v47, %v102
      %v119 = vsub.f32 %v48, %v103
      %v120 = vsub.f32 %v49, %v104
      %v121 = vsub.f32 %v50, %v105
      %v122 = vsub.f32 %v51, %v106
      %v123 = vsub.f32 %v52, %v107
      %v124 = vmul.f32 %v108, %v108
      %v125 = vmul.f32 %v109, %v109
      %v126 = vmul.f32 %v110, %v110
      %v127 = vmul.f32 %v111, %v111
      %v128 = vmul.f32 %v112, %v112
      %v129 = vmul.f32 %v113, %v113
      %v130 = vmul.f32 %v114, %v114
      %v131 = vmul.f32 %v115, %v115
      %v132 = vmul.f32 %v116, %v116
      %v133 = vmul.f32 %v117, %v117
      %v134 = vmul.f32 %v118, %v118
      %v135 = vmul.f32 %v119, %v119
      %v136 = vmul.f32 %v120, %v120
      %v137 = vmul.f32 %v121, %v121
      %v138 = vmul.f32 %v122, %v122
      %v139 = vmul.f32 %v123, %v123
      %140 = vadd.xlane.f32.xlu0 %v124
      %v141 = vpop.xlane.xlu0 %140
      %142 = vadd.xlane.f32.xlu0 %v125
      %v143 = vpop.xlane.xlu0 %142
      %144 = vadd.xlane.f32.xlu0 %v126
      %v145 = vpop.xlane.xlu0 %144
      %146 = vadd.xlane.f32.xlu0 %v127
      %v147 = vpop.xlane.xlu0 %146
      %148 = vadd.xlane.f32.xlu0 %v128
      %v149 = vpop.xlane.xlu0 %148
      %150 = vadd.xlane.f32.xlu0 %v129
      %v151 = vpop.xlane.xlu0 %150
      %152 = vadd.xlane.f32.xlu0 %v130
      %v153 = vpop.xlane.xlu0 %152
      %154 = vadd.xlane.f32.xlu0 %v131
      %v155 = vpop.xlane.xlu0 %154
      %156 = vadd.xlane.f32.xlu0 %v132
      %v157 = vpop.xlane.xlu0 %156
      %158 = vadd.xlane.f32.xlu0 %v133
      %v159 = vpop.xlane.xlu0 %158
      %160 = vadd.xlane.f32.xlu0 %v134
      %v161 = vpop.xlane.xlu0 %160
      %162 = vadd.xlane.f32.xlu0 %v135
      %v163 = vpop.xlane.xlu0 %162
      %164 = vadd.xlane.f32.xlu0 %v136
      %v165 = vpop.xlane.xlu0 %164
      %166 = vadd.xlane.f32.xlu0 %v137
      %v167 = vpop.xlane.xlu0 %166
      %168 = vadd.xlane.f32.xlu0 %v138
      %v169 = vpop.xlane.xlu0 %168
      %170 = vadd.xlane.f32.xlu0 %v139
      %v171 = vpop.xlane.xlu0 %170
      %v172 = vmul.f32 %v141, %v91
      %v173 = vmul.f32 %v143, %v91
      %v174 = vmul.f32 %v145, %v91
      %v175 = vmul.f32 %v147, %v91
      %v176 = vmul.f32 %v149, %v91
      %v177 = vmul.f32 %v151, %v91
      %v178 = vmul.f32 %v153, %v91
      %v179 = vmul.f32 %v155, %v91
      %v180 = vmul.f32 %v157, %v91
      %v181 = vmul.f32 %v159, %v91
      %v182 = vmul.f32 %v161, %v91
      %v183 = vmul.f32 %v163, %v91
      %v184 = vmul.f32 %v165, %v91
      %v185 = vmul.f32 %v167, %v91
      %v186 = vmul.f32 %v169, %v91
      %v187 = vmul.f32 %v171, %v91
      %v188 = vadd.f32 %v172, 1e-05
      %v189 = vadd.f32 %v173, 1e-05
      %v190 = vadd.f32 %v174, 1e-05
      %v191 = vadd.f32 %v175, 1e-05
      %v192 = vadd.f32 %v176, 1e-05
      %v193 = vadd.f32 %v177, 1e-05
      %v194 = vadd.f32 %v178, 1e-05
      %v195 = vadd.f32 %v179, 1e-05
      %v196 = vadd.f32 %v180, 1e-05
      %v197 = vadd.f32 %v181, 1e-05
      %v198 = vadd.f32 %v182, 1e-05
      %v199 = vadd.f32 %v183, 1e-05
      %v200 = vadd.f32 %v184, 1e-05
      %v201 = vadd.f32 %v185, 1e-05
      %v202 = vadd.f32 %v186, 1e-05
      %v203 = vadd.f32 %v187, 1e-05
      %v204 = vrsqrt.pop %v188
      %v205 = vmul.f32 %v204, %v188
      %v206 = vmul.f32 %v205, %v204
      %v207 = vmul.f32 0.5, %v206
      %v208 = vsub.f32 1.5, %v207
      %v209 = vmul.f32 %v204, %v208
      %vm210 = vweird.f32 %v188
      %vm211 = vweird.f32 %v204
      %vm212 = vmor %vm210, %vm211
      %v213 = vsel %vm212, %v204, %v209
      %v214 = vrsqrt.pop %v189
      %v215 = vmul.f32 %v214, %v189
      %v216 = vmul.f32 %v215, %v214
      %v217 = vmul.f32 0.5, %v216
      %v218 = vsub.f32 1.5, %v217
      %v219 = vmul.f32 %v214, %v218
      %vm220 = vweird.f32 %v189
      %vm221 = vweird.f32 %v214
      %vm222 = vmor %vm220, %vm221
      %v223 = vsel %vm222, %v214, %v219
      %v224 = vrsqrt.pop %v190
      %v225 = vmul.f32 %v224, %v190
      %v226 = vmul.f32 %v225, %v224
      %v227 = vmul.f32 0.5, %v226
      %v228 = vsub.f32 1.5, %v227
      %v229 = vmul.f32 %v224, %v228
      %vm230 = vweird.f32 %v190
      %vm231 = vweird.f32 %v224
      %vm232 = vmor %vm230, %vm231
      %v233 = vsel %vm232, %v224, %v229
      %v234 = vrsqrt.pop %v191
      %v235 = vmul.f32 %v234, %v191
      %v236 = vmul.f32 %v235, %v234
      %v237 = vmul.f32 0.5, %v236
      %v238 = vsub.f32 1.5, %v237
      %v239 = vmul.f32 %v234, %v238
      %vm240 = vweird.f32 %v191
      %vm241 = vweird.f32 %v234
      %vm242 = vmor %vm240, %vm241
      %v243 = vsel %vm242, %v234, %v239
      %v244 = vrsqrt.pop %v192
      %v245 = vmul.f32 %v244, %v192
      %v246 = vmul.f32 %v245, %v244
      %v247 = vmul.f32 0.5, %v246
      %v248 = vsub.f32 1.5, %v247
      %v249 = vmul.f32 %v244, %v248
      %vm250 = vweird.f32 %v192
      %vm251 = vweird.f32 %v244
      %vm252 = vmor %vm250, %vm251
      %v253 = vsel %vm252, %v244, %v249
      %v254 = vrsqrt.pop %v193
      %v255 = vmul.f32 %v254, %v193
      %v256 = vmul.f32 %v255, %v254
      %v257 = vmul.f32 0.5, %v256
      %v258 = vsub.f32 1.5, %v257
      %v259 = vmul.f32 %v254, %v258
      %vm260 = vweird.f32 %v193
      %vm261 = vweird.f32 %v254
      %vm262 = vmor %vm260, %vm261
      %v263 = vsel %vm262, %v254, %v259
      %v264 = vrsqrt.pop %v194
      %v265 = vmul.f32 %v264, %v194
      %v266 = vmul.f32 %v265, %v264
      %v267 = vmul.f32 0.5, %v266
      %v268 = vsub.f32 1.5, %v267
      %v269 = vmul.f32 %v264, %v268
      %vm270 = vweird.f32 %v194
      %vm271 = vweird.f32 %v264
      %vm272 = vmor %vm270, %vm271
      %v273 = vsel %vm272, %v264, %v269
      %v274 = vrsqrt.pop %v195
      %v275 = vmul.f32 %v274, %v195
      %v276 = vmul.f32 %v275, %v274
      %v277 = vmul.f32 0.5, %v276
      %v278 = vsub.f32 1.5, %v277
      %v279 = vmul.f32 %v274, %v278
      %vm280 = vweird.f32 %v195
      %vm281 = vweird.f32 %v274
      %vm282 = vmor %vm280, %vm281
      %v283 = vsel %vm282, %v274, %v279
      %v284 = vrsqrt.pop %v196
      %v285 = vmul.f32 %v284, %v196
      %v286 = vmul.f32 %v285, %v284
      %v287 = vmul.f32 0.5, %v286
      %v288 = vsub.f32 1.5, %v287
      %v289 = vmul.f32 %v284, %v288
      %vm290 = vweird.f32 %v196
      %vm291 = vweird.f32 %v284
      %vm292 = vmor %vm290, %vm291
      %v293 = vsel %vm292, %v284, %v289
      %v294 = vrsqrt.pop %v197
      %v295 = vmul.f32 %v294, %v197
      %v296 = vmul.f32 %v295, %v294
      %v297 = vmul.f32 0.5, %v296
      %v298 = vsub.f32 1.5, %v297
      %v299 = vmul.f32 %v294, %v298
      %vm300 = vweird.f32 %v197
      %vm301 = vweird.f32 %v294
      %vm302 = vmor %vm300, %vm301
      %v303 = vsel %vm302, %v294, %v299
      %v304 = vrsqrt.pop %v198
      %v305 = vmul.f32 %v304, %v198
      %v306 = vmul.f32 %v305, %v304
      %v307 = vmul.f32 0.5, %v306
      %v308 = vsub.f32 1.5, %v307
      %v309 = vmul.f32 %v304, %v308
      %vm310 = vweird.f32 %v198
      %vm311 = vweird.f32 %v304
      %vm312 = vmor %vm310, %vm311
      %v313 = vsel %vm312, %v304, %v309
      %v314 = vrsqrt.pop %v199
      %v315 = vmul.f32 %v314, %v199
      %v316 = vmul.f32 %v315, %v314
      %v317 = vmul.f32 0.5, %v316
      %v318 = vsub.f32 1.5, %v317
      %v319 = vmul.f32 %v314, %v318
      %vm320 = vweird.f32 %v199
      %vm321 = vweird.f32 %v314
      %vm322 = vmor %vm320, %vm321
      %v323 = vsel %vm322, %v314, %v319
      %v324 = vrsqrt.pop %v200
      %v325 = vmul.f32 %v324, %v200
      %v326 = vmul.f32 %v325, %v324
      %v327 = vmul.f32 0.5, %v326
      %v328 = vsub.f32 1.5, %v327
      %v329 = vmul.f32 %v324, %v328
      %vm330 = vweird.f32 %v200
      %vm331 = vweird.f32 %v324
      %vm332 = vmor %vm330, %vm331
      %v333 = vsel %vm332, %v324, %v329
      %v334 = vrsqrt.pop %v201
      %v335 = vmul.f32 %v334, %v201
      %v336 = vmul.f32 %v335, %v334
      %v337 = vmul.f32 0.5, %v336
      %v338 = vsub.f32 1.5, %v337
      %v339 = vmul.f32 %v334, %v338
      %vm340 = vweird.f32 %v201
      %vm341 = vweird.f32 %v334
      %vm342 = vmor %vm340, %vm341
      %v343 = vsel %vm342, %v334, %v339
      %v344 = vrsqrt.pop %v202
      %v345 = vmul.f32 %v344, %v202
      %v346 = vmul.f32 %v345, %v344
      %v347 = vmul.f32 0.5, %v346
      %v348 = vsub.f32 1.5, %v347
      %v349 = vmul.f32 %v344, %v348
      %vm350 = vweird.f32 %v202
      %vm351 = vweird.f32 %v344
      %vm352 = vmor %vm350, %vm351
      %v353 = vsel %vm352, %v344, %v349
      %v354 = vrsqrt.pop %v203
      %v355 = vmul.f32 %v354, %v203
      %v356 = vmul.f32 %v355, %v354
      %v357 = vmul.f32 0.5, %v356
      %v358 = vsub.f32 1.5, %v357
      %v359 = vmul.f32 %v354, %v358
      %vm360 = vweird.f32 %v203
      %vm361 = vweird.f32 %v354
      %vm362 = vmor %vm360, %vm361
      %v363 = vsel %vm362, %v354, %v359
      %v364 = vmul.f32 %v108, %v213
      %v365 = vmul.f32 %v109, %v223
      %v366 = vmul.f32 %v110, %v233
      %v367 = vmul.f32 %v111, %v243
      %v368 = vmul.f32 %v112, %v253
      %v369 = vmul.f32 %v113, %v263
      %v370 = vmul.f32 %v114, %v273
      %v371 = vmul.f32 %v115, %v283
      %v372 = vmul.f32 %v116, %v293
      %v373 = vmul.f32 %v117, %v303
      %v374 = vmul.f32 %v118, %v313
      %v375 = vmul.f32 %v119, %v323
      %v376 = vmul.f32 %v120, %v333
      %v377 = vmul.f32 %v121, %v343
      %v378 = vmul.f32 %v122, %v353
      %v379 = vmul.f32 %v123, %v363
      %v380 = vld [vmem:[%s1] sm:$0x1]
      %v382 = vperm.slane %v380, 0
      %v384 = vmul.f32 %v364, %v382
      %v385 = vmul.f32 %v365, %v382
      %v386 = vmul.f32 %v366, %v382
      %v387 = vmul.f32 %v367, %v382
      %v388 = vmul.f32 %v368, %v382
      %v389 = vmul.f32 %v369, %v382
      %v390 = vmul.f32 %v370, %v382
      %v391 = vmul.f32 %v371, %v382
      %v392 = vmul.f32 %v372, %v382
      %v393 = vmul.f32 %v373, %v382
      %v394 = vmul.f32 %v374, %v382
      %v395 = vmul.f32 %v375, %v382
      %v396 = vmul.f32 %v376, %v382
      %v397 = vmul.f32 %v377, %v382
      %v398 = vmul.f32 %v378, %v382
      %v399 = vmul.f32 %v379, %v382
      %v400 = vld [vmem:[%s2] sm:$0x1]
      %v402 = vperm.slane %v400, 0
      %v404 = vadd.f32 %v384, %v402
      %v405 = vadd.f32 %v385, %v402
      %v406 = vadd.f32 %v386, %v402
      %v407 = vadd.f32 %v387, %v402
      %v408 = vadd.f32 %v388, %v402
      %v409 = vadd.f32 %v389, %v402
      %v410 = vadd.f32 %v390, %v402
      %v411 = vadd.f32 %v391, %v402
      %v412 = vadd.f32 %v392, %v402
      %v413 = vadd.f32 %v393, %v402
      %v414 = vadd.f32 %v394, %v402
      %v415 = vadd.f32 %v395, %v402
      %v416 = vadd.f32 %v396, %v402
      %v417 = vadd.f32 %v397, %v402
      %v418 = vadd.f32 %v398, %v402
      %v419 = vadd.f32 %v399, %v402
      %v420 = vpack.c.bf16 %v404, %v404
      %v421 = vpack.c.bf16 %v405, %v405
      %v422 = vpack.c.bf16 %v406, %v406
      %v423 = vpack.c.bf16 %v407, %v407
      %v424 = vpack.c.bf16 %v408, %v408
      %v425 = vpack.c.bf16 %v409, %v409
      %v426 = vpack.c.bf16 %v410, %v410
      %v427 = vpack.c.bf16 %v411, %v411
      %v428 = vpack.c.bf16 %v412, %v412
      %v429 = vpack.c.bf16 %v413, %v413
      %v430 = vpack.c.bf16 %v414, %v414
      %v431 = vpack.c.bf16 %v415, %v415
      %v432 = vpack.c.bf16 %v416, %v416
      %v433 = vpack.c.bf16 %v417, %v417
      %v434 = vpack.c.bf16 %v418, %v418
      %v435 = vpack.c.bf16 %v419, %v419
      %436 = vst [vmem:[#allocation2] sm:$0xf] %v420
      %437 = vst [vmem:[#allocation2 + $0x4] sm:$0xf] %v421
      %438 = vst [vmem:[#allocation2 + $0x8] sm:$0xf] %v422
      %439 = vst [vmem:[#allocation2 + $0xc] sm:$0xf] %v423
      %440 = vst [vmem:[#allocation2 + $0x10] sm:$0xf] %v424
      %441 = vst [vmem:[#allocation2 + $0x14] sm:$0xf] %v425
      %442 = vst [vmem:[#allocation2 + $0x18] sm:$0xf] %v426
      %443 = vst [vmem:[#allocation2 + $0x1c] sm:$0xf] %v427
      %444 = vst [vmem:[#allocation2 + $0x20] sm:$0xf] %v428
      %445 = vst [vmem:[#allocation2 + $0x24] sm:$0xf] %v429
      %446 = vst [vmem:[#allocation2 + $0x28] sm:$0xf] %v430
      %447 = vst [vmem:[#allocation2 + $0x2c] sm:$0xf] %v431
      %448 = vst [vmem:[#allocation2 + $0x30] sm:$0xf] %v432
      %449 = vst [vmem:[#allocation2 + $0x34] sm:$0xf] %v433
      %450 = vst [vmem:[#allocation2 + $0x38] sm:$0xf] %v434
      %451 = vst [vmem:[#allocation2 + $0x3c] sm:$0xf] %v435
      %452 = vst [vmem:[#allocation3] sm:$0xff] 0.0
      %453 = vst [vmem:[#allocation3 + $0x8] sm:$0xff] 0.0
      %454 = vst [vmem:[#allocation3 + $0x10] sm:$0xff] 0.0
      %455 = vst [vmem:[#allocation3 + $0x18] sm:$0xff] 0.0
      %456 = vst [vmem:[#allocation3 + $0x20] sm:$0xff] 0.0
      %457 = vst [vmem:[#allocation3 + $0x28] sm:$0xff] 0.0
      %458 = vst [vmem:[#allocation3 + $0x30] sm:$0xff] 0.0
      %459 = vst [vmem:[#allocation3 + $0x38] sm:$0xff] 0.0
      %460 = vst [vmem:[#allocation3 + $0x40] sm:$0xff] 0.0
      %461 = vst [vmem:[#allocation3 + $0x48] sm:$0xff] 0.0
      %462 = vst [vmem:[#allocation3 + $0x50] sm:$0xff] 0.0
      %463 = vst [vmem:[#allocation3 + $0x58] sm:$0xff] 0.0
      %464 = vst [vmem:[#allocation3 + $0x60] sm:$0xff] 0.0
      %465 = vst [vmem:[#allocation3 + $0x68] sm:$0xff] 0.0
      %466 = vst [vmem:[#allocation3 + $0x70] sm:$0xff] 0.0
      %467 = vst [vmem:[#allocation3 + $0x78] sm:$0xff] 0.0
    $region41: #{basic_transformer_block.19} parent=1 // pred_fallthru
      _
    %v468 = vld [vmem:[#allocation2] sm:$0xf]
    %v469 = vld [vmem:[#allocation2 + $0x4] sm:$0xf]
    %v470 = vld [vmem:[#allocation2 + $0x8] sm:$0xf]
    %v471 = vld [vmem:[#allocation2 + $0xc] sm:$0xf]
    %v472 = vld [vmem:[#allocation2 + $0x10] sm:$0xf]
    %v473 = vld [vmem:[#allocation2 + $0x14] sm:$0xf]
    %v474 = vld [vmem:[#allocation2 + $0x18] sm:$0xf]
    %v475 = vld [vmem:[#allocation2 + $0x1c] sm:$0xf]
    %v476 = vld [vmem:[#allocation2 + $0x20] sm:$0xf]
    %v477 = vld [vmem:[#allocation2 + $0x24] sm:$0xf]
    %v478 = vld [vmem:[#allocation2 + $0x28] sm:$0xf]
    %v479 = vld [vmem:[#allocation2 + $0x2c] sm:$0xf]
    %v480 = vld [vmem:[#allocation2 + $0x30] sm:$0xf]
    %v481 = vld [vmem:[#allocation2 + $0x34] sm:$0xf]
    %v482 = vld [vmem:[#allocation2 + $0x38] sm:$0xf]
    %v483 = vld [vmem:[#allocation2 + $0x3c] sm:$0xf]
    %v484 = vld [vmem:[%s3] sm:$0xff]
    %v485 = vld [vmem:[%s3 + $0x8] sm:$0xff]
    %v486 = vld [vmem:[%s3 + $0x10] sm:$0xff]
    %v487 = vld [vmem:[%s3 + $0x18] sm:$0xff]
    %v488 = vld [vmem:[%s3 + $0x20] sm:$0xff]
    %v489 = vld [vmem:[%s3 + $0x28] sm:$0xff]
    %v490 = vld [vmem:[%s3 + $0x30] sm:$0xff]
    %v491 = vld [vmem:[%s3 + $0x38] sm:$0xff]
    %v492 = vld [vmem:[%s3 + $0x40] sm:$0xff]
    %v493 = vld [vmem:[%s3 + $0x48] sm:$0xff]
    %v494 = vld [vmem:[%s3 + $0x50] sm:$0xff]
    %v495 = vld [vmem:[%s3 + $0x58] sm:$0xff]
    %v496 = vld [vmem:[%s3 + $0x60] sm:$0xff]
    %v497 = vld [vmem:[%s3 + $0x68] sm:$0xff]
    %v498 = vld [vmem:[%s3 + $0x70] sm:$0xff]
    %v499 = vld [vmem:[%s3 + $0x78] sm:$0xff]
    %v500 = vld [vmem:[%s3 + $0x80] sm:$0xff]
    %v501 = vld [vmem:[%s3 + $0x88] sm:$0xff]
    %v502 = vld [vmem:[%s3 + $0x90] sm:$0xff]
    %v503 = vld [vmem:[%s3 + $0x98] sm:$0xff]
    %v504 = vld [vmem:[%s3 + $0xa0] sm:$0xff]
    %v505 = vld [vmem:[%s3 + $0xa8] sm:$0xff]
    %v506 = vld [vmem:[%s3 + $0xb0] sm:$0xff]
    %v507 = vld [vmem:[%s3 + $0xb8] sm:$0xff]
    %v508 = vld [vmem:[%s3 + $0xc0] sm:$0xff]
    %v509 = vld [vmem:[%s3 + $0xc8] sm:$0xff]
    %v510 = vld [vmem:[%s3 + $0xd0] sm:$0xff]
    %v511 = vld [vmem:[%s3 + $0xd8] sm:$0xff]
    %v512 = vld [vmem:[%s3 + $0xe0] sm:$0xff]
    %v513 = vld [vmem:[%s3 + $0xe8] sm:$0xff]
    %v514 = vld [vmem:[%s3 + $0xf0] sm:$0xff]
    %v515 = vld [vmem:[%s3 + $0xf8] sm:$0xff]
    %v516 = vld [vmem:[%s4] sm:$0xf]
    %v518 = vperm.slane %v516, 0
    %v519 = vperm.slane %v516, 1
    %v520 = vperm.slane %v516, 2
    %v521 = vperm.slane %v516, 3
    %v542 = vunpack.c.l.b16 %v468
    %v543 = vunpack.c.l.b16 %v469
    %v544 = vunpack.c.l.b16 %v470
    %v545 = vunpack.c.l.b16 %v471
    %v546 = vunpack.c.l.b16 %v472
    %v547 = vunpack.c.l.b16 %v473
    %v548 = vunpack.c.l.b16 %v474
    %v549 = vunpack.c.l.b16 %v475
    %v550 = vunpack.c.l.b16 %v476
    %v551 = vunpack.c.l.b16 %v477
    %v552 = vunpack.c.l.b16 %v478
    %v553 = vunpack.c.l.b16 %v479
    %v554 = vunpack.c.l.b16 %v480
    %v555 = vunpack.c.l.b16 %v481
    %v556 = vunpack.c.l.b16 %v482
    %v557 = vunpack.c.l.b16 %v483
    %v558 = vpack.c.b16 %v543, %v542
    %v559 = vpack.c.b16 %v545, %v544
    %v560 = vpack.c.b16 %v547, %v546
    %v561 = vpack.c.b16 %v549, %v548
    %v562 = vpack.c.b16 %v551, %v550
    %v563 = vpack.c.b16 %v553, %v552
    %v564 = vpack.c.b16 %v555, %v554
    %v565 = vpack.c.b16 %v557, %v556
    %v606 = vunpack.c.l.b16 %v484
    %v607 = vunpack.c.h.b16 %v484
    %v608 = vunpack.c.l.b16 %v485
    %v609 = vunpack.c.h.b16 %v485
    %v610 = vunpack.c.l.b16 %v486
    %v611 = vunpack.c.h.b16 %v486
    %v612 = vunpack.c.l.b16 %v487
    %v613 = vunpack.c.h.b16 %v487
    %v614 = vunpack.c.l.b16 %v488
    %v615 = vunpack.c.h.b16 %v488
    %v616 = vunpack.c.l.b16 %v489
    %v617 = vunpack.c.h.b16 %v489
    %v618 = vunpack.c.l.b16 %v490
    %v619 = vunpack.c.h.b16 %v490
    %v620 = vunpack.c.l.b16 %v491
    %v621 = vunpack.c.h.b16 %v491
    %v622 = vunpack.c.l.b16 %v492
    %v623 = vunpack.c.h.b16 %v492
    %v624 = vunpack.c.l.b16 %v493
    %v625 = vunpack.c.h.b16 %v493
    %v626 = vunpack.c.l.b16 %v494
    %v627 = vunpack.c.h.b16 %v494
    %v628 = vunpack.c.l.b16 %v495
    %v629 = vunpack.c.h.b16 %v495
    %v630 = vunpack.c.l.b16 %v496
    %v631 = vunpack.c.h.b16 %v496
    %v632 = vunpack.c.l.b16 %v497
    %v633 = vunpack.c.h.b16 %v497
    %v634 = vunpack.c.l.b16 %v498
    %v635 = vunpack.c.h.b16 %v498
    %v636 = vunpack.c.l.b16 %v499
    %v637 = vunpack.c.h.b16 %v499
    %v638 = vunpack.c.l.b16 %v500
    %v639 = vunpack.c.h.b16 %v500
    %v640 = vunpack.c.l.b16 %v501
    %v641 = vunpack.c.h.b16 %v501
    %v642 = vunpack.c.l.b16 %v502
    %v643 = vunpack.c.h.b16 %v502
    %v644 = vunpack.c.l.b16 %v503
    %v645 = vunpack.c.h.b16 %v503
    %v646 = vunpack.c.l.b16 %v504
    %v647 = vunpack.c.h.b16 %v504
    %v648 = vunpack.c.l.b16 %v505
    %v649 = vunpack.c.h.b16 %v505
    %v650 = vunpack.c.l.b16 %v506
    %v651 = vunpack.c.h.b16 %v506
    %v652 = vunpack.c.l.b16 %v507
    %v653 = vunpack.c.h.b16 %v507
    %v654 = vunpack.c.l.b16 %v508
    %v655 = vunpack.c.h.b16 %v508
    %v656 = vunpack.c.l.b16 %v509
    %v657 = vunpack.c.h.b16 %v509
    %v658 = vunpack.c.l.b16 %v510
    %v659 = vunpack.c.h.b16 %v510
    %v660 = vunpack.c.l.b16 %v511
    %v661 = vunpack.c.h.b16 %v511
    %v662 = vunpack.c.l.b16 %v512
    %v663 = vunpack.c.h.b16 %v512
    %v664 = vunpack.c.l.b16 %v513
    %v665 = vunpack.c.h.b16 %v513
    %v666 = vunpack.c.l.b16 %v514
    %v667 = vunpack.c.h.b16 %v514
    %v668 = vunpack.c.l.b16 %v515
    %v669 = vunpack.c.h.b16 %v515
    %v670 = vpack.c.b16 %v610, %v606
    %v671 = vpack.c.b16 %v611, %v607
    %v672 = vpack.c.b16 %v612, %v608
    %v673 = vpack.c.b16 %v613, %v609
    %v674 = vpack.c.b16 %v618, %v614
    %v675 = vpack.c.b16 %v619, %v615
    %v676 = vpack.c.b16 %v620, %v616
    %v677 = vpack.c.b16 %v621, %v617
    %v678 = vpack.c.b16 %v626, %v622
    %v679 = vpack.c.b16 %v627, %v623
    %v680 = vpack.c.b16 %v628, %v624
    %v681 = vpack.c.b16 %v629, %v625
    %v682 = vpack.c.b16 %v634, %v630
    %v683 = vpack.c.b16 %v635, %v631
    %v684 = vpack.c.b16 %v636, %v632
    %v685 = vpack.c.b16 %v637, %v633
    %v686 = vpack.c.b16 %v642, %v638
    %v687 = vpack.c.b16 %v643, %v639
    %v688 = vpack.c.b16 %v644, %v640
    %v689 = vpack.c.b16 %v645, %v641
    %v690 = vpack.c.b16 %v650, %v646
    %v691 = vpack.c.b16 %v651, %v647
    %v692 = vpack.c.b16 %v652, %v648
    %v693 = vpack.c.b16 %v653, %v649
    %v694 = vpack.c.b16 %v658, %v654
    %v695 = vpack.c.b16 %v659, %v655
    %v696 = vpack.c.b16 %v660, %v656
    %v697 = vpack.c.b16 %v661, %v657
    %v698 = vpack.c.b16 %v666, %v662
    %v699 = vpack.c.b16 %v667, %v663
    %v700 = vpack.c.b16 %v668, %v664
    %v701 = vpack.c.b16 %v669, %v665
    %734 = vmatpush.bf16.msra.mxu0 %v698
    %735 = vmatpush.bf16.msra.mxu0 %v694
    %736 = vmatpush.bf16.msra.mxu0 %v690
    %737 = vmatpush.bf16.msra.mxu0 %v686
    %738 = vmatpush.bf16.msra.mxu0 %v682
    %739 = vmatpush.bf16.msra.mxu0 %v678
    %740 = vmatpush.bf16.msra.mxu0 %v674
    %741 = vmatpush.bf16.msra.mxu0 %v670
    %742 = vmatmul.bf16.gmra.mxu0 %v558
    %v743 = vpop.f32.mrf.mxu0
    %v744 = vadd.f32 %v518, %v743
    %v745 = vpop.f32.mrf.mxu0
    %v746 = vadd.f32 %v518, %v745
    %747 = vmatmul.bf16.gmra.mxu0 %v559
    %v748 = vpop.f32.mrf.mxu0
    %v749 = vadd.f32 %v518, %v748
    %v750 = vpop.f32.mrf.mxu0
    %v751 = vadd.f32 %v518, %v750
    %752 = vmatmul.bf16.gmra.mxu0 %v560
    %v753 = vpop.f32.mrf.mxu0
    %v754 = vadd.f32 %v518, %v753
    %v755 = vpop.f32.mrf.mxu0
    %v756 = vadd.f32 %v518, %v755
    %757 = vmatmul.bf16.gmra.mxu0 %v561
    %v758 = vpop.f32.mrf.mxu0
    %v759 = vadd.f32 %v518, %v758
    %v760 = vpop.f32.mrf.mxu0
    %v761 = vadd.f32 %v518, %v760
    %762 = vmatmul.bf16.gmra.mxu0 %v562
    %v763 = vpop.f32.mrf.mxu0
    %v764 = vadd.f32 %v518, %v763
    %v765 = vpop.f32.mrf.mxu0
    %v766 = vadd.f32 %v518, %v765
    %767 = vmatmul.bf16.gmra.mxu0 %v563
    %v768 = vpop.f32.mrf.mxu0
    %v769 = vadd.f32 %v518, %v768
    %v770 = vpop.f32.mrf.mxu0
    %v771 = vadd.f32 %v518, %v770
    %772 = vmatmul.bf16.gmra.mxu0 %v564
    %v773 = vpop.f32.mrf.mxu0
    %v774 = vadd.f32 %v518, %v773
    %v775 = vpop.f32.mrf.mxu0
    %v776 = vadd.f32 %v518, %v775
    %777 = vmatmul.bf16.gmra.mxu0 %v565
    %v778 = vpop.f32.mrf.mxu0
    %v779 = vadd.f32 %v518, %v778
    %v780 = vpop.f32.mrf.mxu0
    %v781 = vadd.f32 %v518, %v780
    %782 = vdwg.mxu0
    %783 = vmatpush.bf16.msra.mxu0 %v699
    %784 = vmatpush.bf16.msra.mxu0 %v695
    %785 = vmatpush.bf16.msra.mxu0 %v691
    %786 = vmatpush.bf16.msra.mxu0 %v687
    %787 = vmatpush.bf16.msra.mxu0 %v683
    %788 = vmatpush.bf16.msra.mxu0 %v679
    %789 = vmatpush.bf16.msra.mxu0 %v675
    %790 = vmatpush.bf16.msra.mxu0 %v671
    %791 = vmatmul.bf16.gmra.mxu0 %v558
    %v792 = vpop.f32.mrf.mxu0
    %v793 = vadd.f32 %v519, %v792
    %v794 = vpop.f32.mrf.mxu0
    %v795 = vadd.f32 %v519, %v794
    %796 = vmatmul.bf16.gmra.mxu0 %v559
    %v797 = vpop.f32.mrf.mxu0
    %v798 = vadd.f32 %v519, %v797
    %v799 = vpop.f32.mrf.mxu0
    %v800 = vadd.f32 %v519, %v799
    %801 = vmatmul.bf16.gmra.mxu0 %v560
    %v802 = vpop.f32.mrf.mxu0
    %v803 = vadd.f32 %v519, %v802
    %v804 = vpop.f32.mrf.mxu0
    %v805 = vadd.f32 %v519, %v804
    %806 = vmatmul.bf16.gmra.mxu0 %v561
    %v807 = vpop.f32.mrf.mxu0
    %v808 = vadd.f32 %v519, %v807
    %v809 = vpop.f32.mrf.mxu0
    %v810 = vadd.f32 %v519, %v809
    %811 = vmatmul.bf16.gmra.mxu0 %v562
    %v812 = vpop.f32.mrf.mxu0
    %v813 = vadd.f32 %v519, %v812
    %v814 = vpop.f32.mrf.mxu0
    %v815 = vadd.f32 %v519, %v814
    %816 = vmatmul.bf16.gmra.mxu0 %v563
    %v817 = vpop.f32.mrf.mxu0
    %v818 = vadd.f32 %v519, %v817
    %v819 = vpop.f32.mrf.mxu0
    %v820 = vadd.f32 %v519, %v819
    %821 = vmatmul.bf16.gmra.mxu0 %v564
    %v822 = vpop.f32.mrf.mxu0
    %v823 = vadd.f32 %v519, %v822
    %v824 = vpop.f32.mrf.mxu0
    %v825 = vadd.f32 %v519, %v824
    %826 = vmatmul.bf16.gmra.mxu0 %v565
    %v827 = vpop.f32.mrf.mxu0
    %v828 = vadd.f32 %v519, %v827
    %v829 = vpop.f32.mrf.mxu0
    %v830 = vadd.f32 %v519, %v829
    %831 = vdwg.mxu0
    %832 = vmatpush.bf16.msra.mxu0 %v700
    %833 = vmatpush.bf16.msra.mxu0 %v696
    %834 = vmatpush.bf16.msra.mxu0 %v692
    %835 = vmatpush.bf16.msra.mxu0 %v688
    %836 = vmatpush.bf16.msra.mxu0 %v684
    %837 = vmatpush.bf16.msra.mxu0 %v680
    %838 = vmatpush.bf16.msra.mxu0 %v676
    %839 = vmatpush.bf16.msra.mxu0 %v672
    %840 = vmatmul.bf16.gmra.mxu0 %v558
    %v841 = vpop.f32.mrf.mxu0
    %v842 = vadd.f32 %v520, %v841
    %v843 = vpop.f32.mrf.mxu0
    %v844 = vadd.f32 %v520, %v843
    %845 = vmatmul.bf16.gmra.mxu0 %v559
    %v846 = vpop.f32.mrf.mxu0
    %v847 = vadd.f32 %v520, %v846
    %v848 = vpop.f32.mrf.mxu0
    %v849 = vadd.f32 %v520, %v848
    %850 = vmatmul.bf16.gmra.mxu0 %v560
    %v851 = vpop.f32.mrf.mxu0
    %v852 = vadd.f32 %v520, %v851
    %v853 = vpop.f32.mrf.mxu0
    %v854 = vadd.f32 %v520, %v853
    %855 = vmatmul.bf16.gmra.mxu0 %v561
    %v856 = vpop.f32.mrf.mxu0
    %v857 = vadd.f32 %v520, %v856
    %v858 = vpop.f32.mrf.mxu0
    %v859 = vadd.f32 %v520, %v858
    %860 = vmatmul.bf16.gmra.mxu0 %v562
    %v861 = vpop.f32.mrf.mxu0
    %v862 = vadd.f32 %v520, %v861
    %v863 = vpop.f32.mrf.mxu0
    %v864 = vadd.f32 %v520, %v863
    %865 = vmatmul.bf16.gmra.mxu0 %v563
    %v866 = vpop.f32.mrf.mxu0
    %v867 = vadd.f32 %v520, %v866
    %v868 = vpop.f32.mrf.mxu0
    %v869 = vadd.f32 %v520, %v868
    %870 = vmatmul.bf16.gmra.mxu0 %v564
    %v871 = vpop.f32.mrf.mxu0
    %v872 = vadd.f32 %v520, %v871
    %v873 = vpop.f32.mrf.mxu0
    %v874 = vadd.f32 %v520, %v873
    %875 = vmatmul.bf16.gmra.mxu0 %v565
    %v876 = vpop.f32.mrf.mxu0
    %v877 = vadd.f32 %v520, %v876
    %v878 = vpop.f32.mrf.mxu0
    %v879 = vadd.f32 %v520, %v878
    %880 = vdwg.mxu0
    %881 = vmatpush.bf16.msra.mxu0 %v701
    %882 = vmatpush.bf16.msra.mxu0 %v697
    %883 = vmatpush.bf16.msra.mxu0 %v693
    %884 = vmatpush.bf16.msra.mxu0 %v689
    %885 = vmatpush.bf16.msra.mxu0 %v685
    %886 = vmatpush.bf16.msra.mxu0 %v681
    %887 = vmatpush.bf16.msra.mxu0 %v677
    %888 = vmatpush.bf16.msra.mxu0 %v673
    %889 = vmatmul.bf16.gmra.mxu0 %v558
    %v890 = vpop.f32.mrf.mxu0
    %v891 = vadd.f32 %v521, %v890
    %v892 = vpop.f32.mrf.mxu0
    %v893 = vadd.f32 %v521, %v892
    %894 = vmatmul.bf16.gmra.mxu0 %v559
    %v895 = vpop.f32.mrf.mxu0
    %v896 = vadd.f32 %v521, %v895
    %v897 = vpop.f32.mrf.mxu0
    %v898 = vadd.f32 %v521, %v897
    %899 = vmatmul.bf16.gmra.mxu0 %v560
    %v900 = vpop.f32.mrf.mxu0
    %v901 = vadd.f32 %v521, %v900
    %v902 = vpop.f32.mrf.mxu0
    %v903 = vadd.f32 %v521, %v902
    %904 = vmatmul.bf16.gmra.mxu0 %v561
    %v905 = vpop.f32.mrf.mxu0
    %v906 = vadd.f32 %v521, %v905
    %v907 = vpop.f32.mrf.mxu0
    %v908 = vadd.f32 %v521, %v907
    %909 = vmatmul.bf16.gmra.mxu0 %v562
    %v910 = vpop.f32.mrf.mxu0
    %v911 = vadd.f32 %v521, %v910
    %v912 = vpop.f32.mrf.mxu0
    %v913 = vadd.f32 %v521, %v912
    %914 = vmatmul.bf16.gmra.mxu0 %v563
    %v915 = vpop.f32.mrf.mxu0
    %v916 = vadd.f32 %v521, %v915
    %v917 = vpop.f32.mrf.mxu0
    %v918 = vadd.f32 %v521, %v917
    %919 = vmatmul.bf16.gmra.mxu0 %v564
    %v920 = vpop.f32.mrf.mxu0
    %v921 = vadd.f32 %v521, %v920
    %v922 = vpop.f32.mrf.mxu0
    %v923 = vadd.f32 %v521, %v922
    %924 = vmatmul.bf16.gmra.mxu0 %v565
    %v925 = vpop.f32.mrf.mxu0
    %v926 = vadd.f32 %v521, %v925
    %v927 = vpop.f32.mrf.mxu0
    %v928 = vadd.f32 %v521, %v927
    %929 = vdwg.mxu0
    %v930 = vld [vmem:[%s5] sm:$0xff]
    %v931 = vld [vmem:[%s5 + $0x8] sm:$0xff]
    %v932 = vld [vmem:[%s5 + $0x10] sm:$0xff]
    %v933 = vld [vmem:[%s5 + $0x18] sm:$0xff]
    %v934 = vld [vmem:[%s5 + $0x20] sm:$0xff]
    %v935 = vld [vmem:[%s5 + $0x28] sm:$0xff]
    %v936 = vld [vmem:[%s5 + $0x30] sm:$0xff]
    %v937 = vld [vmem:[%s5 + $0x38] sm:$0xff]
    %v938 = vld [vmem:[%s5 + $0x40] sm:$0xff]
    %v939 = vld [vmem:[%s5 + $0x48] sm:$0xff]
    %v940 = vld [vmem:[%s5 + $0x50] sm:$0xff]
    %v941 = vld [vmem:[%s5 + $0x58] sm:$0xff]
    %v942 = vld [vmem:[%s5 + $0x60] sm:$0xff]
    %v943 = vld [vmem:[%s5 + $0x68] sm:$0xff]
    %v944 = vld [vmem:[%s5 + $0x70] sm:$0xff]
    %v945 = vld [vmem:[%s5 + $0x78] sm:$0xff]
    %v946 = vld [vmem:[%s5 + $0x80] sm:$0xff]
    %v947 = vld [vmem:[%s5 + $0x88] sm:$0xff]
    %v948 = vld [vmem:[%s5 + $0x90] sm:$0xff]
    %v949 = vld [vmem:[%s5 + $0x98] sm:$0xff]
    %v950 = vld [vmem:[%s5 + $0xa0] sm:$0xff]
    %v951 = vld [vmem:[%s5 + $0xa8] sm:$0xff]
    %v952 = vld [vmem:[%s5 + $0xb0] sm:$0xff]
    %v953 = vld [vmem:[%s5 + $0xb8] sm:$0xff]
    %v954 = vld [vmem:[%s5 + $0xc0] sm:$0xff]
    %v955 = vld [vmem:[%s5 + $0xc8] sm:$0xff]
    %v956 = vld [vmem:[%s5 + $0xd0] sm:$0xff]
    %v957 = vld [vmem:[%s5 + $0xd8] sm:$0xff]
    %v958 = vld [vmem:[%s5 + $0xe0] sm:$0xff]
    %v959 = vld [vmem:[%s5 + $0xe8] sm:$0xff]
    %v960 = vld [vmem:[%s5 + $0xf0] sm:$0xff]
    %v961 = vld [vmem:[%s5 + $0xf8] sm:$0xff]
    %v962 = vld [vmem:[%s6] sm:$0xf]
    %v964 = vperm.slane %v962, 0
    %v965 = vperm.slane %v962, 1
    %v966 = vperm.slane %v962, 2
    %v967 = vperm.slane %v962, 3
    %v1004 = vunpack.c.l.b16 %v930
    %v1005 = vunpack.c.h.b16 %v930
    %v1006 = vunpack.c.l.b16 %v931
    %v1007 = vunpack.c.h.b16 %v931
    %v1008 = vunpack.c.l.b16 %v932
    %v1009 = vunpack.c.h.b16 %v932
    %v1010 = vunpack.c.l.b16 %v933
    %v1011 = vunpack.c.h.b16 %v933
    %v1012 = vunpack.c.l.b16 %v934
    %v1013 = vunpack.c.h.b16 %v934
    %v1014 = vunpack.c.l.b16 %v935
    %v1015 = vunpack.c.h.b16 %v935
    %v1016 = vunpack.c.l.b16 %v936
    %v1017 = vunpack.c.h.b16 %v936
    %v1018 = vunpack.c.l.b16 %v937
    %v1019 = vunpack.c.h.b16 %v937
    %v1020 = vunpack.c.l.b16 %v938
    %v1021 = vunpack.c.h.b16 %v938
    %v1022 = vunpack.c.l.b16 %v939
    %v1023 = vunpack.c.h.b16 %v939
    %v1024 = vunpack.c.l.b16 %v940
    %v1025 = vunpack.c.h.b16 %v940
    %v1026 = vunpack.c.l.b16 %v941
    %v1027 = vunpack.c.h.b16 %v941
    %v1028 = vunpack.c.l.b16 %v942
    %v1029 = vunpack.c.h.b16 %v942
    %v1030 = vunpack.c.l.b16 %v943
    %v1031 = vunpack.c.h.b16 %v943
    %v1032 = vunpack.c.l.b16 %v944
    %v1033 = vunpack.c.h.b16 %v944
    %v1034 = vunpack.c.l.b16 %v945
    %v1035 = vunpack.c.h.b16 %v945
    %v1036 = vunpack.c.l.b16 %v946
    %v1037 = vunpack.c.h.b16 %v946
    %v1038 = vunpack.c.l.b16 %v947
    %v1039 = vunpack.c.h.b16 %v947
    %v1040 = vunpack.c.l.b16 %v948
    %v1041 = vunpack.c.h.b16 %v948
    %v1042 = vunpack.c.l.b16 %v949
    %v1043 = vunpack.c.h.b16 %v949
    %v1044 = vunpack.c.l.b16 %v950
    %v1045 = vunpack.c.h.b16 %v950
    %v1046 = vunpack.c.l.b16 %v951
    %v1047 = vunpack.c.h.b16 %v951
    %v1048 = vunpack.c.l.b16 %v952
    %v1049 = vunpack.c.h.b16 %v952
    %v1050 = vunpack.c.l.b16 %v953
    %v1051 = vunpack.c.h.b16 %v953
    %v1052 = vunpack.c.l.b16 %v954
    %v1053 = vunpack.c.h.b16 %v954
    %v1054 = vunpack.c.l.b16 %v955
    %v1055 = vunpack.c.h.b16 %v955
    %v1056 = vunpack.c.l.b16 %v956
    %v1057 = vunpack.c.h.b16 %v956
    %v1058 = vunpack.c.l.b16 %v957
    %v1059 = vunpack.c.h.b16 %v957
    %v1060 = vunpack.c.l.b16 %v958
    %v1061 = vunpack.c.h.b16 %v958
    %v1062 = vunpack.c.l.b16 %v959
    %v1063 = vunpack.c.h.b16 %v959
    %v1064 = vunpack.c.l.b16 %v960
    %v1065 = vunpack.c.h.b16 %v960
    %v1066 = vunpack.c.l.b16 %v961
    %v1067 = vunpack.c.h.b16 %v961
    %v1068 = vpack.c.b16 %v1008, %v1004
    %v1069 = vpack.c.b16 %v1009, %v1005
    %v1070 = vpack.c.b16 %v1010, %v1006
    %v1071 = vpack.c.b16 %v1011, %v1007
    %v1072 = vpack.c.b16 %v1016, %v1012
    %v1073 = vpack.c.b16 %v1017, %v1013
    %v1074 = vpack.c.b16 %v1018, %v1014
    %v1075 = vpack.c.b16 %v1019, %v1015
    %v1076 = vpack.c.b16 %v1024, %v1020
    %v1077 = vpack.c.b16 %v1025, %v1021
    %v1078 = vpack.c.b16 %v1026, %v1022
    %v1079 = vpack.c.b16 %v1027, %v1023
    %v1080 = vpack.c.b16 %v1032, %v1028
    %v1081 = vpack.c.b16 %v1033, %v1029
    %v1082 = vpack.c.b16 %v1034, %v1030
    %v1083 = vpack.c.b16 %v1035, %v1031
    %v1084 = vpack.c.b16 %v1040, %v1036
    %v1085 = vpack.c.b16 %v1041, %v1037
    %v1086 = vpack.c.b16 %v1042, %v1038
    %v1087 = vpack.c.b16 %v1043, %v1039
    %v1088 = vpack.c.b16 %v1048, %v1044
    %v1089 = vpack.c.b16 %v1049, %v1045
    %v1090 = vpack.c.b16 %v1050, %v1046
    %v1091 = vpack.c.b16 %v1051, %v1047
    %v1092 = vpack.c.b16 %v1056, %v1052
    %v1093 = vpack.c.b16 %v1057, %v1053
    %v1094 = vpack.c.b16 %v1058, %v1054
    %v1095 = vpack.c.b16 %v1059, %v1055
    %v1096 = vpack.c.b16 %v1064, %v1060
    %v1097 = vpack.c.b16 %v1065, %v1061
    %v1098 = vpack.c.b16 %v1066, %v1062
    %v1099 = vpack.c.b16 %v1067, %v1063
    %1132 = vmatpush.bf16.msra.mxu0 %v1096
    %1133 = vmatpush.bf16.msra.mxu0 %v1092
    %1134 = vmatpush.bf16.msra.mxu0 %v1088
    %1135 = vmatpush.bf16.msra.mxu0 %v1084
    %1136 = vmatpush.bf16.msra.mxu0 %v1080
    %1137 = vmatpush.bf16.msra.mxu0 %v1076
    %1138 = vmatpush.bf16.msra.mxu0 %v1072
    %1139 = vmatpush.bf16.msra.mxu0 %v1068
    %1140 = vmatmul.bf16.gmra.mxu0 %v558
    %v1141 = vpop.f32.mrf.mxu0
    %v1142 = vadd.f32 %v964, %v1141
    %v1143 = vpop.f32.mrf.mxu0
    %v1144 = vadd.f32 %v964, %v1143
    %1145 = vmatmul.bf16.gmra.mxu0 %v559
    %v1146 = vpop.f32.mrf.mxu0
    %v1147 = vadd.f32 %v964, %v1146
    %v1148 = vpop.f32.mrf.mxu0
    %v1149 = vadd.f32 %v964, %v1148
    %1150 = vmatmul.bf16.gmra.mxu0 %v560
    %v1151 = vpop.f32.mrf.mxu0
    %v1152 = vadd.f32 %v964, %v1151
    %v1153 = vpop.f32.mrf.mxu0
    %v1154 = vadd.f32 %v964, %v1153
    %1155 = vmatmul.bf16.gmra.mxu0 %v561
    %v1156 = vpop.f32.mrf.mxu0
    %v1157 = vadd.f32 %v964, %v1156
    %v1158 = vpop.f32.mrf.mxu0
    %v1159 = vadd.f32 %v964, %v1158
    %1160 = vmatmul.bf16.gmra.mxu0 %v562
    %v1161 = vpop.f32.mrf.mxu0
    %v1162 = vadd.f32 %v964, %v1161
    %v1163 = vpop.f32.mrf.mxu0
    %v1164 = vadd.f32 %v964, %v1163
    %1165 = vmatmul.bf16.gmra.mxu0 %v563
    %v1166 = vpop.f32.mrf.mxu0
    %v1167 = vadd.f32 %v964, %v1166
    %v1168 = vpop.f32.mrf.mxu0
    %v1169 = vadd.f32 %v964, %v1168
    %1170 = vmatmul.bf16.gmra.mxu0 %v564
    %v1171 = vpop.f32.mrf.mxu0
    %v1172 = vadd.f32 %v964, %v1171
    %v1173 = vpop.f32.mrf.mxu0
    %v1174 = vadd.f32 %v964, %v1173
    %1175 = vmatmul.bf16.gmra.mxu0 %v565
    %v1176 = vpop.f32.mrf.mxu0
    %v1177 = vadd.f32 %v964, %v1176
    %v1178 = vpop.f32.mrf.mxu0
    %v1179 = vadd.f32 %v964, %v1178
    %1180 = vdwg.mxu0
    %1181 = vmatpush.bf16.msra.mxu0 %v1097
    %1182 = vmatpush.bf16.msra.mxu0 %v1093
    %1183 = vmatpush.bf16.msra.mxu0 %v1089
    %1184 = vmatpush.bf16.msra.mxu0 %v1085
    %1185 = vmatpush.bf16.msra.mxu0 %v1081
    %1186 = vmatpush.bf16.msra.mxu0 %v1077
    %1187 = vmatpush.bf16.msra.mxu0 %v1073
    %1188 = vmatpush.bf16.msra.mxu0 %v1069
    %1189 = vmatmul.bf16.gmra.mxu0 %v558
    %v1190 = vpop.f32.mrf.mxu0
    %v1191 = vadd.f32 %v965, %v1190
    %v1192 = vpop.f32.mrf.mxu0
    %v1193 = vadd.f32 %v965, %v1192
    %1194 = vmatmul.bf16.gmra.mxu0 %v559
    %v1195 = vpop.f32.mrf.mxu0
    %v1196 = vadd.f32 %v965, %v1195
    %v1197 = vpop.f32.mrf.mxu0
    %v1198 = vadd.f32 %v965, %v1197
    %1199 = vmatmul.bf16.gmra.mxu0 %v560
    %v1200 = vpop.f32.mrf.mxu0
    %v1201 = vadd.f32 %v965, %v1200
    %v1202 = vpop.f32.mrf.mxu0
    %v1203 = vadd.f32 %v965, %v1202
    %1204 = vmatmul.bf16.gmra.mxu0 %v561
    %v1205 = vpop.f32.mrf.mxu0
    %v1206 = vadd.f32 %v965, %v1205
    %v1207 = vpop.f32.mrf.mxu0
    %v1208 = vadd.f32 %v965, %v1207
    %1209 = vmatmul.bf16.gmra.mxu0 %v562
    %v1210 = vpop.f32.mrf.mxu0
    %v1211 = vadd.f32 %v965, %v1210
    %v1212 = vpop.f32.mrf.mxu0
    %v1213 = vadd.f32 %v965, %v1212
    %1214 = vmatmul.bf16.gmra.mxu0 %v563
    %v1215 = vpop.f32.mrf.mxu0
    %v1216 = vadd.f32 %v965, %v1215
    %v1217 = vpop.f32.mrf.mxu0
    %v1218 = vadd.f32 %v965, %v1217
    %1219 = vmatmul.bf16.gmra.mxu0 %v564
    %v1220 = vpop.f32.mrf.mxu0
    %v1221 = vadd.f32 %v965, %v1220
    %v1222 = vpop.f32.mrf.mxu0
    %v1223 = vadd.f32 %v965, %v1222
    %1224 = vmatmul.bf16.gmra.mxu0 %v565
    %v1225 = vpop.f32.mrf.mxu0
    %v1226 = vadd.f32 %v965, %v1225
    %v1227 = vpop.f32.mrf.mxu0
    %v1228 = vadd.f32 %v965, %v1227
    %1229 = vdwg.mxu0
    %1230 = vmatpush.bf16.msra.mxu0 %v1098
    %1231 = vmatpush.bf16.msra.mxu0 %v1094
    %1232 = vmatpush.bf16.msra.mxu0 %v1090
    %1233 = vmatpush.bf16.msra.mxu0 %v1086
    %1234 = vmatpush.bf16.msra.mxu0 %v1082
    %1235 = vmatpush.bf16.msra.mxu0 %v1078
    %1236 = vmatpush.bf16.msra.mxu0 %v1074
    %1237 = vmatpush.bf16.msra.mxu0 %v1070
    %1238 = vmatmul.bf16.gmra.mxu0 %v558
    %v1239 = vpop.f32.mrf.mxu0
    %v1240 = vadd.f32 %v966, %v1239
    %v1241 = vpop.f32.mrf.mxu0
    %v1242 = vadd.f32 %v966, %v1241
    %1243 = vmatmul.bf16.gmra.mxu0 %v559
    %v1244 = vpop.f32.mrf.mxu0
    %v1245 = vadd.f32 %v966, %v1244
    %v1246 = vpop.f32.mrf.mxu0
    %v1247 = vadd.f32 %v966, %v1246
    %1248 = vmatmul.bf16.gmra.mxu0 %v560
    %v1249 = vpop.f32.mrf.mxu0
    %v1250 = vadd.f32 %v966, %v1249
    %v1251 = vpop.f32.mrf.mxu0
    %v1252 = vadd.f32 %v966, %v1251
    %1253 = vmatmul.bf16.gmra.mxu0 %v561
    %v1254 = vpop.f32.mrf.mxu0
    %v1255 = vadd.f32 %v966, %v1254
    %v1256 = vpop.f32.mrf.mxu0
    %v1257 = vadd.f32 %v966, %v1256
    %1258 = vmatmul.bf16.gmra.mxu0 %v562
    %v1259 = vpop.f32.mrf.mxu0
    %v1260 = vadd.f32 %v966, %v1259
    %v1261 = vpop.f32.mrf.mxu0
    %v1262 = vadd.f32 %v966, %v1261
    %1263 = vmatmul.bf16.gmra.mxu0 %v563
    %v1264 = vpop.f32.mrf.mxu0
    %v1265 = vadd.f32 %v966, %v1264
    %v1266 = vpop.f32.mrf.mxu0
    %v1267 = vadd.f32 %v966, %v1266
    %1268 = vmatmul.bf16.gmra.mxu0 %v564
    %v1269 = vpop.f32.mrf.mxu0
    %v1270 = vadd.f32 %v966, %v1269
    %v1271 = vpop.f32.mrf.mxu0
    %v1272 = vadd.f32 %v966, %v1271
    %1273 = vmatmul.bf16.gmra.mxu0 %v565
    %v1274 = vpop.f32.mrf.mxu0
    %v1275 = vadd.f32 %v966, %v1274
    %v1276 = vpop.f32.mrf.mxu0
    %v1277 = vadd.f32 %v966, %v1276
    %1278 = vdwg.mxu0
    %1279 = vmatpush.bf16.msra.mxu0 %v1099
    %1280 = vmatpush.bf16.msra.mxu0 %v1095
    %1281 = vmatpush.bf16.msra.mxu0 %v1091
    %1282 = vmatpush.bf16.msra.mxu0 %v1087
    %1283 = vmatpush.bf16.msra.mxu0 %v1083
    %1284 = vmatpush.bf16.msra.mxu0 %v1079
    %1285 = vmatpush.bf16.msra.mxu0 %v1075
    %1286 = vmatpush.bf16.msra.mxu0 %v1071
    %1287 = vmatmul.bf16.gmra.mxu0 %v558
    %v1288 = vpop.f32.mrf.mxu0
    %v1289 = vadd.f32 %v967, %v1288
    %v1290 = vpop.f32.mrf.mxu0
    %v1291 = vadd.f32 %v967, %v1290
    %1292 = vmatmul.bf16.gmra.mxu0 %v559
    %v1293 = vpop.f32.mrf.mxu0
    %v1294 = vadd.f32 %v967, %v1293
    %v1295 = vpop.f32.mrf.mxu0
    %v1296 = vadd.f32 %v967, %v1295
    %1297 = vmatmul.bf16.gmra.mxu0 %v560
    %v1298 = vpop.f32.mrf.mxu0
    %v1299 = vadd.f32 %v967, %v1298
    %v1300 = vpop.f32.mrf.mxu0
    %v1301 = vadd.f32 %v967, %v1300
    %1302 = vmatmul.bf16.gmra.mxu0 %v561
    %v1303 = vpop.f32.mrf.mxu0
    %v1304 = vadd.f32 %v967, %v1303
    %v1305 = vpop.f32.mrf.mxu0
    %v1306 = vadd.f32 %v967, %v1305
    %1307 = vmatmul.bf16.gmra.mxu0 %v562
    %v1308 = vpop.f32.mrf.mxu0
    %v1309 = vadd.f32 %v967, %v1308
    %v1310 = vpop.f32.mrf.mxu0
    %v1311 = vadd.f32 %v967, %v1310
    %1312 = vmatmul.bf16.gmra.mxu0 %v563
    %v1313 = vpop.f32.mrf.mxu0
    %v1314 = vadd.f32 %v967, %v1313
    %v1315 = vpop.f32.mrf.mxu0
    %v1316 = vadd.f32 %v967, %v1315
    %1317 = vmatmul.bf16.gmra.mxu0 %v564
    %v1318 = vpop.f32.mrf.mxu0
    %v1319 = vadd.f32 %v967, %v1318
    %v1320 = vpop.f32.mrf.mxu0
    %v1321 = vadd.f32 %v967, %v1320
    %1322 = vmatmul.bf16.gmra.mxu0 %v565
    %v1323 = vpop.f32.mrf.mxu0
    %v1324 = vadd.f32 %v967, %v1323
    %v1325 = vpop.f32.mrf.mxu0
    %v1326 = vadd.f32 %v967, %v1325
    %1327 = vdwg.mxu0
    %v1328 = vmul.f32 %v1142, 0.5
    %v1329 = vmul.f32 %v1191, 0.5
    %v1330 = vmul.f32 %v1240, 0.5
    %v1331 = vmul.f32 %v1289, 0.5
    %v1332 = vmul.f32 %v1144, 0.5
    %v1333 = vmul.f32 %v1193, 0.5
    %v1334 = vmul.f32 %v1242, 0.5
    %v1335 = vmul.f32 %v1291, 0.5
    %v1336 = vmul.f32 %v1147, 0.5
    %v1337 = vmul.f32 %v1196, 0.5
    %v1338 = vmul.f32 %v1245, 0.5
    %v1339 = vmul.f32 %v1294, 0.5
    %v1340 = vmul.f32 %v1149, 0.5
    %v1341 = vmul.f32 %v1198, 0.5
    %v1342 = vmul.f32 %v1247, 0.5
    %v1343 = vmul.f32 %v1296, 0.5
    %v1344 = vmul.f32 %v1152, 0.5
    %v1345 = vmul.f32 %v1201, 0.5
    %v1346 = vmul.f32 %v1250, 0.5
    %v1347 = vmul.f32 %v1299, 0.5
    %v1348 = vmul.f32 %v1154, 0.5
    %v1349 = vmul.f32 %v1203, 0.5
    %v1350 = vmul.f32 %v1252, 0.5
    %v1351 = vmul.f32 %v1301, 0.5
    %v1352 = vmul.f32 %v1157, 0.5
    %v1353 = vmul.f32 %v1206, 0.5
    %v1354 = vmul.f32 %v1255, 0.5
    %v1355 = vmul.f32 %v1304, 0.5
    %v1356 = vmul.f32 %v1159, 0.5
    %v1357 = vmul.f32 %v1208, 0.5
    %v1358 = vmul.f32 %v1257, 0.5
    %v1359 = vmul.f32 %v1306, 0.5
    %v1360 = vmul.f32 %v1162, 0.5
    %v1361 = vmul.f32 %v1211, 0.5
    %v1362 = vmul.f32 %v1260, 0.5
    %v1363 = vmul.f32 %v1309, 0.5
    %v1364 = vmul.f32 %v1164, 0.5
    %v1365 = vmul.f32 %v1213, 0.5
    %v1366 = vmul.f32 %v1262, 0.5
    %v1367 = vmul.f32 %v1311, 0.5
    %v1368 = vmul.f32 %v1167, 0.5
    %v1369 = vmul.f32 %v1216, 0.5
    %v1370 = vmul.f32 %v1265, 0.5
    %v1371 = vmul.f32 %v1314, 0.5
    %v1372 = vmul.f32 %v1169, 0.5
    %v1373 = vmul.f32 %v1218, 0.5
    %v1374 = vmul.f32 %v1267, 0.5
    %v1375 = vmul.f32 %v1316, 0.5
    %v1376 = vmul.f32 %v1172, 0.5
    %v1377 = vmul.f32 %v1221, 0.5
    %v1378 = vmul.f32 %v1270, 0.5
    %v1379 = vmul.f32 %v1319, 0.5
    %v1380 = vmul.f32 %v1174, 0.5
    %v1381 = vmul.f32 %v1223, 0.5
    %v1382 = vmul.f32 %v1272, 0.5
    %v1383 = vmul.f32 %v1321, 0.5
    %v1384 = vmul.f32 %v1177, 0.5
    %v1385 = vmul.f32 %v1226, 0.5
    %v1386 = vmul.f32 %v1275, 0.5
    %v1387 = vmul.f32 %v1324, 0.5
    %v1388 = vmul.f32 %v1179, 0.5
    %v1389 = vmul.f32 %v1228, 0.5
    %v1390 = vmul.f32 %v1277, 0.5
    %v1391 = vmul.f32 %v1326, 0.5
    %v1392 = vmul.f32 %v1142, 0.044715
    %v1393 = vmul.f32 %v1191, 0.044715
    %v1394 = vmul.f32 %v1240, 0.044715
    %v1395 = vmul.f32 %v1289, 0.044715
    %v1396 = vmul.f32 %v1144, 0.044715
    %v1397 = vmul.f32 %v1193, 0.044715
    %v1398 = vmul.f32 %v1242, 0.044715
    %v1399 = vmul.f32 %v1291, 0.044715
    %v1400 = vmul.f32 %v1147, 0.044715
    %v1401 = vmul.f32 %v1196, 0.044715
    %v1402 = vmul.f32 %v1245, 0.044715
    %v1403 = vmul.f32 %v1294, 0.044715
    %v1404 = vmul.f32 %v1149, 0.044715
    %v1405 = vmul.f32 %v1198, 0.044715
    %v1406 = vmul.f32 %v1247, 0.044715
    %v1407 = vmul.f32 %v1296, 0.044715
    %v1408 = vmul.f32 %v1152, 0.044715
    %v1409 = vmul.f32 %v1201, 0.044715
    %v1410 = vmul.f32 %v1250, 0.044715
    %v1411 = vmul.f32 %v1299, 0.044715
    %v1412 = vmul.f32 %v1154, 0.044715
    %v1413 = vmul.f32 %v1203, 0.044715
    %v1414 = vmul.f32 %v1252, 0.044715
    %v1415 = vmul.f32 %v1301, 0.044715
    %v1416 = vmul.f32 %v1157, 0.044715
    %v1417 = vmul.f32 %v1206, 0.044715
    %v1418 = vmul.f32 %v1255, 0.044715
    %v1419 = vmul.f32 %v1304, 0.044715
    %v1420 = vmul.f32 %v1159, 0.044715
    %v1421 = vmul.f32 %v1208, 0.044715
    %v1422 = vmul.f32 %v1257, 0.044715
    %v1423 = vmul.f32 %v1306, 0.044715
    %v1424 = vmul.f32 %v1162, 0.044715
    %v1425 = vmul.f32 %v1211, 0.044715
    %v1426 = vmul.f32 %v1260, 0.044715
    %v1427 = vmul.f32 %v1309, 0.044715
    %v1428 = vmul.f32 %v1164, 0.044715
    %v1429 = vmul.f32 %v1213, 0.044715
    %v1430 = vmul.f32 %v1262, 0.044715
    %v1431 = vmul.f32 %v1311, 0.044715
    %v1432 = vmul.f32 %v1167, 0.044715
    %v1433 = vmul.f32 %v1216, 0.044715
    %v1434 = vmul.f32 %v1265, 0.044715
    %v1435 = vmul.f32 %v1314, 0.044715
    %v1436 = vmul.f32 %v1169, 0.044715
    %v1437 = vmul.f32 %v1218, 0.044715
    %v1438 = vmul.f32 %v1267, 0.044715
    %v1439 = vmul.f32 %v1316, 0.044715
    %v1440 = vmul.f32 %v1172, 0.044715
    %v1441 = vmul.f32 %v1221, 0.044715
    %v1442 = vmul.f32 %v1270, 0.044715
    %v1443 = vmul.f32 %v1319, 0.044715
    %v1444 = vmul.f32 %v1174, 0.044715
    %v1445 = vmul.f32 %v1223, 0.044715
    %v1446 = vmul.f32 %v1272, 0.044715
    %v1447 = vmul.f32 %v1321, 0.044715
    %v1448 = vmul.f32 %v1177, 0.044715
    %v1449 = vmul.f32 %v1226, 0.044715
    %v1450 = vmul.f32 %v1275, 0.044715
    %v1451 = vmul.f32 %v1324, 0.044715
    %v1452 = vmul.f32 %v1179, 0.044715
    %v1453 = vmul.f32 %v1228, 0.044715
    %v1454 = vmul.f32 %v1277, 0.044715
    %v1455 = vmul.f32 %v1326, 0.044715
    %v1456 = vmul.f32 %v1392, %v1142
    %v1457 = vmul.f32 %v1393, %v1191
    %v1458 = vmul.f32 %v1394, %v1240
    %v1459 = vmul.f32 %v1395, %v1289
    %v1460 = vmul.f32 %v1396, %v1144
    %v1461 = vmul.f32 %v1397, %v1193
    %v1462 = vmul.f32 %v1398, %v1242
    %v1463 = vmul.f32 %v1399, %v1291
    %v1464 = vmul.f32 %v1400, %v1147
    %v1465 = vmul.f32 %v1401, %v1196
    %v1466 = vmul.f32 %v1402, %v1245
    %v1467 = vmul.f32 %v1403, %v1294
    %v1468 = vmul.f32 %v1404, %v1149
    %v1469 = vmul.f32 %v1405, %v1198
    %v1470 = vmul.f32 %v1406, %v1247
    %v1471 = vmul.f32 %v1407, %v1296
    %v1472 = vmul.f32 %v1408, %v1152
    %v1473 = vmul.f32 %v1409, %v1201
    %v1474 = vmul.f32 %v1410, %v1250
    %v1475 = vmul.f32 %v1411, %v1299
    %v1476 = vmul.f32 %v1412, %v1154
    %v1477 = vmul.f32 %v1413, %v1203
    %v1478 = vmul.f32 %v1414, %v1252
    %v1479 = vmul.f32 %v1415, %v1301
    %v1480 = vmul.f32 %v1416, %v1157
    %v1481 = vmul.f32 %v1417, %v1206
    %v1482 = vmul.f32 %v1418, %v1255
    %v1483 = vmul.f32 %v1419, %v1304
    %v1484 = vmul.f32 %v1420, %v1159
    %v1485 = vmul.f32 %v1421, %v1208
    %v1486 = vmul.f32 %v1422, %v1257
    %v1487 = vmul.f32 %v1423, %v1306
    %v1488 = vmul.f32 %v1424, %v1162
    %v1489 = vmul.f32 %v1425, %v1211
    %v1490 = vmul.f32 %v1426, %v1260
    %v1491 = vmul.f32 %v1427, %v1309
    %v1492 = vmul.f32 %v1428, %v1164
    %v1493 = vmul.f32 %v1429, %v1213
    %v1494 = vmul.f32 %v1430, %v1262
    %v1495 = vmul.f32 %v1431, %v1311
    %v1496 = vmul.f32 %v1432, %v1167
    %v1497 = vmul.f32 %v1433, %v1216
    %v1498 = vmul.f32 %v1434, %v1265
    %v1499 = vmul.f32 %v1435, %v1314
    %v1500 = vmul.f32 %v1436, %v1169
    %v1501 = vmul.f32 %v1437, %v1218
    %v1502 = vmul.f32 %v1438, %v1267
    %v1503 = vmul.f32 %v1439, %v1316
    %v1504 = vmul.f32 %v1440, %v1172
    %v1505 = vmul.f32 %v1441, %v1221
    %v1506 = vmul.f32 %v1442, %v1270
    %v1507 = vmul.f32 %v1443, %v1319
    %v1508 = vmul.f32 %v1444, %v1174
    %v1509 = vmul.f32 %v1445, %v1223
    %v1510 = vmul.f32 %v1446, %v1272
    %v1511 = vmul.f32 %v1447, %v1321
    %v1512 = vmul.f32 %v1448, %v1177
    %v1513 = vmul.f32 %v1449, %v1226
    %v1514 = vmul.f32 %v1450, %v1275
    %v1515 = vmul.f32 %v1451, %v1324
    %v1516 = vmul.f32 %v1452, %v1179
    %v1517 = vmul.f32 %v1453, %v1228
    %v1518 = vmul.f32 %v1454, %v1277
    %v1519 = vmul.f32 %v1455, %v1326
    %v1520 = vmul.f32 %v1456, %v1142
    %v1521 = vmul.f32 %v1457, %v1191
    %v1522 = vmul.f32 %v1458, %v1240
    %v1523 = vmul.f32 %v1459, %v1289
    %v1524 = vmul.f32 %v1460, %v1144
    %v1525 = vmul.f32 %v1461, %v1193
    %v1526 = vmul.f32 %v1462, %v1242
    %v1527 = vmul.f32 %v1463, %v1291
    %v1528 = vmul.f32 %v1464, %v1147
    %v1529 = vmul.f32 %v1465, %v1196
    %v1530 = vmul.f32 %v1466, %v1245
    %v1531 = vmul.f32 %v1467, %v1294
    %v1532 = vmul.f32 %v1468, %v1149
    %v1533 = vmul.f32 %v1469, %v1198
    %v1534 = vmul.f32 %v1470, %v1247
    %v1535 = vmul.f32 %v1471, %v1296
    %v1536 = vmul.f32 %v1472, %v1152
    %v1537 = vmul.f32 %v1473, %v1201
    %v1538 = vmul.f32 %v1474, %v1250
    %v1539 = vmul.f32 %v1475, %v1299
    %v1540 = vmul.f32 %v1476, %v1154
    %v1541 = vmul.f32 %v1477, %v1203
    %v1542 = vmul.f32 %v1478, %v1252
    %v1543 = vmul.f32 %v1479, %v1301
    %v1544 = vmul.f32 %v1480, %v1157
    %v1545 = vmul.f32 %v1481, %v1206
    %v1546 = vmul.f32 %v1482, %v1255
    %v1547 = vmul.f32 %v1483, %v1304
    %v1548 = vmul.f32 %v1484, %v1159
    %v1549 = vmul.f32 %v1485, %v1208
    %v1550 = vmul.f32 %v1486, %v1257
    %v1551 = vmul.f32 %v1487, %v1306
    %v1552 = vmul.f32 %v1488, %v1162
    %v1553 = vmul.f32 %v1489, %v1211
    %v1554 = vmul.f32 %v1490, %v1260
    %v1555 = vmul.f32 %v1491, %v1309
    %v1556 = vmul.f32 %v1492, %v1164
    %v1557 = vmul.f32 %v1493, %v1213
    %v1558 = vmul.f32 %v1494, %v1262
    %v1559 = vmul.f32 %v1495, %v1311
    %v1560 = vmul.f32 %v1496, %v1167
    %v1561 = vmul.f32 %v1497, %v1216
    %v1562 = vmul.f32 %v1498, %v1265
    %v1563 = vmul.f32 %v1499, %v1314
    %v1564 = vmul.f32 %v1500, %v1169
    %v1565 = vmul.f32 %v1501, %v1218
    %v1566 = vmul.f32 %v1502, %v1267
    %v1567 = vmul.f32 %v1503, %v1316
    %v1568 = vmul.f32 %v1504, %v1172
    %v1569 = vmul.f32 %v1505, %v1221
    %v1570 = vmul.f32 %v1506, %v1270
    %v1571 = vmul.f32 %v1507, %v1319
    %v1572 = vmul.f32 %v1508, %v1174
    %v1573 = vmul.f32 %v1509, %v1223
    %v1574 = vmul.f32 %v1510, %v1272
    %v1575 = vmul.f32 %v1511, %v1321
    %v1576 = vmul.f32 %v1512, %v1177
    %v1577 = vmul.f32 %v1513, %v1226
    %v1578 = vmul.f32 %v1514, %v1275
    %v1579 = vmul.f32 %v1515, %v1324
    %v1580 = vmul.f32 %v1516, %v1179
    %v1581 = vmul.f32 %v1517, %v1228
    %v1582 = vmul.f32 %v1518, %v1277
    %v1583 = vmul.f32 %v1519, %v1326
    %v1584 = vadd.f32 %v1142, %v1520
    %v1585 = vadd.f32 %v1191, %v1521
    %v1586 = vadd.f32 %v1240, %v1522
    %v1587 = vadd.f32 %v1289, %v1523
    %v1588 = vadd.f32 %v1144, %v1524
    %v1589 = vadd.f32 %v1193, %v1525
    %v1590 = vadd.f32 %v1242, %v1526
    %v1591 = vadd.f32 %v1291, %v1527
    %v1592 = vadd.f32 %v1147, %v1528
    %v1593 = vadd.f32 %v1196, %v1529
    %v1594 = vadd.f32 %v1245, %v1530
    %v1595 = vadd.f32 %v1294, %v1531
    %v1596 = vadd.f32 %v1149, %v1532
    %v1597 = vadd.f32 %v1198, %v1533
    %v1598 = vadd.f32 %v1247, %v1534
    %v1599 = vadd.f32 %v1296, %v1535
    %v1600 = vadd.f32 %v1152, %v1536
    %v1601 = vadd.f32 %v1201, %v1537
    %v1602 = vadd.f32 %v1250, %v1538
    %v1603 = vadd.f32 %v1299, %v1539
    %v1604 = vadd.f32 %v1154, %v1540
    %v1605 = vadd.f32 %v1203, %v1541
    %v1606 = vadd.f32 %v1252, %v1542
    %v1607 = vadd.f32 %v1301, %v1543
    %v1608 = vadd.f32 %v1157, %v1544
    %v1609 = vadd.f32 %v1206, %v1545
    %v1610 = vadd.f32 %v1255, %v1546
    %v1611 = vadd.f32 %v1304, %v1547
    %v1612 = vadd.f32 %v1159, %v1548
    %v1613 = vadd.f32 %v1208, %v1549
    %v1614 = vadd.f32 %v1257, %v1550
    %v1615 = vadd.f32 %v1306, %v1551
    %v1616 = vadd.f32 %v1162, %v1552
    %v1617 = vadd.f32 %v1211, %v1553
    %v1618 = vadd.f32 %v1260, %v1554
    %v1619 = vadd.f32 %v1309, %v1555
    %v1620 = vadd.f32 %v1164, %v1556
    %v1621 = vadd.f32 %v1213, %v1557
    %v1622 = vadd.f32 %v1262, %v1558
    %v1623 = vadd.f32 %v1311, %v1559
    %v1624 = vadd.f32 %v1167, %v1560
    %v1625 = vadd.f32 %v1216, %v1561
    %v1626 = vadd.f32 %v1265, %v1562
    %v1627 = vadd.f32 %v1314, %v1563
    %v1628 = vadd.f32 %v1169, %v1564
    %v1629 = vadd.f32 %v1218, %v1565
    %v1630 = vadd.f32 %v1267, %v1566
    %v1631 = vadd.f32 %v1316, %v1567
    %v1632 = vadd.f32 %v1172, %v1568
    %v1633 = vadd.f32 %v1221, %v1569
    %v1634 = vadd.f32 %v1270, %v1570
    %v1635 = vadd.f32 %v1319, %v1571
    %v1636 = vadd.f32 %v1174, %v1572
    %v1637 = vadd.f32 %v1223, %v1573
    %v1638 = vadd.f32 %v1272, %v1574
    %v1639 = vadd.f32 %v1321, %v1575
    %v1640 = vadd.f32 %v1177, %v1576
    %v1641 = vadd.f32 %v1226, %v1577
    %v1642 = vadd.f32 %v1275, %v1578
    %v1643 = vadd.f32 %v1324, %v1579
    %v1644 = vadd.f32 %v1179, %v1580
    %v1645 = vadd.f32 %v1228, %v1581
    %v1646 = vadd.f32 %v1277, %v1582
    %v1647 = vadd.f32 %v1326, %v1583
    %v1648 = vmul.f32 %v1584, 0.7978846
    %v1649 = vmul.f32 %v1585, 0.7978846
    %v1650 = vmul.f32 %v1586, 0.7978846
    %v1651 = vmul.f32 %v1587, 0.7978846
    %v1652 = vmul.f32 %v1588, 0.7978846
    %v1653 = vmul.f32 %v1589, 0.7978846
    %v1654 = vmul.f32 %v1590, 0.7978846
    %v1655 = vmul.f32 %v1591, 0.7978846
    %v1656 = vmul.f32 %v1592, 0.7978846
    %v1657 = vmul.f32 %v1593, 0.7978846
    %v1658 = vmul.f32 %v1594, 0.7978846
    %v1659 = vmul.f32 %v1595, 0.7978846
    %v1660 = vmul.f32 %v1596, 0.7978846
    %v1661 = vmul.f32 %v1597, 0.7978846
    %v1662 = vmul.f32 %v1598, 0.7978846
    %v1663 = vmul.f32 %v1599, 0.7978846
    %v1664 = vmul.f32 %v1600, 0.7978846
    %v1665 = vmul.f32 %v1601, 0.7978846
    %v1666 = vmul.f32 %v1602, 0.7978846
    %v1667 = vmul.f32 %v1603, 0.7978846
    %v1668 = vmul.f32 %v1604, 0.7978846
    %v1669 = vmul.f32 %v1605, 0.7978846
    %v1670 = vmul.f32 %v1606, 0.7978846
    %v1671 = vmul.f32 %v1607, 0.7978846
    %v1672 = vmul.f32 %v1608, 0.7978846
    %v1673 = vmul.f32 %v1609, 0.7978846
    %v1674 = vmul.f32 %v1610, 0.7978846
    %v1675 = vmul.f32 %v1611, 0.7978846
    %v1676 = vmul.f32 %v1612, 0.7978846
    %v1677 = vmul.f32 %v1613, 0.7978846
    %v1678 = vmul.f32 %v1614, 0.7978846
    %v1679 = vmul.f32 %v1615, 0.7978846
    %v1680 = vmul.f32 %v1616, 0.7978846
    %v1681 = vmul.f32 %v1617, 0.7978846
    %v1682 = vmul.f32 %v1618, 0.7978846
    %v1683 = vmul.f32 %v1619, 0.7978846
    %v1684 = vmul.f32 %v1620, 0.7978846
    %v1685 = vmul.f32 %v1621, 0.7978846
    %v1686 = vmul.f32 %v1622, 0.7978846
    %v1687 = vmul.f32 %v1623, 0.7978846
    %v1688 = vmul.f32 %v1624, 0.7978846
    %v1689 = vmul.f32 %v1625, 0.7978846
    %v1690 = vmul.f32 %v1626, 0.7978846
    %v1691 = vmul.f32 %v1627, 0.7978846
    %v1692 = vmul.f32 %v1628, 0.7978846
    %v1693 = vmul.f32 %v1629, 0.7978846
    %v1694 = vmul.f32 %v1630, 0.7978846
    %v1695 = vmul.f32 %v1631, 0.7978846
    %v1696 = vmul.f32 %v1632, 0.7978846
    %v1697 = vmul.f32 %v1633, 0.7978846
    %v1698 = vmul.f32 %v1634, 0.7978846
    %v1699 = vmul.f32 %v1635, 0.7978846
    %v1700 = vmul.f32 %v1636, 0.7978846
    %v1701 = vmul.f32 %v1637, 0.7978846
    %v1702 = vmul.f32 %v1638, 0.7978846
    %v1703 = vmul.f32 %v1639, 0.7978846
    %v1704 = vmul.f32 %v1640, 0.7978846
    %v1705 = vmul.f32 %v1641, 0.7978846
    %v1706 = vmul.f32 %v1642, 0.7978846
    %v1707 = vmul.f32 %v1643, 0.7978846
    %v1708 = vmul.f32 %v1644, 0.7978846
    %v1709 = vmul.f32 %v1645, 0.7978846
    %v1710 = vmul.f32 %v1646, 0.7978846
    %v1711 = vmul.f32 %v1647, 0.7978846
    %v1712 = vtanh.pop %v1648
    %v1713 = vtanh.pop %v1649
    %v1714 = vtanh.pop %v1650
    %v1715 = vtanh.pop %v1651
    %v1716 = vtanh.pop %v1652
    %v1717 = vtanh.pop %v1653
    %v1718 = vtanh.pop %v1654
    %v1719 = vtanh.pop %v1655
    %v1720 = vtanh.pop %v1656
    %v1721 = vtanh.pop %v1657
    %v1722 = vtanh.pop %v1658
    %v1723 = vtanh.pop %v1659
    %v1724 = vtanh.pop %v1660
    %v1725 = vtanh.pop %v1661
    %v1726 = vtanh.pop %v1662
    %v1727 = vtanh.pop %v1663
    %v1728 = vtanh.pop %v1664
    %v1729 = vtanh.pop %v1665
    %v1730 = vtanh.pop %v1666
    %v1731 = vtanh.pop %v1667
    %v1732 = vtanh.pop %v1668
    %v1733 = vtanh.pop %v1669
    %v1734 = vtanh.pop %v1670
    %v1735 = vtanh.pop %v1671
    %v1736 = vtanh.pop %v1672
    %v1737 = vtanh.pop %v1673
    %v1738 = vtanh.pop %v1674
    %v1739 = vtanh.pop %v1675
    %v1740 = vtanh.pop %v1676
    %v1741 = vtanh.pop %v1677
    %v1742 = vtanh.pop %v1678
    %v1743 = vtanh.pop %v1679
    %v1744 = vtanh.pop %v1680
    %v1745 = vtanh.pop %v1681
    %v1746 = vtanh.pop %v1682
    %v1747 = vtanh.pop %v1683
    %v1748 = vtanh.pop %v1684
    %v1749 = vtanh.pop %v1685
    %v1750 = vtanh.pop %v1686
    %v1751 = vtanh.pop %v1687
    %v1752 = vtanh.pop %v1688
    %v1753 = vtanh.pop %v1689
    %v1754 = vtanh.pop %v1690
    %v1755 = vtanh.pop %v1691
    %v1756 = vtanh.pop %v1692
    %v1757 = vtanh.pop %v1693
    %v1758 = vtanh.pop %v1694
    %v1759 = vtanh.pop %v1695
    %v1760 = vtanh.pop %v1696
    %v1761 = vtanh.pop %v1697
    %v1762 = vtanh.pop %v1698
    %v1763 = vtanh.pop %v1699
    %v1764 = vtanh.pop %v1700
    %v1765 = vtanh.pop %v1701
    %v1766 = vtanh.pop %v1702
    %v1767 = vtanh.pop %v1703
    %v1768 = vtanh.pop %v1704
    %v1769 = vtanh.pop %v1705
    %v1770 = vtanh.pop %v1706
    %v1771 = vtanh.pop %v1707
    %v1772 = vtanh.pop %v1708
    %v1773 = vtanh.pop %v1709
    %v1774 = vtanh.pop %v1710
    %v1775 = vtanh.pop %v1711
    %v1776 = vadd.f32 %v1712, 1.0
    %v1777 = vadd.f32 %v1713, 1.0
    %v1778 = vadd.f32 %v1714, 1.0
    %v1779 = vadd.f32 %v1715, 1.0
    %v1780 = vadd.f32 %v1716, 1.0
    %v1781 = vadd.f32 %v1717, 1.0
    %v1782 = vadd.f32 %v1718, 1.0
    %v1783 = vadd.f32 %v1719, 1.0
    %v1784 = vadd.f32 %v1720, 1.0
    %v1785 = vadd.f32 %v1721, 1.0
    %v1786 = vadd.f32 %v1722, 1.0
    %v1787 = vadd.f32 %v1723, 1.0
    %v1788 = vadd.f32 %v1724, 1.0
    %v1789 = vadd.f32 %v1725, 1.0
    %v1790 = vadd.f32 %v1726, 1.0
    %v1791 = vadd.f32 %v1727, 1.0
    %v1792 = vadd.f32 %v1728, 1.0
    %v1793 = vadd.f32 %v1729, 1.0
    %v1794 = vadd.f32 %v1730, 1.0
    %v1795 = vadd.f32 %v1731, 1.0
    %v1796 = vadd.f32 %v1732, 1.0
    %v1797 = vadd.f32 %v1733, 1.0
    %v1798 = vadd.f32 %v1734, 1.0
    %v1799 = vadd.f32 %v1735, 1.0
    %v1800 = vadd.f32 %v1736, 1.0
    %v1801 = vadd.f32 %v1737, 1.0
    %v1802 = vadd.f32 %v1738, 1.0
    %v1803 = vadd.f32 %v1739, 1.0
    %v1804 = vadd.f32 %v1740, 1.0
    %v1805 = vadd.f32 %v1741, 1.0
    %v1806 = vadd.f32 %v1742, 1.0
    %v1807 = vadd.f32 %v1743, 1.0
    %v1808 = vadd.f32 %v1744, 1.0
    %v1809 = vadd.f32 %v1745, 1.0
    %v1810 = vadd.f32 %v1746, 1.0
    %v1811 = vadd.f32 %v1747, 1.0
    %v1812 = vadd.f32 %v1748, 1.0
    %v1813 = vadd.f32 %v1749, 1.0
    %v1814 = vadd.f32 %v1750, 1.0
    %v1815 = vadd.f32 %v1751, 1.0
    %v1816 = vadd.f32 %v1752, 1.0
    %v1817 = vadd.f32 %v1753, 1.0
    %v1818 = vadd.f32 %v1754, 1.0
    %v1819 = vadd.f32 %v1755, 1.0
    %v1820 = vadd.f32 %v1756, 1.0
    %v1821 = vadd.f32 %v1757, 1.0
    %v1822 = vadd.f32 %v1758, 1.0
    %v1823 = vadd.f32 %v1759, 1.0
    %v1824 = vadd.f32 %v1760, 1.0
    %v1825 = vadd.f32 %v1761, 1.0
    %v1826 = vadd.f32 %v1762, 1.0
    %v1827 = vadd.f32 %v1763, 1.0
    %v1828 = vadd.f32 %v1764, 1.0
    %v1829 = vadd.f32 %v1765, 1.0
    %v1830 = vadd.f32 %v1766, 1.0
    %v1831 = vadd.f32 %v1767, 1.0
    %v1832 = vadd.f32 %v1768, 1.0
    %v1833 = vadd.f32 %v1769, 1.0
    %v1834 = vadd.f32 %v1770, 1.0
    %v1835 = vadd.f32 %v1771, 1.0
    %v1836 = vadd.f32 %v1772, 1.0
    %v1837 = vadd.f32 %v1773, 1.0
    %v1838 = vadd.f32 %v1774, 1.0
    %v1839 = vadd.f32 %v1775, 1.0
    %v1840 = vmul.f32 %v1328, %v1776
    %v1841 = vmul.f32 %v1329, %v1777
    %v1842 = vmul.f32 %v1330, %v1778
    %v1843 = vmul.f32 %v1331, %v1779
    %v1844 = vmul.f32 %v1332, %v1780
    %v1845 = vmul.f32 %v1333, %v1781
    %v1846 = vmul.f32 %v1334, %v1782
    %v1847 = vmul.f32 %v1335, %v1783
    %v1848 = vmul.f32 %v1336, %v1784
    %v1849 = vmul.f32 %v1337, %v1785
    %v1850 = vmul.f32 %v1338, %v1786
    %v1851 = vmul.f32 %v1339, %v1787
    %v1852 = vmul.f32 %v1340, %v1788
    %v1853 = vmul.f32 %v1341, %v1789
    %v1854 = vmul.f32 %v1342, %v1790
    %v1855 = vmul.f32 %v1343, %v1791
    %v1856 = vmul.f32 %v1344, %v1792
    %v1857 = vmul.f32 %v1345, %v1793
    %v1858 = vmul.f32 %v1346, %v1794
    %v1859 = vmul.f32 %v1347, %v1795
    %v1860 = vmul.f32 %v1348, %v1796
    %v1861 = vmul.f32 %v1349, %v1797
    %v1862 = vmul.f32 %v1350, %v1798
    %v1863 = vmul.f32 %v1351, %v1799
    %v1864 = vmul.f32 %v1352, %v1800
    %v1865 = vmul.f32 %v1353, %v1801
    %v1866 = vmul.f32 %v1354, %v1802
    %v1867 = vmul.f32 %v1355, %v1803
    %v1868 = vmul.f32 %v1356, %v1804
    %v1869 = vmul.f32 %v1357, %v1805
    %v1870 = vmul.f32 %v1358, %v1806
    %v1871 = vmul.f32 %v1359, %v1807
    %v1872 = vmul.f32 %v1360, %v1808
    %v1873 = vmul.f32 %v1361, %v1809
    %v1874 = vmul.f32 %v1362, %v1810
    %v1875 = vmul.f32 %v1363, %v1811
    %v1876 = vmul.f32 %v1364, %v1812
    %v1877 = vmul.f32 %v1365, %v1813
    %v1878 = vmul.f32 %v1366, %v1814
    %v1879 = vmul.f32 %v1367, %v1815
    %v1880 = vmul.f32 %v1368, %v1816
    %v1881 = vmul.f32 %v1369, %v1817
    %v1882 = vmul.f32 %v1370, %v1818
    %v1883 = vmul.f32 %v1371, %v1819
    %v1884 = vmul.f32 %v1372, %v1820
    %v1885 = vmul.f32 %v1373, %v1821
    %v1886 = vmul.f32 %v1374, %v1822
    %v1887 = vmul.f32 %v1375, %v1823
    %v1888 = vmul.f32 %v1376, %v1824
    %v1889 = vmul.f32 %v1377, %v1825
    %v1890 = vmul.f32 %v1378, %v1826
    %v1891 = vmul.f32 %v1379, %v1827
    %v1892 = vmul.f32 %v1380, %v1828
    %v1893 = vmul.f32 %v1381, %v1829
    %v1894 = vmul.f32 %v1382, %v1830
    %v1895 = vmul.f32 %v1383, %v1831
    %v1896 = vmul.f32 %v1384, %v1832
    %v1897 = vmul.f32 %v1385, %v1833
    %v1898 = vmul.f32 %v1386, %v1834
    %v1899 = vmul.f32 %v1387, %v1835
    %v1900 = vmul.f32 %v1388, %v1836
    %v1901 = vmul.f32 %v1389, %v1837
    %v1902 = vmul.f32 %v1390, %v1838
    %v1903 = vmul.f32 %v1391, %v1839
    %v1904 = vmul.f32 %v744, %v1840
    %v1905 = vmul.f32 %v793, %v1841
    %v1906 = vmul.f32 %v842, %v1842
    %v1907 = vmul.f32 %v891, %v1843
    %v1908 = vmul.f32 %v746, %v1844
    %v1909 = vmul.f32 %v795, %v1845
    %v1910 = vmul.f32 %v844, %v1846
    %v1911 = vmul.f32 %v893, %v1847
    %v1912 = vmul.f32 %v749, %v1848
    %v1913 = vmul.f32 %v798, %v1849
    %v1914 = vmul.f32 %v847, %v1850
    %v1915 = vmul.f32 %v896, %v1851
    %v1916 = vmul.f32 %v751, %v1852
    %v1917 = vmul.f32 %v800, %v1853
    %v1918 = vmul.f32 %v849, %v1854
    %v1919 = vmul.f32 %v898, %v1855
    %v1920 = vmul.f32 %v754, %v1856
    %v1921 = vmul.f32 %v803, %v1857
    %v1922 = vmul.f32 %v852, %v1858
    %v1923 = vmul.f32 %v901, %v1859
    %v1924 = vmul.f32 %v756, %v1860
    %v1925 = vmul.f32 %v805, %v1861
    %v1926 = vmul.f32 %v854, %v1862
    %v1927 = vmul.f32 %v903, %v1863
    %v1928 = vmul.f32 %v759, %v1864
    %v1929 = vmul.f32 %v808, %v1865
    %v1930 = vmul.f32 %v857, %v1866
    %v1931 = vmul.f32 %v906, %v1867
    %v1932 = vmul.f32 %v761, %v1868
    %v1933 = vmul.f32 %v810, %v1869
    %v1934 = vmul.f32 %v859, %v1870
    %v1935 = vmul.f32 %v908, %v1871
    %v1936 = vmul.f32 %v764, %v1872
    %v1937 = vmul.f32 %v813, %v1873
    %v1938 = vmul.f32 %v862, %v1874
    %v1939 = vmul.f32 %v911, %v1875
    %v1940 = vmul.f32 %v766, %v1876
    %v1941 = vmul.f32 %v815, %v1877
    %v1942 = vmul.f32 %v864, %v1878
    %v1943 = vmul.f32 %v913, %v1879
    %v1944 = vmul.f32 %v769, %v1880
    %v1945 = vmul.f32 %v818, %v1881
    %v1946 = vmul.f32 %v867, %v1882
    %v1947 = vmul.f32 %v916, %v1883
    %v1948 = vmul.f32 %v771, %v1884
    %v1949 = vmul.f32 %v820, %v1885
    %v1950 = vmul.f32 %v869, %v1886
    %v1951 = vmul.f32 %v918, %v1887
    %v1952 = vmul.f32 %v774, %v1888
    %v1953 = vmul.f32 %v823, %v1889
    %v1954 = vmul.f32 %v872, %v1890
    %v1955 = vmul.f32 %v921, %v1891
    %v1956 = vmul.f32 %v776, %v1892
    %v1957 = vmul.f32 %v825, %v1893
    %v1958 = vmul.f32 %v874, %v1894
    %v1959 = vmul.f32 %v923, %v1895
    %v1960 = vmul.f32 %v779, %v1896
    %v1961 = vmul.f32 %v828, %v1897
    %v1962 = vmul.f32 %v877, %v1898
    %v1963 = vmul.f32 %v926, %v1899
    %v1964 = vmul.f32 %v781, %v1900
    %v1965 = vmul.f32 %v830, %v1901
    %v1966 = vmul.f32 %v879, %v1902
    %v1967 = vmul.f32 %v928, %v1903
    %v1968 = vpack.c.bf16 %v1908, %v1904
    %v1969 = vpack.c.bf16 %v1909, %v1905
    %v1970 = vpack.c.bf16 %v1910, %v1906
    %v1971 = vpack.c.bf16 %v1911, %v1907
    %v1972 = vpack.c.bf16 %v1916, %v1912
    %v1973 = vpack.c.bf16 %v1917, %v1913
    %v1974 = vpack.c.bf16 %v1918, %v1914
    %v1975 = vpack.c.bf16 %v1919, %v1915
    %v1976 = vpack.c.bf16 %v1924, %v1920
    %v1977 = vpack.c.bf16 %v1925, %v1921
    %v1978 = vpack.c.bf16 %v1926, %v1922
    %v1979 = vpack.c.bf16 %v1927, %v1923
    %v1980 = vpack.c.bf16 %v1932, %v1928
    %v1981 = vpack.c.bf16 %v1933, %v1929
    %v1982 = vpack.c.bf16 %v1934, %v1930
    %v1983 = vpack.c.bf16 %v1935, %v1931
    %v1984 = vpack.c.bf16 %v1940, %v1936
    %v1985 = vpack.c.bf16 %v1941, %v1937
    %v1986 = vpack.c.bf16 %v1942, %v1938
    %v1987 = vpack.c.bf16 %v1943, %v1939
    %v1988 = vpack.c.bf16 %v1948, %v1944
    %v1989 = vpack.c.bf16 %v1949, %v1945
    %v1990 = vpack.c.bf16 %v1950, %v1946
    %v1991 = vpack.c.bf16 %v1951, %v1947
    %v1992 = vpack.c.bf16 %v1956, %v1952
    %v1993 = vpack.c.bf16 %v1957, %v1953
    %v1994 = vpack.c.bf16 %v1958, %v1954
    %v1995 = vpack.c.bf16 %v1959, %v1955
    %v1996 = vpack.c.bf16 %v1964, %v1960
    %v1997 = vpack.c.bf16 %v1965, %v1961
    %v1998 = vpack.c.bf16 %v1966, %v1962
    %v1999 = vpack.c.bf16 %v1967, %v1963
    %v2000 = vld [vmem:[#allocation3] sm:$0xff]
    %v2001 = vld [vmem:[#allocation3 + $0x8] sm:$0xff]
    %v2002 = vld [vmem:[#allocation3 + $0x10] sm:$0xff]
    %v2003 = vld [vmem:[#allocation3 + $0x18] sm:$0xff]
    %v2004 = vld [vmem:[#allocation3 + $0x20] sm:$0xff]
    %v2005 = vld [vmem:[#allocation3 + $0x28] sm:$0xff]
    %v2006 = vld [vmem:[#allocation3 + $0x30] sm:$0xff]
    %v2007 = vld [vmem:[#allocation3 + $0x38] sm:$0xff]
    %v2008 = vld [vmem:[#allocation3 + $0x40] sm:$0xff]
    %v2009 = vld [vmem:[#allocation3 + $0x48] sm:$0xff]
    %v2010 = vld [vmem:[#allocation3 + $0x50] sm:$0xff]
    %v2011 = vld [vmem:[#allocation3 + $0x58] sm:$0xff]
    %v2012 = vld [vmem:[#allocation3 + $0x60] sm:$0xff]
    %v2013 = vld [vmem:[#allocation3 + $0x68] sm:$0xff]
    %v2014 = vld [vmem:[#allocation3 + $0x70] sm:$0xff]
    %v2015 = vld [vmem:[#allocation3 + $0x78] sm:$0xff]
    %v2016 = vld [vmem:[%s7] sm:$0xf]
    %v2017 = vld [vmem:[%s7 + $0x4] sm:$0xf]
    %v2018 = vld [vmem:[%s7 + $0x8] sm:$0xf]
    %v2019 = vld [vmem:[%s7 + $0xc] sm:$0xf]
    %v2020 = vld [vmem:[%s7 + $0x10] sm:$0xf]
    %v2021 = vld [vmem:[%s7 + $0x14] sm:$0xf]
    %v2022 = vld [vmem:[%s7 + $0x18] sm:$0xf]
    %v2023 = vld [vmem:[%s7 + $0x1c] sm:$0xf]
    %v2024 = vld [vmem:[%s7 + $0x20] sm:$0xf]
    %v2025 = vld [vmem:[%s7 + $0x24] sm:$0xf]
    %v2026 = vld [vmem:[%s7 + $0x28] sm:$0xf]
    %v2027 = vld [vmem:[%s7 + $0x2c] sm:$0xf]
    %v2028 = vld [vmem:[%s7 + $0x30] sm:$0xf]
    %v2029 = vld [vmem:[%s7 + $0x34] sm:$0xf]
    %v2030 = vld [vmem:[%s7 + $0x38] sm:$0xf]
    %v2031 = vld [vmem:[%s7 + $0x3c] sm:$0xf]
    %v2032 = vld [vmem:[%s7 + $0x40] sm:$0xf]
    %v2033 = vld [vmem:[%s7 + $0x44] sm:$0xf]
    %v2034 = vld [vmem:[%s7 + $0x48] sm:$0xf]
    %v2035 = vld [vmem:[%s7 + $0x4c] sm:$0xf]
    %v2036 = vld [vmem:[%s7 + $0x50] sm:$0xf]
    %v2037 = vld [vmem:[%s7 + $0x54] sm:$0xf]
    %v2038 = vld [vmem:[%s7 + $0x58] sm:$0xf]
    %v2039 = vld [vmem:[%s7 + $0x5c] sm:$0xf]
    %v2040 = vld [vmem:[%s7 + $0x60] sm:$0xf]
    %v2041 = vld [vmem:[%s7 + $0x64] sm:$0xf]
    %v2042 = vld [vmem:[%s7 + $0x68] sm:$0xf]
    %v2043 = vld [vmem:[%s7 + $0x6c] sm:$0xf]
    %v2044 = vld [vmem:[%s7 + $0x70] sm:$0xf]
    %v2045 = vld [vmem:[%s7 + $0x74] sm:$0xf]
    %v2046 = vld [vmem:[%s7 + $0x78] sm:$0xf]
    %v2047 = vld [vmem:[%s7 + $0x7c] sm:$0xf]
    %v2048 = vld [vmem:[%s7 + $0x80] sm:$0xf]
    %v2049 = vld [vmem:[%s7 + $0x84] sm:$0xf]
    %v2050 = vld [vmem:[%s7 + $0x88] sm:$0xf]
    %v2051 = vld [vmem:[%s7 + $0x8c] sm:$0xf]
    %v2052 = vld [vmem:[%s7 + $0x90] sm:$0xf]
    %v2053 = vld [vmem:[%s7 + $0x94] sm:$0xf]
    %v2054 = vld [vmem:[%s7 + $0x98] sm:$0xf]
    %v2055 = vld [vmem:[%s7 + $0x9c] sm:$0xf]
    %v2056 = vld [vmem:[%s7 + $0xa0] sm:$0xf]
    %v2057 = vld [vmem:[%s7 + $0xa4] sm:$0xf]
    %v2058 = vld [vmem:[%s7 + $0xa8] sm:$0xf]
    %v2059 = vld [vmem:[%s7 + $0xac] sm:$0xf]
    %v2060 = vld [vmem:[%s7 + $0xb0] sm:$0xf]
    %v2061 = vld [vmem:[%s7 + $0xb4] sm:$0xf]
    %v2062 = vld [vmem:[%s7 + $0xb8] sm:$0xf]
    %v2063 = vld [vmem:[%s7 + $0xbc] sm:$0xf]
    %v2064 = vld [vmem:[%s7 + $0xc0] sm:$0xf]
    %v2065 = vld [vmem:[%s7 + $0xc4] sm:$0xf]
    %v2066 = vld [vmem:[%s7 + $0xc8] sm:$0xf]
    %v2067 = vld [vmem:[%s7 + $0xcc] sm:$0xf]
    %v2068 = vld [vmem:[%s7 + $0xd0] sm:$0xf]
    %v2069 = vld [vmem:[%s7 + $0xd4] sm:$0xf]
    %v2070 = vld [vmem:[%s7 + $0xd8] sm:$0xf]
    %v2071 = vld [vmem:[%s7 + $0xdc] sm:$0xf]
    %v2072 = vld [vmem:[%s7 + $0xe0] sm:$0xf]
    %v2073 = vld [vmem:[%s7 + $0xe4] sm:$0xf]
    %v2074 = vld [vmem:[%s7 + $0xe8] sm:$0xf]
    %v2075 = vld [vmem:[%s7 + $0xec] sm:$0xf]
    %v2076 = vld [vmem:[%s7 + $0xf0] sm:$0xf]
    %v2077 = vld [vmem:[%s7 + $0xf4] sm:$0xf]
    %v2078 = vld [vmem:[%s7 + $0xf8] sm:$0xf]
    %v2079 = vld [vmem:[%s7 + $0xfc] sm:$0xf]
    %v2144 = vunpack.c.l.b16 %v2016
    %v2145 = vunpack.c.l.b16 %v2017
    %v2146 = vunpack.c.l.b16 %v2018
    %v2147 = vunpack.c.l.b16 %v2019
    %v2148 = vunpack.c.l.b16 %v2020
    %v2149 = vunpack.c.l.b16 %v2021
    %v2150 = vunpack.c.l.b16 %v2022
    %v2151 = vunpack.c.l.b16 %v2023
    %v2152 = vunpack.c.l.b16 %v2024
    %v2153 = vunpack.c.l.b16 %v2025
    %v2154 = vunpack.c.l.b16 %v2026
    %v2155 = vunpack.c.l.b16 %v2027
    %v2156 = vunpack.c.l.b16 %v2028
    %v2157 = vunpack.c.l.b16 %v2029
    %v2158 = vunpack.c.l.b16 %v2030
    %v2159 = vunpack.c.l.b16 %v2031
    %v2160 = vunpack.c.l.b16 %v2032
    %v2161 = vunpack.c.l.b16 %v2033
    %v2162 = vunpack.c.l.b16 %v2034
    %v2163 = vunpack.c.l.b16 %v2035
    %v2164 = vunpack.c.l.b16 %v2036
    %v2165 = vunpack.c.l.b16 %v2037
    %v2166 = vunpack.c.l.b16 %v2038
    %v2167 = vunpack.c.l.b16 %v2039
    %v2168 = vunpack.c.l.b16 %v2040
    %v2169 = vunpack.c.l.b16 %v2041
    %v2170 = vunpack.c.l.b16 %v2042
    %v2171 = vunpack.c.l.b16 %v2043
    %v2172 = vunpack.c.l.b16 %v2044
    %v2173 = vunpack.c.l.b16 %v2045
    %v2174 = vunpack.c.l.b16 %v2046
    %v2175 = vunpack.c.l.b16 %v2047
    %v2176 = vunpack.c.l.b16 %v2048
    %v2177 = vunpack.c.l.b16 %v2049
    %v2178 = vunpack.c.l.b16 %v2050
    %v2179 = vunpack.c.l.b16 %v2051
    %v2180 = vunpack.c.l.b16 %v2052
    %v2181 = vunpack.c.l.b16 %v2053
    %v2182 = vunpack.c.l.b16 %v2054
    %v2183 = vunpack.c.l.b16 %v2055
    %v2184 = vunpack.c.l.b16 %v2056
    %v2185 = vunpack.c.l.b16 %v2057
    %v2186 = vunpack.c.l.b16 %v2058
    %v2187 = vunpack.c.l.b16 %v2059
    %v2188 = vunpack.c.l.b16 %v2060
    %v2189 = vunpack.c.l.b16 %v2061
    %v2190 = vunpack.c.l.b16 %v2062
    %v2191 = vunpack.c.l.b16 %v2063
    %v2192 = vunpack.c.l.b16 %v2064
    %v2193 = vunpack.c.l.b16 %v2065
    %v2194 = vunpack.c.l.b16 %v2066
    %v2195 = vunpack.c.l.b16 %v2067
    %v2196 = vunpack.c.l.b16 %v2068
    %v2197 = vunpack.c.l.b16 %v2069
    %v2198 = vunpack.c.l.b16 %v2070
    %v2199 = vunpack.c.l.b16 %v2071
    %v2200 = vunpack.c.l.b16 %v2072
    %v2201 = vunpack.c.l.b16 %v2073
    %v2202 = vunpack.c.l.b16 %v2074
    %v2203 = vunpack.c.l.b16 %v2075
    %v2204 = vunpack.c.l.b16 %v2076
    %v2205 = vunpack.c.l.b16 %v2077
    %v2206 = vunpack.c.l.b16 %v2078
    %v2207 = vunpack.c.l.b16 %v2079
    %v2208 = vpack.c.b16 %v2145, %v2144
    %v2209 = vpack.c.b16 %v2147, %v2146
    %v2210 = vpack.c.b16 %v2149, %v2148
    %v2211 = vpack.c.b16 %v2151, %v2150
    %v2212 = vpack.c.b16 %v2153, %v2152
    %v2213 = vpack.c.b16 %v2155, %v2154
    %v2214 = vpack.c.b16 %v2157, %v2156
    %v2215 = vpack.c.b16 %v2159, %v2158
    %v2216 = vpack.c.b16 %v2161, %v2160
    %v2217 = vpack.c.b16 %v2163, %v2162
    %v2218 = vpack.c.b16 %v2165, %v2164
    %v2219 = vpack.c.b16 %v2167, %v2166
    %v2220 = vpack.c.b16 %v2169, %v2168
    %v2221 = vpack.c.b16 %v2171, %v2170
    %v2222 = vpack.c.b16 %v2173, %v2172
    %v2223 = vpack.c.b16 %v2175, %v2174
    %v2224 = vpack.c.b16 %v2177, %v2176
    %v2225 = vpack.c.b16 %v2179, %v2178
    %v2226 = vpack.c.b16 %v2181, %v2180
    %v2227 = vpack.c.b16 %v2183, %v2182
    %v2228 = vpack.c.b16 %v2185, %v2184
    %v2229 = vpack.c.b16 %v2187, %v2186
    %v2230 = vpack.c.b16 %v2189, %v2188
    %v2231 = vpack.c.b16 %v2191, %v2190
    %v2232 = vpack.c.b16 %v2193, %v2192
    %v2233 = vpack.c.b16 %v2195, %v2194
    %v2234 = vpack.c.b16 %v2197, %v2196
    %v2235 = vpack.c.b16 %v2199, %v2198
    %v2236 = vpack.c.b16 %v2201, %v2200
    %v2237 = vpack.c.b16 %v2203, %v2202
    %v2238 = vpack.c.b16 %v2205, %v2204
    %v2239 = vpack.c.b16 %v2207, %v2206
    %2272 = vmatpush.bf16.msra.mxu0 %v2215
    %2273 = vmatpush.bf16.msra.mxu0 %v2214
    %2274 = vmatpush.bf16.msra.mxu0 %v2213
    %2275 = vmatpush.bf16.msra.mxu0 %v2212
    %2276 = vmatpush.bf16.msra.mxu0 %v2211
    %2277 = vmatpush.bf16.msra.mxu0 %v2210
    %2278 = vmatpush.bf16.msra.mxu0 %v2209
    %2279 = vmatpush.bf16.msra.mxu0 %v2208
    %2280 = vmatmul.bf16.gmra.mxu0 %v1968
    %v2281 = vpop.f32.mrf.mxu0
    %v2282 = vadd.f32 0.0, %v2281
    %v2283 = vpop.f32.mrf.mxu0
    %v2284 = vadd.f32 0.0, %v2283
    %2285 = vmatmul.bf16.gmra.mxu0 %v1972
    %v2286 = vpop.f32.mrf.mxu0
    %v2287 = vadd.f32 0.0, %v2286
    %v2288 = vpop.f32.mrf.mxu0
    %v2289 = vadd.f32 0.0, %v2288
    %2290 = vmatmul.bf16.gmra.mxu0 %v1976
    %v2291 = vpop.f32.mrf.mxu0
    %v2292 = vadd.f32 0.0, %v2291
    %v2293 = vpop.f32.mrf.mxu0
    %v2294 = vadd.f32 0.0, %v2293
    %2295 = vmatmul.bf16.gmra.mxu0 %v1980
    %v2296 = vpop.f32.mrf.mxu0
    %v2297 = vadd.f32 0.0, %v2296
    %v2298 = vpop.f32.mrf.mxu0
    %v2299 = vadd.f32 0.0, %v2298
    %2300 = vmatmul.bf16.gmra.mxu0 %v1984
    %v2301 = vpop.f32.mrf.mxu0
    %v2302 = vadd.f32 0.0, %v2301
    %v2303 = vpop.f32.mrf.mxu0
    %v2304 = vadd.f32 0.0, %v2303
    %2305 = vmatmul.bf16.gmra.mxu0 %v1988
    %v2306 = vpop.f32.mrf.mxu0
    %v2307 = vadd.f32 0.0, %v2306
    %v2308 = vpop.f32.mrf.mxu0
    %v2309 = vadd.f32 0.0, %v2308
    %2310 = vmatmul.bf16.gmra.mxu0 %v1992
    %v2311 = vpop.f32.mrf.mxu0
    %v2312 = vadd.f32 0.0, %v2311
    %v2313 = vpop.f32.mrf.mxu0
    %v2314 = vadd.f32 0.0, %v2313
    %2315 = vmatmul.bf16.gmra.mxu0 %v1996
    %v2316 = vpop.f32.mrf.mxu0
    %v2317 = vadd.f32 0.0, %v2316
    %v2318 = vpop.f32.mrf.mxu0
    %v2319 = vadd.f32 0.0, %v2318
    %2320 = vdwg.mxu0
    %2321 = vmatpush.bf16.msra.mxu0 %v2223
    %2322 = vmatpush.bf16.msra.mxu0 %v2222
    %2323 = vmatpush.bf16.msra.mxu0 %v2221
    %2324 = vmatpush.bf16.msra.mxu0 %v2220
    %2325 = vmatpush.bf16.msra.mxu0 %v2219
    %2326 = vmatpush.bf16.msra.mxu0 %v2218
    %2327 = vmatpush.bf16.msra.mxu0 %v2217
    %2328 = vmatpush.bf16.msra.mxu0 %v2216
    %2329 = vmatmul.bf16.gmra.mxu0 %v1969
    %v2330 = vpop.f32.mrf.mxu0
    %v2331 = vadd.f32 %v2282, %v2330
    %v2332 = vpop.f32.mrf.mxu0
    %v2333 = vadd.f32 %v2284, %v2332
    %2334 = vmatmul.bf16.gmra.mxu0 %v1973
    %v2335 = vpop.f32.mrf.mxu0
    %v2336 = vadd.f32 %v2287, %v2335
    %v2337 = vpop.f32.mrf.mxu0
    %v2338 = vadd.f32 %v2289, %v2337
    %2339 = vmatmul.bf16.gmra.mxu0 %v1977
    %v2340 = vpop.f32.mrf.mxu0
    %v2341 = vadd.f32 %v2292, %v2340
    %v2342 = vpop.f32.mrf.mxu0
    %v2343 = vadd.f32 %v2294, %v2342
    %2344 = vmatmul.bf16.gmra.mxu0 %v1981
    %v2345 = vpop.f32.mrf.mxu0
    %v2346 = vadd.f32 %v2297, %v2345
    %v2347 = vpop.f32.mrf.mxu0
    %v2348 = vadd.f32 %v2299, %v2347
    %2349 = vmatmul.bf16.gmra.mxu0 %v1985
    %v2350 = vpop.f32.mrf.mxu0
    %v2351 = vadd.f32 %v2302, %v2350
    %v2352 = vpop.f32.mrf.mxu0
    %v2353 = vadd.f32 %v2304, %v2352
    %2354 = vmatmul.bf16.gmra.mxu0 %v1989
    %v2355 = vpop.f32.mrf.mxu0
    %v2356 = vadd.f32 %v2307, %v2355
    %v2357 = vpop.f32.mrf.mxu0
    %v2358 = vadd.f32 %v2309, %v2357
    %2359 = vmatmul.bf16.gmra.mxu0 %v1993
    %v2360 = vpop.f32.mrf.mxu0
    %v2361 = vadd.f32 %v2312, %v2360
    %v2362 = vpop.f32.mrf.mxu0
    %v2363 = vadd.f32 %v2314, %v2362
    %2364 = vmatmul.bf16.gmra.mxu0 %v1997
    %v2365 = vpop.f32.mrf.mxu0
    %v2366 = vadd.f32 %v2317, %v2365
    %v2367 = vpop.f32.mrf.mxu0
    %v2368 = vadd.f32 %v2319, %v2367
    %2369 = vdwg.mxu0
    %2370 = vmatpush.bf16.msra.mxu0 %v2231
    %2371 = vmatpush.bf16.msra.mxu0 %v2230
    %2372 = vmatpush.bf16.msra.mxu0 %v2229
    %2373 = vmatpush.bf16.msra.mxu0 %v2228
    %2374 = vmatpush.bf16.msra.mxu0 %v2227
    %2375 = vmatpush.bf16.msra.mxu0 %v2226
    %2376 = vmatpush.bf16.msra.mxu0 %v2225
    %2377 = vmatpush.bf16.msra.mxu0 %v2224
    %2378 = vmatmul.bf16.gmra.mxu0 %v1970
    %v2379 = vpop.f32.mrf.mxu0
    %v2380 = vadd.f32 %v2331, %v2379
    %v2381 = vpop.f32.mrf.mxu0
    %v2382 = vadd.f32 %v2333, %v2381
    %2383 = vmatmul.bf16.gmra.mxu0 %v1974
    %v2384 = vpop.f32.mrf.mxu0
    %v2385 = vadd.f32 %v2336, %v2384
    %v2386 = vpop.f32.mrf.mxu0
    %v2387 = vadd.f32 %v2338, %v2386
    %2388 = vmatmul.bf16.gmra.mxu0 %v1978
    %v2389 = vpop.f32.mrf.mxu0
    %v2390 = vadd.f32 %v2341, %v2389
    %v2391 = vpop.f32.mrf.mxu0
    %v2392 = vadd.f32 %v2343, %v2391
    %2393 = vmatmul.bf16.gmra.mxu0 %v1982
    %v2394 = vpop.f32.mrf.mxu0
    %v2395 = vadd.f32 %v2346, %v2394
    %v2396 = vpop.f32.mrf.mxu0
    %v2397 = vadd.f32 %v2348, %v2396
    %2398 = vmatmul.bf16.gmra.mxu0 %v1986
    %v2399 = vpop.f32.mrf.mxu0
    %v2400 = vadd.f32 %v2351, %v2399
    %v2401 = vpop.f32.mrf.mxu0
    %v2402 = vadd.f32 %v2353, %v2401
    %2403 = vmatmul.bf16.gmra.mxu0 %v1990
    %v2404 = vpop.f32.mrf.mxu0
    %v2405 = vadd.f32 %v2356, %v2404
    %v2406 = vpop.f32.mrf.mxu0
    %v2407 = vadd.f32 %v2358, %v2406
    %2408 = vmatmul.bf16.gmra.mxu0 %v1994
    %v2409 = vpop.f32.mrf.mxu0
    %v2410 = vadd.f32 %v2361, %v2409
    %v2411 = vpop.f32.mrf.mxu0
    %v2412 = vadd.f32 %v2363, %v2411
    %2413 = vmatmul.bf16.gmra.mxu0 %v1998
    %v2414 = vpop.f32.mrf.mxu0
    %v2415 = vadd.f32 %v2366, %v2414
    %v2416 = vpop.f32.mrf.mxu0
    %v2417 = vadd.f32 %v2368, %v2416
    %2418 = vdwg.mxu0
    %2419 = vmatpush.bf16.msra.mxu0 %v2239
    %2420 = vmatpush.bf16.msra.mxu0 %v2238
    %2421 = vmatpush.bf16.msra.mxu0 %v2237
    %2422 = vmatpush.bf16.msra.mxu0 %v2236
    %2423 = vmatpush.bf16.msra.mxu0 %v2235
    %2424 = vmatpush.bf16.msra.mxu0 %v2234
    %2425 = vmatpush.bf16.msra.mxu0 %v2233
    %2426 = vmatpush.bf16.msra.mxu0 %v2232
    %2427 = vmatmul.bf16.gmra.mxu0 %v1971
    %v2428 = vpop.f32.mrf.mxu0
    %v2429 = vadd.f32 %v2380, %v2428
    %v2430 = vpop.f32.mrf.mxu0
    %v2431 = vadd.f32 %v2382, %v2430
    %2432 = vmatmul.bf16.gmra.mxu0 %v1975
    %v2433 = vpop.f32.mrf.mxu0
    %v2434 = vadd.f32 %v2385, %v2433
    %v2435 = vpop.f32.mrf.mxu0
    %v2436 = vadd.f32 %v2387, %v2435
    %2437 = vmatmul.bf16.gmra.mxu0 %v1979
    %v2438 = vpop.f32.mrf.mxu0
    %v2439 = vadd.f32 %v2390, %v2438
    %v2440 = vpop.f32.mrf.mxu0
    %v2441 = vadd.f32 %v2392, %v2440
    %2442 = vmatmul.bf16.gmra.mxu0 %v1983
    %v2443 = vpop.f32.mrf.mxu0
    %v2444 = vadd.f32 %v2395, %v2443
    %v2445 = vpop.f32.mrf.mxu0
    %v2446 = vadd.f32 %v2397, %v2445
    %2447 = vmatmul.bf16.gmra.mxu0 %v1987
    %v2448 = vpop.f32.mrf.mxu0
    %v2449 = vadd.f32 %v2400, %v2448
    %v2450 = vpop.f32.mrf.mxu0
    %v2451 = vadd.f32 %v2402, %v2450
    %2452 = vmatmul.bf16.gmra.mxu0 %v1991
    %v2453 = vpop.f32.mrf.mxu0
    %v2454 = vadd.f32 %v2405, %v2453
    %v2455 = vpop.f32.mrf.mxu0
    %v2456 = vadd.f32 %v2407, %v2455
    %2457 = vmatmul.bf16.gmra.mxu0 %v1995
    %v2458 = vpop.f32.mrf.mxu0
    %v2459 = vadd.f32 %v2410, %v2458
    %v2460 = vpop.f32.mrf.mxu0
    %v2461 = vadd.f32 %v2412, %v2460
    %2462 = vmatmul.bf16.gmra.mxu0 %v1999
    %v2463 = vpop.f32.mrf.mxu0
    %v2464 = vadd.f32 %v2415, %v2463
    %v2465 = vpop.f32.mrf.mxu0
    %v2466 = vadd.f32 %v2417, %v2465
    %2467 = vdwg.mxu0
    %v2468 = vadd.f32 %v2000, %v2429
    %v2469 = vadd.f32 %v2001, %v2431
    %v2470 = vadd.f32 %v2002, %v2434
    %v2471 = vadd.f32 %v2003, %v2436
    %v2472 = vadd.f32 %v2004, %v2439
    %v2473 = vadd.f32 %v2005, %v2441
    %v2474 = vadd.f32 %v2006, %v2444
    %v2475 = vadd.f32 %v2007, %v2446
    %v2476 = vadd.f32 %v2008, %v2449
    %v2477 = vadd.f32 %v2009, %v2451
    %v2478 = vadd.f32 %v2010, %v2454
    %v2479 = vadd.f32 %v2011, %v2456
    %v2480 = vadd.f32 %v2012, %v2459
    %v2481 = vadd.f32 %v2013, %v2461
    %v2482 = vadd.f32 %v2014, %v2464
    %v2483 = vadd.f32 %v2015, %v2466
    %2484 = vst [vmem:[#allocation3] sm:$0xff] %v2468
    %2485 = vst [vmem:[#allocation3 + $0x8] sm:$0xff] %v2469
    %2486 = vst [vmem:[#allocation3 + $0x10] sm:$0xff] %v2470
    %2487 = vst [vmem:[#allocation3 + $0x18] sm:$0xff] %v2471
    %2488 = vst [vmem:[#allocation3 + $0x20] sm:$0xff] %v2472
    %2489 = vst [vmem:[#allocation3 + $0x28] sm:$0xff] %v2473
    %2490 = vst [vmem:[#allocation3 + $0x30] sm:$0xff] %v2474
    %2491 = vst [vmem:[#allocation3 + $0x38] sm:$0xff] %v2475
    %2492 = vst [vmem:[#allocation3 + $0x40] sm:$0xff] %v2476
    %2493 = vst [vmem:[#allocation3 + $0x48] sm:$0xff] %v2477
    %2494 = vst [vmem:[#allocation3 + $0x50] sm:$0xff] %v2478
    %2495 = vst [vmem:[#allocation3 + $0x58] sm:$0xff] %v2479
    %2496 = vst [vmem:[#allocation3 + $0x60] sm:$0xff] %v2480
    %2497 = vst [vmem:[#allocation3 + $0x68] sm:$0xff] %v2481
    %2498 = vst [vmem:[#allocation3 + $0x70] sm:$0xff] %v2482
    %2499 = vst [vmem:[#allocation3 + $0x78] sm:$0xff] %v2483
    // Predicated region
    $region42: #{basic_transformer_block.19} parent=1 // pred_check
      %p2500 = pneg %p33
    $region43: #{basic_transformer_block.19} parent=1 // pred_check_branch
      %2502 = sbr.rel (%p2500) target = $region45
    $region44: #{basic_transformer_block.19} parent=1 // pred_region
      %v2503 = vld [vmem:[#allocation3] sm:$0xff]
      %v2504 = vld [vmem:[#allocation3 + $0x8] sm:$0xff]
      %v2505 = vld [vmem:[#allocation3 + $0x10] sm:$0xff]
      %v2506 = vld [vmem:[#allocation3 + $0x18] sm:$0xff]
      %v2507 = vld [vmem:[#allocation3 + $0x20] sm:$0xff]
      %v2508 = vld [vmem:[#allocation3 + $0x28] sm:$0xff]
      %v2509 = vld [vmem:[#allocation3 + $0x30] sm:$0xff]
      %v2510 = vld [vmem:[#allocation3 + $0x38] sm:$0xff]
      %v2511 = vld [vmem:[#allocation3 + $0x40] sm:$0xff]
      %v2512 = vld [vmem:[#allocation3 + $0x48] sm:$0xff]
      %v2513 = vld [vmem:[#allocation3 + $0x50] sm:$0xff]
      %v2514 = vld [vmem:[#allocation3 + $0x58] sm:$0xff]
      %v2515 = vld [vmem:[#allocation3 + $0x60] sm:$0xff]
      %v2516 = vld [vmem:[#allocation3 + $0x68] sm:$0xff]
      %v2517 = vld [vmem:[#allocation3 + $0x70] sm:$0xff]
      %v2518 = vld [vmem:[#allocation3 + $0x78] sm:$0xff]
      %v2519 = vld [vmem:[%s8] sm:$0x1]
      %v2521 = vperm.slane %v2519, 0
      %v2523 = vadd.f32 %v2503, %v2521
      %v2524 = vadd.f32 %v2504, %v2521
      %v2525 = vadd.f32 %v2505, %v2521
      %v2526 = vadd.f32 %v2506, %v2521
      %v2527 = vadd.f32 %v2507, %v2521
      %v2528 = vadd.f32 %v2508, %v2521
      %v2529 = vadd.f32 %v2509, %v2521
      %v2530 = vadd.f32 %v2510, %v2521
      %v2531 = vadd.f32 %v2511, %v2521
      %v2532 = vadd.f32 %v2512, %v2521
      %v2533 = vadd.f32 %v2513, %v2521
      %v2534 = vadd.f32 %v2514, %v2521
      %v2535 = vadd.f32 %v2515, %v2521
      %v2536 = vadd.f32 %v2516, %v2521
      %v2537 = vadd.f32 %v2517, %v2521
      %v2538 = vadd.f32 %v2518, %v2521
      %v2539 = vld [vmem:[%s0] sm:$0xff]
      %v2540 = vld [vmem:[%s0 + $0x8] sm:$0xff]
      %v2541 = vld [vmem:[%s0 + $0x10] sm:$0xff]
      %v2542 = vld [vmem:[%s0 + $0x18] sm:$0xff]
      %v2543 = vld [vmem:[%s0 + $0x20] sm:$0xff]
      %v2544 = vld [vmem:[%s0 + $0x28] sm:$0xff]
      %v2545 = vld [vmem:[%s0 + $0x30] sm:$0xff]
      %v2546 = vld [vmem:[%s0 + $0x38] sm:$0xff]
      %v2547 = vld [vmem:[%s0 + $0x40] sm:$0xff]
      %v2548 = vld [vmem:[%s0 + $0x48] sm:$0xff]
      %v2549 = vld [vmem:[%s0 + $0x50] sm:$0xff]
      %v2550 = vld [vmem:[%s0 + $0x58] sm:$0xff]
      %v2551 = vld [vmem:[%s0 + $0x60] sm:$0xff]
      %v2552 = vld [vmem:[%s0 + $0x68] sm:$0xff]
      %v2553 = vld [vmem:[%s0 + $0x70] sm:$0xff]
      %v2554 = vld [vmem:[%s0 + $0x78] sm:$0xff]
      %v2555 = vadd.f32 %v2523, %v2539
      %v2556 = vadd.f32 %v2524, %v2540
      %v2557 = vadd.f32 %v2525, %v2541
      %v2558 = vadd.f32 %v2526, %v2542
      %v2559 = vadd.f32 %v2527, %v2543
      %v2560 = vadd.f32 %v2528, %v2544
      %v2561 = vadd.f32 %v2529, %v2545
      %v2562 = vadd.f32 %v2530, %v2546
      %v2563 = vadd.f32 %v2531, %v2547
      %v2564 = vadd.f32 %v2532, %v2548
      %v2565 = vadd.f32 %v2533, %v2549
      %v2566 = vadd.f32 %v2534, %v2550
      %v2567 = vadd.f32 %v2535, %v2551
      %v2568 = vadd.f32 %v2536, %v2552
      %v2569 = vadd.f32 %v2537, %v2553
      %v2570 = vadd.f32 %v2538, %v2554
      %2571 = vst [vmem:[#allocation4] sm:$0xff] %v2555
      %2572 = vst [vmem:[#allocation4 + $0x8] sm:$0xff] %v2556
      %2573 = vst [vmem:[#allocation4 + $0x10] sm:$0xff] %v2557
      %2574 = vst [vmem:[#allocation4 + $0x18] sm:$0xff] %v2558
      %2575 = vst [vmem:[#allocation4 + $0x20] sm:$0xff] %v2559
      %2576 = vst [vmem:[#allocation4 + $0x28] sm:$0xff] %v2560
      %2577 = vst [vmem:[#allocation4 + $0x30] sm:$0xff] %v2561
      %2578 = vst [vmem:[#allocation4 + $0x38] sm:$0xff] %v2562
      %2579 = vst [vmem:[#allocation4 + $0x40] sm:$0xff] %v2563
      %2580 = vst [vmem:[#allocation4 + $0x48] sm:$0xff] %v2564
      %2581 = vst [vmem:[#allocation4 + $0x50] sm:$0xff] %v2565
      %2582 = vst [vmem:[#allocation4 + $0x58] sm:$0xff] %v2566
      %2583 = vst [vmem:[#allocation4 + $0x60] sm:$0xff] %v2567
      %2584 = vst [vmem:[#allocation4 + $0x68] sm:$0xff] %v2568
      %2585 = vst [vmem:[#allocation4 + $0x70] sm:$0xff] %v2569
      %2586 = vst [vmem:[#allocation4 + $0x78] sm:$0xff] %v2570
    $region45: #{basic_transformer_block.19} parent=1 // pred_fallthru
      _
    // Predicated region
    $region46: #{basic_transformer_block.19} parent=1 // pred_check
      _
    $region47: #{basic_transformer_block.19} parent=1 // pred_check_branch
      %2588 = sbr.rel (0) target = $region49
    $region48: #{basic_transformer_block.19} parent=1 // pred_region
      %2590 = vsyncadd [#allocation5], 0
      %s2591 = sshll.u32 [#allocation4], 4
      %s2592 = int_to_ptr.vmem [resolvable:$true] %s2591
      %s2593 = sshll.u32 %s9, 4
      %s2594 = int_to_ptr.hbm [resolvable:$true] %s2593
      %2599 = dma.vmem_to_hbm [thread:$0]  %s2592, 2048, %s2594, [#allocation5], 128, 128, 8
    $region49: #{basic_transformer_block.19} parent=1 // pred_fallthru
      _
    // Predicated region
    $region50: #{basic_transformer_block.19} parent=1 // pred_check
      _
    $region51: #{basic_transformer_block.19} parent=1 // pred_check_branch
      %2601 = sbr.rel (0) target = $region53
    $region52: #{basic_transformer_block.19} parent=1 // pred_region
      %2603 = dma.done [#allocation5], 2048
    $region53: #{basic_transformer_block.19} parent=1 // pred_fallthru
      _
    %2604 = vsyncpa [#allocation5], 1

</llo_original>
